<compile_context>
chip_gen: v5e
topology: v5e:2x2
jax: 0.10.0
libtpu: 0.0.40
codegen_flags: <defaults>
</compile_context>

<pallas_src>
import functools
import math

import numpy as np
import jax
import jax.numpy as jnp
from jax import lax
from jax.experimental import pallas as pl
from jax.experimental.pallas import tpu as pltpu

F32 = jnp.float32
PAD0 = 8  # sublane-aligned offset of the data region inside the depthwise-conv scratch


# ------------------------------ in-kernel math -------------------------------

def _gln(x, g, beta, eps=1e-8):
    """GlobalLayerNorm: per-sample stats over (T, C), per-channel affine. x: (B, T, C)."""
    n = float(x.shape[-1] * x.shape[-2])
    mu = jnp.sum(jnp.sum(x, axis=-1, keepdims=True), axis=-2, keepdims=True) / n
    d = x - mu
    var = jnp.sum(jnp.sum(d * d, axis=-1, keepdims=True), axis=-2, keepdims=True) / n
    return d * lax.rsqrt(var + eps) * g + beta


def _ln(x, g, b, eps=1e-5):
    """Per-token LayerNorm over the channel (last) axis. x: (N, C)."""
    mu = jnp.mean(x, axis=-1, keepdims=True)
    var = jnp.mean(jnp.square(x - mu), axis=-1, keepdims=True)
    return (x - mu) * lax.rsqrt(var + eps) * g + b


def _prelu(x, a):
    return jnp.where(x >= 0, x, a * x)


def _tmix(m, x):
    """Time-mixing matmul: apply m (T_out, T_in) to every entry of x (N, T_in, C)."""
    n = x.shape[0]
    mb = jnp.broadcast_to(m[None], (n,) + m.shape)
    return jnp.einsum('bot,btc->boc', mb, x, preferred_element_type=F32)


def _stage_pad(pad_ref, x):
    """Write x (B, T, C) into the conv scratch at aligned offset PAD0 and zero the
    8 rows behind it (rows [0, PAD0) are zeroed once per kernel invocation)."""
    b, t, c = x.shape
    pad_ref[:, PAD0:PAD0 + t, :] = x
    pad_ref[:, PAD0 + t:PAD0 + t + PAD0, :] = jnp.zeros((b, PAD0, c), F32)


def _dw_taps(pad_ref, t_out, w, ksize):
    """Depthwise stride-1 'same' conv: K offset loads from the padded scratch ref
    accumulated with VPU FMAs.  w: (K, 1, 1, C)."""
    p = ksize // 2
    acc = pad_ref[:, PAD0 - p:PAD0 - p + t_out, :] * w[0]
    for k in range(1, ksize):
        o = PAD0 - p + k
        acc = acc + pad_ref[:, o:o + t_out, :] * w[k]
    return acc


def _injection(pad_ref, x_l, x_g, u, pw, ksize):
    """InjectionSum: depthwise ConvNorm on the local branch, sigmoid-gated and plain
    depthwise ConvNorms on the global branch, one fused nearest-upsample matmul for
    both global branches, then combine."""
    (wl, gl, bl), (wa, ga_, ba), (wg, gg, bg) = pw
    bsz = x_l.shape[0]
    t_l, t_g = x_l.shape[1], x_g.shape[1]
    _stage_pad(pad_ref, x_l)
    loc = _gln(_dw_taps(pad_ref, t_l, wl, ksize), gl, bl)
    _stage_pad(pad_ref, x_g)
    gate = jax.nn.sigmoid(_gln(_dw_taps(pad_ref, t_g, wa, ksize), ga_, ba))
    glob = _gln(_dw_taps(pad_ref, t_g, wg, ksize), gg, bg)
    if u is None:                                   # same length: nearest interp == identity
        return loc * gate + glob
    both = _tmix(u, jnp.concatenate([gate, glob], axis=0))     # (2B, T_l, C): one matmul
    return loc * both[0:bsz] + both[bsz:2 * bsz]


# ------------------------------- fused kernel --------------------------------

def _tdf_kernel(B, D, C, K, S, H, T, *refs):
    """Whole TDFBlock forward in one kernel; all intermediates stay in VMEM/vregs.
    Argument order must match the packing in `tdf_block_forward` exactly."""
    *ins, out_ref, pad_ref = refs
    it = iter(ins)
    ld = lambda: next(it)[...]          # noqa: E731

    # leading pad rows of the depthwise-conv scratch stay zero for the whole kernel
    pad_ref[:, 0:PAD0, :] = jnp.zeros((B, PAD0, C), F32)

    T0, Tl = T[0], T[S - 1]

    # ---- encode (depthwise 1x1 + PReLU); NCL -> NLC transpose folded in ----
    x = ld()                                        # (B, D, T0)
    ew, eb, ea = ld(), ld(), ld()                   # (1, 1, D)
    enc = _prelu(jnp.swapaxes(x, 1, 2) * ew + eb, ea)   # (B, T0, D)
    residual = enc

    # ---- in_to_hidden: batch-folded 1x1 conv -> gLN -> PReLU ----------------
    iw, ib, ig, ibeta, ia = ld(), ld(), ld(), ld(), ld()
    h = jnp.dot(enc.reshape(B * T0, D), iw, preferred_element_type=F32) + ib
    bu = [_prelu(_gln(h.reshape(B, T0, C), ig, ibeta), ia)]

    # ---- bottom-up pyramid: depthwise stride-2 conv + gLN -------------------
    for i in range(S - 1):
        w, b, g, beta, down = ld(), ld(), ld(), ld(), ld()
        _stage_pad(pad_ref, bu[i])
        conv = _dw_taps(pad_ref, T[i], w, K) + b        # stride-1 'same' conv
        bu.append(_gln(_tmix(down, conv), g, beta))     # stride-2 selection via 0/1 matmul

    # ---- global-attention input: bu[-1] + sum_i adaptive_avg_pool(bu[i]) ----
    ga_in = bu[S - 1]
    for i in range(S - 1):
        ga_in = ga_in + _tmix(ld(), bu[i])

    # ---- transformer block: heads via channel masks, batch via score mask ---
    head_mask, batch_mask = ld(), ld()              # (H, 1, C), (B*Tl, B*Tl)
    wqkv, bqkv, wo, bo = ld(), ld(), ld(), ld()
    ln1g, ln1b, w1, b1 = ld(), ld(), ld(), ld()
    w2, b2, ln2g, ln2b = ld(), ld(), ld(), ld()
    dh = C // H
    gaf = ga_in.reshape(B * Tl, C)
    qkv = jnp.dot(gaf, wqkv, preferred_element_type=F32) + bqkv      # (B*Tl, 3C)
    q = qkv[:, 0:C][None] * head_mask               # (H, B*Tl, C)
    k = qkv[:, C:2 * C][None] * head_mask
    v = qkv[:, 2 * C:3 * C][None] * head_mask
    sc = jnp.einsum('htc,hsc->hts', q, k, preferred_element_type=F32) / math.sqrt(dh)
    sc = sc + batch_mask[None]                      # mask cross-batch token pairs
    sc = sc - jnp.max(sc, axis=-1, keepdims=True)
    ex = jnp.exp(sc)
    probs = ex / jnp.sum(ex, axis=-1, keepdims=True)        # exact divide
    attn = jnp.sum(jnp.einsum('hts,hsc->htc', probs, v, preferred_element_type=F32), axis=0)
    attn = jnp.dot(attn, wo, preferred_element_type=F32) + bo
    y = _ln(gaf + attn, ln1g, ln1b)                 # post-LN
    ff = jnp.maximum(jnp.dot(y, w1, preferred_element_type=F32) + b1, 0.0)
    ff = jnp.dot(ff, w2, preferred_element_type=F32) + b2
    ga_out = _ln(y + ff, ln2g, ln2b).reshape(B, Tl, C)

    # ---- inject global features into every pyramid stage --------------------
    inj = []
    for i in range(S):
        pw = []
        for _ in range(3):                          # local, act(gate), global ConvNorms
            pw.append((ld(), ld(), ld()))
        u = ld() if i < S - 1 else None
        inj.append(_injection(pad_ref, bu[i], ga_out, u, pw, K))

    # ---- top-down fusion (with per-stage skip) -------------------------------
    prev = inj[S - 1]
    for i in range(S - 2, -1, -1):
        pw = []
        for _ in range(3):
            pw.append((ld(), ld(), ld()))
        u = ld()
        prev = _injection(pad_ref, inj[i], prev, u, pw, K) + inj[i]

    # ---- hidden_to_in 1x1 conv + residual; emit NCL --------------------------
    hw, hb = ld(), ld()                             # (C, D), (1, D)
    out = jnp.dot(prev.reshape(B * T0, C), hw, preferred_element_type=F32) + hb
    out_ref[...] = jnp.swapaxes(out.reshape(B, T0, D) + residual, 1, 2)


# ----------------------------- host-built matrices ---------------------------

def _pool_matrix(l_out, l_in):
    """PyTorch adaptive_avg_pool1d as an (l_out, l_in) averaging matrix."""
    m = np.zeros((l_out, l_in), np.float32)
    for o in range(l_out):
        s = (o * l_in) // l_out
        e = -((-(o + 1) * l_in) // l_out)
        m[o, s:e] = 1.0 / (e - s)
    return jnp.asarray(m)


def _nearest_matrix(t_out, t_in):
    """F.interpolate(mode='nearest') along T as a (t_out, t_in) 0/1 matrix."""
    m = np.zeros((t_out, t_in), np.float32)
    idx = (np.arange(t_out) * t_in) // t_out
    m[np.arange(t_out), idx] = 1.0
    return jnp.asarray(m)


def _stride2_matrix(t_out, t_in):
    """Stride-2 tap selection (conv downsample) as a (t_out, t_in) 0/1 matrix."""
    m = np.zeros((t_out, t_in), np.float32)
    m[np.arange(t_out), 2 * np.arange(t_out)] = 1.0
    return jnp.asarray(m)


def _head_mask(n_heads, c):
    dh = c // n_heads
    m = np.zeros((n_heads, 1, c), np.float32)
    for h in range(n_heads):
        m[h, 0, h * dh:(h + 1) * dh] = 1.0
    return jnp.asarray(m)


def _batch_mask(b, t):
    bid = np.arange(b * t) // t
    m = np.where(bid[:, None] == bid[None, :], 0.0, -1e30).astype(np.float32)
    return jnp.asarray(m)


# --------------------------------- forward -----------------------------------

def tdf_block_forward(params, x_nct, *, stage_num, kernel_size, n_heads):
    """x_nct: (B, in_dim, T) PyTorch Conv1d layout; returns the same layout."""
    assert stage_num > 1
    B, D, T0 = x_nct.shape
    S, K, H = stage_num, kernel_size, n_heads
    C = params['in_to_hidden']['w'].shape[1]
    Fd = params['ga']['w1'].shape[1]
    assert C % H == 0
    p = K // 2
    T = [T0]
    for _ in range(S - 1):
        T.append((T[-1] + 2 * p - K) // 2 + 1)
    Tl = T[-1]

    def cvec(a):                       # (C,) -> (1, 1, C), broadcastable over (B, T, C)
        return a.reshape(1, 1, -1)

    def conv_norm(q):                  # bias-free depthwise ConvNorm params
        return [q['w'].reshape(K, 1, 1, C), cvec(q['g']), cvec(q['beta'])]

    # ---- pack kernel arguments (order must match _tdf_kernel) ----------------
    args = [x_nct]
    e = params['encode']
    args += [e['w'].reshape(1, 1, D), e['b'].reshape(1, 1, D), e['alpha'].reshape(1, 1, D)]
    ith = params['in_to_hidden']
    args += [ith['w'], ith['b'].reshape(1, C), cvec(ith['g']), cvec(ith['beta']),
             cvec(ith['alpha'])]
    for i in range(S - 1):
        bp = params['bottom_up'][i]
        args += [bp['w'].reshape(K, 1, 1, C), cvec(bp['b']), cvec(bp['g']), cvec(bp['beta']),
                 _stride2_matrix(T[i + 1], T[i])]
    for i in range(S - 1):
        args += [_pool_matrix(Tl, T[i])]
    args += [_head_mask(H, C), _batch_mask(B, Tl)]
    g = params['ga']
    args += [g['wqkv'], g['bqkv'].reshape(1, 3 * C), g['wo'], g['bo'].reshape(1, C),
             g['ln1_g'].reshape(1, C), g['ln1_b'].reshape(1, C),
             g['w1'], g['b1'].reshape(1, Fd), g['w2'], g['b2'].reshape(1, C),
             g['ln2_g'].reshape(1, C), g['ln2_b'].reshape(1, C)]
    for i in range(S):
        q = params['inter_inj'][i]
        args += conv_norm(q['local']) + conv_norm(q['act']) + conv_norm(q['global'])
        if i < S - 1:
            args += [_nearest_matrix(T[i], Tl)]
    for i in range(S - 2, -1, -1):                  # packed in kernel consumption order
        q = params['last_inj'][i]
        args += conv_norm(q['local']) + conv_norm(q['act']) + conv_norm(q['global'])
        args += [_nearest_matrix(T[i], T[i + 1])]
    h2i = params['hidden_to_in']
    args += [h2i['w'].T, h2i['b'].reshape(1, D)]    # (C, D) so (B*T, C) @ (C, D)

    # ---- advisory cost estimate ----------------------------------------------
    flops = 2 * B * T0 * D * C * 2
    flops += 2 * B * Tl * C * (4 * C) + 4 * B * Tl * C * Fd
    flops += 4 * H * (B * Tl) * (B * Tl) * (C // H)
    flops += (3 * (2 * S - 1) + (S - 1)) * 2 * B * T0 * K * C    # depthwise conv FMAs
    flops += 6 * S * 2 * B * T0 * Tl * C                         # time-mix matmuls (coarse)
    transcendentals = H * (B * Tl) ** 2 + (2 * S - 1) * B * T0 * C
    bytes_accessed = int(sum(int(np.prod(a.shape)) for a in args) + B * D * T0) * 4

    return pl.pallas_call(
        functools.partial(_tdf_kernel, B, D, C, K, S, H, tuple(T)),
        out_shape=jax.ShapeDtypeStruct((B, D, T0), F32),
        scratch_shapes=[pltpu.VMEM((B, T0 + 2 * PAD0, C), F32)],
        compiler_params=pltpu.CompilerParams(vmem_limit_bytes=32 * 1024 * 1024),
        cost_estimate=pl.CostEstimate(flops=int(flops),
                                      transcendentals=int(transcendentals),
                                      bytes_accessed=int(bytes_accessed)),
    )(*args)


# ----------------------------- parameter init --------------------------------

def init_params(seed, *, in_dim, conv_dim, kernel_size, stage_num, ffn_dim):
    keys = iter(jax.random.split(jax.random.PRNGKey(seed), 256))

    def nrm(shape, scale):
        return jax.random.normal(next(keys), shape, F32) * scale

    D, C, K = in_dim, conv_dim, kernel_size

    def conv_norm_p():
        return {'w': nrm((K, C), 1.0 / math.sqrt(K)),
                'g': jnp.ones((C,), F32), 'beta': jnp.zeros((C,), F32)}

    return {
        'encode': {'w': nrm((D,), 1.0), 'b': nrm((D,), 0.1),
                   'alpha': jnp.full((D,), 0.25, F32)},
        'in_to_hidden': {'w': nrm((D, C), 1.0 / math.sqrt(D)), 'b': nrm((C,), 0.1),
                         'g': jnp.ones((C,), F32), 'beta': jnp.zeros((C,), F32),
                         'alpha': jnp.full((C,), 0.25, F32)},
        'hidden_to_in': {'w': nrm((D, C), 1.0 / math.sqrt(C)),     # (out=D, in=C)
                         'b': nrm((D,), 0.1)},
        'bottom_up': [{'w': nrm((K, C), 1.0 / math.sqrt(K)), 'b': nrm((C,), 0.1),
                       'g': jnp.ones((C,), F32), 'beta': jnp.zeros((C,), F32)}
                      for _ in range(stage_num - 1)],
        'inter_inj': [{'local': conv_norm_p(), 'act': conv_norm_p(),
                       'global': conv_norm_p()} for _ in range(stage_num)],
        'last_inj': [{'local': conv_norm_p(), 'act': conv_norm_p(),
                      'global': conv_norm_p()} for _ in range(stage_num - 1)],
        'ga': {
            'wqkv': nrm((C, 3 * C), 1.0 / math.sqrt(C)),
            'bqkv': jnp.zeros((3 * C,), F32),
            'wo': nrm((C, C), 1.0 / math.sqrt(C)), 'bo': jnp.zeros((C,), F32),
            'ln1_g': jnp.ones((C,), F32), 'ln1_b': jnp.zeros((C,), F32),
            'w1': nrm((C, ffn_dim), 1.0 / math.sqrt(C)),
            'b1': jnp.zeros((ffn_dim,), F32),
            'w2': nrm((ffn_dim, C), 1.0 / math.sqrt(ffn_dim)),
            'b2': jnp.zeros((C,), F32),
            'ln2_g': jnp.ones((C,), F32), 'ln2_b': jnp.zeros((C,), F32),
        },
    }


# ----------------------------------- main -------------------------------------

if __name__ == "__main__":
    B, T = 2, 32
    in_dim = conv_dim = 32
    stage_num, kernel_size, n_heads, ffn_dim = 3, 5, 4, 64

    params = init_params(0, in_dim=in_dim, conv_dim=conv_dim,
                         kernel_size=kernel_size, stage_num=stage_num,
                         ffn_dim=ffn_dim)
    x = jax.random.normal(jax.random.PRNGKey(0), (B, in_dim, T), F32)

    fwd = jax.jit(functools.partial(tdf_block_forward, stage_num=stage_num,
                                    kernel_size=kernel_size, n_heads=n_heads))
    out = fwd(params, x)
    jax.block_until_ready(out)
    assert out.shape == (B, in_dim, T), out.shape
    assert bool(jnp.all(jnp.isfinite(out)))
    print("KERNEL_OK")
</pallas_src>

<mosaic_0001>
module attributes {stable_mosaic.version = 11 : i64} {
  func.func @_tdf_kernel(%arg0: memref<2x32x32xf32, #tpu.memory_space<vmem>>, %arg1: memref<1x1x32xf32, #tpu.memory_space<vmem>>, %arg2: memref<1x1x32xf32, #tpu.memory_space<vmem>>, %arg3: memref<1x1x32xf32, #tpu.memory_space<vmem>>, %arg4: memref<32x32xf32, #tpu.memory_space<vmem>>, %arg5: memref<1x32xf32, #tpu.memory_space<vmem>>, %arg6: memref<1x1x32xf32, #tpu.memory_space<vmem>>, %arg7: memref<1x1x32xf32, #tpu.memory_space<vmem>>, %arg8: memref<1x1x32xf32, #tpu.memory_space<vmem>>, %arg9: memref<5x1x1x32xf32, #tpu.memory_space<vmem>>, %arg10: memref<1x1x32xf32, #tpu.memory_space<vmem>>, %arg11: memref<1x1x32xf32, #tpu.memory_space<vmem>>, %arg12: memref<1x1x32xf32, #tpu.memory_space<vmem>>, %arg13: memref<16x32xf32, #tpu.memory_space<vmem>>, %arg14: memref<5x1x1x32xf32, #tpu.memory_space<vmem>>, %arg15: memref<1x1x32xf32, #tpu.memory_space<vmem>>, %arg16: memref<1x1x32xf32, #tpu.memory_space<vmem>>, %arg17: memref<1x1x32xf32, #tpu.memory_space<vmem>>, %arg18: memref<8x16xf32, #tpu.memory_space<vmem>>, %arg19: memref<8x32xf32, #tpu.memory_space<vmem>>, %arg20: memref<8x16xf32, #tpu.memory_space<vmem>>, %arg21: memref<4x1x32xf32, #tpu.memory_space<vmem>>, %arg22: memref<16x16xf32, #tpu.memory_space<vmem>>, %arg23: memref<32x96xf32, #tpu.memory_space<vmem>>, %arg24: memref<1x96xf32, #tpu.memory_space<vmem>>, %arg25: memref<32x32xf32, #tpu.memory_space<vmem>>, %arg26: memref<1x32xf32, #tpu.memory_space<vmem>>, %arg27: memref<1x32xf32, #tpu.memory_space<vmem>>, %arg28: memref<1x32xf32, #tpu.memory_space<vmem>>, %arg29: memref<32x64xf32, #tpu.memory_space<vmem>>, %arg30: memref<1x64xf32, #tpu.memory_space<vmem>>, %arg31: memref<64x32xf32, #tpu.memory_space<vmem>>, %arg32: memref<1x32xf32, #tpu.memory_space<vmem>>, %arg33: memref<1x32xf32, #tpu.memory_space<vmem>>, %arg34: memref<1x32xf32, #tpu.memory_space<vmem>>, %arg35: memref<5x1x1x32xf32, #tpu.memory_space<vmem>>, %arg36: memref<1x1x32xf32, #tpu.memory_space<vmem>>, %arg37: memref<1x1x32xf32, #tpu.memory_space<vmem>>, %arg38: memref<5x1x1x32xf32, #tpu.memory_space<vmem>>, %arg39: memref<1x1x32xf32, #tpu.memory_space<vmem>>, %arg40: memref<1x1x32xf32, #tpu.memory_space<vmem>>, %arg41: memref<5x1x1x32xf32, #tpu.memory_space<vmem>>, %arg42: memref<1x1x32xf32, #tpu.memory_space<vmem>>, %arg43: memref<1x1x32xf32, #tpu.memory_space<vmem>>, %arg44: memref<32x8xf32, #tpu.memory_space<vmem>>, %arg45: memref<5x1x1x32xf32, #tpu.memory_space<vmem>>, %arg46: memref<1x1x32xf32, #tpu.memory_space<vmem>>, %arg47: memref<1x1x32xf32, #tpu.memory_space<vmem>>, %arg48: memref<5x1x1x32xf32, #tpu.memory_space<vmem>>, %arg49: memref<1x1x32xf32, #tpu.memory_space<vmem>>, %arg50: memref<1x1x32xf32, #tpu.memory_space<vmem>>, %arg51: memref<5x1x1x32xf32, #tpu.memory_space<vmem>>, %arg52: memref<1x1x32xf32, #tpu.memory_space<vmem>>, %arg53: memref<1x1x32xf32, #tpu.memory_space<vmem>>, %arg54: memref<16x8xf32, #tpu.memory_space<vmem>>, %arg55: memref<5x1x1x32xf32, #tpu.memory_space<vmem>>, %arg56: memref<1x1x32xf32, #tpu.memory_space<vmem>>, %arg57: memref<1x1x32xf32, #tpu.memory_space<vmem>>, %arg58: memref<5x1x1x32xf32, #tpu.memory_space<vmem>>, %arg59: memref<1x1x32xf32, #tpu.memory_space<vmem>>, %arg60: memref<1x1x32xf32, #tpu.memory_space<vmem>>, %arg61: memref<5x1x1x32xf32, #tpu.memory_space<vmem>>, %arg62: memref<1x1x32xf32, #tpu.memory_space<vmem>>, %arg63: memref<1x1x32xf32, #tpu.memory_space<vmem>>, %arg64: memref<5x1x1x32xf32, #tpu.memory_space<vmem>>, %arg65: memref<1x1x32xf32, #tpu.memory_space<vmem>>, %arg66: memref<1x1x32xf32, #tpu.memory_space<vmem>>, %arg67: memref<5x1x1x32xf32, #tpu.memory_space<vmem>>, %arg68: memref<1x1x32xf32, #tpu.memory_space<vmem>>, %arg69: memref<1x1x32xf32, #tpu.memory_space<vmem>>, %arg70: memref<5x1x1x32xf32, #tpu.memory_space<vmem>>, %arg71: memref<1x1x32xf32, #tpu.memory_space<vmem>>, %arg72: memref<1x1x32xf32, #tpu.memory_space<vmem>>, %arg73: memref<16x8xf32, #tpu.memory_space<vmem>>, %arg74: memref<5x1x1x32xf32, #tpu.memory_space<vmem>>, %arg75: memref<1x1x32xf32, #tpu.memory_space<vmem>>, %arg76: memref<1x1x32xf32, #tpu.memory_space<vmem>>, %arg77: memref<5x1x1x32xf32, #tpu.memory_space<vmem>>, %arg78: memref<1x1x32xf32, #tpu.memory_space<vmem>>, %arg79: memref<1x1x32xf32, #tpu.memory_space<vmem>>, %arg80: memref<5x1x1x32xf32, #tpu.memory_space<vmem>>, %arg81: memref<1x1x32xf32, #tpu.memory_space<vmem>>, %arg82: memref<1x1x32xf32, #tpu.memory_space<vmem>>, %arg83: memref<32x16xf32, #tpu.memory_space<vmem>>, %arg84: memref<32x32xf32, #tpu.memory_space<vmem>>, %arg85: memref<1x32xf32, #tpu.memory_space<vmem>>, %arg86: memref<2x32x32xf32, #tpu.memory_space<vmem>>, %arg87: memref<2x48x32xf32, #tpu.memory_space<vmem>>) attributes {dimension_semantics = [], scalar_prefetch = 0 : i64, scratch_operands = 1 : i64, tpu.core_type = #tpu.core_type<tc>} {
    %cst = arith.constant 0.000000e+00 : f32
    %0 = vector.broadcast %cst : f32 to vector<2x8x32xf32>
    %c0 = arith.constant 0 : index
    %c0_0 = arith.constant 0 : index
    %c0_1 = arith.constant 0 : index
    %1 = vector.load %arg87[%c0, %c0_0, %c0_1] : memref<2x48x32xf32, #tpu.memory_space<vmem>>, vector<2x8x32xf32>
    tpu.vector_store %arg87[%c0, %c0_0, %c0_1], %0 {strides = array<i32>} : memref<2x48x32xf32, #tpu.memory_space<vmem>>, vector<2x8x32xf32>,
    %c0_2 = arith.constant 0 : index
    %c0_3 = arith.constant 0 : index
    %c0_4 = arith.constant 0 : index
    %2 = vector.load %arg0[%c0_2, %c0_3, %c0_4] : memref<2x32x32xf32, #tpu.memory_space<vmem>>, vector<2x32x32xf32>
    %c0_5 = arith.constant 0 : index
    %c0_6 = arith.constant 0 : index
    %c0_7 = arith.constant 0 : index
    %3 = vector.load %arg1[%c0_5, %c0_6, %c0_7] : memref<1x1x32xf32, #tpu.memory_space<vmem>>, vector<1x1x32xf32>
    %c0_8 = arith.constant 0 : index
    %c0_9 = arith.constant 0 : index
    %c0_10 = arith.constant 0 : index
    %4 = vector.load %arg2[%c0_8, %c0_9, %c0_10] : memref<1x1x32xf32, #tpu.memory_space<vmem>>, vector<1x1x32xf32>
    %c0_11 = arith.constant 0 : index
    %c0_12 = arith.constant 0 : index
    %c0_13 = arith.constant 0 : index
    %5 = vector.load %arg3[%c0_11, %c0_12, %c0_13] : memref<1x1x32xf32, #tpu.memory_space<vmem>>, vector<1x1x32xf32>
    %6 = tpu.transpose %2, [0, 2, 1] : vector<2x32x32xf32> -> vector<2x32x32xf32>
    %7 = vector.broadcast %3 : vector<1x1x32xf32> to vector<2x32x32xf32>
    %8 = arith.mulf %6, %7 : vector<2x32x32xf32>
    %9 = vector.broadcast %4 : vector<1x1x32xf32> to vector<2x32x32xf32>
    %10 = arith.addf %8, %9 : vector<2x32x32xf32>
    %cst_14 = arith.constant 0.000000e+00 : f32
    %11 = vector.broadcast %cst_14 : f32 to vector<2x32x32xf32>
    %12 = arith.cmpf oge, %10, %11 : vector<2x32x32xf32>
    %13 = vector.broadcast %5 : vector<1x1x32xf32> to vector<2x32x32xf32>
    %14 = arith.mulf %13, %10 : vector<2x32x32xf32>
    %15 = arith.select %12, %10, %14 : vector<2x32x32xi1>, vector<2x32x32xf32>
    %c0_15 = arith.constant 0 : index
    %c0_16 = arith.constant 0 : index
    %16 = vector.load %arg4[%c0_15, %c0_16] : memref<32x32xf32, #tpu.memory_space<vmem>>, vector<32x32xf32>
    %c0_17 = arith.constant 0 : index
    %c0_18 = arith.constant 0 : index
    %17 = vector.load %arg5[%c0_17, %c0_18] : memref<1x32xf32, #tpu.memory_space<vmem>>, vector<1x32xf32>
    %c0_19 = arith.constant 0 : index
    %c0_20 = arith.constant 0 : index
    %c0_21 = arith.constant 0 : index
    %18 = vector.load %arg6[%c0_19, %c0_20, %c0_21] : memref<1x1x32xf32, #tpu.memory_space<vmem>>, vector<1x1x32xf32>
    %c0_22 = arith.constant 0 : index
    %c0_23 = arith.constant 0 : index
    %c0_24 = arith.constant 0 : index
    %19 = vector.load %arg7[%c0_22, %c0_23, %c0_24] : memref<1x1x32xf32, #tpu.memory_space<vmem>>, vector<1x1x32xf32>
    %c0_25 = arith.constant 0 : index
    %c0_26 = arith.constant 0 : index
    %c0_27 = arith.constant 0 : index
    %20 = vector.load %arg8[%c0_25, %c0_26, %c0_27] : memref<1x1x32xf32, #tpu.memory_space<vmem>>, vector<1x1x32xf32>
    %21 = vector.shape_cast %15 : vector<2x32x32xf32> to vector<64x32xf32>
    %cst_28 = arith.constant dense<0.000000e+00> : vector<64x32xf32>
    %22 = tpu.matmul %21, %16, %cst_28 {dimension_numbers = #tpu.dot_dimension_numbers<[1], [0], [0], [1], [0, 0, 1, 1], [], []>} : vector<64x32xf32>, vector<32x32xf32>, vector<64x32xf32> -> vector<64x32xf32>
    %23 = vector.broadcast %17 : vector<1x32xf32> to vector<64x32xf32>
    %24 = arith.addf %22, %23 : vector<64x32xf32>
    %25 = vector.shape_cast %24 : vector<64x32xf32> to vector<2x32x32xf32>
    %cst_29 = arith.constant dense<0.000000e+00> : vector<2x32xf32>
    %26 = vector.multi_reduction <add>, %25, %cst_29 [2] : vector<2x32x32xf32> to vector<2x32xf32>
    %27 = vector.shape_cast %26 : vector<2x32xf32> to vector<2x32x1xf32>
    %cst_30 = arith.constant dense<0.000000e+00> : vector<2x1xf32>
    %28 = vector.multi_reduction <add>, %27, %cst_30 [1] : vector<2x32x1xf32> to vector<2x1xf32>
    %29 = vector.shape_cast %28 : vector<2x1xf32> to vector<2x1x1xf32>
    %cst_31 = arith.constant 1.024000e+03 : f32
    %30 = vector.broadcast %cst_31 : f32 to vector<2x1x1xf32>
    %31 = arith.divf %29, %30 : vector<2x1x1xf32>
    %32 = vector.broadcast %31 : vector<2x1x1xf32> to vector<2x32x32xf32>
    %33 = arith.subf %25, %32 : vector<2x32x32xf32>
    %34 = arith.mulf %33, %33 : vector<2x32x32xf32>
    %cst_32 = arith.constant dense<0.000000e+00> : vector<2x32xf32>
    %35 = vector.multi_reduction <add>, %34, %cst_32 [2] : vector<2x32x32xf32> to vector<2x32xf32>
    %36 = vector.shape_cast %35 : vector<2x32xf32> to vector<2x32x1xf32>
    %cst_33 = arith.constant dense<0.000000e+00> : vector<2x1xf32>
    %37 = vector.multi_reduction <add>, %36, %cst_33 [1] : vector<2x32x1xf32> to vector<2x1xf32>
    %38 = vector.shape_cast %37 : vector<2x1xf32> to vector<2x1x1xf32>
    %cst_34 = arith.constant 1.024000e+03 : f32
    %39 = vector.broadcast %cst_34 : f32 to vector<2x1x1xf32>
    %40 = arith.divf %38, %39 : vector<2x1x1xf32>
    %cst_35 = arith.constant 9.99999993E-9 : f32
    %41 = vector.broadcast %cst_35 : f32 to vector<2x1x1xf32>
    %42 = arith.addf %40, %41 : vector<2x1x1xf32>
    %43 = math.rsqrt %42 : vector<2x1x1xf32>
    %44 = vector.broadcast %43 : vector<2x1x1xf32> to vector<2x32x32xf32>
    %45 = arith.mulf %33, %44 : vector<2x32x32xf32>
    %46 = vector.broadcast %18 : vector<1x1x32xf32> to vector<2x32x32xf32>
    %47 = arith.mulf %45, %46 : vector<2x32x32xf32>
    %48 = vector.broadcast %19 : vector<1x1x32xf32> to vector<2x32x32xf32>
    %49 = arith.addf %47, %48 : vector<2x32x32xf32>
    %cst_36 = arith.constant 0.000000e+00 : f32
    %50 = vector.broadcast %cst_36 : f32 to vector<2x32x32xf32>
    %51 = arith.cmpf oge, %49, %50 : vector<2x32x32xf32>
    %52 = vector.broadcast %20 : vector<1x1x32xf32> to vector<2x32x32xf32>
    %53 = arith.mulf %52, %49 : vector<2x32x32xf32>
    %54 = arith.select %51, %49, %53 : vector<2x32x32xi1>, vector<2x32x32xf32>
    %c0_37 = arith.constant 0 : index
    %c0_38 = arith.constant 0 : index
    %c0_39 = arith.constant 0 : index
    %c0_40 = arith.constant 0 : index
    %55 = vector.load %arg9[%c0_37, %c0_38, %c0_39, %c0_40] : memref<5x1x1x32xf32, #tpu.memory_space<vmem>>, vector<5x1x1x32xf32>
    %c0_41 = arith.constant 0 : index
    %c0_42 = arith.constant 0 : index
    %c0_43 = arith.constant 0 : index
    %56 = vector.load %arg10[%c0_41, %c0_42, %c0_43] : memref<1x1x32xf32, #tpu.memory_space<vmem>>, vector<1x1x32xf32>
    %c0_44 = arith.constant 0 : index
    %c0_45 = arith.constant 0 : index
    %c0_46 = arith.constant 0 : index
    %57 = vector.load %arg11[%c0_44, %c0_45, %c0_46] : memref<1x1x32xf32, #tpu.memory_space<vmem>>, vector<1x1x32xf32>
    %c0_47 = arith.constant 0 : index
    %c0_48 = arith.constant 0 : index
    %c0_49 = arith.constant 0 : index
    %58 = vector.load %arg12[%c0_47, %c0_48, %c0_49] : memref<1x1x32xf32, #tpu.memory_space<vmem>>, vector<1x1x32xf32>
    %c0_50 = arith.constant 0 : index
    %c0_51 = arith.constant 0 : index
    %59 = vector.load %arg13[%c0_50, %c0_51] : memref<16x32xf32, #tpu.memory_space<vmem>>, vector<16x32xf32>
    %c0_52 = arith.constant 0 : index
    %c8 = arith.constant 8 : index
    %c0_53 = arith.constant 0 : index
    %60 = vector.load %arg87[%c0_52, %c8, %c0_53] : memref<2x48x32xf32, #tpu.memory_space<vmem>>, vector<2x32x32xf32>
    tpu.vector_store %arg87[%c0_52, %c8, %c0_53], %54 {strides = array<i32>} : memref<2x48x32xf32, #tpu.memory_space<vmem>>, vector<2x32x32xf32>,
    %cst_54 = arith.constant 0.000000e+00 : f32
    %61 = vector.broadcast %cst_54 : f32 to vector<2x8x32xf32>
    %c0_55 = arith.constant 0 : index
    %c40 = arith.constant 40 : index
    %c0_56 = arith.constant 0 : index
    %62 = vector.load %arg87[%c0_55, %c40, %c0_56] : memref<2x48x32xf32, #tpu.memory_space<vmem>>, vector<2x8x32xf32>
    tpu.vector_store %arg87[%c0_55, %c40, %c0_56], %61 {strides = array<i32>} : memref<2x48x32xf32, #tpu.memory_space<vmem>>, vector<2x8x32xf32>,
    %c0_57 = arith.constant 0 : index
    %c6 = arith.constant 6 : index
    %c0_58 = arith.constant 0 : index
    %63 = vector.load %arg87[%c0_57, %c6, %c0_58] : memref<2x48x32xf32, #tpu.memory_space<vmem>>, vector<2x32x32xf32>
    %64 = vector.extract_strided_slice %55 {offsets = [0, 0, 0, 0], sizes = [1, 1, 1, 32], strides = [1, 1, 1, 1]} : vector<5x1x1x32xf32> to vector<1x1x1x32xf32>
    %65 = vector.shape_cast %64 : vector<1x1x1x32xf32> to vector<1x1x32xf32>
    %66 = vector.broadcast %65 : vector<1x1x32xf32> to vector<2x32x32xf32>
    %67 = arith.mulf %63, %66 : vector<2x32x32xf32>
    %c0_59 = arith.constant 0 : index
    %c7 = arith.constant 7 : index
    %c0_60 = arith.constant 0 : index
    %68 = vector.load %arg87[%c0_59, %c7, %c0_60] : memref<2x48x32xf32, #tpu.memory_space<vmem>>, vector<2x32x32xf32>
    %69 = vector.extract_strided_slice %55 {offsets = [1, 0, 0, 0], sizes = [1, 1, 1, 32], strides = [1, 1, 1, 1]} : vector<5x1x1x32xf32> to vector<1x1x1x32xf32>
    %70 = vector.shape_cast %69 : vector<1x1x1x32xf32> to vector<1x1x32xf32>
    %71 = vector.broadcast %70 : vector<1x1x32xf32> to vector<2x32x32xf32>
    %72 = arith.mulf %68, %71 : vector<2x32x32xf32>
    %73 = arith.addf %67, %72 : vector<2x32x32xf32>
    %c0_61 = arith.constant 0 : index
    %c8_62 = arith.constant 8 : index
    %c0_63 = arith.constant 0 : index
    %74 = vector.load %arg87[%c0_61, %c8_62, %c0_63] : memref<2x48x32xf32, #tpu.memory_space<vmem>>, vector<2x32x32xf32>
    %75 = vector.extract_strided_slice %55 {offsets = [2, 0, 0, 0], sizes = [1, 1, 1, 32], strides = [1, 1, 1, 1]} : vector<5x1x1x32xf32> to vector<1x1x1x32xf32>
    %76 = vector.shape_cast %75 : vector<1x1x1x32xf32> to vector<1x1x32xf32>
    %77 = vector.broadcast %76 : vector<1x1x32xf32> to vector<2x32x32xf32>
    %78 = arith.mulf %74, %77 : vector<2x32x32xf32>
    %79 = arith.addf %73, %78 : vector<2x32x32xf32>
    %c0_64 = arith.constant 0 : index
    %c9 = arith.constant 9 : index
    %c0_65 = arith.constant 0 : index
    %80 = vector.load %arg87[%c0_64, %c9, %c0_65] : memref<2x48x32xf32, #tpu.memory_space<vmem>>, vector<2x32x32xf32>
    %81 = vector.extract_strided_slice %55 {offsets = [3, 0, 0, 0], sizes = [1, 1, 1, 32], strides = [1, 1, 1, 1]} : vector<5x1x1x32xf32> to vector<1x1x1x32xf32>
    %82 = vector.shape_cast %81 : vector<1x1x1x32xf32> to vector<1x1x32xf32>
    %83 = vector.broadcast %82 : vector<1x1x32xf32> to vector<2x32x32xf32>
    %84 = arith.mulf %80, %83 : vector<2x32x32xf32>
    %85 = arith.addf %79, %84 : vector<2x32x32xf32>
    %c0_66 = arith.constant 0 : index
    %c10 = arith.constant 10 : index
    %c0_67 = arith.constant 0 : index
    %86 = vector.load %arg87[%c0_66, %c10, %c0_67] : memref<2x48x32xf32, #tpu.memory_space<vmem>>, vector<2x32x32xf32>
    %87 = vector.extract_strided_slice %55 {offsets = [4, 0, 0, 0], sizes = [1, 1, 1, 32], strides = [1, 1, 1, 1]} : vector<5x1x1x32xf32> to vector<1x1x1x32xf32>
    %88 = vector.shape_cast %87 : vector<1x1x1x32xf32> to vector<1x1x32xf32>
    %89 = vector.broadcast %88 : vector<1x1x32xf32> to vector<2x32x32xf32>
    %90 = arith.mulf %86, %89 : vector<2x32x32xf32>
    %91 = arith.addf %85, %90 : vector<2x32x32xf32>
    %92 = vector.broadcast %56 : vector<1x1x32xf32> to vector<2x32x32xf32>
    %93 = arith.addf %91, %92 : vector<2x32x32xf32>
    %94 = vector.shape_cast %59 : vector<16x32xf32> to vector<1x16x32xf32>
    %95 = vector.shape_cast %94 : vector<1x16x32xf32> to vector<1x16x32xf32>
    %96 = vector.broadcast %95 : vector<1x16x32xf32> to vector<2x16x32xf32>
    "tpu.trace_start"() <{level = 10 : i32, message = "bot,btc->boc"}> : () -> ()
    %cst_68 = arith.constant dense<0.000000e+00> : vector<2x16x32xf32>
    %97 = tpu.matmul %96, %93, %cst_68 {dimension_numbers = #tpu.dot_dimension_numbers<[2], [1], [1], [2], [0, 0, 0, 1, 1, 2], [0], [0]>} : vector<2x16x32xf32>, vector<2x32x32xf32>, vector<2x16x32xf32> -> vector<2x16x32xf32>
    "tpu.trace_stop"() : () -> ()
    %cst_69 = arith.constant dense<0.000000e+00> : vector<2x16xf32>
    %98 = vector.multi_reduction <add>, %97, %cst_69 [2] : vector<2x16x32xf32> to vector<2x16xf32>
    %99 = vector.shape_cast %98 : vector<2x16xf32> to vector<2x16x1xf32>
    %cst_70 = arith.constant dense<0.000000e+00> : vector<2x1xf32>
    %100 = vector.multi_reduction <add>, %99, %cst_70 [1] : vector<2x16x1xf32> to vector<2x1xf32>
    %101 = vector.shape_cast %100 : vector<2x1xf32> to vector<2x1x1xf32>
    %cst_71 = arith.constant 5.120000e+02 : f32
    %102 = vector.broadcast %cst_71 : f32 to vector<2x1x1xf32>
    %103 = arith.divf %101, %102 : vector<2x1x1xf32>
    %104 = vector.broadcast %103 : vector<2x1x1xf32> to vector<2x16x32xf32>
    %105 = arith.subf %97, %104 : vector<2x16x32xf32>
    %106 = arith.mulf %105, %105 : vector<2x16x32xf32>
    %cst_72 = arith.constant dense<0.000000e+00> : vector<2x16xf32>
    %107 = vector.multi_reduction <add>, %106, %cst_72 [2] : vector<2x16x32xf32> to vector<2x16xf32>
    %108 = vector.shape_cast %107 : vector<2x16xf32> to vector<2x16x1xf32>
    %cst_73 = arith.constant dense<0.000000e+00> : vector<2x1xf32>
    %109 = vector.multi_reduction <add>, %108, %cst_73 [1] : vector<2x16x1xf32> to vector<2x1xf32>
    %110 = vector.shape_cast %109 : vector<2x1xf32> to vector<2x1x1xf32>
    %cst_74 = arith.constant 5.120000e+02 : f32
    %111 = vector.broadcast %cst_74 : f32 to vector<2x1x1xf32>
    %112 = arith.divf %110, %111 : vector<2x1x1xf32>
    %cst_75 = arith.constant 9.99999993E-9 : f32
    %113 = vector.broadcast %cst_75 : f32 to vector<2x1x1xf32>
    %114 = arith.addf %112, %113 : vector<2x1x1xf32>
    %115 = math.rsqrt %114 : vector<2x1x1xf32>
    %116 = vector.broadcast %115 : vector<2x1x1xf32> to vector<2x16x32xf32>
    %117 = arith.mulf %105, %116 : vector<2x16x32xf32>
    %118 = vector.broadcast %57 : vector<1x1x32xf32> to vector<2x16x32xf32>
    %119 = arith.mulf %117, %118 : vector<2x16x32xf32>
    %120 = vector.broadcast %58 : vector<1x1x32xf32> to vector<2x16x32xf32>
    %121 = arith.addf %119, %120 : vector<2x16x32xf32>
    %c0_76 = arith.constant 0 : index
    %c0_77 = arith.constant 0 : index
    %c0_78 = arith.constant 0 : index
    %c0_79 = arith.constant 0 : index
    %122 = vector.load %arg14[%c0_76, %c0_77, %c0_78, %c0_79] : memref<5x1x1x32xf32, #tpu.memory_space<vmem>>, vector<5x1x1x32xf32>
    %c0_80 = arith.constant 0 : index
    %c0_81 = arith.constant 0 : index
    %c0_82 = arith.constant 0 : index
    %123 = vector.load %arg15[%c0_80, %c0_81, %c0_82] : memref<1x1x32xf32, #tpu.memory_space<vmem>>, vector<1x1x32xf32>
    %c0_83 = arith.constant 0 : index
    %c0_84 = arith.constant 0 : index
    %c0_85 = arith.constant 0 : index
    %124 = vector.load %arg16[%c0_83, %c0_84, %c0_85] : memref<1x1x32xf32, #tpu.memory_space<vmem>>, vector<1x1x32xf32>
    %c0_86 = arith.constant 0 : index
    %c0_87 = arith.constant 0 : index
    %c0_88 = arith.constant 0 : index
    %125 = vector.load %arg17[%c0_86, %c0_87, %c0_88] : memref<1x1x32xf32, #tpu.memory_space<vmem>>, vector<1x1x32xf32>
    %c0_89 = arith.constant 0 : index
    %c0_90 = arith.constant 0 : index
    %126 = vector.load %arg18[%c0_89, %c0_90] : memref<8x16xf32, #tpu.memory_space<vmem>>, vector<8x16xf32>
    %c0_91 = arith.constant 0 : index
    %c8_92 = arith.constant 8 : index
    %c0_93 = arith.constant 0 : index
    %127 = vector.load %arg87[%c0_91, %c8_92, %c0_93] : memref<2x48x32xf32, #tpu.memory_space<vmem>>, vector<2x16x32xf32>
    tpu.vector_store %arg87[%c0_91, %c8_92, %c0_93], %121 {strides = array<i32>} : memref<2x48x32xf32, #tpu.memory_space<vmem>>, vector<2x16x32xf32>,
    %cst_94 = arith.constant 0.000000e+00 : f32
    %128 = vector.broadcast %cst_94 : f32 to vector<2x8x32xf32>
    %c0_95 = arith.constant 0 : index
    %c24 = arith.constant 24 : index
    %c0_96 = arith.constant 0 : index
    %129 = vector.load %arg87[%c0_95, %c24, %c0_96] : memref<2x48x32xf32, #tpu.memory_space<vmem>>, vector<2x8x32xf32>
    tpu.vector_store %arg87[%c0_95, %c24, %c0_96], %128 {strides = array<i32>} : memref<2x48x32xf32, #tpu.memory_space<vmem>>, vector<2x8x32xf32>,
    %c0_97 = arith.constant 0 : index
    %c6_98 = arith.constant 6 : index
    %c0_99 = arith.constant 0 : index
    %130 = vector.load %arg87[%c0_97, %c6_98, %c0_99] : memref<2x48x32xf32, #tpu.memory_space<vmem>>, vector<2x16x32xf32>
    %131 = vector.extract_strided_slice %122 {offsets = [0, 0, 0, 0], sizes = [1, 1, 1, 32], strides = [1, 1, 1, 1]} : vector<5x1x1x32xf32> to vector<1x1x1x32xf32>
    %132 = vector.shape_cast %131 : vector<1x1x1x32xf32> to vector<1x1x32xf32>
    %133 = vector.broadcast %132 : vector<1x1x32xf32> to vector<2x16x32xf32>
    %134 = arith.mulf %130, %133 : vector<2x16x32xf32>
    %c0_100 = arith.constant 0 : index
    %c7_101 = arith.constant 7 : index
    %c0_102 = arith.constant 0 : index
    %135 = vector.load %arg87[%c0_100, %c7_101, %c0_102] : memref<2x48x32xf32, #tpu.memory_space<vmem>>, vector<2x16x32xf32>
    %136 = vector.extract_strided_slice %122 {offsets = [1, 0, 0, 0], sizes = [1, 1, 1, 32], strides = [1, 1, 1, 1]} : vector<5x1x1x32xf32> to vector<1x1x1x32xf32>
    %137 = vector.shape_cast %136 : vector<1x1x1x32xf32> to vector<1x1x32xf32>
    %138 = vector.broadcast %137 : vector<1x1x32xf32> to vector<2x16x32xf32>
    %139 = arith.mulf %135, %138 : vector<2x16x32xf32>
    %140 = arith.addf %134, %139 : vector<2x16x32xf32>
    %c0_103 = arith.constant 0 : index
    %c8_104 = arith.constant 8 : index
    %c0_105 = arith.constant 0 : index
    %141 = vector.load %arg87[%c0_103, %c8_104, %c0_105] : memref<2x48x32xf32, #tpu.memory_space<vmem>>, vector<2x16x32xf32>
    %142 = vector.extract_strided_slice %122 {offsets = [2, 0, 0, 0], sizes = [1, 1, 1, 32], strides = [1, 1, 1, 1]} : vector<5x1x1x32xf32> to vector<1x1x1x32xf32>
    %143 = vector.shape_cast %142 : vector<1x1x1x32xf32> to vector<1x1x32xf32>
    %144 = vector.broadcast %143 : vector<1x1x32xf32> to vector<2x16x32xf32>
    %145 = arith.mulf %141, %144 : vector<2x16x32xf32>
    %146 = arith.addf %140, %145 : vector<2x16x32xf32>
    %c0_106 = arith.constant 0 : index
    %c9_107 = arith.constant 9 : index
    %c0_108 = arith.constant 0 : index
    %147 = vector.load %arg87[%c0_106, %c9_107, %c0_108] : memref<2x48x32xf32, #tpu.memory_space<vmem>>, vector<2x16x32xf32>
    %148 = vector.extract_strided_slice %122 {offsets = [3, 0, 0, 0], sizes = [1, 1, 1, 32], strides = [1, 1, 1, 1]} : vector<5x1x1x32xf32> to vector<1x1x1x32xf32>
    %149 = vector.shape_cast %148 : vector<1x1x1x32xf32> to vector<1x1x32xf32>
    %150 = vector.broadcast %149 : vector<1x1x32xf32> to vector<2x16x32xf32>
    %151 = arith.mulf %147, %150 : vector<2x16x32xf32>
    %152 = arith.addf %146, %151 : vector<2x16x32xf32>
    %c0_109 = arith.constant 0 : index
    %c10_110 = arith.constant 10 : index
    %c0_111 = arith.constant 0 : index
    %153 = vector.load %arg87[%c0_109, %c10_110, %c0_111] : memref<2x48x32xf32, #tpu.memory_space<vmem>>, vector<2x16x32xf32>
    %154 = vector.extract_strided_slice %122 {offsets = [4, 0, 0, 0], sizes = [1, 1, 1, 32], strides = [1, 1, 1, 1]} : vector<5x1x1x32xf32> to vector<1x1x1x32xf32>
    %155 = vector.shape_cast %154 : vector<1x1x1x32xf32> to vector<1x1x32xf32>
    %156 = vector.broadcast %155 : vector<1x1x32xf32> to vector<2x16x32xf32>
    %157 = arith.mulf %153, %156 : vector<2x16x32xf32>
    %158 = arith.addf %152, %157 : vector<2x16x32xf32>
    %159 = vector.broadcast %123 : vector<1x1x32xf32> to vector<2x16x32xf32>
    %160 = arith.addf %158, %159 : vector<2x16x32xf32>
    %161 = vector.shape_cast %126 : vector<8x16xf32> to vector<1x8x16xf32>
    %162 = vector.shape_cast %161 : vector<1x8x16xf32> to vector<1x8x16xf32>
    %163 = vector.broadcast %162 : vector<1x8x16xf32> to vector<2x8x16xf32>
    "tpu.trace_start"() <{level = 10 : i32, message = "bot,btc->boc"}> : () -> ()
    %cst_112 = arith.constant dense<0.000000e+00> : vector<2x8x32xf32>
    %164 = tpu.matmul %163, %160, %cst_112 {dimension_numbers = #tpu.dot_dimension_numbers<[2], [1], [1], [2], [0, 0, 0, 1, 1, 2], [0], [0]>} : vector<2x8x16xf32>, vector<2x16x32xf32>, vector<2x8x32xf32> -> vector<2x8x32xf32>
    "tpu.trace_stop"() : () -> ()
    %cst_113 = arith.constant dense<0.000000e+00> : vector<2x8xf32>
    %165 = vector.multi_reduction <add>, %164, %cst_113 [2] : vector<2x8x32xf32> to vector<2x8xf32>
    %166 = vector.shape_cast %165 : vector<2x8xf32> to vector<2x8x1xf32>
    %cst_114 = arith.constant dense<0.000000e+00> : vector<2x1xf32>
    %167 = vector.multi_reduction <add>, %166, %cst_114 [1] : vector<2x8x1xf32> to vector<2x1xf32>
    %168 = vector.shape_cast %167 : vector<2x1xf32> to vector<2x1x1xf32>
    %cst_115 = arith.constant 2.560000e+02 : f32
    %169 = vector.broadcast %cst_115 : f32 to vector<2x1x1xf32>
    %170 = arith.divf %168, %169 : vector<2x1x1xf32>
    %171 = vector.broadcast %170 : vector<2x1x1xf32> to vector<2x8x32xf32>
    %172 = arith.subf %164, %171 : vector<2x8x32xf32>
    %173 = arith.mulf %172, %172 : vector<2x8x32xf32>
    %cst_116 = arith.constant dense<0.000000e+00> : vector<2x8xf32>
    %174 = vector.multi_reduction <add>, %173, %cst_116 [2] : vector<2x8x32xf32> to vector<2x8xf32>
    %175 = vector.shape_cast %174 : vector<2x8xf32> to vector<2x8x1xf32>
    %cst_117 = arith.constant dense<0.000000e+00> : vector<2x1xf32>
    %176 = vector.multi_reduction <add>, %175, %cst_117 [1] : vector<2x8x1xf32> to vector<2x1xf32>
    %177 = vector.shape_cast %176 : vector<2x1xf32> to vector<2x1x1xf32>
    %cst_118 = arith.constant 2.560000e+02 : f32
    %178 = vector.broadcast %cst_118 : f32 to vector<2x1x1xf32>
    %179 = arith.divf %177, %178 : vector<2x1x1xf32>
    %cst_119 = arith.constant 9.99999993E-9 : f32
    %180 = vector.broadcast %cst_119 : f32 to vector<2x1x1xf32>
    %181 = arith.addf %179, %180 : vector<2x1x1xf32>
    %182 = math.rsqrt %181 : vector<2x1x1xf32>
    %183 = vector.broadcast %182 : vector<2x1x1xf32> to vector<2x8x32xf32>
    %184 = arith.mulf %172, %183 : vector<2x8x32xf32>
    %185 = vector.broadcast %124 : vector<1x1x32xf32> to vector<2x8x32xf32>
    %186 = arith.mulf %184, %185 : vector<2x8x32xf32>
    %187 = vector.broadcast %125 : vector<1x1x32xf32> to vector<2x8x32xf32>
    %188 = arith.addf %186, %187 : vector<2x8x32xf32>
    %c0_120 = arith.constant 0 : index
    %c0_121 = arith.constant 0 : index
    %189 = vector.load %arg19[%c0_120, %c0_121] : memref<8x32xf32, #tpu.memory_space<vmem>>, vector<8x32xf32>
    %190 = vector.shape_cast %189 : vector<8x32xf32> to vector<1x8x32xf32>
    %191 = vector.shape_cast %190 : vector<1x8x32xf32> to vector<1x8x32xf32>
    %192 = vector.broadcast %191 : vector<1x8x32xf32> to vector<2x8x32xf32>
    "tpu.trace_start"() <{level = 10 : i32, message = "bot,btc->boc"}> : () -> ()
    %cst_122 = arith.constant dense<0.000000e+00> : vector<2x8x32xf32>
    %193 = tpu.matmul %192, %54, %cst_122 {dimension_numbers = #tpu.dot_dimension_numbers<[2], [1], [1], [2], [0, 0, 0, 1, 1, 2], [0], [0]>} : vector<2x8x32xf32>, vector<2x32x32xf32>, vector<2x8x32xf32> -> vector<2x8x32xf32>
    "tpu.trace_stop"() : () -> ()
    %194 = arith.addf %188, %193 : vector<2x8x32xf32>
    %c0_123 = arith.constant 0 : index
    %c0_124 = arith.constant 0 : index
    %195 = vector.load %arg20[%c0_123, %c0_124] : memref<8x16xf32, #tpu.memory_space<vmem>>, vector<8x16xf32>
    %196 = vector.shape_cast %195 : vector<8x16xf32> to vector<1x8x16xf32>
    %197 = vector.shape_cast %196 : vector<1x8x16xf32> to vector<1x8x16xf32>
    %198 = vector.broadcast %197 : vector<1x8x16xf32> to vector<2x8x16xf32>
    "tpu.trace_start"() <{level = 10 : i32, message = "bot,btc->boc"}> : () -> ()
    %cst_125 = arith.constant dense<0.000000e+00> : vector<2x8x32xf32>
    %199 = tpu.matmul %198, %121, %cst_125 {dimension_numbers = #tpu.dot_dimension_numbers<[2], [1], [1], [2], [0, 0, 0, 1, 1, 2], [0], [0]>} : vector<2x8x16xf32>, vector<2x16x32xf32>, vector<2x8x32xf32> -> vector<2x8x32xf32>
    "tpu.trace_stop"() : () -> ()
    %200 = arith.addf %194, %199 : vector<2x8x32xf32>
    %c0_126 = arith.constant 0 : index
    %c0_127 = arith.constant 0 : index
    %c0_128 = arith.constant 0 : index
    %201 = vector.load %arg21[%c0_126, %c0_127, %c0_128] : memref<4x1x32xf32, #tpu.memory_space<vmem>>, vector<4x1x32xf32>
    %c0_129 = arith.constant 0 : index
    %c0_130 = arith.constant 0 : index
    %202 = vector.load %arg22[%c0_129, %c0_130] : memref<16x16xf32, #tpu.memory_space<vmem>>, vector<16x16xf32>
    %c0_131 = arith.constant 0 : index
    %c0_132 = arith.constant 0 : index
    %203 = vector.load %arg23[%c0_131, %c0_132] : memref<32x96xf32, #tpu.memory_space<vmem>>, vector<32x96xf32>
    %c0_133 = arith.constant 0 : index
    %c0_134 = arith.constant 0 : index
    %204 = vector.load %arg24[%c0_133, %c0_134] : memref<1x96xf32, #tpu.memory_space<vmem>>, vector<1x96xf32>
    %c0_135 = arith.constant 0 : index
    %c0_136 = arith.constant 0 : index
    %205 = vector.load %arg25[%c0_135, %c0_136] : memref<32x32xf32, #tpu.memory_space<vmem>>, vector<32x32xf32>
    %c0_137 = arith.constant 0 : index
    %c0_138 = arith.constant 0 : index
    %206 = vector.load %arg26[%c0_137, %c0_138] : memref<1x32xf32, #tpu.memory_space<vmem>>, vector<1x32xf32>
    %c0_139 = arith.constant 0 : index
    %c0_140 = arith.constant 0 : index
    %207 = vector.load %arg27[%c0_139, %c0_140] : memref<1x32xf32, #tpu.memory_space<vmem>>, vector<1x32xf32>
    %c0_141 = arith.constant 0 : index
    %c0_142 = arith.constant 0 : index
    %208 = vector.load %arg28[%c0_141, %c0_142] : memref<1x32xf32, #tpu.memory_space<vmem>>, vector<1x32xf32>
    %c0_143 = arith.constant 0 : index
    %c0_144 = arith.constant 0 : index
    %209 = vector.load %arg29[%c0_143, %c0_144] : memref<32x64xf32, #tpu.memory_space<vmem>>, vector<32x64xf32>
    %c0_145 = arith.constant 0 : index
    %c0_146 = arith.constant 0 : index
    %210 = vector.load %arg30[%c0_145, %c0_146] : memref<1x64xf32, #tpu.memory_space<vmem>>, vector<1x64xf32>
    %c0_147 = arith.constant 0 : index
    %c0_148 = arith.constant 0 : index
    %211 = vector.load %arg31[%c0_147, %c0_148] : memref<64x32xf32, #tpu.memory_space<vmem>>, vector<64x32xf32>
    %c0_149 = arith.constant 0 : index
    %c0_150 = arith.constant 0 : index
    %212 = vector.load %arg32[%c0_149, %c0_150] : memref<1x32xf32, #tpu.memory_space<vmem>>, vector<1x32xf32>
    %c0_151 = arith.constant 0 : index
    %c0_152 = arith.constant 0 : index
    %213 = vector.load %arg33[%c0_151, %c0_152] : memref<1x32xf32, #tpu.memory_space<vmem>>, vector<1x32xf32>
    %c0_153 = arith.constant 0 : index
    %c0_154 = arith.constant 0 : index
    %214 = vector.load %arg34[%c0_153, %c0_154] : memref<1x32xf32, #tpu.memory_space<vmem>>, vector<1x32xf32>
    %215 = vector.shape_cast %200 : vector<2x8x32xf32> to vector<16x32xf32>
    %cst_155 = arith.constant dense<0.000000e+00> : vector<16x96xf32>
    %216 = tpu.matmul %215, %203, %cst_155 {dimension_numbers = #tpu.dot_dimension_numbers<[1], [0], [0], [1], [0, 0, 1, 1], [], []>} : vector<16x32xf32>, vector<32x96xf32>, vector<16x96xf32> -> vector<16x96xf32>
    %217 = vector.broadcast %204 : vector<1x96xf32> to vector<16x96xf32>
    %218 = arith.addf %216, %217 : vector<16x96xf32>
    %219 = vector.extract_strided_slice %218 {offsets = [0, 0], sizes = [16, 32], strides = [1, 1]} : vector<16x96xf32> to vector<16x32xf32>
    %220 = vector.shape_cast %219 : vector<16x32xf32> to vector<1x16x32xf32>
    %221 = vector.broadcast %220 : vector<1x16x32xf32> to vector<4x16x32xf32>
    %222 = vector.broadcast %201 : vector<4x1x32xf32> to vector<4x16x32xf32>
    %223 = arith.mulf %221, %222 : vector<4x16x32xf32>
    %224 = vector.extract_strided_slice %218 {offsets = [0, 32], sizes = [16, 32], strides = [1, 1]} : vector<16x96xf32> to vector<16x32xf32>
    %225 = vector.shape_cast %224 : vector<16x32xf32> to vector<1x16x32xf32>
    %226 = vector.broadcast %225 : vector<1x16x32xf32> to vector<4x16x32xf32>
    %227 = vector.broadcast %201 : vector<4x1x32xf32> to vector<4x16x32xf32>
    %228 = arith.mulf %226, %227 : vector<4x16x32xf32>
    %229 = vector.extract_strided_slice %218 {offsets = [0, 64], sizes = [16, 32], strides = [1, 1]} : vector<16x96xf32> to vector<16x32xf32>
    %230 = vector.shape_cast %229 : vector<16x32xf32> to vector<1x16x32xf32>
    %231 = vector.broadcast %230 : vector<1x16x32xf32> to vector<4x16x32xf32>
    %232 = vector.broadcast %201 : vector<4x1x32xf32> to vector<4x16x32xf32>
    %233 = arith.mulf %231, %232 : vector<4x16x32xf32>
    "tpu.trace_start"() <{level = 10 : i32, message = "htc,hsc->hts"}> : () -> ()
    %cst_156 = arith.constant dense<0.000000e+00> : vector<4x16x16xf32>
    %234 = tpu.matmul %223, %228, %cst_156 {dimension_numbers = #tpu.dot_dimension_numbers<[2], [2], [1], [1], [0, 0, 0, 1, 1, 1], [0], [0]>} : vector<4x16x32xf32>, vector<4x16x32xf32>, vector<4x16x16xf32> -> vector<4x16x16xf32>
    "tpu.trace_stop"() : () -> ()
    %cst_157 = arith.constant 2.82842708 : f32
    %235 = vector.broadcast %cst_157 : f32 to vector<4x16x16xf32>
    %236 = arith.divf %234, %235 : vector<4x16x16xf32>
    %237 = vector.shape_cast %202 : vector<16x16xf32> to vector<1x16x16xf32>
    %238 = vector.broadcast %237 : vector<1x16x16xf32> to vector<4x16x16xf32>
    %239 = arith.addf %236, %238 : vector<4x16x16xf32>
    %cst_158 = arith.constant dense<0xFF800000> : vector<4x16xf32>
    %240 = vector.multi_reduction <maximumf>, %239, %cst_158 [2] : vector<4x16x16xf32> to vector<4x16xf32>
    %241 = vector.shape_cast %240 : vector<4x16xf32> to vector<4x16x1xf32>
    %242 = vector.broadcast %241 : vector<4x16x1xf32> to vector<4x16x16xf32>
    %243 = arith.subf %239, %242 : vector<4x16x16xf32>
    %244 = math.exp %243 : vector<4x16x16xf32>
    %cst_159 = arith.constant dense<0.000000e+00> : vector<4x16xf32>
    %245 = vector.multi_reduction <add>, %244, %cst_159 [2] : vector<4x16x16xf32> to vector<4x16xf32>
    %246 = vector.shape_cast %245 : vector<4x16xf32> to vector<4x16x1xf32>
    %247 = vector.broadcast %246 : vector<4x16x1xf32> to vector<4x16x16xf32>
    %248 = arith.divf %244, %247 : vector<4x16x16xf32>
    "tpu.trace_start"() <{level = 10 : i32, message = "hts,hsc->htc"}> : () -> ()
    %cst_160 = arith.constant dense<0.000000e+00> : vector<4x16x32xf32>
    %249 = tpu.matmul %248, %233, %cst_160 {dimension_numbers = #tpu.dot_dimension_numbers<[2], [1], [1], [2], [0, 0, 0, 1, 1, 2], [0], [0]>} : vector<4x16x16xf32>, vector<4x16x32xf32>, vector<4x16x32xf32> -> vector<4x16x32xf32>
    "tpu.trace_stop"() : () -> ()
    %cst_161 = arith.constant dense<0.000000e+00> : vector<16x32xf32>
    %250 = vector.multi_reduction <add>, %249, %cst_161 [0] : vector<4x16x32xf32> to vector<16x32xf32>
    %cst_162 = arith.constant dense<0.000000e+00> : vector<16x32xf32>
    %251 = tpu.matmul %250, %205, %cst_162 {dimension_numbers = #tpu.dot_dimension_numbers<[1], [0], [0], [1], [0, 0, 1, 1], [], []>} : vector<16x32xf32>, vector<32x32xf32>, vector<16x32xf32> -> vector<16x32xf32>
    %252 = vector.broadcast %206 : vector<1x32xf32> to vector<16x32xf32>
    %253 = arith.addf %251, %252 : vector<16x32xf32>
    %254 = arith.addf %215, %253 : vector<16x32xf32>
    %cst_163 = arith.constant dense<0.000000e+00> : vector<16xf32>
    %255 = vector.multi_reduction <add>, %254, %cst_163 [1] : vector<16x32xf32> to vector<16xf32>
    %256 = vector.shape_cast %255 : vector<16xf32> to vector<16x1xf32>
    %cst_164 = arith.constant 3.200000e+01 : f32
    %257 = vector.broadcast %cst_164 : f32 to vector<16x1xf32>
    %258 = arith.divf %256, %257 : vector<16x1xf32>
    %259 = vector.broadcast %258 : vector<16x1xf32> to vector<16x32xf32>
    %260 = arith.subf %254, %259 : vector<16x32xf32>
    %261 = arith.mulf %260, %260 : vector<16x32xf32>
    %cst_165 = arith.constant dense<0.000000e+00> : vector<16xf32>
    %262 = vector.multi_reduction <add>, %261, %cst_165 [1] : vector<16x32xf32> to vector<16xf32>
    %263 = vector.shape_cast %262 : vector<16xf32> to vector<16x1xf32>
    %cst_166 = arith.constant 3.200000e+01 : f32
    %264 = vector.broadcast %cst_166 : f32 to vector<16x1xf32>
    %265 = arith.divf %263, %264 : vector<16x1xf32>
    %266 = vector.broadcast %258 : vector<16x1xf32> to vector<16x32xf32>
    %267 = arith.subf %254, %266 : vector<16x32xf32>
    %cst_167 = arith.constant 9.99999974E-6 : f32
    %268 = vector.broadcast %cst_167 : f32 to vector<16x1xf32>
    %269 = arith.addf %265, %268 : vector<16x1xf32>
    %270 = math.rsqrt %269 : vector<16x1xf32>
    %271 = vector.broadcast %270 : vector<16x1xf32> to vector<16x32xf32>
    %272 = arith.mulf %267, %271 : vector<16x32xf32>
    %273 = vector.broadcast %207 : vector<1x32xf32> to vector<16x32xf32>
    %274 = arith.mulf %272, %273 : vector<16x32xf32>
    %275 = vector.broadcast %208 : vector<1x32xf32> to vector<16x32xf32>
    %276 = arith.addf %274, %275 : vector<16x32xf32>
    %cst_168 = arith.constant dense<0.000000e+00> : vector<16x64xf32>
    %277 = tpu.matmul %276, %209, %cst_168 {dimension_numbers = #tpu.dot_dimension_numbers<[1], [0], [0], [1], [0, 0, 1, 1], [], []>} : vector<16x32xf32>, vector<32x64xf32>, vector<16x64xf32> -> vector<16x64xf32>
    %278 = vector.broadcast %210 : vector<1x64xf32> to vector<16x64xf32>
    %279 = arith.addf %277, %278 : vector<16x64xf32>
    %cst_169 = arith.constant 0.000000e+00 : f32
    %280 = vector.broadcast %cst_169 : f32 to vector<16x64xf32>
    %281 = arith.maximumf %279, %280 : vector<16x64xf32>
    %cst_170 = arith.constant dense<0.000000e+00> : vector<16x32xf32>
    %282 = tpu.matmul %281, %211, %cst_170 {dimension_numbers = #tpu.dot_dimension_numbers<[1], [0], [0], [1], [0, 0, 1, 1], [], []>} : vector<16x64xf32>, vector<64x32xf32>, vector<16x32xf32> -> vector<16x32xf32>
    %283 = vector.broadcast %212 : vector<1x32xf32> to vector<16x32xf32>
    %284 = arith.addf %282, %283 : vector<16x32xf32>
    %285 = arith.addf %276, %284 : vector<16x32xf32>
    %cst_171 = arith.constant dense<0.000000e+00> : vector<16xf32>
    %286 = vector.multi_reduction <add>, %285, %cst_171 [1] : vector<16x32xf32> to vector<16xf32>
    %287 = vector.shape_cast %286 : vector<16xf32> to vector<16x1xf32>
    %cst_172 = arith.constant 3.200000e+01 : f32
    %288 = vector.broadcast %cst_172 : f32 to vector<16x1xf32>
    %289 = arith.divf %287, %288 : vector<16x1xf32>
    %290 = vector.broadcast %289 : vector<16x1xf32> to vector<16x32xf32>
    %291 = arith.subf %285, %290 : vector<16x32xf32>
    %292 = arith.mulf %291, %291 : vector<16x32xf32>
    %cst_173 = arith.constant dense<0.000000e+00> : vector<16xf32>
    %293 = vector.multi_reduction <add>, %292, %cst_173 [1] : vector<16x32xf32> to vector<16xf32>
    %294 = vector.shape_cast %293 : vector<16xf32> to vector<16x1xf32>
    %cst_174 = arith.constant 3.200000e+01 : f32
    %295 = vector.broadcast %cst_174 : f32 to vector<16x1xf32>
    %296 = arith.divf %294, %295 : vector<16x1xf32>
    %297 = vector.broadcast %289 : vector<16x1xf32> to vector<16x32xf32>
    %298 = arith.subf %285, %297 : vector<16x32xf32>
    %cst_175 = arith.constant 9.99999974E-6 : f32
    %299 = vector.broadcast %cst_175 : f32 to vector<16x1xf32>
    %300 = arith.addf %296, %299 : vector<16x1xf32>
    %301 = math.rsqrt %300 : vector<16x1xf32>
    %302 = vector.broadcast %301 : vector<16x1xf32> to vector<16x32xf32>
    %303 = arith.mulf %298, %302 : vector<16x32xf32>
    %304 = vector.broadcast %213 : vector<1x32xf32> to vector<16x32xf32>
    %305 = arith.mulf %303, %304 : vector<16x32xf32>
    %306 = vector.broadcast %214 : vector<1x32xf32> to vector<16x32xf32>
    %307 = arith.addf %305, %306 : vector<16x32xf32>
    %308 = vector.shape_cast %307 : vector<16x32xf32> to vector<2x8x32xf32>
    %c0_176 = arith.constant 0 : index
    %c0_177 = arith.constant 0 : index
    %c0_178 = arith.constant 0 : index
    %c0_179 = arith.constant 0 : index
    %309 = vector.load %arg35[%c0_176, %c0_177, %c0_178, %c0_179] : memref<5x1x1x32xf32, #tpu.memory_space<vmem>>, vector<5x1x1x32xf32>
    %c0_180 = arith.constant 0 : index
    %c0_181 = arith.constant 0 : index
    %c0_182 = arith.constant 0 : index
    %310 = vector.load %arg36[%c0_180, %c0_181, %c0_182] : memref<1x1x32xf32, #tpu.memory_space<vmem>>, vector<1x1x32xf32>
    %c0_183 = arith.constant 0 : index
    %c0_184 = arith.constant 0 : index
    %c0_185 = arith.constant 0 : index
    %311 = vector.load %arg37[%c0_183, %c0_184, %c0_185] : memref<1x1x32xf32, #tpu.memory_space<vmem>>, vector<1x1x32xf32>
    %c0_186 = arith.constant 0 : index
    %c0_187 = arith.constant 0 : index
    %c0_188 = arith.constant 0 : index
    %c0_189 = arith.constant 0 : index
    %312 = vector.load %arg38[%c0_186, %c0_187, %c0_188, %c0_189] : memref<5x1x1x32xf32, #tpu.memory_space<vmem>>, vector<5x1x1x32xf32>
    %c0_190 = arith.constant 0 : index
    %c0_191 = arith.constant 0 : index
    %c0_192 = arith.constant 0 : index
    %313 = vector.load %arg39[%c0_190, %c0_191, %c0_192] : memref<1x1x32xf32, #tpu.memory_space<vmem>>, vector<1x1x32xf32>
    %c0_193 = arith.constant 0 : index
    %c0_194 = arith.constant 0 : index
    %c0_195 = arith.constant 0 : index
    %314 = vector.load %arg40[%c0_193, %c0_194, %c0_195] : memref<1x1x32xf32, #tpu.memory_space<vmem>>, vector<1x1x32xf32>
    %c0_196 = arith.constant 0 : index
    %c0_197 = arith.constant 0 : index
    %c0_198 = arith.constant 0 : index
    %c0_199 = arith.constant 0 : index
    %315 = vector.load %arg41[%c0_196, %c0_197, %c0_198, %c0_199] : memref<5x1x1x32xf32, #tpu.memory_space<vmem>>, vector<5x1x1x32xf32>
    %c0_200 = arith.constant 0 : index
    %c0_201 = arith.constant 0 : index
    %c0_202 = arith.constant 0 : index
    %316 = vector.load %arg42[%c0_200, %c0_201, %c0_202] : memref<1x1x32xf32, #tpu.memory_space<vmem>>, vector<1x1x32xf32>
    %c0_203 = arith.constant 0 : index
    %c0_204 = arith.constant 0 : index
    %c0_205 = arith.constant 0 : index
    %317 = vector.load %arg43[%c0_203, %c0_204, %c0_205] : memref<1x1x32xf32, #tpu.memory_space<vmem>>, vector<1x1x32xf32>
    %c0_206 = arith.constant 0 : index
    %c0_207 = arith.constant 0 : index
    %318 = vector.load %arg44[%c0_206, %c0_207] : memref<32x8xf32, #tpu.memory_space<vmem>>, vector<32x8xf32>
    %c0_208 = arith.constant 0 : index
    %c8_209 = arith.constant 8 : index
    %c0_210 = arith.constant 0 : index
    %319 = vector.load %arg87[%c0_208, %c8_209, %c0_210] : memref<2x48x32xf32, #tpu.memory_space<vmem>>, vector<2x32x32xf32>
    tpu.vector_store %arg87[%c0_208, %c8_209, %c0_210], %54 {strides = array<i32>} : memref<2x48x32xf32, #tpu.memory_space<vmem>>, vector<2x32x32xf32>,
    %cst_211 = arith.constant 0.000000e+00 : f32
    %320 = vector.broadcast %cst_211 : f32 to vector<2x8x32xf32>
    %c0_212 = arith.constant 0 : index
    %c40_213 = arith.constant 40 : index
    %c0_214 = arith.constant 0 : index
    %321 = vector.load %arg87[%c0_212, %c40_213, %c0_214] : memref<2x48x32xf32, #tpu.memory_space<vmem>>, vector<2x8x32xf32>
    tpu.vector_store %arg87[%c0_212, %c40_213, %c0_214], %320 {strides = array<i32>} : memref<2x48x32xf32, #tpu.memory_space<vmem>>, vector<2x8x32xf32>,
    %c0_215 = arith.constant 0 : index
    %c6_216 = arith.constant 6 : index
    %c0_217 = arith.constant 0 : index
    %322 = vector.load %arg87[%c0_215, %c6_216, %c0_217] : memref<2x48x32xf32, #tpu.memory_space<vmem>>, vector<2x32x32xf32>
    %323 = vector.extract_strided_slice %309 {offsets = [0, 0, 0, 0], sizes = [1, 1, 1, 32], strides = [1, 1, 1, 1]} : vector<5x1x1x32xf32> to vector<1x1x1x32xf32>
    %324 = vector.shape_cast %323 : vector<1x1x1x32xf32> to vector<1x1x32xf32>
    %325 = vector.broadcast %324 : vector<1x1x32xf32> to vector<2x32x32xf32>
    %326 = arith.mulf %322, %325 : vector<2x32x32xf32>
    %c0_218 = arith.constant 0 : index
    %c7_219 = arith.constant 7 : index
    %c0_220 = arith.constant 0 : index
    %327 = vector.load %arg87[%c0_218, %c7_219, %c0_220] : memref<2x48x32xf32, #tpu.memory_space<vmem>>, vector<2x32x32xf32>
    %328 = vector.extract_strided_slice %309 {offsets = [1, 0, 0, 0], sizes = [1, 1, 1, 32], strides = [1, 1, 1, 1]} : vector<5x1x1x32xf32> to vector<1x1x1x32xf32>
    %329 = vector.shape_cast %328 : vector<1x1x1x32xf32> to vector<1x1x32xf32>
    %330 = vector.broadcast %329 : vector<1x1x32xf32> to vector<2x32x32xf32>
    %331 = arith.mulf %327, %330 : vector<2x32x32xf32>
    %332 = arith.addf %326, %331 : vector<2x32x32xf32>
    %c0_221 = arith.constant 0 : index
    %c8_222 = arith.constant 8 : index
    %c0_223 = arith.constant 0 : index
    %333 = vector.load %arg87[%c0_221, %c8_222, %c0_223] : memref<2x48x32xf32, #tpu.memory_space<vmem>>, vector<2x32x32xf32>
    %334 = vector.extract_strided_slice %309 {offsets = [2, 0, 0, 0], sizes = [1, 1, 1, 32], strides = [1, 1, 1, 1]} : vector<5x1x1x32xf32> to vector<1x1x1x32xf32>
    %335 = vector.shape_cast %334 : vector<1x1x1x32xf32> to vector<1x1x32xf32>
    %336 = vector.broadcast %335 : vector<1x1x32xf32> to vector<2x32x32xf32>
    %337 = arith.mulf %333, %336 : vector<2x32x32xf32>
    %338 = arith.addf %332, %337 : vector<2x32x32xf32>
    %c0_224 = arith.constant 0 : index
    %c9_225 = arith.constant 9 : index
    %c0_226 = arith.constant 0 : index
    %339 = vector.load %arg87[%c0_224, %c9_225, %c0_226] : memref<2x48x32xf32, #tpu.memory_space<vmem>>, vector<2x32x32xf32>
    %340 = vector.extract_strided_slice %309 {offsets = [3, 0, 0, 0], sizes = [1, 1, 1, 32], strides = [1, 1, 1, 1]} : vector<5x1x1x32xf32> to vector<1x1x1x32xf32>
    %341 = vector.shape_cast %340 : vector<1x1x1x32xf32> to vector<1x1x32xf32>
    %342 = vector.broadcast %341 : vector<1x1x32xf32> to vector<2x32x32xf32>
    %343 = arith.mulf %339, %342 : vector<2x32x32xf32>
    %344 = arith.addf %338, %343 : vector<2x32x32xf32>
    %c0_227 = arith.constant 0 : index
    %c10_228 = arith.constant 10 : index
    %c0_229 = arith.constant 0 : index
    %345 = vector.load %arg87[%c0_227, %c10_228, %c0_229] : memref<2x48x32xf32, #tpu.memory_space<vmem>>, vector<2x32x32xf32>
    %346 = vector.extract_strided_slice %309 {offsets = [4, 0, 0, 0], sizes = [1, 1, 1, 32], strides = [1, 1, 1, 1]} : vector<5x1x1x32xf32> to vector<1x1x1x32xf32>
    %347 = vector.shape_cast %346 : vector<1x1x1x32xf32> to vector<1x1x32xf32>
    %348 = vector.broadcast %347 : vector<1x1x32xf32> to vector<2x32x32xf32>
    %349 = arith.mulf %345, %348 : vector<2x32x32xf32>
    %350 = arith.addf %344, %349 : vector<2x32x32xf32>
    %cst_230 = arith.constant dense<0.000000e+00> : vector<2x32xf32>
    %351 = vector.multi_reduction <add>, %350, %cst_230 [2] : vector<2x32x32xf32> to vector<2x32xf32>
    %352 = vector.shape_cast %351 : vector<2x32xf32> to vector<2x32x1xf32>
    %cst_231 = arith.constant dense<0.000000e+00> : vector<2x1xf32>
    %353 = vector.multi_reduction <add>, %352, %cst_231 [1] : vector<2x32x1xf32> to vector<2x1xf32>
    %354 = vector.shape_cast %353 : vector<2x1xf32> to vector<2x1x1xf32>
    %cst_232 = arith.constant 1.024000e+03 : f32
    %355 = vector.broadcast %cst_232 : f32 to vector<2x1x1xf32>
    %356 = arith.divf %354, %355 : vector<2x1x1xf32>
    %357 = vector.broadcast %356 : vector<2x1x1xf32> to vector<2x32x32xf32>
    %358 = arith.subf %350, %357 : vector<2x32x32xf32>
    %359 = arith.mulf %358, %358 : vector<2x32x32xf32>
    %cst_233 = arith.constant dense<0.000000e+00> : vector<2x32xf32>
    %360 = vector.multi_reduction <add>, %359, %cst_233 [2] : vector<2x32x32xf32> to vector<2x32xf32>
    %361 = vector.shape_cast %360 : vector<2x32xf32> to vector<2x32x1xf32>
    %cst_234 = arith.constant dense<0.000000e+00> : vector<2x1xf32>
    %362 = vector.multi_reduction <add>, %361, %cst_234 [1] : vector<2x32x1xf32> to vector<2x1xf32>
    %363 = vector.shape_cast %362 : vector<2x1xf32> to vector<2x1x1xf32>
    %cst_235 = arith.constant 1.024000e+03 : f32
    %364 = vector.broadcast %cst_235 : f32 to vector<2x1x1xf32>
    %365 = arith.divf %363, %364 : vector<2x1x1xf32>
    %cst_236 = arith.constant 9.99999993E-9 : f32
    %366 = vector.broadcast %cst_236 : f32 to vector<2x1x1xf32>
    %367 = arith.addf %365, %366 : vector<2x1x1xf32>
    %368 = math.rsqrt %367 : vector<2x1x1xf32>
    %369 = vector.broadcast %368 : vector<2x1x1xf32> to vector<2x32x32xf32>
    %370 = arith.mulf %358, %369 : vector<2x32x32xf32>
    %371 = vector.broadcast %310 : vector<1x1x32xf32> to vector<2x32x32xf32>
    %372 = arith.mulf %370, %371 : vector<2x32x32xf32>
    %373 = vector.broadcast %311 : vector<1x1x32xf32> to vector<2x32x32xf32>
    %374 = arith.addf %372, %373 : vector<2x32x32xf32>
    %c0_237 = arith.constant 0 : index
    %c8_238 = arith.constant 8 : index
    %c0_239 = arith.constant 0 : index
    %375 = vector.load %arg87[%c0_237, %c8_238, %c0_239] : memref<2x48x32xf32, #tpu.memory_space<vmem>>, vector<2x8x32xf32>
    tpu.vector_store %arg87[%c0_237, %c8_238, %c0_239], %308 {strides = array<i32>} : memref<2x48x32xf32, #tpu.memory_space<vmem>>, vector<2x8x32xf32>,
    %cst_240 = arith.constant 0.000000e+00 : f32
    %376 = vector.broadcast %cst_240 : f32 to vector<2x8x32xf32>
    %c0_241 = arith.constant 0 : index
    %c16 = arith.constant 16 : index
    %c0_242 = arith.constant 0 : index
    %377 = vector.load %arg87[%c0_241, %c16, %c0_242] : memref<2x48x32xf32, #tpu.memory_space<vmem>>, vector<2x8x32xf32>
    tpu.vector_store %arg87[%c0_241, %c16, %c0_242], %376 {strides = array<i32>} : memref<2x48x32xf32, #tpu.memory_space<vmem>>, vector<2x8x32xf32>,
    %c0_243 = arith.constant 0 : index
    %c6_244 = arith.constant 6 : index
    %c0_245 = arith.constant 0 : index
    %378 = vector.load %arg87[%c0_243, %c6_244, %c0_245] : memref<2x48x32xf32, #tpu.memory_space<vmem>>, vector<2x8x32xf32>
    %379 = vector.extract_strided_slice %312 {offsets = [0, 0, 0, 0], sizes = [1, 1, 1, 32], strides = [1, 1, 1, 1]} : vector<5x1x1x32xf32> to vector<1x1x1x32xf32>
    %380 = vector.shape_cast %379 : vector<1x1x1x32xf32> to vector<1x1x32xf32>
    %381 = vector.broadcast %380 : vector<1x1x32xf32> to vector<2x8x32xf32>
    %382 = arith.mulf %378, %381 : vector<2x8x32xf32>
    %c0_246 = arith.constant 0 : index
    %c7_247 = arith.constant 7 : index
    %c0_248 = arith.constant 0 : index
    %383 = vector.load %arg87[%c0_246, %c7_247, %c0_248] : memref<2x48x32xf32, #tpu.memory_space<vmem>>, vector<2x8x32xf32>
    %384 = vector.extract_strided_slice %312 {offsets = [1, 0, 0, 0], sizes = [1, 1, 1, 32], strides = [1, 1, 1, 1]} : vector<5x1x1x32xf32> to vector<1x1x1x32xf32>
    %385 = vector.shape_cast %384 : vector<1x1x1x32xf32> to vector<1x1x32xf32>
    %386 = vector.broadcast %385 : vector<1x1x32xf32> to vector<2x8x32xf32>
    %387 = arith.mulf %383, %386 : vector<2x8x32xf32>
    %388 = arith.addf %382, %387 : vector<2x8x32xf32>
    %c0_249 = arith.constant 0 : index
    %c8_250 = arith.constant 8 : index
    %c0_251 = arith.constant 0 : index
    %389 = vector.load %arg87[%c0_249, %c8_250, %c0_251] : memref<2x48x32xf32, #tpu.memory_space<vmem>>, vector<2x8x32xf32>
    %390 = vector.extract_strided_slice %312 {offsets = [2, 0, 0, 0], sizes = [1, 1, 1, 32], strides = [1, 1, 1, 1]} : vector<5x1x1x32xf32> to vector<1x1x1x32xf32>
    %391 = vector.shape_cast %390 : vector<1x1x1x32xf32> to vector<1x1x32xf32>
    %392 = vector.broadcast %391 : vector<1x1x32xf32> to vector<2x8x32xf32>
    %393 = arith.mulf %389, %392 : vector<2x8x32xf32>
    %394 = arith.addf %388, %393 : vector<2x8x32xf32>
    %c0_252 = arith.constant 0 : index
    %c9_253 = arith.constant 9 : index
    %c0_254 = arith.constant 0 : index
    %395 = vector.load %arg87[%c0_252, %c9_253, %c0_254] : memref<2x48x32xf32, #tpu.memory_space<vmem>>, vector<2x8x32xf32>
    %396 = vector.extract_strided_slice %312 {offsets = [3, 0, 0, 0], sizes = [1, 1, 1, 32], strides = [1, 1, 1, 1]} : vector<5x1x1x32xf32> to vector<1x1x1x32xf32>
    %397 = vector.shape_cast %396 : vector<1x1x1x32xf32> to vector<1x1x32xf32>
    %398 = vector.broadcast %397 : vector<1x1x32xf32> to vector<2x8x32xf32>
    %399 = arith.mulf %395, %398 : vector<2x8x32xf32>
    %400 = arith.addf %394, %399 : vector<2x8x32xf32>
    %c0_255 = arith.constant 0 : index
    %c10_256 = arith.constant 10 : index
    %c0_257 = arith.constant 0 : index
    %401 = vector.load %arg87[%c0_255, %c10_256, %c0_257] : memref<2x48x32xf32, #tpu.memory_space<vmem>>, vector<2x8x32xf32>
    %402 = vector.extract_strided_slice %312 {offsets = [4, 0, 0, 0], sizes = [1, 1, 1, 32], strides = [1, 1, 1, 1]} : vector<5x1x1x32xf32> to vector<1x1x1x32xf32>
    %403 = vector.shape_cast %402 : vector<1x1x1x32xf32> to vector<1x1x32xf32>
    %404 = vector.broadcast %403 : vector<1x1x32xf32> to vector<2x8x32xf32>
    %405 = arith.mulf %401, %404 : vector<2x8x32xf32>
    %406 = arith.addf %400, %405 : vector<2x8x32xf32>
    %cst_258 = arith.constant dense<0.000000e+00> : vector<2x8xf32>
    %407 = vector.multi_reduction <add>, %406, %cst_258 [2] : vector<2x8x32xf32> to vector<2x8xf32>
    %408 = vector.shape_cast %407 : vector<2x8xf32> to vector<2x8x1xf32>
    %cst_259 = arith.constant dense<0.000000e+00> : vector<2x1xf32>
    %409 = vector.multi_reduction <add>, %408, %cst_259 [1] : vector<2x8x1xf32> to vector<2x1xf32>
    %410 = vector.shape_cast %409 : vector<2x1xf32> to vector<2x1x1xf32>
    %cst_260 = arith.constant 2.560000e+02 : f32
    %411 = vector.broadcast %cst_260 : f32 to vector<2x1x1xf32>
    %412 = arith.divf %410, %411 : vector<2x1x1xf32>
    %413 = vector.broadcast %412 : vector<2x1x1xf32> to vector<2x8x32xf32>
    %414 = arith.subf %406, %413 : vector<2x8x32xf32>
    %415 = arith.mulf %414, %414 : vector<2x8x32xf32>
    %cst_261 = arith.constant dense<0.000000e+00> : vector<2x8xf32>
    %416 = vector.multi_reduction <add>, %415, %cst_261 [2] : vector<2x8x32xf32> to vector<2x8xf32>
    %417 = vector.shape_cast %416 : vector<2x8xf32> to vector<2x8x1xf32>
    %cst_262 = arith.constant dense<0.000000e+00> : vector<2x1xf32>
    %418 = vector.multi_reduction <add>, %417, %cst_262 [1] : vector<2x8x1xf32> to vector<2x1xf32>
    %419 = vector.shape_cast %418 : vector<2x1xf32> to vector<2x1x1xf32>
    %cst_263 = arith.constant 2.560000e+02 : f32
    %420 = vector.broadcast %cst_263 : f32 to vector<2x1x1xf32>
    %421 = arith.divf %419, %420 : vector<2x1x1xf32>
    %cst_264 = arith.constant 9.99999993E-9 : f32
    %422 = vector.broadcast %cst_264 : f32 to vector<2x1x1xf32>
    %423 = arith.addf %421, %422 : vector<2x1x1xf32>
    %424 = math.rsqrt %423 : vector<2x1x1xf32>
    %425 = vector.broadcast %424 : vector<2x1x1xf32> to vector<2x8x32xf32>
    %426 = arith.mulf %414, %425 : vector<2x8x32xf32>
    %427 = vector.broadcast %313 : vector<1x1x32xf32> to vector<2x8x32xf32>
    %428 = arith.mulf %426, %427 : vector<2x8x32xf32>
    %429 = vector.broadcast %314 : vector<1x1x32xf32> to vector<2x8x32xf32>
    %430 = arith.addf %428, %429 : vector<2x8x32xf32>
    %431 = arith.negf %430 : vector<2x8x32xf32>
    %432 = math.exp %431 : vector<2x8x32xf32>
    %cst_265 = arith.constant 1.000000e+00 : f32
    %433 = vector.broadcast %cst_265 : f32 to vector<2x8x32xf32>
    %434 = arith.addf %433, %432 : vector<2x8x32xf32>
    %435 = arith.divf %433, %434 : vector<2x8x32xf32>
    %c0_266 = arith.constant 0 : index
    %c6_267 = arith.constant 6 : index
    %c0_268 = arith.constant 0 : index
    %436 = vector.load %arg87[%c0_266, %c6_267, %c0_268] : memref<2x48x32xf32, #tpu.memory_space<vmem>>, vector<2x8x32xf32>
    %437 = vector.extract_strided_slice %315 {offsets = [0, 0, 0, 0], sizes = [1, 1, 1, 32], strides = [1, 1, 1, 1]} : vector<5x1x1x32xf32> to vector<1x1x1x32xf32>
    %438 = vector.shape_cast %437 : vector<1x1x1x32xf32> to vector<1x1x32xf32>
    %439 = vector.broadcast %438 : vector<1x1x32xf32> to vector<2x8x32xf32>
    %440 = arith.mulf %436, %439 : vector<2x8x32xf32>
    %c0_269 = arith.constant 0 : index
    %c7_270 = arith.constant 7 : index
    %c0_271 = arith.constant 0 : index
    %441 = vector.load %arg87[%c0_269, %c7_270, %c0_271] : memref<2x48x32xf32, #tpu.memory_space<vmem>>, vector<2x8x32xf32>
    %442 = vector.extract_strided_slice %315 {offsets = [1, 0, 0, 0], sizes = [1, 1, 1, 32], strides = [1, 1, 1, 1]} : vector<5x1x1x32xf32> to vector<1x1x1x32xf32>
    %443 = vector.shape_cast %442 : vector<1x1x1x32xf32> to vector<1x1x32xf32>
    %444 = vector.broadcast %443 : vector<1x1x32xf32> to vector<2x8x32xf32>
    %445 = arith.mulf %441, %444 : vector<2x8x32xf32>
    %446 = arith.addf %440, %445 : vector<2x8x32xf32>
    %c0_272 = arith.constant 0 : index
    %c8_273 = arith.constant 8 : index
    %c0_274 = arith.constant 0 : index
    %447 = vector.load %arg87[%c0_272, %c8_273, %c0_274] : memref<2x48x32xf32, #tpu.memory_space<vmem>>, vector<2x8x32xf32>
    %448 = vector.extract_strided_slice %315 {offsets = [2, 0, 0, 0], sizes = [1, 1, 1, 32], strides = [1, 1, 1, 1]} : vector<5x1x1x32xf32> to vector<1x1x1x32xf32>
    %449 = vector.shape_cast %448 : vector<1x1x1x32xf32> to vector<1x1x32xf32>
    %450 = vector.broadcast %449 : vector<1x1x32xf32> to vector<2x8x32xf32>
    %451 = arith.mulf %447, %450 : vector<2x8x32xf32>
    %452 = arith.addf %446, %451 : vector<2x8x32xf32>
    %c0_275 = arith.constant 0 : index
    %c9_276 = arith.constant 9 : index
    %c0_277 = arith.constant 0 : index
    %453 = vector.load %arg87[%c0_275, %c9_276, %c0_277] : memref<2x48x32xf32, #tpu.memory_space<vmem>>, vector<2x8x32xf32>
    %454 = vector.extract_strided_slice %315 {offsets = [3, 0, 0, 0], sizes = [1, 1, 1, 32], strides = [1, 1, 1, 1]} : vector<5x1x1x32xf32> to vector<1x1x1x32xf32>
    %455 = vector.shape_cast %454 : vector<1x1x1x32xf32> to vector<1x1x32xf32>
    %456 = vector.broadcast %455 : vector<1x1x32xf32> to vector<2x8x32xf32>
    %457 = arith.mulf %453, %456 : vector<2x8x32xf32>
    %458 = arith.addf %452, %457 : vector<2x8x32xf32>
    %c0_278 = arith.constant 0 : index
    %c10_279 = arith.constant 10 : index
    %c0_280 = arith.constant 0 : index
    %459 = vector.load %arg87[%c0_278, %c10_279, %c0_280] : memref<2x48x32xf32, #tpu.memory_space<vmem>>, vector<2x8x32xf32>
    %460 = vector.extract_strided_slice %315 {offsets = [4, 0, 0, 0], sizes = [1, 1, 1, 32], strides = [1, 1, 1, 1]} : vector<5x1x1x32xf32> to vector<1x1x1x32xf32>
    %461 = vector.shape_cast %460 : vector<1x1x1x32xf32> to vector<1x1x32xf32>
    %462 = vector.broadcast %461 : vector<1x1x32xf32> to vector<2x8x32xf32>
    %463 = arith.mulf %459, %462 : vector<2x8x32xf32>
    %464 = arith.addf %458, %463 : vector<2x8x32xf32>
    %cst_281 = arith.constant dense<0.000000e+00> : vector<2x8xf32>
    %465 = vector.multi_reduction <add>, %464, %cst_281 [2] : vector<2x8x32xf32> to vector<2x8xf32>
    %466 = vector.shape_cast %465 : vector<2x8xf32> to vector<2x8x1xf32>
    %cst_282 = arith.constant dense<0.000000e+00> : vector<2x1xf32>
    %467 = vector.multi_reduction <add>, %466, %cst_282 [1] : vector<2x8x1xf32> to vector<2x1xf32>
    %468 = vector.shape_cast %467 : vector<2x1xf32> to vector<2x1x1xf32>
    %cst_283 = arith.constant 2.560000e+02 : f32
    %469 = vector.broadcast %cst_283 : f32 to vector<2x1x1xf32>
    %470 = arith.divf %468, %469 : vector<2x1x1xf32>
    %471 = vector.broadcast %470 : vector<2x1x1xf32> to vector<2x8x32xf32>
    %472 = arith.subf %464, %471 : vector<2x8x32xf32>
    %473 = arith.mulf %472, %472 : vector<2x8x32xf32>
    %cst_284 = arith.constant dense<0.000000e+00> : vector<2x8xf32>
    %474 = vector.multi_reduction <add>, %473, %cst_284 [2] : vector<2x8x32xf32> to vector<2x8xf32>
    %475 = vector.shape_cast %474 : vector<2x8xf32> to vector<2x8x1xf32>
    %cst_285 = arith.constant dense<0.000000e+00> : vector<2x1xf32>
    %476 = vector.multi_reduction <add>, %475, %cst_285 [1] : vector<2x8x1xf32> to vector<2x1xf32>
    %477 = vector.shape_cast %476 : vector<2x1xf32> to vector<2x1x1xf32>
    %cst_286 = arith.constant 2.560000e+02 : f32
    %478 = vector.broadcast %cst_286 : f32 to vector<2x1x1xf32>
    %479 = arith.divf %477, %478 : vector<2x1x1xf32>
    %cst_287 = arith.constant 9.99999993E-9 : f32
    %480 = vector.broadcast %cst_287 : f32 to vector<2x1x1xf32>
    %481 = arith.addf %479, %480 : vector<2x1x1xf32>
    %482 = math.rsqrt %481 : vector<2x1x1xf32>
    %483 = vector.broadcast %482 : vector<2x1x1xf32> to vector<2x8x32xf32>
    %484 = arith.mulf %472, %483 : vector<2x8x32xf32>
    %485 = vector.broadcast %316 : vector<1x1x32xf32> to vector<2x8x32xf32>
    %486 = arith.mulf %484, %485 : vector<2x8x32xf32>
    %487 = vector.broadcast %317 : vector<1x1x32xf32> to vector<2x8x32xf32>
    %488 = arith.addf %486, %487 : vector<2x8x32xf32>
    %489 = tpu.concatenate %435, %488 in 0 : vector<2x8x32xf32>, vector<2x8x32xf32> -> vector<4x8x32xf32>
    %490 = vector.shape_cast %318 : vector<32x8xf32> to vector<1x32x8xf32>
    %491 = vector.shape_cast %490 : vector<1x32x8xf32> to vector<1x32x8xf32>
    %492 = vector.broadcast %491 : vector<1x32x8xf32> to vector<4x32x8xf32>
    "tpu.trace_start"() <{level = 10 : i32, message = "bot,btc->boc"}> : () -> ()
    %cst_288 = arith.constant dense<0.000000e+00> : vector<4x32x32xf32>
    %493 = tpu.matmul %492, %489, %cst_288 {dimension_numbers = #tpu.dot_dimension_numbers<[2], [1], [1], [2], [0, 0, 0, 1, 1, 2], [0], [0]>} : vector<4x32x8xf32>, vector<4x8x32xf32>, vector<4x32x32xf32> -> vector<4x32x32xf32>
    "tpu.trace_stop"() : () -> ()
    %494 = vector.extract_strided_slice %493 {offsets = [0, 0, 0], sizes = [2, 32, 32], strides = [1, 1, 1]} : vector<4x32x32xf32> to vector<2x32x32xf32>
    %495 = arith.mulf %374, %494 : vector<2x32x32xf32>
    %496 = vector.extract_strided_slice %493 {offsets = [2, 0, 0], sizes = [2, 32, 32], strides = [1, 1, 1]} : vector<4x32x32xf32> to vector<2x32x32xf32>
    %497 = arith.addf %495, %496 : vector<2x32x32xf32>
    %c0_289 = arith.constant 0 : index
    %c0_290 = arith.constant 0 : index
    %c0_291 = arith.constant 0 : index
    %c0_292 = arith.constant 0 : index
    %498 = vector.load %arg45[%c0_289, %c0_290, %c0_291, %c0_292] : memref<5x1x1x32xf32, #tpu.memory_space<vmem>>, vector<5x1x1x32xf32>
    %c0_293 = arith.constant 0 : index
    %c0_294 = arith.constant 0 : index
    %c0_295 = arith.constant 0 : index
    %499 = vector.load %arg46[%c0_293, %c0_294, %c0_295] : memref<1x1x32xf32, #tpu.memory_space<vmem>>, vector<1x1x32xf32>
    %c0_296 = arith.constant 0 : index
    %c0_297 = arith.constant 0 : index
    %c0_298 = arith.constant 0 : index
    %500 = vector.load %arg47[%c0_296, %c0_297, %c0_298] : memref<1x1x32xf32, #tpu.memory_space<vmem>>, vector<1x1x32xf32>
    %c0_299 = arith.constant 0 : index
    %c0_300 = arith.constant 0 : index
    %c0_301 = arith.constant 0 : index
    %c0_302 = arith.constant 0 : index
    %501 = vector.load %arg48[%c0_299, %c0_300, %c0_301, %c0_302] : memref<5x1x1x32xf32, #tpu.memory_space<vmem>>, vector<5x1x1x32xf32>
    %c0_303 = arith.constant 0 : index
    %c0_304 = arith.constant 0 : index
    %c0_305 = arith.constant 0 : index
    %502 = vector.load %arg49[%c0_303, %c0_304, %c0_305] : memref<1x1x32xf32, #tpu.memory_space<vmem>>, vector<1x1x32xf32>
    %c0_306 = arith.constant 0 : index
    %c0_307 = arith.constant 0 : index
    %c0_308 = arith.constant 0 : index
    %503 = vector.load %arg50[%c0_306, %c0_307, %c0_308] : memref<1x1x32xf32, #tpu.memory_space<vmem>>, vector<1x1x32xf32>
    %c0_309 = arith.constant 0 : index
    %c0_310 = arith.constant 0 : index
    %c0_311 = arith.constant 0 : index
    %c0_312 = arith.constant 0 : index
    %504 = vector.load %arg51[%c0_309, %c0_310, %c0_311, %c0_312] : memref<5x1x1x32xf32, #tpu.memory_space<vmem>>, vector<5x1x1x32xf32>
    %c0_313 = arith.constant 0 : index
    %c0_314 = arith.constant 0 : index
    %c0_315 = arith.constant 0 : index
    %505 = vector.load %arg52[%c0_313, %c0_314, %c0_315] : memref<1x1x32xf32, #tpu.memory_space<vmem>>, vector<1x1x32xf32>
    %c0_316 = arith.constant 0 : index
    %c0_317 = arith.constant 0 : index
    %c0_318 = arith.constant 0 : index
    %506 = vector.load %arg53[%c0_316, %c0_317, %c0_318] : memref<1x1x32xf32, #tpu.memory_space<vmem>>, vector<1x1x32xf32>
    %c0_319 = arith.constant 0 : index
    %c0_320 = arith.constant 0 : index
    %507 = vector.load %arg54[%c0_319, %c0_320] : memref<16x8xf32, #tpu.memory_space<vmem>>, vector<16x8xf32>
    %c0_321 = arith.constant 0 : index
    %c8_322 = arith.constant 8 : index
    %c0_323 = arith.constant 0 : index
    %508 = vector.load %arg87[%c0_321, %c8_322, %c0_323] : memref<2x48x32xf32, #tpu.memory_space<vmem>>, vector<2x16x32xf32>
    tpu.vector_store %arg87[%c0_321, %c8_322, %c0_323], %121 {strides = array<i32>} : memref<2x48x32xf32, #tpu.memory_space<vmem>>, vector<2x16x32xf32>,
    %cst_324 = arith.constant 0.000000e+00 : f32
    %509 = vector.broadcast %cst_324 : f32 to vector<2x8x32xf32>
    %c0_325 = arith.constant 0 : index
    %c24_326 = arith.constant 24 : index
    %c0_327 = arith.constant 0 : index
    %510 = vector.load %arg87[%c0_325, %c24_326, %c0_327] : memref<2x48x32xf32, #tpu.memory_space<vmem>>, vector<2x8x32xf32>
    tpu.vector_store %arg87[%c0_325, %c24_326, %c0_327], %509 {strides = array<i32>} : memref<2x48x32xf32, #tpu.memory_space<vmem>>, vector<2x8x32xf32>,
    %c0_328 = arith.constant 0 : index
    %c6_329 = arith.constant 6 : index
    %c0_330 = arith.constant 0 : index
    %511 = vector.load %arg87[%c0_328, %c6_329, %c0_330] : memref<2x48x32xf32, #tpu.memory_space<vmem>>, vector<2x16x32xf32>
    %512 = vector.extract_strided_slice %498 {offsets = [0, 0, 0, 0], sizes = [1, 1, 1, 32], strides = [1, 1, 1, 1]} : vector<5x1x1x32xf32> to vector<1x1x1x32xf32>
    %513 = vector.shape_cast %512 : vector<1x1x1x32xf32> to vector<1x1x32xf32>
    %514 = vector.broadcast %513 : vector<1x1x32xf32> to vector<2x16x32xf32>
    %515 = arith.mulf %511, %514 : vector<2x16x32xf32>
    %c0_331 = arith.constant 0 : index
    %c7_332 = arith.constant 7 : index
    %c0_333 = arith.constant 0 : index
    %516 = vector.load %arg87[%c0_331, %c7_332, %c0_333] : memref<2x48x32xf32, #tpu.memory_space<vmem>>, vector<2x16x32xf32>
    %517 = vector.extract_strided_slice %498 {offsets = [1, 0, 0, 0], sizes = [1, 1, 1, 32], strides = [1, 1, 1, 1]} : vector<5x1x1x32xf32> to vector<1x1x1x32xf32>
    %518 = vector.shape_cast %517 : vector<1x1x1x32xf32> to vector<1x1x32xf32>
    %519 = vector.broadcast %518 : vector<1x1x32xf32> to vector<2x16x32xf32>
    %520 = arith.mulf %516, %519 : vector<2x16x32xf32>
    %521 = arith.addf %515, %520 : vector<2x16x32xf32>
    %c0_334 = arith.constant 0 : index
    %c8_335 = arith.constant 8 : index
    %c0_336 = arith.constant 0 : index
    %522 = vector.load %arg87[%c0_334, %c8_335, %c0_336] : memref<2x48x32xf32, #tpu.memory_space<vmem>>, vector<2x16x32xf32>
    %523 = vector.extract_strided_slice %498 {offsets = [2, 0, 0, 0], sizes = [1, 1, 1, 32], strides = [1, 1, 1, 1]} : vector<5x1x1x32xf32> to vector<1x1x1x32xf32>
    %524 = vector.shape_cast %523 : vector<1x1x1x32xf32> to vector<1x1x32xf32>
    %525 = vector.broadcast %524 : vector<1x1x32xf32> to vector<2x16x32xf32>
    %526 = arith.mulf %522, %525 : vector<2x16x32xf32>
    %527 = arith.addf %521, %526 : vector<2x16x32xf32>
    %c0_337 = arith.constant 0 : index
    %c9_338 = arith.constant 9 : index
    %c0_339 = arith.constant 0 : index
    %528 = vector.load %arg87[%c0_337, %c9_338, %c0_339] : memref<2x48x32xf32, #tpu.memory_space<vmem>>, vector<2x16x32xf32>
    %529 = vector.extract_strided_slice %498 {offsets = [3, 0, 0, 0], sizes = [1, 1, 1, 32], strides = [1, 1, 1, 1]} : vector<5x1x1x32xf32> to vector<1x1x1x32xf32>
    %530 = vector.shape_cast %529 : vector<1x1x1x32xf32> to vector<1x1x32xf32>
    %531 = vector.broadcast %530 : vector<1x1x32xf32> to vector<2x16x32xf32>
    %532 = arith.mulf %528, %531 : vector<2x16x32xf32>
    %533 = arith.addf %527, %532 : vector<2x16x32xf32>
    %c0_340 = arith.constant 0 : index
    %c10_341 = arith.constant 10 : index
    %c0_342 = arith.constant 0 : index
    %534 = vector.load %arg87[%c0_340, %c10_341, %c0_342] : memref<2x48x32xf32, #tpu.memory_space<vmem>>, vector<2x16x32xf32>
    %535 = vector.extract_strided_slice %498 {offsets = [4, 0, 0, 0], sizes = [1, 1, 1, 32], strides = [1, 1, 1, 1]} : vector<5x1x1x32xf32> to vector<1x1x1x32xf32>
    %536 = vector.shape_cast %535 : vector<1x1x1x32xf32> to vector<1x1x32xf32>
    %537 = vector.broadcast %536 : vector<1x1x32xf32> to vector<2x16x32xf32>
    %538 = arith.mulf %534, %537 : vector<2x16x32xf32>
    %539 = arith.addf %533, %538 : vector<2x16x32xf32>
    %cst_343 = arith.constant dense<0.000000e+00> : vector<2x16xf32>
    %540 = vector.multi_reduction <add>, %539, %cst_343 [2] : vector<2x16x32xf32> to vector<2x16xf32>
    %541 = vector.shape_cast %540 : vector<2x16xf32> to vector<2x16x1xf32>
    %cst_344 = arith.constant dense<0.000000e+00> : vector<2x1xf32>
    %542 = vector.multi_reduction <add>, %541, %cst_344 [1] : vector<2x16x1xf32> to vector<2x1xf32>
    %543 = vector.shape_cast %542 : vector<2x1xf32> to vector<2x1x1xf32>
    %cst_345 = arith.constant 5.120000e+02 : f32
    %544 = vector.broadcast %cst_345 : f32 to vector<2x1x1xf32>
    %545 = arith.divf %543, %544 : vector<2x1x1xf32>
    %546 = vector.broadcast %545 : vector<2x1x1xf32> to vector<2x16x32xf32>
    %547 = arith.subf %539, %546 : vector<2x16x32xf32>
    %548 = arith.mulf %547, %547 : vector<2x16x32xf32>
    %cst_346 = arith.constant dense<0.000000e+00> : vector<2x16xf32>
    %549 = vector.multi_reduction <add>, %548, %cst_346 [2] : vector<2x16x32xf32> to vector<2x16xf32>
    %550 = vector.shape_cast %549 : vector<2x16xf32> to vector<2x16x1xf32>
    %cst_347 = arith.constant dense<0.000000e+00> : vector<2x1xf32>
    %551 = vector.multi_reduction <add>, %550, %cst_347 [1] : vector<2x16x1xf32> to vector<2x1xf32>
    %552 = vector.shape_cast %551 : vector<2x1xf32> to vector<2x1x1xf32>
    %cst_348 = arith.constant 5.120000e+02 : f32
    %553 = vector.broadcast %cst_348 : f32 to vector<2x1x1xf32>
    %554 = arith.divf %552, %553 : vector<2x1x1xf32>
    %cst_349 = arith.constant 9.99999993E-9 : f32
    %555 = vector.broadcast %cst_349 : f32 to vector<2x1x1xf32>
    %556 = arith.addf %554, %555 : vector<2x1x1xf32>
    %557 = math.rsqrt %556 : vector<2x1x1xf32>
    %558 = vector.broadcast %557 : vector<2x1x1xf32> to vector<2x16x32xf32>
    %559 = arith.mulf %547, %558 : vector<2x16x32xf32>
    %560 = vector.broadcast %499 : vector<1x1x32xf32> to vector<2x16x32xf32>
    %561 = arith.mulf %559, %560 : vector<2x16x32xf32>
    %562 = vector.broadcast %500 : vector<1x1x32xf32> to vector<2x16x32xf32>
    %563 = arith.addf %561, %562 : vector<2x16x32xf32>
    %c0_350 = arith.constant 0 : index
    %c8_351 = arith.constant 8 : index
    %c0_352 = arith.constant 0 : index
    %564 = vector.load %arg87[%c0_350, %c8_351, %c0_352] : memref<2x48x32xf32, #tpu.memory_space<vmem>>, vector<2x8x32xf32>
    tpu.vector_store %arg87[%c0_350, %c8_351, %c0_352], %308 {strides = array<i32>} : memref<2x48x32xf32, #tpu.memory_space<vmem>>, vector<2x8x32xf32>,
    %cst_353 = arith.constant 0.000000e+00 : f32
    %565 = vector.broadcast %cst_353 : f32 to vector<2x8x32xf32>
    %c0_354 = arith.constant 0 : index
    %c16_355 = arith.constant 16 : index
    %c0_356 = arith.constant 0 : index
    %566 = vector.load %arg87[%c0_354, %c16_355, %c0_356] : memref<2x48x32xf32, #tpu.memory_space<vmem>>, vector<2x8x32xf32>
    tpu.vector_store %arg87[%c0_354, %c16_355, %c0_356], %565 {strides = array<i32>} : memref<2x48x32xf32, #tpu.memory_space<vmem>>, vector<2x8x32xf32>,
    %c0_357 = arith.constant 0 : index
    %c6_358 = arith.constant 6 : index
    %c0_359 = arith.constant 0 : index
    %567 = vector.load %arg87[%c0_357, %c6_358, %c0_359] : memref<2x48x32xf32, #tpu.memory_space<vmem>>, vector<2x8x32xf32>
    %568 = vector.extract_strided_slice %501 {offsets = [0, 0, 0, 0], sizes = [1, 1, 1, 32], strides = [1, 1, 1, 1]} : vector<5x1x1x32xf32> to vector<1x1x1x32xf32>
    %569 = vector.shape_cast %568 : vector<1x1x1x32xf32> to vector<1x1x32xf32>
    %570 = vector.broadcast %569 : vector<1x1x32xf32> to vector<2x8x32xf32>
    %571 = arith.mulf %567, %570 : vector<2x8x32xf32>
    %c0_360 = arith.constant 0 : index
    %c7_361 = arith.constant 7 : index
    %c0_362 = arith.constant 0 : index
    %572 = vector.load %arg87[%c0_360, %c7_361, %c0_362] : memref<2x48x32xf32, #tpu.memory_space<vmem>>, vector<2x8x32xf32>
    %573 = vector.extract_strided_slice %501 {offsets = [1, 0, 0, 0], sizes = [1, 1, 1, 32], strides = [1, 1, 1, 1]} : vector<5x1x1x32xf32> to vector<1x1x1x32xf32>
    %574 = vector.shape_cast %573 : vector<1x1x1x32xf32> to vector<1x1x32xf32>
    %575 = vector.broadcast %574 : vector<1x1x32xf32> to vector<2x8x32xf32>
    %576 = arith.mulf %572, %575 : vector<2x8x32xf32>
    %577 = arith.addf %571, %576 : vector<2x8x32xf32>
    %c0_363 = arith.constant 0 : index
    %c8_364 = arith.constant 8 : index
    %c0_365 = arith.constant 0 : index
    %578 = vector.load %arg87[%c0_363, %c8_364, %c0_365] : memref<2x48x32xf32, #tpu.memory_space<vmem>>, vector<2x8x32xf32>
    %579 = vector.extract_strided_slice %501 {offsets = [2, 0, 0, 0], sizes = [1, 1, 1, 32], strides = [1, 1, 1, 1]} : vector<5x1x1x32xf32> to vector<1x1x1x32xf32>
    %580 = vector.shape_cast %579 : vector<1x1x1x32xf32> to vector<1x1x32xf32>
    %581 = vector.broadcast %580 : vector<1x1x32xf32> to vector<2x8x32xf32>
    %582 = arith.mulf %578, %581 : vector<2x8x32xf32>
    %583 = arith.addf %577, %582 : vector<2x8x32xf32>
    %c0_366 = arith.constant 0 : index
    %c9_367 = arith.constant 9 : index
    %c0_368 = arith.constant 0 : index
    %584 = vector.load %arg87[%c0_366, %c9_367, %c0_368] : memref<2x48x32xf32, #tpu.memory_space<vmem>>, vector<2x8x32xf32>
    %585 = vector.extract_strided_slice %501 {offsets = [3, 0, 0, 0], sizes = [1, 1, 1, 32], strides = [1, 1, 1, 1]} : vector<5x1x1x32xf32> to vector<1x1x1x32xf32>
    %586 = vector.shape_cast %585 : vector<1x1x1x32xf32> to vector<1x1x32xf32>
    %587 = vector.broadcast %586 : vector<1x1x32xf32> to vector<2x8x32xf32>
    %588 = arith.mulf %584, %587 : vector<2x8x32xf32>
    %589 = arith.addf %583, %588 : vector<2x8x32xf32>
    %c0_369 = arith.constant 0 : index
    %c10_370 = arith.constant 10 : index
    %c0_371 = arith.constant 0 : index
    %590 = vector.load %arg87[%c0_369, %c10_370, %c0_371] : memref<2x48x32xf32, #tpu.memory_space<vmem>>, vector<2x8x32xf32>
    %591 = vector.extract_strided_slice %501 {offsets = [4, 0, 0, 0], sizes = [1, 1, 1, 32], strides = [1, 1, 1, 1]} : vector<5x1x1x32xf32> to vector<1x1x1x32xf32>
    %592 = vector.shape_cast %591 : vector<1x1x1x32xf32> to vector<1x1x32xf32>
    %593 = vector.broadcast %592 : vector<1x1x32xf32> to vector<2x8x32xf32>
    %594 = arith.mulf %590, %593 : vector<2x8x32xf32>
    %595 = arith.addf %589, %594 : vector<2x8x32xf32>
    %cst_372 = arith.constant dense<0.000000e+00> : vector<2x8xf32>
    %596 = vector.multi_reduction <add>, %595, %cst_372 [2] : vector<2x8x32xf32> to vector<2x8xf32>
    %597 = vector.shape_cast %596 : vector<2x8xf32> to vector<2x8x1xf32>
    %cst_373 = arith.constant dense<0.000000e+00> : vector<2x1xf32>
    %598 = vector.multi_reduction <add>, %597, %cst_373 [1] : vector<2x8x1xf32> to vector<2x1xf32>
    %599 = vector.shape_cast %598 : vector<2x1xf32> to vector<2x1x1xf32>
    %cst_374 = arith.constant 2.560000e+02 : f32
    %600 = vector.broadcast %cst_374 : f32 to vector<2x1x1xf32>
    %601 = arith.divf %599, %600 : vector<2x1x1xf32>
    %602 = vector.broadcast %601 : vector<2x1x1xf32> to vector<2x8x32xf32>
    %603 = arith.subf %595, %602 : vector<2x8x32xf32>
    %604 = arith.mulf %603, %603 : vector<2x8x32xf32>
    %cst_375 = arith.constant dense<0.000000e+00> : vector<2x8xf32>
    %605 = vector.multi_reduction <add>, %604, %cst_375 [2] : vector<2x8x32xf32> to vector<2x8xf32>
    %606 = vector.shape_cast %605 : vector<2x8xf32> to vector<2x8x1xf32>
    %cst_376 = arith.constant dense<0.000000e+00> : vector<2x1xf32>
    %607 = vector.multi_reduction <add>, %606, %cst_376 [1] : vector<2x8x1xf32> to vector<2x1xf32>
    %608 = vector.shape_cast %607 : vector<2x1xf32> to vector<2x1x1xf32>
    %cst_377 = arith.constant 2.560000e+02 : f32
    %609 = vector.broadcast %cst_377 : f32 to vector<2x1x1xf32>
    %610 = arith.divf %608, %609 : vector<2x1x1xf32>
    %cst_378 = arith.constant 9.99999993E-9 : f32
    %611 = vector.broadcast %cst_378 : f32 to vector<2x1x1xf32>
    %612 = arith.addf %610, %611 : vector<2x1x1xf32>
    %613 = math.rsqrt %612 : vector<2x1x1xf32>
    %614 = vector.broadcast %613 : vector<2x1x1xf32> to vector<2x8x32xf32>
    %615 = arith.mulf %603, %614 : vector<2x8x32xf32>
    %616 = vector.broadcast %502 : vector<1x1x32xf32> to vector<2x8x32xf32>
    %617 = arith.mulf %615, %616 : vector<2x8x32xf32>
    %618 = vector.broadcast %503 : vector<1x1x32xf32> to vector<2x8x32xf32>
    %619 = arith.addf %617, %618 : vector<2x8x32xf32>
    %620 = arith.negf %619 : vector<2x8x32xf32>
    %621 = math.exp %620 : vector<2x8x32xf32>
    %cst_379 = arith.constant 1.000000e+00 : f32
    %622 = vector.broadcast %cst_379 : f32 to vector<2x8x32xf32>
    %623 = arith.addf %622, %621 : vector<2x8x32xf32>
    %624 = arith.divf %622, %623 : vector<2x8x32xf32>
    %c0_380 = arith.constant 0 : index
    %c6_381 = arith.constant 6 : index
    %c0_382 = arith.constant 0 : index
    %625 = vector.load %arg87[%c0_380, %c6_381, %c0_382] : memref<2x48x32xf32, #tpu.memory_space<vmem>>, vector<2x8x32xf32>
    %626 = vector.extract_strided_slice %504 {offsets = [0, 0, 0, 0], sizes = [1, 1, 1, 32], strides = [1, 1, 1, 1]} : vector<5x1x1x32xf32> to vector<1x1x1x32xf32>
    %627 = vector.shape_cast %626 : vector<1x1x1x32xf32> to vector<1x1x32xf32>
    %628 = vector.broadcast %627 : vector<1x1x32xf32> to vector<2x8x32xf32>
    %629 = arith.mulf %625, %628 : vector<2x8x32xf32>
    %c0_383 = arith.constant 0 : index
    %c7_384 = arith.constant 7 : index
    %c0_385 = arith.constant 0 : index
    %630 = vector.load %arg87[%c0_383, %c7_384, %c0_385] : memref<2x48x32xf32, #tpu.memory_space<vmem>>, vector<2x8x32xf32>
    %631 = vector.extract_strided_slice %504 {offsets = [1, 0, 0, 0], sizes = [1, 1, 1, 32], strides = [1, 1, 1, 1]} : vector<5x1x1x32xf32> to vector<1x1x1x32xf32>
    %632 = vector.shape_cast %631 : vector<1x1x1x32xf32> to vector<1x1x32xf32>
    %633 = vector.broadcast %632 : vector<1x1x32xf32> to vector<2x8x32xf32>
    %634 = arith.mulf %630, %633 : vector<2x8x32xf32>
    %635 = arith.addf %629, %634 : vector<2x8x32xf32>
    %c0_386 = arith.constant 0 : index
    %c8_387 = arith.constant 8 : index
    %c0_388 = arith.constant 0 : index
    %636 = vector.load %arg87[%c0_386, %c8_387, %c0_388] : memref<2x48x32xf32, #tpu.memory_space<vmem>>, vector<2x8x32xf32>
    %637 = vector.extract_strided_slice %504 {offsets = [2, 0, 0, 0], sizes = [1, 1, 1, 32], strides = [1, 1, 1, 1]} : vector<5x1x1x32xf32> to vector<1x1x1x32xf32>
    %638 = vector.shape_cast %637 : vector<1x1x1x32xf32> to vector<1x1x32xf32>
    %639 = vector.broadcast %638 : vector<1x1x32xf32> to vector<2x8x32xf32>
    %640 = arith.mulf %636, %639 : vector<2x8x32xf32>
    %641 = arith.addf %635, %640 : vector<2x8x32xf32>
    %c0_389 = arith.constant 0 : index
    %c9_390 = arith.constant 9 : index
    %c0_391 = arith.constant 0 : index
    %642 = vector.load %arg87[%c0_389, %c9_390, %c0_391] : memref<2x48x32xf32, #tpu.memory_space<vmem>>, vector<2x8x32xf32>
    %643 = vector.extract_strided_slice %504 {offsets = [3, 0, 0, 0], sizes = [1, 1, 1, 32], strides = [1, 1, 1, 1]} : vector<5x1x1x32xf32> to vector<1x1x1x32xf32>
    %644 = vector.shape_cast %643 : vector<1x1x1x32xf32> to vector<1x1x32xf32>
    %645 = vector.broadcast %644 : vector<1x1x32xf32> to vector<2x8x32xf32>
    %646 = arith.mulf %642, %645 : vector<2x8x32xf32>
    %647 = arith.addf %641, %646 : vector<2x8x32xf32>
    %c0_392 = arith.constant 0 : index
    %c10_393 = arith.constant 10 : index
    %c0_394 = arith.constant 0 : index
    %648 = vector.load %arg87[%c0_392, %c10_393, %c0_394] : memref<2x48x32xf32, #tpu.memory_space<vmem>>, vector<2x8x32xf32>
    %649 = vector.extract_strided_slice %504 {offsets = [4, 0, 0, 0], sizes = [1, 1, 1, 32], strides = [1, 1, 1, 1]} : vector<5x1x1x32xf32> to vector<1x1x1x32xf32>
    %650 = vector.shape_cast %649 : vector<1x1x1x32xf32> to vector<1x1x32xf32>
    %651 = vector.broadcast %650 : vector<1x1x32xf32> to vector<2x8x32xf32>
    %652 = arith.mulf %648, %651 : vector<2x8x32xf32>
    %653 = arith.addf %647, %652 : vector<2x8x32xf32>
    %cst_395 = arith.constant dense<0.000000e+00> : vector<2x8xf32>
    %654 = vector.multi_reduction <add>, %653, %cst_395 [2] : vector<2x8x32xf32> to vector<2x8xf32>
    %655 = vector.shape_cast %654 : vector<2x8xf32> to vector<2x8x1xf32>
    %cst_396 = arith.constant dense<0.000000e+00> : vector<2x1xf32>
    %656 = vector.multi_reduction <add>, %655, %cst_396 [1] : vector<2x8x1xf32> to vector<2x1xf32>
    %657 = vector.shape_cast %656 : vector<2x1xf32> to vector<2x1x1xf32>
    %cst_397 = arith.constant 2.560000e+02 : f32
    %658 = vector.broadcast %cst_397 : f32 to vector<2x1x1xf32>
    %659 = arith.divf %657, %658 : vector<2x1x1xf32>
    %660 = vector.broadcast %659 : vector<2x1x1xf32> to vector<2x8x32xf32>
    %661 = arith.subf %653, %660 : vector<2x8x32xf32>
    %662 = arith.mulf %661, %661 : vector<2x8x32xf32>
    %cst_398 = arith.constant dense<0.000000e+00> : vector<2x8xf32>
    %663 = vector.multi_reduction <add>, %662, %cst_398 [2] : vector<2x8x32xf32> to vector<2x8xf32>
    %664 = vector.shape_cast %663 : vector<2x8xf32> to vector<2x8x1xf32>
    %cst_399 = arith.constant dense<0.000000e+00> : vector<2x1xf32>
    %665 = vector.multi_reduction <add>, %664, %cst_399 [1] : vector<2x8x1xf32> to vector<2x1xf32>
    %666 = vector.shape_cast %665 : vector<2x1xf32> to vector<2x1x1xf32>
    %cst_400 = arith.constant 2.560000e+02 : f32
    %667 = vector.broadcast %cst_400 : f32 to vector<2x1x1xf32>
    %668 = arith.divf %666, %667 : vector<2x1x1xf32>
    %cst_401 = arith.constant 9.99999993E-9 : f32
    %669 = vector.broadcast %cst_401 : f32 to vector<2x1x1xf32>
    %670 = arith.addf %668, %669 : vector<2x1x1xf32>
    %671 = math.rsqrt %670 : vector<2x1x1xf32>
    %672 = vector.broadcast %671 : vector<2x1x1xf32> to vector<2x8x32xf32>
    %673 = arith.mulf %661, %672 : vector<2x8x32xf32>
    %674 = vector.broadcast %505 : vector<1x1x32xf32> to vector<2x8x32xf32>
    %675 = arith.mulf %673, %674 : vector<2x8x32xf32>
    %676 = vector.broadcast %506 : vector<1x1x32xf32> to vector<2x8x32xf32>
    %677 = arith.addf %675, %676 : vector<2x8x32xf32>
    %678 = tpu.concatenate %624, %677 in 0 : vector<2x8x32xf32>, vector<2x8x32xf32> -> vector<4x8x32xf32>
    %679 = vector.shape_cast %507 : vector<16x8xf32> to vector<1x16x8xf32>
    %680 = vector.shape_cast %679 : vector<1x16x8xf32> to vector<1x16x8xf32>
    %681 = vector.broadcast %680 : vector<1x16x8xf32> to vector<4x16x8xf32>
    "tpu.trace_start"() <{level = 10 : i32, message = "bot,btc->boc"}> : () -> ()
    %cst_402 = arith.constant dense<0.000000e+00> : vector<4x16x32xf32>
    %682 = tpu.matmul %681, %678, %cst_402 {dimension_numbers = #tpu.dot_dimension_numbers<[2], [1], [1], [2], [0, 0, 0, 1, 1, 2], [0], [0]>} : vector<4x16x8xf32>, vector<4x8x32xf32>, vector<4x16x32xf32> -> vector<4x16x32xf32>
    "tpu.trace_stop"() : () -> ()
    %683 = vector.extract_strided_slice %682 {offsets = [0, 0, 0], sizes = [2, 16, 32], strides = [1, 1, 1]} : vector<4x16x32xf32> to vector<2x16x32xf32>
    %684 = arith.mulf %563, %683 : vector<2x16x32xf32>
    %685 = vector.extract_strided_slice %682 {offsets = [2, 0, 0], sizes = [2, 16, 32], strides = [1, 1, 1]} : vector<4x16x32xf32> to vector<2x16x32xf32>
    %686 = arith.addf %684, %685 : vector<2x16x32xf32>
    %c0_403 = arith.constant 0 : index
    %c0_404 = arith.constant 0 : index
    %c0_405 = arith.constant 0 : index
    %c0_406 = arith.constant 0 : index
    %687 = vector.load %arg55[%c0_403, %c0_404, %c0_405, %c0_406] : memref<5x1x1x32xf32, #tpu.memory_space<vmem>>, vector<5x1x1x32xf32>
    %c0_407 = arith.constant 0 : index
    %c0_408 = arith.constant 0 : index
    %c0_409 = arith.constant 0 : index
    %688 = vector.load %arg56[%c0_407, %c0_408, %c0_409] : memref<1x1x32xf32, #tpu.memory_space<vmem>>, vector<1x1x32xf32>
    %c0_410 = arith.constant 0 : index
    %c0_411 = arith.constant 0 : index
    %c0_412 = arith.constant 0 : index
    %689 = vector.load %arg57[%c0_410, %c0_411, %c0_412] : memref<1x1x32xf32, #tpu.memory_space<vmem>>, vector<1x1x32xf32>
    %c0_413 = arith.constant 0 : index
    %c0_414 = arith.constant 0 : index
    %c0_415 = arith.constant 0 : index
    %c0_416 = arith.constant 0 : index
    %690 = vector.load %arg58[%c0_413, %c0_414, %c0_415, %c0_416] : memref<5x1x1x32xf32, #tpu.memory_space<vmem>>, vector<5x1x1x32xf32>
    %c0_417 = arith.constant 0 : index
    %c0_418 = arith.constant 0 : index
    %c0_419 = arith.constant 0 : index
    %691 = vector.load %arg59[%c0_417, %c0_418, %c0_419] : memref<1x1x32xf32, #tpu.memory_space<vmem>>, vector<1x1x32xf32>
    %c0_420 = arith.constant 0 : index
    %c0_421 = arith.constant 0 : index
    %c0_422 = arith.constant 0 : index
    %692 = vector.load %arg60[%c0_420, %c0_421, %c0_422] : memref<1x1x32xf32, #tpu.memory_space<vmem>>, vector<1x1x32xf32>
    %c0_423 = arith.constant 0 : index
    %c0_424 = arith.constant 0 : index
    %c0_425 = arith.constant 0 : index
    %c0_426 = arith.constant 0 : index
    %693 = vector.load %arg61[%c0_423, %c0_424, %c0_425, %c0_426] : memref<5x1x1x32xf32, #tpu.memory_space<vmem>>, vector<5x1x1x32xf32>
    %c0_427 = arith.constant 0 : index
    %c0_428 = arith.constant 0 : index
    %c0_429 = arith.constant 0 : index
    %694 = vector.load %arg62[%c0_427, %c0_428, %c0_429] : memref<1x1x32xf32, #tpu.memory_space<vmem>>, vector<1x1x32xf32>
    %c0_430 = arith.constant 0 : index
    %c0_431 = arith.constant 0 : index
    %c0_432 = arith.constant 0 : index
    %695 = vector.load %arg63[%c0_430, %c0_431, %c0_432] : memref<1x1x32xf32, #tpu.memory_space<vmem>>, vector<1x1x32xf32>
    %c0_433 = arith.constant 0 : index
    %c8_434 = arith.constant 8 : index
    %c0_435 = arith.constant 0 : index
    %696 = vector.load %arg87[%c0_433, %c8_434, %c0_435] : memref<2x48x32xf32, #tpu.memory_space<vmem>>, vector<2x8x32xf32>
    tpu.vector_store %arg87[%c0_433, %c8_434, %c0_435], %188 {strides = array<i32>} : memref<2x48x32xf32, #tpu.memory_space<vmem>>, vector<2x8x32xf32>,
    %cst_436 = arith.constant 0.000000e+00 : f32
    %697 = vector.broadcast %cst_436 : f32 to vector<2x8x32xf32>
    %c0_437 = arith.constant 0 : index
    %c16_438 = arith.constant 16 : index
    %c0_439 = arith.constant 0 : index
    %698 = vector.load %arg87[%c0_437, %c16_438, %c0_439] : memref<2x48x32xf32, #tpu.memory_space<vmem>>, vector<2x8x32xf32>
    tpu.vector_store %arg87[%c0_437, %c16_438, %c0_439], %697 {strides = array<i32>} : memref<2x48x32xf32, #tpu.memory_space<vmem>>, vector<2x8x32xf32>,
    %c0_440 = arith.constant 0 : index
    %c6_441 = arith.constant 6 : index
    %c0_442 = arith.constant 0 : index
    %699 = vector.load %arg87[%c0_440, %c6_441, %c0_442] : memref<2x48x32xf32, #tpu.memory_space<vmem>>, vector<2x8x32xf32>
    %700 = vector.extract_strided_slice %687 {offsets = [0, 0, 0, 0], sizes = [1, 1, 1, 32], strides = [1, 1, 1, 1]} : vector<5x1x1x32xf32> to vector<1x1x1x32xf32>
    %701 = vector.shape_cast %700 : vector<1x1x1x32xf32> to vector<1x1x32xf32>
    %702 = vector.broadcast %701 : vector<1x1x32xf32> to vector<2x8x32xf32>
    %703 = arith.mulf %699, %702 : vector<2x8x32xf32>
    %c0_443 = arith.constant 0 : index
    %c7_444 = arith.constant 7 : index
    %c0_445 = arith.constant 0 : index
    %704 = vector.load %arg87[%c0_443, %c7_444, %c0_445] : memref<2x48x32xf32, #tpu.memory_space<vmem>>, vector<2x8x32xf32>
    %705 = vector.extract_strided_slice %687 {offsets = [1, 0, 0, 0], sizes = [1, 1, 1, 32], strides = [1, 1, 1, 1]} : vector<5x1x1x32xf32> to vector<1x1x1x32xf32>
    %706 = vector.shape_cast %705 : vector<1x1x1x32xf32> to vector<1x1x32xf32>
    %707 = vector.broadcast %706 : vector<1x1x32xf32> to vector<2x8x32xf32>
    %708 = arith.mulf %704, %707 : vector<2x8x32xf32>
    %709 = arith.addf %703, %708 : vector<2x8x32xf32>
    %c0_446 = arith.constant 0 : index
    %c8_447 = arith.constant 8 : index
    %c0_448 = arith.constant 0 : index
    %710 = vector.load %arg87[%c0_446, %c8_447, %c0_448] : memref<2x48x32xf32, #tpu.memory_space<vmem>>, vector<2x8x32xf32>
    %711 = vector.extract_strided_slice %687 {offsets = [2, 0, 0, 0], sizes = [1, 1, 1, 32], strides = [1, 1, 1, 1]} : vector<5x1x1x32xf32> to vector<1x1x1x32xf32>
    %712 = vector.shape_cast %711 : vector<1x1x1x32xf32> to vector<1x1x32xf32>
    %713 = vector.broadcast %712 : vector<1x1x32xf32> to vector<2x8x32xf32>
    %714 = arith.mulf %710, %713 : vector<2x8x32xf32>
    %715 = arith.addf %709, %714 : vector<2x8x32xf32>
    %c0_449 = arith.constant 0 : index
    %c9_450 = arith.constant 9 : index
    %c0_451 = arith.constant 0 : index
    %716 = vector.load %arg87[%c0_449, %c9_450, %c0_451] : memref<2x48x32xf32, #tpu.memory_space<vmem>>, vector<2x8x32xf32>
    %717 = vector.extract_strided_slice %687 {offsets = [3, 0, 0, 0], sizes = [1, 1, 1, 32], strides = [1, 1, 1, 1]} : vector<5x1x1x32xf32> to vector<1x1x1x32xf32>
    %718 = vector.shape_cast %717 : vector<1x1x1x32xf32> to vector<1x1x32xf32>
    %719 = vector.broadcast %718 : vector<1x1x32xf32> to vector<2x8x32xf32>
    %720 = arith.mulf %716, %719 : vector<2x8x32xf32>
    %721 = arith.addf %715, %720 : vector<2x8x32xf32>
    %c0_452 = arith.constant 0 : index
    %c10_453 = arith.constant 10 : index
    %c0_454 = arith.constant 0 : index
    %722 = vector.load %arg87[%c0_452, %c10_453, %c0_454] : memref<2x48x32xf32, #tpu.memory_space<vmem>>, vector<2x8x32xf32>
    %723 = vector.extract_strided_slice %687 {offsets = [4, 0, 0, 0], sizes = [1, 1, 1, 32], strides = [1, 1, 1, 1]} : vector<5x1x1x32xf32> to vector<1x1x1x32xf32>
    %724 = vector.shape_cast %723 : vector<1x1x1x32xf32> to vector<1x1x32xf32>
    %725 = vector.broadcast %724 : vector<1x1x32xf32> to vector<2x8x32xf32>
    %726 = arith.mulf %722, %725 : vector<2x8x32xf32>
    %727 = arith.addf %721, %726 : vector<2x8x32xf32>
    %cst_455 = arith.constant dense<0.000000e+00> : vector<2x8xf32>
    %728 = vector.multi_reduction <add>, %727, %cst_455 [2] : vector<2x8x32xf32> to vector<2x8xf32>
    %729 = vector.shape_cast %728 : vector<2x8xf32> to vector<2x8x1xf32>
    %cst_456 = arith.constant dense<0.000000e+00> : vector<2x1xf32>
    %730 = vector.multi_reduction <add>, %729, %cst_456 [1] : vector<2x8x1xf32> to vector<2x1xf32>
    %731 = vector.shape_cast %730 : vector<2x1xf32> to vector<2x1x1xf32>
    %cst_457 = arith.constant 2.560000e+02 : f32
    %732 = vector.broadcast %cst_457 : f32 to vector<2x1x1xf32>
    %733 = arith.divf %731, %732 : vector<2x1x1xf32>
    %734 = vector.broadcast %733 : vector<2x1x1xf32> to vector<2x8x32xf32>
    %735 = arith.subf %727, %734 : vector<2x8x32xf32>
    %736 = arith.mulf %735, %735 : vector<2x8x32xf32>
    %cst_458 = arith.constant dense<0.000000e+00> : vector<2x8xf32>
    %737 = vector.multi_reduction <add>, %736, %cst_458 [2] : vector<2x8x32xf32> to vector<2x8xf32>
    %738 = vector.shape_cast %737 : vector<2x8xf32> to vector<2x8x1xf32>
    %cst_459 = arith.constant dense<0.000000e+00> : vector<2x1xf32>
    %739 = vector.multi_reduction <add>, %738, %cst_459 [1] : vector<2x8x1xf32> to vector<2x1xf32>
    %740 = vector.shape_cast %739 : vector<2x1xf32> to vector<2x1x1xf32>
    %cst_460 = arith.constant 2.560000e+02 : f32
    %741 = vector.broadcast %cst_460 : f32 to vector<2x1x1xf32>
    %742 = arith.divf %740, %741 : vector<2x1x1xf32>
    %cst_461 = arith.constant 9.99999993E-9 : f32
    %743 = vector.broadcast %cst_461 : f32 to vector<2x1x1xf32>
    %744 = arith.addf %742, %743 : vector<2x1x1xf32>
    %745 = math.rsqrt %744 : vector<2x1x1xf32>
    %746 = vector.broadcast %745 : vector<2x1x1xf32> to vector<2x8x32xf32>
    %747 = arith.mulf %735, %746 : vector<2x8x32xf32>
    %748 = vector.broadcast %688 : vector<1x1x32xf32> to vector<2x8x32xf32>
    %749 = arith.mulf %747, %748 : vector<2x8x32xf32>
    %750 = vector.broadcast %689 : vector<1x1x32xf32> to vector<2x8x32xf32>
    %751 = arith.addf %749, %750 : vector<2x8x32xf32>
    %c0_462 = arith.constant 0 : index
    %c8_463 = arith.constant 8 : index
    %c0_464 = arith.constant 0 : index
    %752 = vector.load %arg87[%c0_462, %c8_463, %c0_464] : memref<2x48x32xf32, #tpu.memory_space<vmem>>, vector<2x8x32xf32>
    tpu.vector_store %arg87[%c0_462, %c8_463, %c0_464], %308 {strides = array<i32>} : memref<2x48x32xf32, #tpu.memory_space<vmem>>, vector<2x8x32xf32>,
    %cst_465 = arith.constant 0.000000e+00 : f32
    %753 = vector.broadcast %cst_465 : f32 to vector<2x8x32xf32>
    %c0_466 = arith.constant 0 : index
    %c16_467 = arith.constant 16 : index
    %c0_468 = arith.constant 0 : index
    %754 = vector.load %arg87[%c0_466, %c16_467, %c0_468] : memref<2x48x32xf32, #tpu.memory_space<vmem>>, vector<2x8x32xf32>
    tpu.vector_store %arg87[%c0_466, %c16_467, %c0_468], %753 {strides = array<i32>} : memref<2x48x32xf32, #tpu.memory_space<vmem>>, vector<2x8x32xf32>,
    %c0_469 = arith.constant 0 : index
    %c6_470 = arith.constant 6 : index
    %c0_471 = arith.constant 0 : index
    %755 = vector.load %arg87[%c0_469, %c6_470, %c0_471] : memref<2x48x32xf32, #tpu.memory_space<vmem>>, vector<2x8x32xf32>
    %756 = vector.extract_strided_slice %690 {offsets = [0, 0, 0, 0], sizes = [1, 1, 1, 32], strides = [1, 1, 1, 1]} : vector<5x1x1x32xf32> to vector<1x1x1x32xf32>
    %757 = vector.shape_cast %756 : vector<1x1x1x32xf32> to vector<1x1x32xf32>
    %758 = vector.broadcast %757 : vector<1x1x32xf32> to vector<2x8x32xf32>
    %759 = arith.mulf %755, %758 : vector<2x8x32xf32>
    %c0_472 = arith.constant 0 : index
    %c7_473 = arith.constant 7 : index
    %c0_474 = arith.constant 0 : index
    %760 = vector.load %arg87[%c0_472, %c7_473, %c0_474] : memref<2x48x32xf32, #tpu.memory_space<vmem>>, vector<2x8x32xf32>
    %761 = vector.extract_strided_slice %690 {offsets = [1, 0, 0, 0], sizes = [1, 1, 1, 32], strides = [1, 1, 1, 1]} : vector<5x1x1x32xf32> to vector<1x1x1x32xf32>
    %762 = vector.shape_cast %761 : vector<1x1x1x32xf32> to vector<1x1x32xf32>
    %763 = vector.broadcast %762 : vector<1x1x32xf32> to vector<2x8x32xf32>
    %764 = arith.mulf %760, %763 : vector<2x8x32xf32>
    %765 = arith.addf %759, %764 : vector<2x8x32xf32>
    %c0_475 = arith.constant 0 : index
    %c8_476 = arith.constant 8 : index
    %c0_477 = arith.constant 0 : index
    %766 = vector.load %arg87[%c0_475, %c8_476, %c0_477] : memref<2x48x32xf32, #tpu.memory_space<vmem>>, vector<2x8x32xf32>
    %767 = vector.extract_strided_slice %690 {offsets = [2, 0, 0, 0], sizes = [1, 1, 1, 32], strides = [1, 1, 1, 1]} : vector<5x1x1x32xf32> to vector<1x1x1x32xf32>
    %768 = vector.shape_cast %767 : vector<1x1x1x32xf32> to vector<1x1x32xf32>
    %769 = vector.broadcast %768 : vector<1x1x32xf32> to vector<2x8x32xf32>
    %770 = arith.mulf %766, %769 : vector<2x8x32xf32>
    %771 = arith.addf %765, %770 : vector<2x8x32xf32>
    %c0_478 = arith.constant 0 : index
    %c9_479 = arith.constant 9 : index
    %c0_480 = arith.constant 0 : index
    %772 = vector.load %arg87[%c0_478, %c9_479, %c0_480] : memref<2x48x32xf32, #tpu.memory_space<vmem>>, vector<2x8x32xf32>
    %773 = vector.extract_strided_slice %690 {offsets = [3, 0, 0, 0], sizes = [1, 1, 1, 32], strides = [1, 1, 1, 1]} : vector<5x1x1x32xf32> to vector<1x1x1x32xf32>
    %774 = vector.shape_cast %773 : vector<1x1x1x32xf32> to vector<1x1x32xf32>
    %775 = vector.broadcast %774 : vector<1x1x32xf32> to vector<2x8x32xf32>
    %776 = arith.mulf %772, %775 : vector<2x8x32xf32>
    %777 = arith.addf %771, %776 : vector<2x8x32xf32>
    %c0_481 = arith.constant 0 : index
    %c10_482 = arith.constant 10 : index
    %c0_483 = arith.constant 0 : index
    %778 = vector.load %arg87[%c0_481, %c10_482, %c0_483] : memref<2x48x32xf32, #tpu.memory_space<vmem>>, vector<2x8x32xf32>
    %779 = vector.extract_strided_slice %690 {offsets = [4, 0, 0, 0], sizes = [1, 1, 1, 32], strides = [1, 1, 1, 1]} : vector<5x1x1x32xf32> to vector<1x1x1x32xf32>
    %780 = vector.shape_cast %779 : vector<1x1x1x32xf32> to vector<1x1x32xf32>
    %781 = vector.broadcast %780 : vector<1x1x32xf32> to vector<2x8x32xf32>
    %782 = arith.mulf %778, %781 : vector<2x8x32xf32>
    %783 = arith.addf %777, %782 : vector<2x8x32xf32>
    %cst_484 = arith.constant dense<0.000000e+00> : vector<2x8xf32>
    %784 = vector.multi_reduction <add>, %783, %cst_484 [2] : vector<2x8x32xf32> to vector<2x8xf32>
    %785 = vector.shape_cast %784 : vector<2x8xf32> to vector<2x8x1xf32>
    %cst_485 = arith.constant dense<0.000000e+00> : vector<2x1xf32>
    %786 = vector.multi_reduction <add>, %785, %cst_485 [1] : vector<2x8x1xf32> to vector<2x1xf32>
    %787 = vector.shape_cast %786 : vector<2x1xf32> to vector<2x1x1xf32>
    %cst_486 = arith.constant 2.560000e+02 : f32
    %788 = vector.broadcast %cst_486 : f32 to vector<2x1x1xf32>
    %789 = arith.divf %787, %788 : vector<2x1x1xf32>
    %790 = vector.broadcast %789 : vector<2x1x1xf32> to vector<2x8x32xf32>
    %791 = arith.subf %783, %790 : vector<2x8x32xf32>
    %792 = arith.mulf %791, %791 : vector<2x8x32xf32>
    %cst_487 = arith.constant dense<0.000000e+00> : vector<2x8xf32>
    %793 = vector.multi_reduction <add>, %792, %cst_487 [2] : vector<2x8x32xf32> to vector<2x8xf32>
    %794 = vector.shape_cast %793 : vector<2x8xf32> to vector<2x8x1xf32>
    %cst_488 = arith.constant dense<0.000000e+00> : vector<2x1xf32>
    %795 = vector.multi_reduction <add>, %794, %cst_488 [1] : vector<2x8x1xf32> to vector<2x1xf32>
    %796 = vector.shape_cast %795 : vector<2x1xf32> to vector<2x1x1xf32>
    %cst_489 = arith.constant 2.560000e+02 : f32
    %797 = vector.broadcast %cst_489 : f32 to vector<2x1x1xf32>
    %798 = arith.divf %796, %797 : vector<2x1x1xf32>
    %cst_490 = arith.constant 9.99999993E-9 : f32
    %799 = vector.broadcast %cst_490 : f32 to vector<2x1x1xf32>
    %800 = arith.addf %798, %799 : vector<2x1x1xf32>
    %801 = math.rsqrt %800 : vector<2x1x1xf32>
    %802 = vector.broadcast %801 : vector<2x1x1xf32> to vector<2x8x32xf32>
    %803 = arith.mulf %791, %802 : vector<2x8x32xf32>
    %804 = vector.broadcast %691 : vector<1x1x32xf32> to vector<2x8x32xf32>
    %805 = arith.mulf %803, %804 : vector<2x8x32xf32>
    %806 = vector.broadcast %692 : vector<1x1x32xf32> to vector<2x8x32xf32>
    %807 = arith.addf %805, %806 : vector<2x8x32xf32>
    %808 = arith.negf %807 : vector<2x8x32xf32>
    %809 = math.exp %808 : vector<2x8x32xf32>
    %cst_491 = arith.constant 1.000000e+00 : f32
    %810 = vector.broadcast %cst_491 : f32 to vector<2x8x32xf32>
    %811 = arith.addf %810, %809 : vector<2x8x32xf32>
    %812 = arith.divf %810, %811 : vector<2x8x32xf32>
    %c0_492 = arith.constant 0 : index
    %c6_493 = arith.constant 6 : index
    %c0_494 = arith.constant 0 : index
    %813 = vector.load %arg87[%c0_492, %c6_493, %c0_494] : memref<2x48x32xf32, #tpu.memory_space<vmem>>, vector<2x8x32xf32>
    %814 = vector.extract_strided_slice %693 {offsets = [0, 0, 0, 0], sizes = [1, 1, 1, 32], strides = [1, 1, 1, 1]} : vector<5x1x1x32xf32> to vector<1x1x1x32xf32>
    %815 = vector.shape_cast %814 : vector<1x1x1x32xf32> to vector<1x1x32xf32>
    %816 = vector.broadcast %815 : vector<1x1x32xf32> to vector<2x8x32xf32>
    %817 = arith.mulf %813, %816 : vector<2x8x32xf32>
    %c0_495 = arith.constant 0 : index
    %c7_496 = arith.constant 7 : index
    %c0_497 = arith.constant 0 : index
    %818 = vector.load %arg87[%c0_495, %c7_496, %c0_497] : memref<2x48x32xf32, #tpu.memory_space<vmem>>, vector<2x8x32xf32>
    %819 = vector.extract_strided_slice %693 {offsets = [1, 0, 0, 0], sizes = [1, 1, 1, 32], strides = [1, 1, 1, 1]} : vector<5x1x1x32xf32> to vector<1x1x1x32xf32>
    %820 = vector.shape_cast %819 : vector<1x1x1x32xf32> to vector<1x1x32xf32>
    %821 = vector.broadcast %820 : vector<1x1x32xf32> to vector<2x8x32xf32>
    %822 = arith.mulf %818, %821 : vector<2x8x32xf32>
    %823 = arith.addf %817, %822 : vector<2x8x32xf32>
    %c0_498 = arith.constant 0 : index
    %c8_499 = arith.constant 8 : index
    %c0_500 = arith.constant 0 : index
    %824 = vector.load %arg87[%c0_498, %c8_499, %c0_500] : memref<2x48x32xf32, #tpu.memory_space<vmem>>, vector<2x8x32xf32>
    %825 = vector.extract_strided_slice %693 {offsets = [2, 0, 0, 0], sizes = [1, 1, 1, 32], strides = [1, 1, 1, 1]} : vector<5x1x1x32xf32> to vector<1x1x1x32xf32>
    %826 = vector.shape_cast %825 : vector<1x1x1x32xf32> to vector<1x1x32xf32>
    %827 = vector.broadcast %826 : vector<1x1x32xf32> to vector<2x8x32xf32>
    %828 = arith.mulf %824, %827 : vector<2x8x32xf32>
    %829 = arith.addf %823, %828 : vector<2x8x32xf32>
    %c0_501 = arith.constant 0 : index
    %c9_502 = arith.constant 9 : index
    %c0_503 = arith.constant 0 : index
    %830 = vector.load %arg87[%c0_501, %c9_502, %c0_503] : memref<2x48x32xf32, #tpu.memory_space<vmem>>, vector<2x8x32xf32>
    %831 = vector.extract_strided_slice %693 {offsets = [3, 0, 0, 0], sizes = [1, 1, 1, 32], strides = [1, 1, 1, 1]} : vector<5x1x1x32xf32> to vector<1x1x1x32xf32>
    %832 = vector.shape_cast %831 : vector<1x1x1x32xf32> to vector<1x1x32xf32>
    %833 = vector.broadcast %832 : vector<1x1x32xf32> to vector<2x8x32xf32>
    %834 = arith.mulf %830, %833 : vector<2x8x32xf32>
    %835 = arith.addf %829, %834 : vector<2x8x32xf32>
    %c0_504 = arith.constant 0 : index
    %c10_505 = arith.constant 10 : index
    %c0_506 = arith.constant 0 : index
    %836 = vector.load %arg87[%c0_504, %c10_505, %c0_506] : memref<2x48x32xf32, #tpu.memory_space<vmem>>, vector<2x8x32xf32>
    %837 = vector.extract_strided_slice %693 {offsets = [4, 0, 0, 0], sizes = [1, 1, 1, 32], strides = [1, 1, 1, 1]} : vector<5x1x1x32xf32> to vector<1x1x1x32xf32>
    %838 = vector.shape_cast %837 : vector<1x1x1x32xf32> to vector<1x1x32xf32>
    %839 = vector.broadcast %838 : vector<1x1x32xf32> to vector<2x8x32xf32>
    %840 = arith.mulf %836, %839 : vector<2x8x32xf32>
    %841 = arith.addf %835, %840 : vector<2x8x32xf32>
    %cst_507 = arith.constant dense<0.000000e+00> : vector<2x8xf32>
    %842 = vector.multi_reduction <add>, %841, %cst_507 [2] : vector<2x8x32xf32> to vector<2x8xf32>
    %843 = vector.shape_cast %842 : vector<2x8xf32> to vector<2x8x1xf32>
    %cst_508 = arith.constant dense<0.000000e+00> : vector<2x1xf32>
    %844 = vector.multi_reduction <add>, %843, %cst_508 [1] : vector<2x8x1xf32> to vector<2x1xf32>
    %845 = vector.shape_cast %844 : vector<2x1xf32> to vector<2x1x1xf32>
    %cst_509 = arith.constant 2.560000e+02 : f32
    %846 = vector.broadcast %cst_509 : f32 to vector<2x1x1xf32>
    %847 = arith.divf %845, %846 : vector<2x1x1xf32>
    %848 = vector.broadcast %847 : vector<2x1x1xf32> to vector<2x8x32xf32>
    %849 = arith.subf %841, %848 : vector<2x8x32xf32>
    %850 = arith.mulf %849, %849 : vector<2x8x32xf32>
    %cst_510 = arith.constant dense<0.000000e+00> : vector<2x8xf32>
    %851 = vector.multi_reduction <add>, %850, %cst_510 [2] : vector<2x8x32xf32> to vector<2x8xf32>
    %852 = vector.shape_cast %851 : vector<2x8xf32> to vector<2x8x1xf32>
    %cst_511 = arith.constant dense<0.000000e+00> : vector<2x1xf32>
    %853 = vector.multi_reduction <add>, %852, %cst_511 [1] : vector<2x8x1xf32> to vector<2x1xf32>
    %854 = vector.shape_cast %853 : vector<2x1xf32> to vector<2x1x1xf32>
    %cst_512 = arith.constant 2.560000e+02 : f32
    %855 = vector.broadcast %cst_512 : f32 to vector<2x1x1xf32>
    %856 = arith.divf %854, %855 : vector<2x1x1xf32>
    %cst_513 = arith.constant 9.99999993E-9 : f32
    %857 = vector.broadcast %cst_513 : f32 to vector<2x1x1xf32>
    %858 = arith.addf %856, %857 : vector<2x1x1xf32>
    %859 = math.rsqrt %858 : vector<2x1x1xf32>
    %860 = vector.broadcast %859 : vector<2x1x1xf32> to vector<2x8x32xf32>
    %861 = arith.mulf %849, %860 : vector<2x8x32xf32>
    %862 = vector.broadcast %694 : vector<1x1x32xf32> to vector<2x8x32xf32>
    %863 = arith.mulf %861, %862 : vector<2x8x32xf32>
    %864 = vector.broadcast %695 : vector<1x1x32xf32> to vector<2x8x32xf32>
    %865 = arith.addf %863, %864 : vector<2x8x32xf32>
    %866 = arith.mulf %751, %812 : vector<2x8x32xf32>
    %867 = arith.addf %866, %865 : vector<2x8x32xf32>
    %c0_514 = arith.constant 0 : index
    %c0_515 = arith.constant 0 : index
    %c0_516 = arith.constant 0 : index
    %c0_517 = arith.constant 0 : index
    %868 = vector.load %arg64[%c0_514, %c0_515, %c0_516, %c0_517] : memref<5x1x1x32xf32, #tpu.memory_space<vmem>>, vector<5x1x1x32xf32>
    %c0_518 = arith.constant 0 : index
    %c0_519 = arith.constant 0 : index
    %c0_520 = arith.constant 0 : index
    %869 = vector.load %arg65[%c0_518, %c0_519, %c0_520] : memref<1x1x32xf32, #tpu.memory_space<vmem>>, vector<1x1x32xf32>
    %c0_521 = arith.constant 0 : index
    %c0_522 = arith.constant 0 : index
    %c0_523 = arith.constant 0 : index
    %870 = vector.load %arg66[%c0_521, %c0_522, %c0_523] : memref<1x1x32xf32, #tpu.memory_space<vmem>>, vector<1x1x32xf32>
    %c0_524 = arith.constant 0 : index
    %c0_525 = arith.constant 0 : index
    %c0_526 = arith.constant 0 : index
    %c0_527 = arith.constant 0 : index
    %871 = vector.load %arg67[%c0_524, %c0_525, %c0_526, %c0_527] : memref<5x1x1x32xf32, #tpu.memory_space<vmem>>, vector<5x1x1x32xf32>
    %c0_528 = arith.constant 0 : index
    %c0_529 = arith.constant 0 : index
    %c0_530 = arith.constant 0 : index
    %872 = vector.load %arg68[%c0_528, %c0_529, %c0_530] : memref<1x1x32xf32, #tpu.memory_space<vmem>>, vector<1x1x32xf32>
    %c0_531 = arith.constant 0 : index
    %c0_532 = arith.constant 0 : index
    %c0_533 = arith.constant 0 : index
    %873 = vector.load %arg69[%c0_531, %c0_532, %c0_533] : memref<1x1x32xf32, #tpu.memory_space<vmem>>, vector<1x1x32xf32>
    %c0_534 = arith.constant 0 : index
    %c0_535 = arith.constant 0 : index
    %c0_536 = arith.constant 0 : index
    %c0_537 = arith.constant 0 : index
    %874 = vector.load %arg70[%c0_534, %c0_535, %c0_536, %c0_537] : memref<5x1x1x32xf32, #tpu.memory_space<vmem>>, vector<5x1x1x32xf32>
    %c0_538 = arith.constant 0 : index
    %c0_539 = arith.constant 0 : index
    %c0_540 = arith.constant 0 : index
    %875 = vector.load %arg71[%c0_538, %c0_539, %c0_540] : memref<1x1x32xf32, #tpu.memory_space<vmem>>, vector<1x1x32xf32>
    %c0_541 = arith.constant 0 : index
    %c0_542 = arith.constant 0 : index
    %c0_543 = arith.constant 0 : index
    %876 = vector.load %arg72[%c0_541, %c0_542, %c0_543] : memref<1x1x32xf32, #tpu.memory_space<vmem>>, vector<1x1x32xf32>
    %c0_544 = arith.constant 0 : index
    %c0_545 = arith.constant 0 : index
    %877 = vector.load %arg73[%c0_544, %c0_545] : memref<16x8xf32, #tpu.memory_space<vmem>>, vector<16x8xf32>
    %c0_546 = arith.constant 0 : index
    %c8_547 = arith.constant 8 : index
    %c0_548 = arith.constant 0 : index
    %878 = vector.load %arg87[%c0_546, %c8_547, %c0_548] : memref<2x48x32xf32, #tpu.memory_space<vmem>>, vector<2x16x32xf32>
    tpu.vector_store %arg87[%c0_546, %c8_547, %c0_548], %686 {strides = array<i32>} : memref<2x48x32xf32, #tpu.memory_space<vmem>>, vector<2x16x32xf32>,
    %cst_549 = arith.constant 0.000000e+00 : f32
    %879 = vector.broadcast %cst_549 : f32 to vector<2x8x32xf32>
    %c0_550 = arith.constant 0 : index
    %c24_551 = arith.constant 24 : index
    %c0_552 = arith.constant 0 : index
    %880 = vector.load %arg87[%c0_550, %c24_551, %c0_552] : memref<2x48x32xf32, #tpu.memory_space<vmem>>, vector<2x8x32xf32>
    tpu.vector_store %arg87[%c0_550, %c24_551, %c0_552], %879 {strides = array<i32>} : memref<2x48x32xf32, #tpu.memory_space<vmem>>, vector<2x8x32xf32>,
    %c0_553 = arith.constant 0 : index
    %c6_554 = arith.constant 6 : index
    %c0_555 = arith.constant 0 : index
    %881 = vector.load %arg87[%c0_553, %c6_554, %c0_555] : memref<2x48x32xf32, #tpu.memory_space<vmem>>, vector<2x16x32xf32>
    %882 = vector.extract_strided_slice %868 {offsets = [0, 0, 0, 0], sizes = [1, 1, 1, 32], strides = [1, 1, 1, 1]} : vector<5x1x1x32xf32> to vector<1x1x1x32xf32>
    %883 = vector.shape_cast %882 : vector<1x1x1x32xf32> to vector<1x1x32xf32>
    %884 = vector.broadcast %883 : vector<1x1x32xf32> to vector<2x16x32xf32>
    %885 = arith.mulf %881, %884 : vector<2x16x32xf32>
    %c0_556 = arith.constant 0 : index
    %c7_557 = arith.constant 7 : index
    %c0_558 = arith.constant 0 : index
    %886 = vector.load %arg87[%c0_556, %c7_557, %c0_558] : memref<2x48x32xf32, #tpu.memory_space<vmem>>, vector<2x16x32xf32>
    %887 = vector.extract_strided_slice %868 {offsets = [1, 0, 0, 0], sizes = [1, 1, 1, 32], strides = [1, 1, 1, 1]} : vector<5x1x1x32xf32> to vector<1x1x1x32xf32>
    %888 = vector.shape_cast %887 : vector<1x1x1x32xf32> to vector<1x1x32xf32>
    %889 = vector.broadcast %888 : vector<1x1x32xf32> to vector<2x16x32xf32>
    %890 = arith.mulf %886, %889 : vector<2x16x32xf32>
    %891 = arith.addf %885, %890 : vector<2x16x32xf32>
    %c0_559 = arith.constant 0 : index
    %c8_560 = arith.constant 8 : index
    %c0_561 = arith.constant 0 : index
    %892 = vector.load %arg87[%c0_559, %c8_560, %c0_561] : memref<2x48x32xf32, #tpu.memory_space<vmem>>, vector<2x16x32xf32>
    %893 = vector.extract_strided_slice %868 {offsets = [2, 0, 0, 0], sizes = [1, 1, 1, 32], strides = [1, 1, 1, 1]} : vector<5x1x1x32xf32> to vector<1x1x1x32xf32>
    %894 = vector.shape_cast %893 : vector<1x1x1x32xf32> to vector<1x1x32xf32>
    %895 = vector.broadcast %894 : vector<1x1x32xf32> to vector<2x16x32xf32>
    %896 = arith.mulf %892, %895 : vector<2x16x32xf32>
    %897 = arith.addf %891, %896 : vector<2x16x32xf32>
    %c0_562 = arith.constant 0 : index
    %c9_563 = arith.constant 9 : index
    %c0_564 = arith.constant 0 : index
    %898 = vector.load %arg87[%c0_562, %c9_563, %c0_564] : memref<2x48x32xf32, #tpu.memory_space<vmem>>, vector<2x16x32xf32>
    %899 = vector.extract_strided_slice %868 {offsets = [3, 0, 0, 0], sizes = [1, 1, 1, 32], strides = [1, 1, 1, 1]} : vector<5x1x1x32xf32> to vector<1x1x1x32xf32>
    %900 = vector.shape_cast %899 : vector<1x1x1x32xf32> to vector<1x1x32xf32>
    %901 = vector.broadcast %900 : vector<1x1x32xf32> to vector<2x16x32xf32>
    %902 = arith.mulf %898, %901 : vector<2x16x32xf32>
    %903 = arith.addf %897, %902 : vector<2x16x32xf32>
    %c0_565 = arith.constant 0 : index
    %c10_566 = arith.constant 10 : index
    %c0_567 = arith.constant 0 : index
    %904 = vector.load %arg87[%c0_565, %c10_566, %c0_567] : memref<2x48x32xf32, #tpu.memory_space<vmem>>, vector<2x16x32xf32>
    %905 = vector.extract_strided_slice %868 {offsets = [4, 0, 0, 0], sizes = [1, 1, 1, 32], strides = [1, 1, 1, 1]} : vector<5x1x1x32xf32> to vector<1x1x1x32xf32>
    %906 = vector.shape_cast %905 : vector<1x1x1x32xf32> to vector<1x1x32xf32>
    %907 = vector.broadcast %906 : vector<1x1x32xf32> to vector<2x16x32xf32>
    %908 = arith.mulf %904, %907 : vector<2x16x32xf32>
    %909 = arith.addf %903, %908 : vector<2x16x32xf32>
    %cst_568 = arith.constant dense<0.000000e+00> : vector<2x16xf32>
    %910 = vector.multi_reduction <add>, %909, %cst_568 [2] : vector<2x16x32xf32> to vector<2x16xf32>
    %911 = vector.shape_cast %910 : vector<2x16xf32> to vector<2x16x1xf32>
    %cst_569 = arith.constant dense<0.000000e+00> : vector<2x1xf32>
    %912 = vector.multi_reduction <add>, %911, %cst_569 [1] : vector<2x16x1xf32> to vector<2x1xf32>
    %913 = vector.shape_cast %912 : vector<2x1xf32> to vector<2x1x1xf32>
    %cst_570 = arith.constant 5.120000e+02 : f32
    %914 = vector.broadcast %cst_570 : f32 to vector<2x1x1xf32>
    %915 = arith.divf %913, %914 : vector<2x1x1xf32>
    %916 = vector.broadcast %915 : vector<2x1x1xf32> to vector<2x16x32xf32>
    %917 = arith.subf %909, %916 : vector<2x16x32xf32>
    %918 = arith.mulf %917, %917 : vector<2x16x32xf32>
    %cst_571 = arith.constant dense<0.000000e+00> : vector<2x16xf32>
    %919 = vector.multi_reduction <add>, %918, %cst_571 [2] : vector<2x16x32xf32> to vector<2x16xf32>
    %920 = vector.shape_cast %919 : vector<2x16xf32> to vector<2x16x1xf32>
    %cst_572 = arith.constant dense<0.000000e+00> : vector<2x1xf32>
    %921 = vector.multi_reduction <add>, %920, %cst_572 [1] : vector<2x16x1xf32> to vector<2x1xf32>
    %922 = vector.shape_cast %921 : vector<2x1xf32> to vector<2x1x1xf32>
    %cst_573 = arith.constant 5.120000e+02 : f32
    %923 = vector.broadcast %cst_573 : f32 to vector<2x1x1xf32>
    %924 = arith.divf %922, %923 : vector<2x1x1xf32>
    %cst_574 = arith.constant 9.99999993E-9 : f32
    %925 = vector.broadcast %cst_574 : f32 to vector<2x1x1xf32>
    %926 = arith.addf %924, %925 : vector<2x1x1xf32>
    %927 = math.rsqrt %926 : vector<2x1x1xf32>
    %928 = vector.broadcast %927 : vector<2x1x1xf32> to vector<2x16x32xf32>
    %929 = arith.mulf %917, %928 : vector<2x16x32xf32>
    %930 = vector.broadcast %869 : vector<1x1x32xf32> to vector<2x16x32xf32>
    %931 = arith.mulf %929, %930 : vector<2x16x32xf32>
    %932 = vector.broadcast %870 : vector<1x1x32xf32> to vector<2x16x32xf32>
    %933 = arith.addf %931, %932 : vector<2x16x32xf32>
    %c0_575 = arith.constant 0 : index
    %c8_576 = arith.constant 8 : index
    %c0_577 = arith.constant 0 : index
    %934 = vector.load %arg87[%c0_575, %c8_576, %c0_577] : memref<2x48x32xf32, #tpu.memory_space<vmem>>, vector<2x8x32xf32>
    tpu.vector_store %arg87[%c0_575, %c8_576, %c0_577], %867 {strides = array<i32>} : memref<2x48x32xf32, #tpu.memory_space<vmem>>, vector<2x8x32xf32>,
    %cst_578 = arith.constant 0.000000e+00 : f32
    %935 = vector.broadcast %cst_578 : f32 to vector<2x8x32xf32>
    %c0_579 = arith.constant 0 : index
    %c16_580 = arith.constant 16 : index
    %c0_581 = arith.constant 0 : index
    %936 = vector.load %arg87[%c0_579, %c16_580, %c0_581] : memref<2x48x32xf32, #tpu.memory_space<vmem>>, vector<2x8x32xf32>
    tpu.vector_store %arg87[%c0_579, %c16_580, %c0_581], %935 {strides = array<i32>} : memref<2x48x32xf32, #tpu.memory_space<vmem>>, vector<2x8x32xf32>,
    %c0_582 = arith.constant 0 : index
    %c6_583 = arith.constant 6 : index
    %c0_584 = arith.constant 0 : index
    %937 = vector.load %arg87[%c0_582, %c6_583, %c0_584] : memref<2x48x32xf32, #tpu.memory_space<vmem>>, vector<2x8x32xf32>
    %938 = vector.extract_strided_slice %871 {offsets = [0, 0, 0, 0], sizes = [1, 1, 1, 32], strides = [1, 1, 1, 1]} : vector<5x1x1x32xf32> to vector<1x1x1x32xf32>
    %939 = vector.shape_cast %938 : vector<1x1x1x32xf32> to vector<1x1x32xf32>
    %940 = vector.broadcast %939 : vector<1x1x32xf32> to vector<2x8x32xf32>
    %941 = arith.mulf %937, %940 : vector<2x8x32xf32>
    %c0_585 = arith.constant 0 : index
    %c7_586 = arith.constant 7 : index
    %c0_587 = arith.constant 0 : index
    %942 = vector.load %arg87[%c0_585, %c7_586, %c0_587] : memref<2x48x32xf32, #tpu.memory_space<vmem>>, vector<2x8x32xf32>
    %943 = vector.extract_strided_slice %871 {offsets = [1, 0, 0, 0], sizes = [1, 1, 1, 32], strides = [1, 1, 1, 1]} : vector<5x1x1x32xf32> to vector<1x1x1x32xf32>
    %944 = vector.shape_cast %943 : vector<1x1x1x32xf32> to vector<1x1x32xf32>
    %945 = vector.broadcast %944 : vector<1x1x32xf32> to vector<2x8x32xf32>
    %946 = arith.mulf %942, %945 : vector<2x8x32xf32>
    %947 = arith.addf %941, %946 : vector<2x8x32xf32>
    %c0_588 = arith.constant 0 : index
    %c8_589 = arith.constant 8 : index
    %c0_590 = arith.constant 0 : index
    %948 = vector.load %arg87[%c0_588, %c8_589, %c0_590] : memref<2x48x32xf32, #tpu.memory_space<vmem>>, vector<2x8x32xf32>
    %949 = vector.extract_strided_slice %871 {offsets = [2, 0, 0, 0], sizes = [1, 1, 1, 32], strides = [1, 1, 1, 1]} : vector<5x1x1x32xf32> to vector<1x1x1x32xf32>
    %950 = vector.shape_cast %949 : vector<1x1x1x32xf32> to vector<1x1x32xf32>
    %951 = vector.broadcast %950 : vector<1x1x32xf32> to vector<2x8x32xf32>
    %952 = arith.mulf %948, %951 : vector<2x8x32xf32>
    %953 = arith.addf %947, %952 : vector<2x8x32xf32>
    %c0_591 = arith.constant 0 : index
    %c9_592 = arith.constant 9 : index
    %c0_593 = arith.constant 0 : index
    %954 = vector.load %arg87[%c0_591, %c9_592, %c0_593] : memref<2x48x32xf32, #tpu.memory_space<vmem>>, vector<2x8x32xf32>
    %955 = vector.extract_strided_slice %871 {offsets = [3, 0, 0, 0], sizes = [1, 1, 1, 32], strides = [1, 1, 1, 1]} : vector<5x1x1x32xf32> to vector<1x1x1x32xf32>
    %956 = vector.shape_cast %955 : vector<1x1x1x32xf32> to vector<1x1x32xf32>
    %957 = vector.broadcast %956 : vector<1x1x32xf32> to vector<2x8x32xf32>
    %958 = arith.mulf %954, %957 : vector<2x8x32xf32>
    %959 = arith.addf %953, %958 : vector<2x8x32xf32>
    %c0_594 = arith.constant 0 : index
    %c10_595 = arith.constant 10 : index
    %c0_596 = arith.constant 0 : index
    %960 = vector.load %arg87[%c0_594, %c10_595, %c0_596] : memref<2x48x32xf32, #tpu.memory_space<vmem>>, vector<2x8x32xf32>
    %961 = vector.extract_strided_slice %871 {offsets = [4, 0, 0, 0], sizes = [1, 1, 1, 32], strides = [1, 1, 1, 1]} : vector<5x1x1x32xf32> to vector<1x1x1x32xf32>
    %962 = vector.shape_cast %961 : vector<1x1x1x32xf32> to vector<1x1x32xf32>
    %963 = vector.broadcast %962 : vector<1x1x32xf32> to vector<2x8x32xf32>
    %964 = arith.mulf %960, %963 : vector<2x8x32xf32>
    %965 = arith.addf %959, %964 : vector<2x8x32xf32>
    %cst_597 = arith.constant dense<0.000000e+00> : vector<2x8xf32>
    %966 = vector.multi_reduction <add>, %965, %cst_597 [2] : vector<2x8x32xf32> to vector<2x8xf32>
    %967 = vector.shape_cast %966 : vector<2x8xf32> to vector<2x8x1xf32>
    %cst_598 = arith.constant dense<0.000000e+00> : vector<2x1xf32>
    %968 = vector.multi_reduction <add>, %967, %cst_598 [1] : vector<2x8x1xf32> to vector<2x1xf32>
    %969 = vector.shape_cast %968 : vector<2x1xf32> to vector<2x1x1xf32>
    %cst_599 = arith.constant 2.560000e+02 : f32
    %970 = vector.broadcast %cst_599 : f32 to vector<2x1x1xf32>
    %971 = arith.divf %969, %970 : vector<2x1x1xf32>
    %972 = vector.broadcast %971 : vector<2x1x1xf32> to vector<2x8x32xf32>
    %973 = arith.subf %965, %972 : vector<2x8x32xf32>
    %974 = arith.mulf %973, %973 : vector<2x8x32xf32>
    %cst_600 = arith.constant dense<0.000000e+00> : vector<2x8xf32>
    %975 = vector.multi_reduction <add>, %974, %cst_600 [2] : vector<2x8x32xf32> to vector<2x8xf32>
    %976 = vector.shape_cast %975 : vector<2x8xf32> to vector<2x8x1xf32>
    %cst_601 = arith.constant dense<0.000000e+00> : vector<2x1xf32>
    %977 = vector.multi_reduction <add>, %976, %cst_601 [1] : vector<2x8x1xf32> to vector<2x1xf32>
    %978 = vector.shape_cast %977 : vector<2x1xf32> to vector<2x1x1xf32>
    %cst_602 = arith.constant 2.560000e+02 : f32
    %979 = vector.broadcast %cst_602 : f32 to vector<2x1x1xf32>
    %980 = arith.divf %978, %979 : vector<2x1x1xf32>
    %cst_603 = arith.constant 9.99999993E-9 : f32
    %981 = vector.broadcast %cst_603 : f32 to vector<2x1x1xf32>
    %982 = arith.addf %980, %981 : vector<2x1x1xf32>
    %983 = math.rsqrt %982 : vector<2x1x1xf32>
    %984 = vector.broadcast %983 : vector<2x1x1xf32> to vector<2x8x32xf32>
    %985 = arith.mulf %973, %984 : vector<2x8x32xf32>
    %986 = vector.broadcast %872 : vector<1x1x32xf32> to vector<2x8x32xf32>
    %987 = arith.mulf %985, %986 : vector<2x8x32xf32>
    %988 = vector.broadcast %873 : vector<1x1x32xf32> to vector<2x8x32xf32>
    %989 = arith.addf %987, %988 : vector<2x8x32xf32>
    %990 = arith.negf %989 : vector<2x8x32xf32>
    %991 = math.exp %990 : vector<2x8x32xf32>
    %cst_604 = arith.constant 1.000000e+00 : f32
    %992 = vector.broadcast %cst_604 : f32 to vector<2x8x32xf32>
    %993 = arith.addf %992, %991 : vector<2x8x32xf32>
    %994 = arith.divf %992, %993 : vector<2x8x32xf32>
    %c0_605 = arith.constant 0 : index
    %c6_606 = arith.constant 6 : index
    %c0_607 = arith.constant 0 : index
    %995 = vector.load %arg87[%c0_605, %c6_606, %c0_607] : memref<2x48x32xf32, #tpu.memory_space<vmem>>, vector<2x8x32xf32>
    %996 = vector.extract_strided_slice %874 {offsets = [0, 0, 0, 0], sizes = [1, 1, 1, 32], strides = [1, 1, 1, 1]} : vector<5x1x1x32xf32> to vector<1x1x1x32xf32>
    %997 = vector.shape_cast %996 : vector<1x1x1x32xf32> to vector<1x1x32xf32>
    %998 = vector.broadcast %997 : vector<1x1x32xf32> to vector<2x8x32xf32>
    %999 = arith.mulf %995, %998 : vector<2x8x32xf32>
    %c0_608 = arith.constant 0 : index
    %c7_609 = arith.constant 7 : index
    %c0_610 = arith.constant 0 : index
    %1000 = vector.load %arg87[%c0_608, %c7_609, %c0_610] : memref<2x48x32xf32, #tpu.memory_space<vmem>>, vector<2x8x32xf32>
    %1001 = vector.extract_strided_slice %874 {offsets = [1, 0, 0, 0], sizes = [1, 1, 1, 32], strides = [1, 1, 1, 1]} : vector<5x1x1x32xf32> to vector<1x1x1x32xf32>
    %1002 = vector.shape_cast %1001 : vector<1x1x1x32xf32> to vector<1x1x32xf32>
    %1003 = vector.broadcast %1002 : vector<1x1x32xf32> to vector<2x8x32xf32>
    %1004 = arith.mulf %1000, %1003 : vector<2x8x32xf32>
    %1005 = arith.addf %999, %1004 : vector<2x8x32xf32>
    %c0_611 = arith.constant 0 : index
    %c8_612 = arith.constant 8 : index
    %c0_613 = arith.constant 0 : index
    %1006 = vector.load %arg87[%c0_611, %c8_612, %c0_613] : memref<2x48x32xf32, #tpu.memory_space<vmem>>, vector<2x8x32xf32>
    %1007 = vector.extract_strided_slice %874 {offsets = [2, 0, 0, 0], sizes = [1, 1, 1, 32], strides = [1, 1, 1, 1]} : vector<5x1x1x32xf32> to vector<1x1x1x32xf32>
    %1008 = vector.shape_cast %1007 : vector<1x1x1x32xf32> to vector<1x1x32xf32>
    %1009 = vector.broadcast %1008 : vector<1x1x32xf32> to vector<2x8x32xf32>
    %1010 = arith.mulf %1006, %1009 : vector<2x8x32xf32>
    %1011 = arith.addf %1005, %1010 : vector<2x8x32xf32>
    %c0_614 = arith.constant 0 : index
    %c9_615 = arith.constant 9 : index
    %c0_616 = arith.constant 0 : index
    %1012 = vector.load %arg87[%c0_614, %c9_615, %c0_616] : memref<2x48x32xf32, #tpu.memory_space<vmem>>, vector<2x8x32xf32>
    %1013 = vector.extract_strided_slice %874 {offsets = [3, 0, 0, 0], sizes = [1, 1, 1, 32], strides = [1, 1, 1, 1]} : vector<5x1x1x32xf32> to vector<1x1x1x32xf32>
    %1014 = vector.shape_cast %1013 : vector<1x1x1x32xf32> to vector<1x1x32xf32>
    %1015 = vector.broadcast %1014 : vector<1x1x32xf32> to vector<2x8x32xf32>
    %1016 = arith.mulf %1012, %1015 : vector<2x8x32xf32>
    %1017 = arith.addf %1011, %1016 : vector<2x8x32xf32>
    %c0_617 = arith.constant 0 : index
    %c10_618 = arith.constant 10 : index
    %c0_619 = arith.constant 0 : index
    %1018 = vector.load %arg87[%c0_617, %c10_618, %c0_619] : memref<2x48x32xf32, #tpu.memory_space<vmem>>, vector<2x8x32xf32>
    %1019 = vector.extract_strided_slice %874 {offsets = [4, 0, 0, 0], sizes = [1, 1, 1, 32], strides = [1, 1, 1, 1]} : vector<5x1x1x32xf32> to vector<1x1x1x32xf32>
    %1020 = vector.shape_cast %1019 : vector<1x1x1x32xf32> to vector<1x1x32xf32>
    %1021 = vector.broadcast %1020 : vector<1x1x32xf32> to vector<2x8x32xf32>
    %1022 = arith.mulf %1018, %1021 : vector<2x8x32xf32>
    %1023 = arith.addf %1017, %1022 : vector<2x8x32xf32>
    %cst_620 = arith.constant dense<0.000000e+00> : vector<2x8xf32>
    %1024 = vector.multi_reduction <add>, %1023, %cst_620 [2] : vector<2x8x32xf32> to vector<2x8xf32>
    %1025 = vector.shape_cast %1024 : vector<2x8xf32> to vector<2x8x1xf32>
    %cst_621 = arith.constant dense<0.000000e+00> : vector<2x1xf32>
    %1026 = vector.multi_reduction <add>, %1025, %cst_621 [1] : vector<2x8x1xf32> to vector<2x1xf32>
    %1027 = vector.shape_cast %1026 : vector<2x1xf32> to vector<2x1x1xf32>
    %cst_622 = arith.constant 2.560000e+02 : f32
    %1028 = vector.broadcast %cst_622 : f32 to vector<2x1x1xf32>
    %1029 = arith.divf %1027, %1028 : vector<2x1x1xf32>
    %1030 = vector.broadcast %1029 : vector<2x1x1xf32> to vector<2x8x32xf32>
    %1031 = arith.subf %1023, %1030 : vector<2x8x32xf32>
    %1032 = arith.mulf %1031, %1031 : vector<2x8x32xf32>
    %cst_623 = arith.constant dense<0.000000e+00> : vector<2x8xf32>
    %1033 = vector.multi_reduction <add>, %1032, %cst_623 [2] : vector<2x8x32xf32> to vector<2x8xf32>
    %1034 = vector.shape_cast %1033 : vector<2x8xf32> to vector<2x8x1xf32>
    %cst_624 = arith.constant dense<0.000000e+00> : vector<2x1xf32>
    %1035 = vector.multi_reduction <add>, %1034, %cst_624 [1] : vector<2x8x1xf32> to vector<2x1xf32>
    %1036 = vector.shape_cast %1035 : vector<2x1xf32> to vector<2x1x1xf32>
    %cst_625 = arith.constant 2.560000e+02 : f32
    %1037 = vector.broadcast %cst_625 : f32 to vector<2x1x1xf32>
    %1038 = arith.divf %1036, %1037 : vector<2x1x1xf32>
    %cst_626 = arith.constant 9.99999993E-9 : f32
    %1039 = vector.broadcast %cst_626 : f32 to vector<2x1x1xf32>
    %1040 = arith.addf %1038, %1039 : vector<2x1x1xf32>
    %1041 = math.rsqrt %1040 : vector<2x1x1xf32>
    %1042 = vector.broadcast %1041 : vector<2x1x1xf32> to vector<2x8x32xf32>
    %1043 = arith.mulf %1031, %1042 : vector<2x8x32xf32>
    %1044 = vector.broadcast %875 : vector<1x1x32xf32> to vector<2x8x32xf32>
    %1045 = arith.mulf %1043, %1044 : vector<2x8x32xf32>
    %1046 = vector.broadcast %876 : vector<1x1x32xf32> to vector<2x8x32xf32>
    %1047 = arith.addf %1045, %1046 : vector<2x8x32xf32>
    %1048 = tpu.concatenate %994, %1047 in 0 : vector<2x8x32xf32>, vector<2x8x32xf32> -> vector<4x8x32xf32>
    %1049 = vector.shape_cast %877 : vector<16x8xf32> to vector<1x16x8xf32>
    %1050 = vector.shape_cast %1049 : vector<1x16x8xf32> to vector<1x16x8xf32>
    %1051 = vector.broadcast %1050 : vector<1x16x8xf32> to vector<4x16x8xf32>
    "tpu.trace_start"() <{level = 10 : i32, message = "bot,btc->boc"}> : () -> ()
    %cst_627 = arith.constant dense<0.000000e+00> : vector<4x16x32xf32>
    %1052 = tpu.matmul %1051, %1048, %cst_627 {dimension_numbers = #tpu.dot_dimension_numbers<[2], [1], [1], [2], [0, 0, 0, 1, 1, 2], [0], [0]>} : vector<4x16x8xf32>, vector<4x8x32xf32>, vector<4x16x32xf32> -> vector<4x16x32xf32>
    "tpu.trace_stop"() : () -> ()
    %1053 = vector.extract_strided_slice %1052 {offsets = [0, 0, 0], sizes = [2, 16, 32], strides = [1, 1, 1]} : vector<4x16x32xf32> to vector<2x16x32xf32>
    %1054 = arith.mulf %933, %1053 : vector<2x16x32xf32>
    %1055 = vector.extract_strided_slice %1052 {offsets = [2, 0, 0], sizes = [2, 16, 32], strides = [1, 1, 1]} : vector<4x16x32xf32> to vector<2x16x32xf32>
    %1056 = arith.addf %1054, %1055 : vector<2x16x32xf32>
    %1057 = arith.addf %1056, %686 : vector<2x16x32xf32>
    %c0_628 = arith.constant 0 : index
    %c0_629 = arith.constant 0 : index
    %c0_630 = arith.constant 0 : index
    %c0_631 = arith.constant 0 : index
    %1058 = vector.load %arg74[%c0_628, %c0_629, %c0_630, %c0_631] : memref<5x1x1x32xf32, #tpu.memory_space<vmem>>, vector<5x1x1x32xf32>
    %c0_632 = arith.constant 0 : index
    %c0_633 = arith.constant 0 : index
    %c0_634 = arith.constant 0 : index
    %1059 = vector.load %arg75[%c0_632, %c0_633, %c0_634] : memref<1x1x32xf32, #tpu.memory_space<vmem>>, vector<1x1x32xf32>
    %c0_635 = arith.constant 0 : index
    %c0_636 = arith.constant 0 : index
    %c0_637 = arith.constant 0 : index
    %1060 = vector.load %arg76[%c0_635, %c0_636, %c0_637] : memref<1x1x32xf32, #tpu.memory_space<vmem>>, vector<1x1x32xf32>
    %c0_638 = arith.constant 0 : index
    %c0_639 = arith.constant 0 : index
    %c0_640 = arith.constant 0 : index
    %c0_641 = arith.constant 0 : index
    %1061 = vector.load %arg77[%c0_638, %c0_639, %c0_640, %c0_641] : memref<5x1x1x32xf32, #tpu.memory_space<vmem>>, vector<5x1x1x32xf32>
    %c0_642 = arith.constant 0 : index
    %c0_643 = arith.constant 0 : index
    %c0_644 = arith.constant 0 : index
    %1062 = vector.load %arg78[%c0_642, %c0_643, %c0_644] : memref<1x1x32xf32, #tpu.memory_space<vmem>>, vector<1x1x32xf32>
    %c0_645 = arith.constant 0 : index
    %c0_646 = arith.constant 0 : index
    %c0_647 = arith.constant 0 : index
    %1063 = vector.load %arg79[%c0_645, %c0_646, %c0_647] : memref<1x1x32xf32, #tpu.memory_space<vmem>>, vector<1x1x32xf32>
    %c0_648 = arith.constant 0 : index
    %c0_649 = arith.constant 0 : index
    %c0_650 = arith.constant 0 : index
    %c0_651 = arith.constant 0 : index
    %1064 = vector.load %arg80[%c0_648, %c0_649, %c0_650, %c0_651] : memref<5x1x1x32xf32, #tpu.memory_space<vmem>>, vector<5x1x1x32xf32>
    %c0_652 = arith.constant 0 : index
    %c0_653 = arith.constant 0 : index
    %c0_654 = arith.constant 0 : index
    %1065 = vector.load %arg81[%c0_652, %c0_653, %c0_654] : memref<1x1x32xf32, #tpu.memory_space<vmem>>, vector<1x1x32xf32>
    %c0_655 = arith.constant 0 : index
    %c0_656 = arith.constant 0 : index
    %c0_657 = arith.constant 0 : index
    %1066 = vector.load %arg82[%c0_655, %c0_656, %c0_657] : memref<1x1x32xf32, #tpu.memory_space<vmem>>, vector<1x1x32xf32>
    %c0_658 = arith.constant 0 : index
    %c0_659 = arith.constant 0 : index
    %1067 = vector.load %arg83[%c0_658, %c0_659] : memref<32x16xf32, #tpu.memory_space<vmem>>, vector<32x16xf32>
    %c0_660 = arith.constant 0 : index
    %c8_661 = arith.constant 8 : index
    %c0_662 = arith.constant 0 : index
    %1068 = vector.load %arg87[%c0_660, %c8_661, %c0_662] : memref<2x48x32xf32, #tpu.memory_space<vmem>>, vector<2x32x32xf32>
    tpu.vector_store %arg87[%c0_660, %c8_661, %c0_662], %497 {strides = array<i32>} : memref<2x48x32xf32, #tpu.memory_space<vmem>>, vector<2x32x32xf32>,
    %cst_663 = arith.constant 0.000000e+00 : f32
    %1069 = vector.broadcast %cst_663 : f32 to vector<2x8x32xf32>
    %c0_664 = arith.constant 0 : index
    %c40_665 = arith.constant 40 : index
    %c0_666 = arith.constant 0 : index
    %1070 = vector.load %arg87[%c0_664, %c40_665, %c0_666] : memref<2x48x32xf32, #tpu.memory_space<vmem>>, vector<2x8x32xf32>
    tpu.vector_store %arg87[%c0_664, %c40_665, %c0_666], %1069 {strides = array<i32>} : memref<2x48x32xf32, #tpu.memory_space<vmem>>, vector<2x8x32xf32>,
    %c0_667 = arith.constant 0 : index
    %c6_668 = arith.constant 6 : index
    %c0_669 = arith.constant 0 : index
    %1071 = vector.load %arg87[%c0_667, %c6_668, %c0_669] : memref<2x48x32xf32, #tpu.memory_space<vmem>>, vector<2x32x32xf32>
    %1072 = vector.extract_strided_slice %1058 {offsets = [0, 0, 0, 0], sizes = [1, 1, 1, 32], strides = [1, 1, 1, 1]} : vector<5x1x1x32xf32> to vector<1x1x1x32xf32>
    %1073 = vector.shape_cast %1072 : vector<1x1x1x32xf32> to vector<1x1x32xf32>
    %1074 = vector.broadcast %1073 : vector<1x1x32xf32> to vector<2x32x32xf32>
    %1075 = arith.mulf %1071, %1074 : vector<2x32x32xf32>
    %c0_670 = arith.constant 0 : index
    %c7_671 = arith.constant 7 : index
    %c0_672 = arith.constant 0 : index
    %1076 = vector.load %arg87[%c0_670, %c7_671, %c0_672] : memref<2x48x32xf32, #tpu.memory_space<vmem>>, vector<2x32x32xf32>
    %1077 = vector.extract_strided_slice %1058 {offsets = [1, 0, 0, 0], sizes = [1, 1, 1, 32], strides = [1, 1, 1, 1]} : vector<5x1x1x32xf32> to vector<1x1x1x32xf32>
    %1078 = vector.shape_cast %1077 : vector<1x1x1x32xf32> to vector<1x1x32xf32>
    %1079 = vector.broadcast %1078 : vector<1x1x32xf32> to vector<2x32x32xf32>
    %1080 = arith.mulf %1076, %1079 : vector<2x32x32xf32>
    %1081 = arith.addf %1075, %1080 : vector<2x32x32xf32>
    %c0_673 = arith.constant 0 : index
    %c8_674 = arith.constant 8 : index
    %c0_675 = arith.constant 0 : index
    %1082 = vector.load %arg87[%c0_673, %c8_674, %c0_675] : memref<2x48x32xf32, #tpu.memory_space<vmem>>, vector<2x32x32xf32>
    %1083 = vector.extract_strided_slice %1058 {offsets = [2, 0, 0, 0], sizes = [1, 1, 1, 32], strides = [1, 1, 1, 1]} : vector<5x1x1x32xf32> to vector<1x1x1x32xf32>
    %1084 = vector.shape_cast %1083 : vector<1x1x1x32xf32> to vector<1x1x32xf32>
    %1085 = vector.broadcast %1084 : vector<1x1x32xf32> to vector<2x32x32xf32>
    %1086 = arith.mulf %1082, %1085 : vector<2x32x32xf32>
    %1087 = arith.addf %1081, %1086 : vector<2x32x32xf32>
    %c0_676 = arith.constant 0 : index
    %c9_677 = arith.constant 9 : index
    %c0_678 = arith.constant 0 : index
    %1088 = vector.load %arg87[%c0_676, %c9_677, %c0_678] : memref<2x48x32xf32, #tpu.memory_space<vmem>>, vector<2x32x32xf32>
    %1089 = vector.extract_strided_slice %1058 {offsets = [3, 0, 0, 0], sizes = [1, 1, 1, 32], strides = [1, 1, 1, 1]} : vector<5x1x1x32xf32> to vector<1x1x1x32xf32>
    %1090 = vector.shape_cast %1089 : vector<1x1x1x32xf32> to vector<1x1x32xf32>
    %1091 = vector.broadcast %1090 : vector<1x1x32xf32> to vector<2x32x32xf32>
    %1092 = arith.mulf %1088, %1091 : vector<2x32x32xf32>
    %1093 = arith.addf %1087, %1092 : vector<2x32x32xf32>
    %c0_679 = arith.constant 0 : index
    %c10_680 = arith.constant 10 : index
    %c0_681 = arith.constant 0 : index
    %1094 = vector.load %arg87[%c0_679, %c10_680, %c0_681] : memref<2x48x32xf32, #tpu.memory_space<vmem>>, vector<2x32x32xf32>
    %1095 = vector.extract_strided_slice %1058 {offsets = [4, 0, 0, 0], sizes = [1, 1, 1, 32], strides = [1, 1, 1, 1]} : vector<5x1x1x32xf32> to vector<1x1x1x32xf32>
    %1096 = vector.shape_cast %1095 : vector<1x1x1x32xf32> to vector<1x1x32xf32>
    %1097 = vector.broadcast %1096 : vector<1x1x32xf32> to vector<2x32x32xf32>
    %1098 = arith.mulf %1094, %1097 : vector<2x32x32xf32>
    %1099 = arith.addf %1093, %1098 : vector<2x32x32xf32>
    %cst_682 = arith.constant dense<0.000000e+00> : vector<2x32xf32>
    %1100 = vector.multi_reduction <add>, %1099, %cst_682 [2] : vector<2x32x32xf32> to vector<2x32xf32>
    %1101 = vector.shape_cast %1100 : vector<2x32xf32> to vector<2x32x1xf32>
    %cst_683 = arith.constant dense<0.000000e+00> : vector<2x1xf32>
    %1102 = vector.multi_reduction <add>, %1101, %cst_683 [1] : vector<2x32x1xf32> to vector<2x1xf32>
    %1103 = vector.shape_cast %1102 : vector<2x1xf32> to vector<2x1x1xf32>
    %cst_684 = arith.constant 1.024000e+03 : f32
    %1104 = vector.broadcast %cst_684 : f32 to vector<2x1x1xf32>
    %1105 = arith.divf %1103, %1104 : vector<2x1x1xf32>
    %1106 = vector.broadcast %1105 : vector<2x1x1xf32> to vector<2x32x32xf32>
    %1107 = arith.subf %1099, %1106 : vector<2x32x32xf32>
    %1108 = arith.mulf %1107, %1107 : vector<2x32x32xf32>
    %cst_685 = arith.constant dense<0.000000e+00> : vector<2x32xf32>
    %1109 = vector.multi_reduction <add>, %1108, %cst_685 [2] : vector<2x32x32xf32> to vector<2x32xf32>
    %1110 = vector.shape_cast %1109 : vector<2x32xf32> to vector<2x32x1xf32>
    %cst_686 = arith.constant dense<0.000000e+00> : vector<2x1xf32>
    %1111 = vector.multi_reduction <add>, %1110, %cst_686 [1] : vector<2x32x1xf32> to vector<2x1xf32>
    %1112 = vector.shape_cast %1111 : vector<2x1xf32> to vector<2x1x1xf32>
    %cst_687 = arith.constant 1.024000e+03 : f32
    %1113 = vector.broadcast %cst_687 : f32 to vector<2x1x1xf32>
    %1114 = arith.divf %1112, %1113 : vector<2x1x1xf32>
    %cst_688 = arith.constant 9.99999993E-9 : f32
    %1115 = vector.broadcast %cst_688 : f32 to vector<2x1x1xf32>
    %1116 = arith.addf %1114, %1115 : vector<2x1x1xf32>
    %1117 = math.rsqrt %1116 : vector<2x1x1xf32>
    %1118 = vector.broadcast %1117 : vector<2x1x1xf32> to vector<2x32x32xf32>
    %1119 = arith.mulf %1107, %1118 : vector<2x32x32xf32>
    %1120 = vector.broadcast %1059 : vector<1x1x32xf32> to vector<2x32x32xf32>
    %1121 = arith.mulf %1119, %1120 : vector<2x32x32xf32>
    %1122 = vector.broadcast %1060 : vector<1x1x32xf32> to vector<2x32x32xf32>
    %1123 = arith.addf %1121, %1122 : vector<2x32x32xf32>
    %c0_689 = arith.constant 0 : index
    %c8_690 = arith.constant 8 : index
    %c0_691 = arith.constant 0 : index
    %1124 = vector.load %arg87[%c0_689, %c8_690, %c0_691] : memref<2x48x32xf32, #tpu.memory_space<vmem>>, vector<2x16x32xf32>
    tpu.vector_store %arg87[%c0_689, %c8_690, %c0_691], %1057 {strides = array<i32>} : memref<2x48x32xf32, #tpu.memory_space<vmem>>, vector<2x16x32xf32>,
    %cst_692 = arith.constant 0.000000e+00 : f32
    %1125 = vector.broadcast %cst_692 : f32 to vector<2x8x32xf32>
    %c0_693 = arith.constant 0 : index
    %c24_694 = arith.constant 24 : index
    %c0_695 = arith.constant 0 : index
    %1126 = vector.load %arg87[%c0_693, %c24_694, %c0_695] : memref<2x48x32xf32, #tpu.memory_space<vmem>>, vector<2x8x32xf32>
    tpu.vector_store %arg87[%c0_693, %c24_694, %c0_695], %1125 {strides = array<i32>} : memref<2x48x32xf32, #tpu.memory_space<vmem>>, vector<2x8x32xf32>,
    %c0_696 = arith.constant 0 : index
    %c6_697 = arith.constant 6 : index
    %c0_698 = arith.constant 0 : index
    %1127 = vector.load %arg87[%c0_696, %c6_697, %c0_698] : memref<2x48x32xf32, #tpu.memory_space<vmem>>, vector<2x16x32xf32>
    %1128 = vector.extract_strided_slice %1061 {offsets = [0, 0, 0, 0], sizes = [1, 1, 1, 32], strides = [1, 1, 1, 1]} : vector<5x1x1x32xf32> to vector<1x1x1x32xf32>
    %1129 = vector.shape_cast %1128 : vector<1x1x1x32xf32> to vector<1x1x32xf32>
    %1130 = vector.broadcast %1129 : vector<1x1x32xf32> to vector<2x16x32xf32>
    %1131 = arith.mulf %1127, %1130 : vector<2x16x32xf32>
    %c0_699 = arith.constant 0 : index
    %c7_700 = arith.constant 7 : index
    %c0_701 = arith.constant 0 : index
    %1132 = vector.load %arg87[%c0_699, %c7_700, %c0_701] : memref<2x48x32xf32, #tpu.memory_space<vmem>>, vector<2x16x32xf32>
    %1133 = vector.extract_strided_slice %1061 {offsets = [1, 0, 0, 0], sizes = [1, 1, 1, 32], strides = [1, 1, 1, 1]} : vector<5x1x1x32xf32> to vector<1x1x1x32xf32>
    %1134 = vector.shape_cast %1133 : vector<1x1x1x32xf32> to vector<1x1x32xf32>
    %1135 = vector.broadcast %1134 : vector<1x1x32xf32> to vector<2x16x32xf32>
    %1136 = arith.mulf %1132, %1135 : vector<2x16x32xf32>
    %1137 = arith.addf %1131, %1136 : vector<2x16x32xf32>
    %c0_702 = arith.constant 0 : index
    %c8_703 = arith.constant 8 : index
    %c0_704 = arith.constant 0 : index
    %1138 = vector.load %arg87[%c0_702, %c8_703, %c0_704] : memref<2x48x32xf32, #tpu.memory_space<vmem>>, vector<2x16x32xf32>
    %1139 = vector.extract_strided_slice %1061 {offsets = [2, 0, 0, 0], sizes = [1, 1, 1, 32], strides = [1, 1, 1, 1]} : vector<5x1x1x32xf32> to vector<1x1x1x32xf32>
    %1140 = vector.shape_cast %1139 : vector<1x1x1x32xf32> to vector<1x1x32xf32>
    %1141 = vector.broadcast %1140 : vector<1x1x32xf32> to vector<2x16x32xf32>
    %1142 = arith.mulf %1138, %1141 : vector<2x16x32xf32>
    %1143 = arith.addf %1137, %1142 : vector<2x16x32xf32>
    %c0_705 = arith.constant 0 : index
    %c9_706 = arith.constant 9 : index
    %c0_707 = arith.constant 0 : index
    %1144 = vector.load %arg87[%c0_705, %c9_706, %c0_707] : memref<2x48x32xf32, #tpu.memory_space<vmem>>, vector<2x16x32xf32>
    %1145 = vector.extract_strided_slice %1061 {offsets = [3, 0, 0, 0], sizes = [1, 1, 1, 32], strides = [1, 1, 1, 1]} : vector<5x1x1x32xf32> to vector<1x1x1x32xf32>
    %1146 = vector.shape_cast %1145 : vector<1x1x1x32xf32> to vector<1x1x32xf32>
    %1147 = vector.broadcast %1146 : vector<1x1x32xf32> to vector<2x16x32xf32>
    %1148 = arith.mulf %1144, %1147 : vector<2x16x32xf32>
    %1149 = arith.addf %1143, %1148 : vector<2x16x32xf32>
    %c0_708 = arith.constant 0 : index
    %c10_709 = arith.constant 10 : index
    %c0_710 = arith.constant 0 : index
    %1150 = vector.load %arg87[%c0_708, %c10_709, %c0_710] : memref<2x48x32xf32, #tpu.memory_space<vmem>>, vector<2x16x32xf32>
    %1151 = vector.extract_strided_slice %1061 {offsets = [4, 0, 0, 0], sizes = [1, 1, 1, 32], strides = [1, 1, 1, 1]} : vector<5x1x1x32xf32> to vector<1x1x1x32xf32>
    %1152 = vector.shape_cast %1151 : vector<1x1x1x32xf32> to vector<1x1x32xf32>
    %1153 = vector.broadcast %1152 : vector<1x1x32xf32> to vector<2x16x32xf32>
    %1154 = arith.mulf %1150, %1153 : vector<2x16x32xf32>
    %1155 = arith.addf %1149, %1154 : vector<2x16x32xf32>
    %cst_711 = arith.constant dense<0.000000e+00> : vector<2x16xf32>
    %1156 = vector.multi_reduction <add>, %1155, %cst_711 [2] : vector<2x16x32xf32> to vector<2x16xf32>
    %1157 = vector.shape_cast %1156 : vector<2x16xf32> to vector<2x16x1xf32>
    %cst_712 = arith.constant dense<0.000000e+00> : vector<2x1xf32>
    %1158 = vector.multi_reduction <add>, %1157, %cst_712 [1] : vector<2x16x1xf32> to vector<2x1xf32>
    %1159 = vector.shape_cast %1158 : vector<2x1xf32> to vector<2x1x1xf32>
    %cst_713 = arith.constant 5.120000e+02 : f32
    %1160 = vector.broadcast %cst_713 : f32 to vector<2x1x1xf32>
    %1161 = arith.divf %1159, %1160 : vector<2x1x1xf32>
    %1162 = vector.broadcast %1161 : vector<2x1x1xf32> to vector<2x16x32xf32>
    %1163 = arith.subf %1155, %1162 : vector<2x16x32xf32>
    %1164 = arith.mulf %1163, %1163 : vector<2x16x32xf32>
    %cst_714 = arith.constant dense<0.000000e+00> : vector<2x16xf32>
    %1165 = vector.multi_reduction <add>, %1164, %cst_714 [2] : vector<2x16x32xf32> to vector<2x16xf32>
    %1166 = vector.shape_cast %1165 : vector<2x16xf32> to vector<2x16x1xf32>
    %cst_715 = arith.constant dense<0.000000e+00> : vector<2x1xf32>
    %1167 = vector.multi_reduction <add>, %1166, %cst_715 [1] : vector<2x16x1xf32> to vector<2x1xf32>
    %1168 = vector.shape_cast %1167 : vector<2x1xf32> to vector<2x1x1xf32>
    %cst_716 = arith.constant 5.120000e+02 : f32
    %1169 = vector.broadcast %cst_716 : f32 to vector<2x1x1xf32>
    %1170 = arith.divf %1168, %1169 : vector<2x1x1xf32>
    %cst_717 = arith.constant 9.99999993E-9 : f32
    %1171 = vector.broadcast %cst_717 : f32 to vector<2x1x1xf32>
    %1172 = arith.addf %1170, %1171 : vector<2x1x1xf32>
    %1173 = math.rsqrt %1172 : vector<2x1x1xf32>
    %1174 = vector.broadcast %1173 : vector<2x1x1xf32> to vector<2x16x32xf32>
    %1175 = arith.mulf %1163, %1174 : vector<2x16x32xf32>
    %1176 = vector.broadcast %1062 : vector<1x1x32xf32> to vector<2x16x32xf32>
    %1177 = arith.mulf %1175, %1176 : vector<2x16x32xf32>
    %1178 = vector.broadcast %1063 : vector<1x1x32xf32> to vector<2x16x32xf32>
    %1179 = arith.addf %1177, %1178 : vector<2x16x32xf32>
    %1180 = arith.negf %1179 : vector<2x16x32xf32>
    %1181 = math.exp %1180 : vector<2x16x32xf32>
    %cst_718 = arith.constant 1.000000e+00 : f32
    %1182 = vector.broadcast %cst_718 : f32 to vector<2x16x32xf32>
    %1183 = arith.addf %1182, %1181 : vector<2x16x32xf32>
    %1184 = arith.divf %1182, %1183 : vector<2x16x32xf32>
    %c0_719 = arith.constant 0 : index
    %c6_720 = arith.constant 6 : index
    %c0_721 = arith.constant 0 : index
    %1185 = vector.load %arg87[%c0_719, %c6_720, %c0_721] : memref<2x48x32xf32, #tpu.memory_space<vmem>>, vector<2x16x32xf32>
    %1186 = vector.extract_strided_slice %1064 {offsets = [0, 0, 0, 0], sizes = [1, 1, 1, 32], strides = [1, 1, 1, 1]} : vector<5x1x1x32xf32> to vector<1x1x1x32xf32>
    %1187 = vector.shape_cast %1186 : vector<1x1x1x32xf32> to vector<1x1x32xf32>
    %1188 = vector.broadcast %1187 : vector<1x1x32xf32> to vector<2x16x32xf32>
    %1189 = arith.mulf %1185, %1188 : vector<2x16x32xf32>
    %c0_722 = arith.constant 0 : index
    %c7_723 = arith.constant 7 : index
    %c0_724 = arith.constant 0 : index
    %1190 = vector.load %arg87[%c0_722, %c7_723, %c0_724] : memref<2x48x32xf32, #tpu.memory_space<vmem>>, vector<2x16x32xf32>
    %1191 = vector.extract_strided_slice %1064 {offsets = [1, 0, 0, 0], sizes = [1, 1, 1, 32], strides = [1, 1, 1, 1]} : vector<5x1x1x32xf32> to vector<1x1x1x32xf32>
    %1192 = vector.shape_cast %1191 : vector<1x1x1x32xf32> to vector<1x1x32xf32>
    %1193 = vector.broadcast %1192 : vector<1x1x32xf32> to vector<2x16x32xf32>
    %1194 = arith.mulf %1190, %1193 : vector<2x16x32xf32>
    %1195 = arith.addf %1189, %1194 : vector<2x16x32xf32>
    %c0_725 = arith.constant 0 : index
    %c8_726 = arith.constant 8 : index
    %c0_727 = arith.constant 0 : index
    %1196 = vector.load %arg87[%c0_725, %c8_726, %c0_727] : memref<2x48x32xf32, #tpu.memory_space<vmem>>, vector<2x16x32xf32>
    %1197 = vector.extract_strided_slice %1064 {offsets = [2, 0, 0, 0], sizes = [1, 1, 1, 32], strides = [1, 1, 1, 1]} : vector<5x1x1x32xf32> to vector<1x1x1x32xf32>
    %1198 = vector.shape_cast %1197 : vector<1x1x1x32xf32> to vector<1x1x32xf32>
    %1199 = vector.broadcast %1198 : vector<1x1x32xf32> to vector<2x16x32xf32>
    %1200 = arith.mulf %1196, %1199 : vector<2x16x32xf32>
    %1201 = arith.addf %1195, %1200 : vector<2x16x32xf32>
    %c0_728 = arith.constant 0 : index
    %c9_729 = arith.constant 9 : index
    %c0_730 = arith.constant 0 : index
    %1202 = vector.load %arg87[%c0_728, %c9_729, %c0_730] : memref<2x48x32xf32, #tpu.memory_space<vmem>>, vector<2x16x32xf32>
    %1203 = vector.extract_strided_slice %1064 {offsets = [3, 0, 0, 0], sizes = [1, 1, 1, 32], strides = [1, 1, 1, 1]} : vector<5x1x1x32xf32> to vector<1x1x1x32xf32>
    %1204 = vector.shape_cast %1203 : vector<1x1x1x32xf32> to vector<1x1x32xf32>
    %1205 = vector.broadcast %1204 : vector<1x1x32xf32> to vector<2x16x32xf32>
    %1206 = arith.mulf %1202, %1205 : vector<2x16x32xf32>
    %1207 = arith.addf %1201, %1206 : vector<2x16x32xf32>
    %c0_731 = arith.constant 0 : index
    %c10_732 = arith.constant 10 : index
    %c0_733 = arith.constant 0 : index
    %1208 = vector.load %arg87[%c0_731, %c10_732, %c0_733] : memref<2x48x32xf32, #tpu.memory_space<vmem>>, vector<2x16x32xf32>
    %1209 = vector.extract_strided_slice %1064 {offsets = [4, 0, 0, 0], sizes = [1, 1, 1, 32], strides = [1, 1, 1, 1]} : vector<5x1x1x32xf32> to vector<1x1x1x32xf32>
    %1210 = vector.shape_cast %1209 : vector<1x1x1x32xf32> to vector<1x1x32xf32>
    %1211 = vector.broadcast %1210 : vector<1x1x32xf32> to vector<2x16x32xf32>
    %1212 = arith.mulf %1208, %1211 : vector<2x16x32xf32>
    %1213 = arith.addf %1207, %1212 : vector<2x16x32xf32>
    %cst_734 = arith.constant dense<0.000000e+00> : vector<2x16xf32>
    %1214 = vector.multi_reduction <add>, %1213, %cst_734 [2] : vector<2x16x32xf32> to vector<2x16xf32>
    %1215 = vector.shape_cast %1214 : vector<2x16xf32> to vector<2x16x1xf32>
    %cst_735 = arith.constant dense<0.000000e+00> : vector<2x1xf32>
    %1216 = vector.multi_reduction <add>, %1215, %cst_735 [1] : vector<2x16x1xf32> to vector<2x1xf32>
    %1217 = vector.shape_cast %1216 : vector<2x1xf32> to vector<2x1x1xf32>
    %cst_736 = arith.constant 5.120000e+02 : f32
    %1218 = vector.broadcast %cst_736 : f32 to vector<2x1x1xf32>
    %1219 = arith.divf %1217, %1218 : vector<2x1x1xf32>
    %1220 = vector.broadcast %1219 : vector<2x1x1xf32> to vector<2x16x32xf32>
    %1221 = arith.subf %1213, %1220 : vector<2x16x32xf32>
    %1222 = arith.mulf %1221, %1221 : vector<2x16x32xf32>
    %cst_737 = arith.constant dense<0.000000e+00> : vector<2x16xf32>
    %1223 = vector.multi_reduction <add>, %1222, %cst_737 [2] : vector<2x16x32xf32> to vector<2x16xf32>
    %1224 = vector.shape_cast %1223 : vector<2x16xf32> to vector<2x16x1xf32>
    %cst_738 = arith.constant dense<0.000000e+00> : vector<2x1xf32>
    %1225 = vector.multi_reduction <add>, %1224, %cst_738 [1] : vector<2x16x1xf32> to vector<2x1xf32>
    %1226 = vector.shape_cast %1225 : vector<2x1xf32> to vector<2x1x1xf32>
    %cst_739 = arith.constant 5.120000e+02 : f32
    %1227 = vector.broadcast %cst_739 : f32 to vector<2x1x1xf32>
    %1228 = arith.divf %1226, %1227 : vector<2x1x1xf32>
    %cst_740 = arith.constant 9.99999993E-9 : f32
    %1229 = vector.broadcast %cst_740 : f32 to vector<2x1x1xf32>
    %1230 = arith.addf %1228, %1229 : vector<2x1x1xf32>
    %1231 = math.rsqrt %1230 : vector<2x1x1xf32>
    %1232 = vector.broadcast %1231 : vector<2x1x1xf32> to vector<2x16x32xf32>
    %1233 = arith.mulf %1221, %1232 : vector<2x16x32xf32>
    %1234 = vector.broadcast %1065 : vector<1x1x32xf32> to vector<2x16x32xf32>
    %1235 = arith.mulf %1233, %1234 : vector<2x16x32xf32>
    %1236 = vector.broadcast %1066 : vector<1x1x32xf32> to vector<2x16x32xf32>
    %1237 = arith.addf %1235, %1236 : vector<2x16x32xf32>
    %1238 = tpu.concatenate %1184, %1237 in 0 : vector<2x16x32xf32>, vector<2x16x32xf32> -> vector<4x16x32xf32>
    %1239 = vector.shape_cast %1067 : vector<32x16xf32> to vector<1x32x16xf32>
    %1240 = vector.shape_cast %1239 : vector<1x32x16xf32> to vector<1x32x16xf32>
    %1241 = vector.broadcast %1240 : vector<1x32x16xf32> to vector<4x32x16xf32>
    "tpu.trace_start"() <{level = 10 : i32, message = "bot,btc->boc"}> : () -> ()
    %cst_741 = arith.constant dense<0.000000e+00> : vector<4x32x32xf32>
    %1242 = tpu.matmul %1241, %1238, %cst_741 {dimension_numbers = #tpu.dot_dimension_numbers<[2], [1], [1], [2], [0, 0, 0, 1, 1, 2], [0], [0]>} : vector<4x32x16xf32>, vector<4x16x32xf32>, vector<4x32x32xf32> -> vector<4x32x32xf32>
    "tpu.trace_stop"() : () -> ()
    %1243 = vector.extract_strided_slice %1242 {offsets = [0, 0, 0], sizes = [2, 32, 32], strides = [1, 1, 1]} : vector<4x32x32xf32> to vector<2x32x32xf32>
    %1244 = arith.mulf %1123, %1243 : vector<2x32x32xf32>
    %1245 = vector.extract_strided_slice %1242 {offsets = [2, 0, 0], sizes = [2, 32, 32], strides = [1, 1, 1]} : vector<4x32x32xf32> to vector<2x32x32xf32>
    %1246 = arith.addf %1244, %1245 : vector<2x32x32xf32>
    %1247 = arith.addf %1246, %497 : vector<2x32x32xf32>
    %c0_742 = arith.constant 0 : index
    %c0_743 = arith.constant 0 : index
    %1248 = vector.load %arg84[%c0_742, %c0_743] : memref<32x32xf32, #tpu.memory_space<vmem>>, vector<32x32xf32>
    %c0_744 = arith.constant 0 : index
    %c0_745 = arith.constant 0 : index
    %1249 = vector.load %arg85[%c0_744, %c0_745] : memref<1x32xf32, #tpu.memory_space<vmem>>, vector<1x32xf32>
    %1250 = vector.shape_cast %1247 : vector<2x32x32xf32> to vector<64x32xf32>
    %cst_746 = arith.constant dense<0.000000e+00> : vector<64x32xf32>
    %1251 = tpu.matmul %1250, %1248, %cst_746 {dimension_numbers = #tpu.dot_dimension_numbers<[1], [0], [0], [1], [0, 0, 1, 1], [], []>} : vector<64x32xf32>, vector<32x32xf32>, vector<64x32xf32> -> vector<64x32xf32>
    %1252 = vector.broadcast %1249 : vector<1x32xf32> to vector<64x32xf32>
    %1253 = arith.addf %1251, %1252 : vector<64x32xf32>
    %1254 = vector.shape_cast %1253 : vector<64x32xf32> to vector<2x32x32xf32>
    %1255 = arith.addf %1254, %15 : vector<2x32x32xf32>
    %1256 = tpu.transpose %1255, [0, 2, 1] : vector<2x32x32xf32> -> vector<2x32x32xf32>
    %c0_747 = arith.constant 0 : index
    %c0_748 = arith.constant 0 : index
    %c0_749 = arith.constant 0 : index
    %1257 = vector.load %arg86[%c0_747, %c0_748, %c0_749] : memref<2x32x32xf32, #tpu.memory_space<vmem>>, vector<2x32x32xf32>
    tpu.vector_store %arg86[%c0_747, %c0_748, %c0_749], %1256 {strides = array<i32>} : memref<2x32x32xf32, #tpu.memory_space<vmem>>, vector<2x32x32xf32>,
    return
  }
}

</mosaic_0001>

<llo_original>
// kernel: tdf_block_forward.1
$region0: #{tdf_block_forward.1}
  #allocation0 [shape = 'u32[]', space=smem, size = 0x4, offset = 0x4, fixed_abs, tag = 'smem constant byte address 0x4 - core index']
  #allocation1 [shape = 'u32[72,128]{1,0:T(1,128)}', space=vmem, size = 0x9000, scoped, tag = 'internal scratch']
  #allocation2 [shape = 'f32[2,48,32]{2,1,0:T(8,128)}', space=vmem, size = 0xc000, scoped, tag = 'scratch operand']
  %s0 = inlined_call_operand.smem [shape: u32[87], index: -1, kind: input, shape index: {}]
  %s1 = sld [smem:[%s0]]
  %s2 = scalar_lea.smem %s0, 1
  %s3 = sld [smem:[%s2]]
  %s4 = scalar_lea.smem %s0, 2
  %s5 = sld [smem:[%s4]]
  %s6 = scalar_lea.smem %s0, 3
  %s7 = sld [smem:[%s6]]
  %s8 = scalar_lea.smem %s0, 4
  %s9 = sld [smem:[%s8]]
  %s10 = scalar_lea.smem %s0, 5
  %s11 = sld [smem:[%s10]]
  %s12 = scalar_lea.smem %s0, 6
  %s13 = sld [smem:[%s12]]
  %s14 = scalar_lea.smem %s0, 7
  %s15 = sld [smem:[%s14]]
  %s16 = scalar_lea.smem %s0, 8
  %s17 = sld [smem:[%s16]]
  %s18 = scalar_lea.smem %s0, 9
  %s19 = sld [smem:[%s18]]
  %s20 = scalar_lea.smem %s0, 10
  %s21 = sld [smem:[%s20]]
  %s22 = scalar_lea.smem %s0, 11
  %s23 = sld [smem:[%s22]]
  %s24 = scalar_lea.smem %s0, 12
  %s25 = sld [smem:[%s24]]
  %s26 = scalar_lea.smem %s0, 13
  %s27 = sld [smem:[%s26]]
  %s28 = scalar_lea.smem %s0, 14
  %s29 = sld [smem:[%s28]]
  %s30 = scalar_lea.smem %s0, 15
  %s31 = sld [smem:[%s30]]
  %s32 = scalar_lea.smem %s0, 16
  %s33 = sld [smem:[%s32]]
  %s34 = scalar_lea.smem %s0, 17
  %s35 = sld [smem:[%s34]]
  %s36 = scalar_lea.smem %s0, 18
  %s37 = sld [smem:[%s36]]
  %s38 = scalar_lea.smem %s0, 19
  %s39 = sld [smem:[%s38]]
  %s40 = scalar_lea.smem %s0, 20
  %s41 = sld [smem:[%s40]]
  %s42 = scalar_lea.smem %s0, 21
  %s43 = sld [smem:[%s42]]
  %s44 = scalar_lea.smem %s0, 22
  %s45 = sld [smem:[%s44]]
  %s46 = scalar_lea.smem %s0, 23
  %s47 = sld [smem:[%s46]]
  %s48 = scalar_lea.smem %s0, 24
  %s49 = sld [smem:[%s48]]
  %s50 = scalar_lea.smem %s0, 25
  %s51 = sld [smem:[%s50]]
  %s52 = scalar_lea.smem %s0, 26
  %s53 = sld [smem:[%s52]]
  %s54 = scalar_lea.smem %s0, 27
  %s55 = sld [smem:[%s54]]
  %s56 = scalar_lea.smem %s0, 28
  %s57 = sld [smem:[%s56]]
  %s58 = scalar_lea.smem %s0, 29
  %s59 = sld [smem:[%s58]]
  %s60 = scalar_lea.smem %s0, 30
  %s61 = sld [smem:[%s60]]
  %s62 = scalar_lea.smem %s0, 31
  %s63 = sld [smem:[%s62]]
  %s64 = scalar_lea.smem %s0, 32
  %s65 = sld [smem:[%s64]]
  %s66 = scalar_lea.smem %s0, 33
  %s67 = sld [smem:[%s66]]
  %s68 = scalar_lea.smem %s0, 34
  %s69 = sld [smem:[%s68]]
  %s70 = scalar_lea.smem %s0, 35
  %s71 = sld [smem:[%s70]]
  %s72 = scalar_lea.smem %s0, 36
  %s73 = sld [smem:[%s72]]
  %s74 = scalar_lea.smem %s0, 37
  %s75 = sld [smem:[%s74]]
  %s76 = scalar_lea.smem %s0, 38
  %s77 = sld [smem:[%s76]]
  %s78 = scalar_lea.smem %s0, 39
  %s79 = sld [smem:[%s78]]
  %s80 = scalar_lea.smem %s0, 40
  %s81 = sld [smem:[%s80]]
  %s82 = scalar_lea.smem %s0, 41
  %s83 = sld [smem:[%s82]]
  %s84 = scalar_lea.smem %s0, 42
  %s85 = sld [smem:[%s84]]
  %s86 = scalar_lea.smem %s0, 43
  %s87 = sld [smem:[%s86]]
  %s88 = scalar_lea.smem %s0, 44
  %s89 = sld [smem:[%s88]]
  %s90 = scalar_lea.smem %s0, 45
  %s91 = sld [smem:[%s90]]
  %s92 = scalar_lea.smem %s0, 46
  %s93 = sld [smem:[%s92]]
  %s94 = scalar_lea.smem %s0, 47
  %s95 = sld [smem:[%s94]]
  %s96 = scalar_lea.smem %s0, 48
  %s97 = sld [smem:[%s96]]
  %s98 = scalar_lea.smem %s0, 49
  %s99 = sld [smem:[%s98]]
  %s100 = scalar_lea.smem %s0, 50
  %s101 = sld [smem:[%s100]]
  %s102 = scalar_lea.smem %s0, 51
  %s103 = sld [smem:[%s102]]
  %s104 = scalar_lea.smem %s0, 52
  %s105 = sld [smem:[%s104]]
  %s106 = scalar_lea.smem %s0, 53
  %s107 = sld [smem:[%s106]]
  %s108 = scalar_lea.smem %s0, 54
  %s109 = sld [smem:[%s108]]
  %s110 = scalar_lea.smem %s0, 55
  %s111 = sld [smem:[%s110]]
  %s112 = scalar_lea.smem %s0, 56
  %s113 = sld [smem:[%s112]]
  %s114 = scalar_lea.smem %s0, 57
  %s115 = sld [smem:[%s114]]
  %s116 = scalar_lea.smem %s0, 58
  %s117 = sld [smem:[%s116]]
  %s118 = scalar_lea.smem %s0, 59
  %s119 = sld [smem:[%s118]]
  %s120 = scalar_lea.smem %s0, 60
  %s121 = sld [smem:[%s120]]
  %s122 = scalar_lea.smem %s0, 61
  %s123 = sld [smem:[%s122]]
  %s124 = scalar_lea.smem %s0, 62
  %s125 = sld [smem:[%s124]]
  %s126 = scalar_lea.smem %s0, 63
  %s127 = sld [smem:[%s126]]
  %s128 = scalar_lea.smem %s0, 64
  %s129 = sld [smem:[%s128]]
  %s130 = scalar_lea.smem %s0, 65
  %s131 = sld [smem:[%s130]]
  %s132 = scalar_lea.smem %s0, 66
  %s133 = sld [smem:[%s132]]
  %s134 = scalar_lea.smem %s0, 67
  %s135 = sld [smem:[%s134]]
  %s136 = scalar_lea.smem %s0, 68
  %s137 = sld [smem:[%s136]]
  %s138 = scalar_lea.smem %s0, 69
  %s139 = sld [smem:[%s138]]
  %s140 = scalar_lea.smem %s0, 70
  %s141 = sld [smem:[%s140]]
  %s142 = scalar_lea.smem %s0, 71
  %s143 = sld [smem:[%s142]]
  %s144 = scalar_lea.smem %s0, 72
  %s145 = sld [smem:[%s144]]
  %s146 = scalar_lea.smem %s0, 73
  %s147 = sld [smem:[%s146]]
  %s148 = scalar_lea.smem %s0, 74
  %s149 = sld [smem:[%s148]]
  %s150 = scalar_lea.smem %s0, 75
  %s151 = sld [smem:[%s150]]
  %s152 = scalar_lea.smem %s0, 76
  %s153 = sld [smem:[%s152]]
  %s154 = scalar_lea.smem %s0, 77
  %s155 = sld [smem:[%s154]]
  %s156 = scalar_lea.smem %s0, 78
  %s157 = sld [smem:[%s156]]
  %s158 = scalar_lea.smem %s0, 79
  %s159 = sld [smem:[%s158]]
  %s160 = scalar_lea.smem %s0, 80
  %s161 = sld [smem:[%s160]]
  %s162 = scalar_lea.smem %s0, 81
  %s163 = sld [smem:[%s162]]
  %s164 = scalar_lea.smem %s0, 82
  %s165 = sld [smem:[%s164]]
  %s166 = scalar_lea.smem %s0, 83
  %s167 = sld [smem:[%s166]]
  %s168 = scalar_lea.smem %s0, 84
  %s169 = sld [smem:[%s168]]
  %s170 = scalar_lea.smem %s0, 85
  %s171 = sld [smem:[%s170]]
  %s172 = scalar_lea.smem %s0, 86
  %s173 = sld [smem:[%s172]]
  %s174 = sld [smem:[#allocation0]]
  $region570: #{tdf_block_forward.1} parent=0
    _
  %s176 = ssub.s32 1, %s174
  %s177 = scalar_select 0, %s176, %s174
  $region1: #{tdf_block_forward.1} parent=0
    #allocation3 [shape = 'u8[512]{0}', space=vmem, size = 0x400, scoped, tag = 'input window, operand 1, single buffered']
    #allocation4 [shape = 's32[1]{0}', space=sflag, size = 0x4, scoped, tag = 'scoped memory for tdf_block_forward.1']
    #allocation5 [shape = 's32[1]{0}', space=sflag, size = 0x4, scoped, tag = 'scoped memory for tdf_block_forward.1']
    #allocation6 [shape = 'u8[512]{0}', space=vmem, size = 0x400, scoped, tag = 'input window, operand 2, single buffered']
    #allocation7 [shape = 's32[1]{0}', space=sflag, size = 0x4, scoped, tag = 'scoped memory for tdf_block_forward.1']
    #allocation8 [shape = 'u8[512]{0}', space=vmem, size = 0x400, scoped, tag = 'input window, operand 3, single buffered']
    #allocation9 [shape = 'u8[512]{0}', space=vmem, size = 0x400, scoped, tag = 'input window, operand 5, single buffered']
    #allocation10 [shape = 's32[1]{0}', space=sflag, size = 0x4, scoped, tag = 'scoped memory for tdf_block_forward.1']
    #allocation11 [shape = 'u8[512]{0}', space=vmem, size = 0x400, scoped, tag = 'input window, operand 7, single buffered']
    #allocation12 [shape = 'u8[512]{0}', space=vmem, size = 0x400, scoped, tag = 'input window, operand 8, single buffered']
    #allocation13 [shape = 's32[1]{0}', space=sflag, size = 0x4, scoped, tag = 'scoped memory for tdf_block_forward.1']
    #allocation14 [shape = 'u8[512]{0}', space=vmem, size = 0x400, scoped, tag = 'input window, operand 10, single buffered']
    #allocation15 [shape = 'u8[512]{0}', space=vmem, size = 0x400, scoped, tag = 'input window, operand 11, single buffered']
    #allocation16 [shape = 's32[1]{0}', space=sflag, size = 0x4, scoped, tag = 'scoped memory for tdf_block_forward.1']
    #allocation17 [shape = 'u8[512]{0}', space=vmem, size = 0x400, scoped, tag = 'input window, operand 12, single buffered']
    #allocation18 [shape = 'u8[512]{0}', space=vmem, size = 0x400, scoped, tag = 'input window, operand 15, single buffered']
    #allocation19 [shape = 's32[1]{0}', space=sflag, size = 0x4, scoped, tag = 'scoped memory for tdf_block_forward.1']
    #allocation20 [shape = 'u8[512]{0}', space=vmem, size = 0x400, scoped, tag = 'input window, operand 16, single buffered']
    #allocation21 [shape = 'u8[512]{0}', space=vmem, size = 0x400, scoped, tag = 'input window, operand 17, single buffered']
    #allocation22 [shape = 's32[1]{0}', space=sflag, size = 0x4, scoped, tag = 'scoped memory for tdf_block_forward.1']
    #allocation23 [shape = 'u8[4096]{0}', space=vmem, size = 0x1000, scoped, tag = 'input window, operand 18, single buffered']
    #allocation24 [shape = 'u8[4096]{0}', space=vmem, size = 0x1000, scoped, tag = 'input window, operand 19, single buffered']
    #allocation25 [shape = 's32[1]{0}', space=sflag, size = 0x4, scoped, tag = 'scoped memory for tdf_block_forward.1']
    #allocation26 [shape = 'u8[4096]{0}', space=vmem, size = 0x1000, scoped, tag = 'input window, operand 20, single buffered']
    #allocation27 [shape = 'u8[512]{0}', space=vmem, size = 0x400, scoped, tag = 'input window, operand 24, single buffered']
    #allocation28 [shape = 's32[1]{0}', space=sflag, size = 0x4, scoped, tag = 'scoped memory for tdf_block_forward.1']
    #allocation29 [shape = 'u8[512]{0}', space=vmem, size = 0x400, scoped, tag = 'input window, operand 26, single buffered']
    #allocation30 [shape = 'u8[512]{0}', space=vmem, size = 0x400, scoped, tag = 'input window, operand 27, single buffered']
    #allocation31 [shape = 's32[1]{0}', space=sflag, size = 0x4, scoped, tag = 'scoped memory for tdf_block_forward.1']
    #allocation32 [shape = 'u8[512]{0}', space=vmem, size = 0x400, scoped, tag = 'input window, operand 28, single buffered']
    #allocation33 [shape = 'u8[512]{0}', space=vmem, size = 0x400, scoped, tag = 'input window, operand 30, single buffered']
    #allocation34 [shape = 's32[1]{0}', space=sflag, size = 0x4, scoped, tag = 'scoped memory for tdf_block_forward.1']
    #allocation35 [shape = 'u8[512]{0}', space=vmem, size = 0x400, scoped, tag = 'input window, operand 32, single buffered']
    #allocation36 [shape = 'u8[512]{0}', space=vmem, size = 0x400, scoped, tag = 'input window, operand 33, single buffered']
    #allocation37 [shape = 's32[1]{0}', space=sflag, size = 0x4, scoped, tag = 'scoped memory for tdf_block_forward.1']
    #allocation38 [shape = 'u8[512]{0}', space=vmem, size = 0x400, scoped, tag = 'input window, operand 34, single buffered']
    #allocation39 [shape = 'u8[512]{0}', space=vmem, size = 0x400, scoped, tag = 'input window, operand 36, single buffered']
    #allocation40 [shape = 's32[1]{0}', space=sflag, size = 0x4, scoped, tag = 'scoped memory for tdf_block_forward.1']
    #allocation41 [shape = 'u8[512]{0}', space=vmem, size = 0x400, scoped, tag = 'input window, operand 37, single buffered']
    #allocation42 [shape = 'u8[512]{0}', space=vmem, size = 0x400, scoped, tag = 'input window, operand 39, single buffered']
    #allocation43 [shape = 's32[1]{0}', space=sflag, size = 0x4, scoped, tag = 'scoped memory for tdf_block_forward.1']
    #allocation44 [shape = 'u8[512]{0}', space=vmem, size = 0x400, scoped, tag = 'input window, operand 40, single buffered']
    #allocation45 [shape = 'u8[512]{0}', space=vmem, size = 0x400, scoped, tag = 'input window, operand 42, single buffered']
    #allocation46 [shape = 's32[1]{0}', space=sflag, size = 0x4, scoped, tag = 'scoped memory for tdf_block_forward.1']
    #allocation47 [shape = 'u8[512]{0}', space=vmem, size = 0x400, scoped, tag = 'input window, operand 43, single buffered']
    #allocation48 [shape = 'u8[512]{0}', space=vmem, size = 0x400, scoped, tag = 'input window, operand 46, single buffered']
    #allocation49 [shape = 's32[1]{0}', space=sflag, size = 0x4, scoped, tag = 'scoped memory for tdf_block_forward.1']
    #allocation50 [shape = 'u8[512]{0}', space=vmem, size = 0x400, scoped, tag = 'input window, operand 47, single buffered']
    #allocation51 [shape = 'u8[512]{0}', space=vmem, size = 0x400, scoped, tag = 'input window, operand 49, single buffered']
    #allocation52 [shape = 's32[1]{0}', space=sflag, size = 0x4, scoped, tag = 'scoped memory for tdf_block_forward.1']
    #allocation53 [shape = 'u8[512]{0}', space=vmem, size = 0x400, scoped, tag = 'input window, operand 50, single buffered']
    #allocation54 [shape = 'u8[512]{0}', space=vmem, size = 0x400, scoped, tag = 'input window, operand 52, single buffered']
    #allocation55 [shape = 's32[1]{0}', space=sflag, size = 0x4, scoped, tag = 'scoped memory for tdf_block_forward.1']
    #allocation56 [shape = 'u8[512]{0}', space=vmem, size = 0x400, scoped, tag = 'input window, operand 53, single buffered']
    #allocation57 [shape = 'u8[512]{0}', space=vmem, size = 0x400, scoped, tag = 'input window, operand 56, single buffered']
    #allocation58 [shape = 's32[1]{0}', space=sflag, size = 0x4, scoped, tag = 'scoped memory for tdf_block_forward.1']
    #allocation59 [shape = 'u8[512]{0}', space=vmem, size = 0x400, scoped, tag = 'input window, operand 57, single buffered']
    #allocation60 [shape = 'u8[512]{0}', space=vmem, size = 0x400, scoped, tag = 'input window, operand 59, single buffered']
    #allocation61 [shape = 's32[1]{0}', space=sflag, size = 0x4, scoped, tag = 'scoped memory for tdf_block_forward.1']
    #allocation62 [shape = 'u8[512]{0}', space=vmem, size = 0x400, scoped, tag = 'input window, operand 60, single buffered']
    #allocation63 [shape = 'u8[512]{0}', space=vmem, size = 0x400, scoped, tag = 'input window, operand 62, single buffered']
    #allocation64 [shape = 's32[1]{0}', space=sflag, size = 0x4, scoped, tag = 'scoped memory for tdf_block_forward.1']
    #allocation65 [shape = 'u8[512]{0}', space=vmem, size = 0x400, scoped, tag = 'input window, operand 63, single buffered']
    #allocation66 [shape = 'u8[512]{0}', space=vmem, size = 0x400, scoped, tag = 'input window, operand 65, single buffered']
    #allocation67 [shape = 's32[1]{0}', space=sflag, size = 0x4, scoped, tag = 'scoped memory for tdf_block_forward.1']
    #allocation68 [shape = 'u8[512]{0}', space=vmem, size = 0x400, scoped, tag = 'input window, operand 66, single buffered']
    #allocation69 [shape = 'u8[512]{0}', space=vmem, size = 0x400, scoped, tag = 'input window, operand 68, single buffered']
    #allocation70 [shape = 's32[1]{0}', space=sflag, size = 0x4, scoped, tag = 'scoped memory for tdf_block_forward.1']
    #allocation71 [shape = 'u8[512]{0}', space=vmem, size = 0x400, scoped, tag = 'input window, operand 69, single buffered']
    #allocation72 [shape = 'u8[512]{0}', space=vmem, size = 0x400, scoped, tag = 'input window, operand 71, single buffered']
    #allocation73 [shape = 's32[1]{0}', space=sflag, size = 0x4, scoped, tag = 'scoped memory for tdf_block_forward.1']
    #allocation74 [shape = 'u8[512]{0}', space=vmem, size = 0x400, scoped, tag = 'input window, operand 72, single buffered']
    #allocation75 [shape = 'u8[512]{0}', space=vmem, size = 0x400, scoped, tag = 'input window, operand 75, single buffered']
    #allocation76 [shape = 's32[1]{0}', space=sflag, size = 0x4, scoped, tag = 'scoped memory for tdf_block_forward.1']
    #allocation77 [shape = 'u8[512]{0}', space=vmem, size = 0x400, scoped, tag = 'input window, operand 76, single buffered']
    #allocation78 [shape = 'u8[512]{0}', space=vmem, size = 0x400, scoped, tag = 'input window, operand 78, single buffered']
    #allocation79 [shape = 's32[1]{0}', space=sflag, size = 0x4, scoped, tag = 'scoped memory for tdf_block_forward.1']
    #allocation80 [shape = 'u8[512]{0}', space=vmem, size = 0x400, scoped, tag = 'input window, operand 79, single buffered']
    #allocation81 [shape = 'u8[512]{0}', space=vmem, size = 0x400, scoped, tag = 'input window, operand 81, single buffered']
    #allocation82 [shape = 's32[1]{0}', space=sflag, size = 0x4, scoped, tag = 'scoped memory for tdf_block_forward.1']
    #allocation83 [shape = 'u8[512]{0}', space=vmem, size = 0x400, scoped, tag = 'input window, operand 82, single buffered']
    #allocation84 [shape = 'u8[512]{0}', space=vmem, size = 0x400, scoped, tag = 'input window, operand 85, single buffered']
    #allocation85 [shape = 's32[1]{0}', space=sflag, size = 0x4, scoped, tag = 'scoped memory for tdf_block_forward.1']
    #allocation86 [shape = 'u8[32768]{0}', space=vmem, size = 0x8000, scoped, tag = 'output window, operand 0, single buffered']
    %178 = vsyncpa [#allocation4], 0
    %179 = vsyncpa [#allocation7], 0
    %180 = vsyncpa [#allocation10], 0
    %181 = vsyncpa [#allocation13], 0
    %182 = vsyncpa [#allocation16], 0
    %183 = vsyncpa [#allocation19], 0
    %184 = vsyncpa [#allocation22], 0
    %185 = vsyncpa [#allocation25], 0
    %186 = vsyncpa [#allocation28], 0
    %187 = vsyncpa [#allocation31], 0
    %188 = vsyncpa [#allocation34], 0
    %189 = vsyncpa [#allocation37], 0
    %190 = vsyncpa [#allocation40], 0
    %191 = vsyncpa [#allocation43], 0
    %192 = vsyncpa [#allocation46], 0
    %193 = vsyncpa [#allocation49], 0
    %194 = vsyncpa [#allocation52], 0
    %195 = vsyncpa [#allocation55], 0
    %196 = vsyncpa [#allocation58], 0
    %197 = vsyncpa [#allocation61], 0
    %198 = vsyncpa [#allocation64], 0
    %199 = vsyncpa [#allocation67], 0
    %200 = vsyncpa [#allocation70], 0
    %201 = vsyncpa [#allocation73], 0
    %202 = vsyncpa [#allocation76], 0
    %203 = vsyncpa [#allocation79], 0
    %204 = vsyncpa [#allocation82], 0
    %205 = vsyncpa [#allocation85], 0
    %206 = vsyncpa [#allocation5], 0
    // Predicated region
    $region2: #{tdf_block_forward.1} parent=1 // pred_check
      _
    $region3: #{tdf_block_forward.1} parent=1 // pred_check_branch
      %208 = sbr.rel (0) target = $region5
    $region4: #{tdf_block_forward.1} parent=1 // pred_region
      _
    $region5: #{tdf_block_forward.1} parent=1 // pred_fallthru
      _
    // Predicated region
    $region6: #{tdf_block_forward.1} parent=1 // pred_check
      _
    $region7: #{tdf_block_forward.1} parent=1 // pred_check_branch
      %210 = sbr.rel (0) target = $region9
    $region8: #{tdf_block_forward.1} parent=1 // pred_region
      %212 = vsyncadd [#allocation4], 0
      %s214 = sshll.u32 %s3, 4
      %s215 = int_to_ptr.hbm [resolvable:$true] %s214
      %s216 = sshll.u32 [#allocation3], 4
      %s217 = int_to_ptr.vmem [resolvable:$true] %s216
      %219 = dma.hbm_to_vmem [thread:$0]  %s215, 16, %s217, [#allocation4]
    $region9: #{tdf_block_forward.1} parent=1 // pred_fallthru
      _
    // Predicated region
    $region10: #{tdf_block_forward.1} parent=1 // pred_check
      _
    $region11: #{tdf_block_forward.1} parent=1 // pred_check_branch
      %221 = sbr.rel (0) target = $region13
    $region12: #{tdf_block_forward.1} parent=1 // pred_region
      %223 = vsyncadd [#allocation7], 0
      %s225 = sshll.u32 %s5, 4
      %s226 = int_to_ptr.hbm [resolvable:$true] %s225
      %s227 = sshll.u32 [#allocation6], 4
      %s228 = int_to_ptr.vmem [resolvable:$true] %s227
      %230 = dma.hbm_to_vmem [thread:$0]  %s226, 16, %s228, [#allocation7]
    $region13: #{tdf_block_forward.1} parent=1 // pred_fallthru
      _
    // Predicated region
    $region14: #{tdf_block_forward.1} parent=1 // pred_check
      _
    $region15: #{tdf_block_forward.1} parent=1 // pred_check_branch
      %232 = sbr.rel (0) target = $region17
    $region16: #{tdf_block_forward.1} parent=1 // pred_region
      %234 = vsyncadd [#allocation7], 0
      %s236 = sshll.u32 %s7, 4
      %s237 = int_to_ptr.hbm [resolvable:$true] %s236
      %s238 = sshll.u32 [#allocation8], 4
      %s239 = int_to_ptr.vmem [resolvable:$true] %s238
      %241 = dma.hbm_to_vmem [thread:$0]  %s237, 16, %s239, [#allocation7]
    $region17: #{tdf_block_forward.1} parent=1 // pred_fallthru
      _
    // Predicated region
    $region18: #{tdf_block_forward.1} parent=1 // pred_check
      _
    $region19: #{tdf_block_forward.1} parent=1 // pred_check_branch
      %243 = sbr.rel (0) target = $region21
    $region20: #{tdf_block_forward.1} parent=1 // pred_region
      _
    $region21: #{tdf_block_forward.1} parent=1 // pred_fallthru
      _
    // Predicated region
    $region22: #{tdf_block_forward.1} parent=1 // pred_check
      _
    $region23: #{tdf_block_forward.1} parent=1 // pred_check_branch
      %245 = sbr.rel (0) target = $region25
    $region24: #{tdf_block_forward.1} parent=1 // pred_region
      %247 = vsyncadd [#allocation10], 0
      %s249 = sshll.u32 %s11, 4
      %s250 = int_to_ptr.hbm [resolvable:$true] %s249
      %s251 = sshll.u32 [#allocation9], 4
      %s252 = int_to_ptr.vmem [resolvable:$true] %s251
      %254 = dma.hbm_to_vmem [thread:$0]  %s250, 16, %s252, [#allocation10]
    $region25: #{tdf_block_forward.1} parent=1 // pred_fallthru
      _
    // Predicated region
    $region26: #{tdf_block_forward.1} parent=1 // pred_check
      _
    $region27: #{tdf_block_forward.1} parent=1 // pred_check_branch
      %256 = sbr.rel (0) target = $region29
    $region28: #{tdf_block_forward.1} parent=1 // pred_region
      _
    $region29: #{tdf_block_forward.1} parent=1 // pred_fallthru
      _
    // Predicated region
    $region30: #{tdf_block_forward.1} parent=1 // pred_check
      _
    $region31: #{tdf_block_forward.1} parent=1 // pred_check_branch
      %258 = sbr.rel (0) target = $region33
    $region32: #{tdf_block_forward.1} parent=1 // pred_region
      %260 = vsyncadd [#allocation10], 0
      %s262 = sshll.u32 %s15, 4
      %s263 = int_to_ptr.hbm [resolvable:$true] %s262
      %s264 = sshll.u32 [#allocation11], 4
      %s265 = int_to_ptr.vmem [resolvable:$true] %s264
      %267 = dma.hbm_to_vmem [thread:$0]  %s263, 16, %s265, [#allocation10]
    $region33: #{tdf_block_forward.1} parent=1 // pred_fallthru
      _
    // Predicated region
    $region34: #{tdf_block_forward.1} parent=1 // pred_check
      _
    $region35: #{tdf_block_forward.1} parent=1 // pred_check_branch
      %269 = sbr.rel (0) target = $region37
    $region36: #{tdf_block_forward.1} parent=1 // pred_region
      %271 = vsyncadd [#allocation13], 0
      %s273 = sshll.u32 %s17, 4
      %s274 = int_to_ptr.hbm [resolvable:$true] %s273
      %s275 = sshll.u32 [#allocation12], 4
      %s276 = int_to_ptr.vmem [resolvable:$true] %s275
      %278 = dma.hbm_to_vmem [thread:$0]  %s274, 16, %s276, [#allocation13]
    $region37: #{tdf_block_forward.1} parent=1 // pred_fallthru
      _
    // Predicated region
    $region38: #{tdf_block_forward.1} parent=1 // pred_check
      _
    $region39: #{tdf_block_forward.1} parent=1 // pred_check_branch
      %280 = sbr.rel (0) target = $region41
    $region40: #{tdf_block_forward.1} parent=1 // pred_region
      _
    $region41: #{tdf_block_forward.1} parent=1 // pred_fallthru
      _
    // Predicated region
    $region42: #{tdf_block_forward.1} parent=1 // pred_check
      _
    $region43: #{tdf_block_forward.1} parent=1 // pred_check_branch
      %282 = sbr.rel (0) target = $region45
    $region44: #{tdf_block_forward.1} parent=1 // pred_region
      %284 = vsyncadd [#allocation13], 0
      %s286 = sshll.u32 %s21, 4
      %s287 = int_to_ptr.hbm [resolvable:$true] %s286
      %s288 = sshll.u32 [#allocation14], 4
      %s289 = int_to_ptr.vmem [resolvable:$true] %s288
      %291 = dma.hbm_to_vmem [thread:$0]  %s287, 16, %s289, [#allocation13]
    $region45: #{tdf_block_forward.1} parent=1 // pred_fallthru
      _
    // Predicated region
    $region46: #{tdf_block_forward.1} parent=1 // pred_check
      _
    $region47: #{tdf_block_forward.1} parent=1 // pred_check_branch
      %293 = sbr.rel (0) target = $region49
    $region48: #{tdf_block_forward.1} parent=1 // pred_region
      %295 = vsyncadd [#allocation16], 0
      %s297 = sshll.u32 %s23, 4
      %s298 = int_to_ptr.hbm [resolvable:$true] %s297
      %s299 = sshll.u32 [#allocation15], 4
      %s300 = int_to_ptr.vmem [resolvable:$true] %s299
      %302 = dma.hbm_to_vmem [thread:$0]  %s298, 16, %s300, [#allocation16]
    $region49: #{tdf_block_forward.1} parent=1 // pred_fallthru
      _
    // Predicated region
    $region50: #{tdf_block_forward.1} parent=1 // pred_check
      _
    $region51: #{tdf_block_forward.1} parent=1 // pred_check_branch
      %304 = sbr.rel (0) target = $region53
    $region52: #{tdf_block_forward.1} parent=1 // pred_region
      %306 = vsyncadd [#allocation16], 0
      %s308 = sshll.u32 %s25, 4
      %s309 = int_to_ptr.hbm [resolvable:$true] %s308
      %s310 = sshll.u32 [#allocation17], 4
      %s311 = int_to_ptr.vmem [resolvable:$true] %s310
      %313 = dma.hbm_to_vmem [thread:$0]  %s309, 16, %s311, [#allocation16]
    $region53: #{tdf_block_forward.1} parent=1 // pred_fallthru
      _
    // Predicated region
    $region54: #{tdf_block_forward.1} parent=1 // pred_check
      _
    $region55: #{tdf_block_forward.1} parent=1 // pred_check_branch
      %315 = sbr.rel (0) target = $region57
    $region56: #{tdf_block_forward.1} parent=1 // pred_region
      _
    $region57: #{tdf_block_forward.1} parent=1 // pred_fallthru
      _
    // Predicated region
    $region58: #{tdf_block_forward.1} parent=1 // pred_check
      _
    $region59: #{tdf_block_forward.1} parent=1 // pred_check_branch
      %317 = sbr.rel (0) target = $region61
    $region60: #{tdf_block_forward.1} parent=1 // pred_region
      _
    $region61: #{tdf_block_forward.1} parent=1 // pred_fallthru
      _
    // Predicated region
    $region62: #{tdf_block_forward.1} parent=1 // pred_check
      _
    $region63: #{tdf_block_forward.1} parent=1 // pred_check_branch
      %319 = sbr.rel (0) target = $region65
    $region64: #{tdf_block_forward.1} parent=1 // pred_region
      %321 = vsyncadd [#allocation19], 0
      %s323 = sshll.u32 %s31, 4
      %s324 = int_to_ptr.hbm [resolvable:$true] %s323
      %s325 = sshll.u32 [#allocation18], 4
      %s326 = int_to_ptr.vmem [resolvable:$true] %s325
      %328 = dma.hbm_to_vmem [thread:$0]  %s324, 16, %s326, [#allocation19]
    $region65: #{tdf_block_forward.1} parent=1 // pred_fallthru
      _
    // Predicated region
    $region66: #{tdf_block_forward.1} parent=1 // pred_check
      _
    $region67: #{tdf_block_forward.1} parent=1 // pred_check_branch
      %330 = sbr.rel (0) target = $region69
    $region68: #{tdf_block_forward.1} parent=1 // pred_region
      %332 = vsyncadd [#allocation19], 0
      %s334 = sshll.u32 %s33, 4
      %s335 = int_to_ptr.hbm [resolvable:$true] %s334
      %s336 = sshll.u32 [#allocation20], 4
      %s337 = int_to_ptr.vmem [resolvable:$true] %s336
      %339 = dma.hbm_to_vmem [thread:$0]  %s335, 16, %s337, [#allocation19]
    $region69: #{tdf_block_forward.1} parent=1 // pred_fallthru
      _
    // Predicated region
    $region70: #{tdf_block_forward.1} parent=1 // pred_check
      _
    $region71: #{tdf_block_forward.1} parent=1 // pred_check_branch
      %341 = sbr.rel (0) target = $region73
    $region72: #{tdf_block_forward.1} parent=1 // pred_region
      %343 = vsyncadd [#allocation22], 0
      %s345 = sshll.u32 %s35, 4
      %s346 = int_to_ptr.hbm [resolvable:$true] %s345
      %s347 = sshll.u32 [#allocation21], 4
      %s348 = int_to_ptr.vmem [resolvable:$true] %s347
      %350 = dma.hbm_to_vmem [thread:$0]  %s346, 16, %s348, [#allocation22]
    $region73: #{tdf_block_forward.1} parent=1 // pred_fallthru
      _
    // Predicated region
    $region74: #{tdf_block_forward.1} parent=1 // pred_check
      _
    $region75: #{tdf_block_forward.1} parent=1 // pred_check_branch
      %352 = sbr.rel (0) target = $region77
    $region76: #{tdf_block_forward.1} parent=1 // pred_region
      %354 = vsyncadd [#allocation22], 0
      %s356 = sshll.u32 %s37, 4
      %s357 = int_to_ptr.hbm [resolvable:$true] %s356
      %s358 = sshll.u32 [#allocation23], 4
      %s359 = int_to_ptr.vmem [resolvable:$true] %s358
      %361 = dma.hbm_to_vmem [thread:$0]  %s357, 128, %s359, [#allocation22]
    $region77: #{tdf_block_forward.1} parent=1 // pred_fallthru
      _
    // Predicated region
    $region78: #{tdf_block_forward.1} parent=1 // pred_check
      _
    $region79: #{tdf_block_forward.1} parent=1 // pred_check_branch
      %363 = sbr.rel (0) target = $region81
    $region80: #{tdf_block_forward.1} parent=1 // pred_region
      %365 = vsyncadd [#allocation25], 0
      %s367 = sshll.u32 %s39, 4
      %s368 = int_to_ptr.hbm [resolvable:$true] %s367
      %s369 = sshll.u32 [#allocation24], 4
      %s370 = int_to_ptr.vmem [resolvable:$true] %s369
      %372 = dma.hbm_to_vmem [thread:$0]  %s368, 128, %s370, [#allocation25]
    $region81: #{tdf_block_forward.1} parent=1 // pred_fallthru
      _
    // Predicated region
    $region82: #{tdf_block_forward.1} parent=1 // pred_check
      _
    $region83: #{tdf_block_forward.1} parent=1 // pred_check_branch
      %374 = sbr.rel (0) target = $region85
    $region84: #{tdf_block_forward.1} parent=1 // pred_region
      %376 = vsyncadd [#allocation25], 0
      %s378 = sshll.u32 %s41, 4
      %s379 = int_to_ptr.hbm [resolvable:$true] %s378
      %s380 = sshll.u32 [#allocation26], 4
      %s381 = int_to_ptr.vmem [resolvable:$true] %s380
      %383 = dma.hbm_to_vmem [thread:$0]  %s379, 128, %s381, [#allocation25]
    $region85: #{tdf_block_forward.1} parent=1 // pred_fallthru
      _
    // Predicated region
    $region86: #{tdf_block_forward.1} parent=1 // pred_check
      _
    $region87: #{tdf_block_forward.1} parent=1 // pred_check_branch
      %385 = sbr.rel (0) target = $region89
    $region88: #{tdf_block_forward.1} parent=1 // pred_region
      _
    $region89: #{tdf_block_forward.1} parent=1 // pred_fallthru
      _
    // Predicated region
    $region90: #{tdf_block_forward.1} parent=1 // pred_check
      _
    $region91: #{tdf_block_forward.1} parent=1 // pred_check_branch
      %387 = sbr.rel (0) target = $region93
    $region92: #{tdf_block_forward.1} parent=1 // pred_region
      _
    $region93: #{tdf_block_forward.1} parent=1 // pred_fallthru
      _
    // Predicated region
    $region94: #{tdf_block_forward.1} parent=1 // pred_check
      _
    $region95: #{tdf_block_forward.1} parent=1 // pred_check_branch
      %389 = sbr.rel (0) target = $region97
    $region96: #{tdf_block_forward.1} parent=1 // pred_region
      _
    $region97: #{tdf_block_forward.1} parent=1 // pred_fallthru
      _
    // Predicated region
    $region98: #{tdf_block_forward.1} parent=1 // pred_check
      _
    $region99: #{tdf_block_forward.1} parent=1 // pred_check_branch
      %391 = sbr.rel (0) target = $region101
    $region100: #{tdf_block_forward.1} parent=1 // pred_region
      %393 = vsyncadd [#allocation28], 0
      %s395 = sshll.u32 %s49, 4
      %s396 = int_to_ptr.hbm [resolvable:$true] %s395
      %s397 = sshll.u32 [#allocation27], 4
      %s398 = int_to_ptr.vmem [resolvable:$true] %s397
      %400 = dma.hbm_to_vmem [thread:$0]  %s396, 16, %s398, [#allocation28]
    $region101: #{tdf_block_forward.1} parent=1 // pred_fallthru
      _
    // Predicated region
    $region102: #{tdf_block_forward.1} parent=1 // pred_check
      _
    $region103: #{tdf_block_forward.1} parent=1 // pred_check_branch
      %402 = sbr.rel (0) target = $region105
    $region104: #{tdf_block_forward.1} parent=1 // pred_region
      _
    $region105: #{tdf_block_forward.1} parent=1 // pred_fallthru
      _
    // Predicated region
    $region106: #{tdf_block_forward.1} parent=1 // pred_check
      _
    $region107: #{tdf_block_forward.1} parent=1 // pred_check_branch
      %404 = sbr.rel (0) target = $region109
    $region108: #{tdf_block_forward.1} parent=1 // pred_region
      %406 = vsyncadd [#allocation28], 0
      %s408 = sshll.u32 %s53, 4
      %s409 = int_to_ptr.hbm [resolvable:$true] %s408
      %s410 = sshll.u32 [#allocation29], 4
      %s411 = int_to_ptr.vmem [resolvable:$true] %s410
      %413 = dma.hbm_to_vmem [thread:$0]  %s409, 16, %s411, [#allocation28]
    $region109: #{tdf_block_forward.1} parent=1 // pred_fallthru
      _
    // Predicated region
    $region110: #{tdf_block_forward.1} parent=1 // pred_check
      _
    $region111: #{tdf_block_forward.1} parent=1 // pred_check_branch
      %415 = sbr.rel (0) target = $region113
    $region112: #{tdf_block_forward.1} parent=1 // pred_region
      %417 = vsyncadd [#allocation31], 0
      %s419 = sshll.u32 %s55, 4
      %s420 = int_to_ptr.hbm [resolvable:$true] %s419
      %s421 = sshll.u32 [#allocation30], 4
      %s422 = int_to_ptr.vmem [resolvable:$true] %s421
      %424 = dma.hbm_to_vmem [thread:$0]  %s420, 16, %s422, [#allocation31]
    $region113: #{tdf_block_forward.1} parent=1 // pred_fallthru
      _
    // Predicated region
    $region114: #{tdf_block_forward.1} parent=1 // pred_check
      _
    $region115: #{tdf_block_forward.1} parent=1 // pred_check_branch
      %426 = sbr.rel (0) target = $region117
    $region116: #{tdf_block_forward.1} parent=1 // pred_region
      %428 = vsyncadd [#allocation31], 0
      %s430 = sshll.u32 %s57, 4
      %s431 = int_to_ptr.hbm [resolvable:$true] %s430
      %s432 = sshll.u32 [#allocation32], 4
      %s433 = int_to_ptr.vmem [resolvable:$true] %s432
      %435 = dma.hbm_to_vmem [thread:$0]  %s431, 16, %s433, [#allocation31]
    $region117: #{tdf_block_forward.1} parent=1 // pred_fallthru
      _
    // Predicated region
    $region118: #{tdf_block_forward.1} parent=1 // pred_check
      _
    $region119: #{tdf_block_forward.1} parent=1 // pred_check_branch
      %437 = sbr.rel (0) target = $region121
    $region120: #{tdf_block_forward.1} parent=1 // pred_region
      _
    $region121: #{tdf_block_forward.1} parent=1 // pred_fallthru
      _
    // Predicated region
    $region122: #{tdf_block_forward.1} parent=1 // pred_check
      _
    $region123: #{tdf_block_forward.1} parent=1 // pred_check_branch
      %439 = sbr.rel (0) target = $region125
    $region124: #{tdf_block_forward.1} parent=1 // pred_region
      %441 = vsyncadd [#allocation34], 0
      %s443 = sshll.u32 %s61, 4
      %s444 = int_to_ptr.hbm [resolvable:$true] %s443
      %s445 = sshll.u32 [#allocation33], 4
      %s446 = int_to_ptr.vmem [resolvable:$true] %s445
      %448 = dma.hbm_to_vmem [thread:$0]  %s444, 16, %s446, [#allocation34]
    $region125: #{tdf_block_forward.1} parent=1 // pred_fallthru
      _
    // Predicated region
    $region126: #{tdf_block_forward.1} parent=1 // pred_check
      _
    $region127: #{tdf_block_forward.1} parent=1 // pred_check_branch
      %450 = sbr.rel (0) target = $region129
    $region128: #{tdf_block_forward.1} parent=1 // pred_region
      _
    $region129: #{tdf_block_forward.1} parent=1 // pred_fallthru
      _
    // Predicated region
    $region130: #{tdf_block_forward.1} parent=1 // pred_check
      _
    $region131: #{tdf_block_forward.1} parent=1 // pred_check_branch
      %452 = sbr.rel (0) target = $region133
    $region132: #{tdf_block_forward.1} parent=1 // pred_region
      %454 = vsyncadd [#allocation34], 0
      %s456 = sshll.u32 %s65, 4
      %s457 = int_to_ptr.hbm [resolvable:$true] %s456
      %s458 = sshll.u32 [#allocation35], 4
      %s459 = int_to_ptr.vmem [resolvable:$true] %s458
      %461 = dma.hbm_to_vmem [thread:$0]  %s457, 16, %s459, [#allocation34]
    $region133: #{tdf_block_forward.1} parent=1 // pred_fallthru
      _
    // Predicated region
    $region134: #{tdf_block_forward.1} parent=1 // pred_check
      _
    $region135: #{tdf_block_forward.1} parent=1 // pred_check_branch
      %463 = sbr.rel (0) target = $region137
    $region136: #{tdf_block_forward.1} parent=1 // pred_region
      %465 = vsyncadd [#allocation37], 0
      %s467 = sshll.u32 %s67, 4
      %s468 = int_to_ptr.hbm [resolvable:$true] %s467
      %s469 = sshll.u32 [#allocation36], 4
      %s470 = int_to_ptr.vmem [resolvable:$true] %s469
      %472 = dma.hbm_to_vmem [thread:$0]  %s468, 16, %s470, [#allocation37]
    $region137: #{tdf_block_forward.1} parent=1 // pred_fallthru
      _
    // Predicated region
    $region138: #{tdf_block_forward.1} parent=1 // pred_check
      _
    $region139: #{tdf_block_forward.1} parent=1 // pred_check_branch
      %474 = sbr.rel (0) target = $region141
    $region140: #{tdf_block_forward.1} parent=1 // pred_region
      %476 = vsyncadd [#allocation37], 0
      %s478 = sshll.u32 %s69, 4
      %s479 = int_to_ptr.hbm [resolvable:$true] %s478
      %s480 = sshll.u32 [#allocation38], 4
      %s481 = int_to_ptr.vmem [resolvable:$true] %s480
      %483 = dma.hbm_to_vmem [thread:$0]  %s479, 16, %s481, [#allocation37]
    $region141: #{tdf_block_forward.1} parent=1 // pred_fallthru
      _
    // Predicated region
    $region142: #{tdf_block_forward.1} parent=1 // pred_check
      _
    $region143: #{tdf_block_forward.1} parent=1 // pred_check_branch
      %485 = sbr.rel (0) target = $region145
    $region144: #{tdf_block_forward.1} parent=1 // pred_region
      _
    $region145: #{tdf_block_forward.1} parent=1 // pred_fallthru
      _
    // Predicated region
    $region146: #{tdf_block_forward.1} parent=1 // pred_check
      _
    $region147: #{tdf_block_forward.1} parent=1 // pred_check_branch
      %487 = sbr.rel (0) target = $region149
    $region148: #{tdf_block_forward.1} parent=1 // pred_region
      %489 = vsyncadd [#allocation40], 0
      %s491 = sshll.u32 %s73, 4
      %s492 = int_to_ptr.hbm [resolvable:$true] %s491
      %s493 = sshll.u32 [#allocation39], 4
      %s494 = int_to_ptr.vmem [resolvable:$true] %s493
      %496 = dma.hbm_to_vmem [thread:$0]  %s492, 16, %s494, [#allocation40]
    $region149: #{tdf_block_forward.1} parent=1 // pred_fallthru
      _
    // Predicated region
    $region150: #{tdf_block_forward.1} parent=1 // pred_check
      _
    $region151: #{tdf_block_forward.1} parent=1 // pred_check_branch
      %498 = sbr.rel (0) target = $region153
    $region152: #{tdf_block_forward.1} parent=1 // pred_region
      %500 = vsyncadd [#allocation40], 0
      %s502 = sshll.u32 %s75, 4
      %s503 = int_to_ptr.hbm [resolvable:$true] %s502
      %s504 = sshll.u32 [#allocation41], 4
      %s505 = int_to_ptr.vmem [resolvable:$true] %s504
      %507 = dma.hbm_to_vmem [thread:$0]  %s503, 16, %s505, [#allocation40]
    $region153: #{tdf_block_forward.1} parent=1 // pred_fallthru
      _
    // Predicated region
    $region154: #{tdf_block_forward.1} parent=1 // pred_check
      _
    $region155: #{tdf_block_forward.1} parent=1 // pred_check_branch
      %509 = sbr.rel (0) target = $region157
    $region156: #{tdf_block_forward.1} parent=1 // pred_region
      _
    $region157: #{tdf_block_forward.1} parent=1 // pred_fallthru
      _
    // Predicated region
    $region158: #{tdf_block_forward.1} parent=1 // pred_check
      _
    $region159: #{tdf_block_forward.1} parent=1 // pred_check_branch
      %511 = sbr.rel (0) target = $region161
    $region160: #{tdf_block_forward.1} parent=1 // pred_region
      %513 = vsyncadd [#allocation43], 0
      %s515 = sshll.u32 %s79, 4
      %s516 = int_to_ptr.hbm [resolvable:$true] %s515
      %s517 = sshll.u32 [#allocation42], 4
      %s518 = int_to_ptr.vmem [resolvable:$true] %s517
      %520 = dma.hbm_to_vmem [thread:$0]  %s516, 16, %s518, [#allocation43]
    $region161: #{tdf_block_forward.1} parent=1 // pred_fallthru
      _
    // Predicated region
    $region162: #{tdf_block_forward.1} parent=1 // pred_check
      _
    $region163: #{tdf_block_forward.1} parent=1 // pred_check_branch
      %522 = sbr.rel (0) target = $region165
    $region164: #{tdf_block_forward.1} parent=1 // pred_region
      %524 = vsyncadd [#allocation43], 0
      %s526 = sshll.u32 %s81, 4
      %s527 = int_to_ptr.hbm [resolvable:$true] %s526
      %s528 = sshll.u32 [#allocation44], 4
      %s529 = int_to_ptr.vmem [resolvable:$true] %s528
      %531 = dma.hbm_to_vmem [thread:$0]  %s527, 16, %s529, [#allocation43]
    $region165: #{tdf_block_forward.1} parent=1 // pred_fallthru
      _
    // Predicated region
    $region166: #{tdf_block_forward.1} parent=1 // pred_check
      _
    $region167: #{tdf_block_forward.1} parent=1 // pred_check_branch
      %533 = sbr.rel (0) target = $region169
    $region168: #{tdf_block_forward.1} parent=1 // pred_region
      _
    $region169: #{tdf_block_forward.1} parent=1 // pred_fallthru
      _
    // Predicated region
    $region170: #{tdf_block_forward.1} parent=1 // pred_check
      _
    $region171: #{tdf_block_forward.1} parent=1 // pred_check_branch
      %535 = sbr.rel (0) target = $region173
    $region172: #{tdf_block_forward.1} parent=1 // pred_region
      %537 = vsyncadd [#allocation46], 0
      %s539 = sshll.u32 %s85, 4
      %s540 = int_to_ptr.hbm [resolvable:$true] %s539
      %s541 = sshll.u32 [#allocation45], 4
      %s542 = int_to_ptr.vmem [resolvable:$true] %s541
      %544 = dma.hbm_to_vmem [thread:$0]  %s540, 16, %s542, [#allocation46]
    $region173: #{tdf_block_forward.1} parent=1 // pred_fallthru
      _
    // Predicated region
    $region174: #{tdf_block_forward.1} parent=1 // pred_check
      _
    $region175: #{tdf_block_forward.1} parent=1 // pred_check_branch
      %546 = sbr.rel (0) target = $region177
    $region176: #{tdf_block_forward.1} parent=1 // pred_region
      %548 = vsyncadd [#allocation46], 0
      %s550 = sshll.u32 %s87, 4
      %s551 = int_to_ptr.hbm [resolvable:$true] %s550
      %s552 = sshll.u32 [#allocation47], 4
      %s553 = int_to_ptr.vmem [resolvable:$true] %s552
      %555 = dma.hbm_to_vmem [thread:$0]  %s551, 16, %s553, [#allocation46]
    $region177: #{tdf_block_forward.1} parent=1 // pred_fallthru
      _
    // Predicated region
    $region178: #{tdf_block_forward.1} parent=1 // pred_check
      _
    $region179: #{tdf_block_forward.1} parent=1 // pred_check_branch
      %557 = sbr.rel (0) target = $region181
    $region180: #{tdf_block_forward.1} parent=1 // pred_region
      _
    $region181: #{tdf_block_forward.1} parent=1 // pred_fallthru
      _
    // Predicated region
    $region182: #{tdf_block_forward.1} parent=1 // pred_check
      _
    $region183: #{tdf_block_forward.1} parent=1 // pred_check_branch
      %559 = sbr.rel (0) target = $region185
    $region184: #{tdf_block_forward.1} parent=1 // pred_region
      _
    $region185: #{tdf_block_forward.1} parent=1 // pred_fallthru
      _
    // Predicated region
    $region186: #{tdf_block_forward.1} parent=1 // pred_check
      _
    $region187: #{tdf_block_forward.1} parent=1 // pred_check_branch
      %561 = sbr.rel (0) target = $region189
    $region188: #{tdf_block_forward.1} parent=1 // pred_region
      %563 = vsyncadd [#allocation49], 0
      %s565 = sshll.u32 %s93, 4
      %s566 = int_to_ptr.hbm [resolvable:$true] %s565
      %s567 = sshll.u32 [#allocation48], 4
      %s568 = int_to_ptr.vmem [resolvable:$true] %s567
      %570 = dma.hbm_to_vmem [thread:$0]  %s566, 16, %s568, [#allocation49]
    $region189: #{tdf_block_forward.1} parent=1 // pred_fallthru
      _
    // Predicated region
    $region190: #{tdf_block_forward.1} parent=1 // pred_check
      _
    $region191: #{tdf_block_forward.1} parent=1 // pred_check_branch
      %572 = sbr.rel (0) target = $region193
    $region192: #{tdf_block_forward.1} parent=1 // pred_region
      %574 = vsyncadd [#allocation49], 0
      %s576 = sshll.u32 %s95, 4
      %s577 = int_to_ptr.hbm [resolvable:$true] %s576
      %s578 = sshll.u32 [#allocation50], 4
      %s579 = int_to_ptr.vmem [resolvable:$true] %s578
      %581 = dma.hbm_to_vmem [thread:$0]  %s577, 16, %s579, [#allocation49]
    $region193: #{tdf_block_forward.1} parent=1 // pred_fallthru
      _
    // Predicated region
    $region194: #{tdf_block_forward.1} parent=1 // pred_check
      _
    $region195: #{tdf_block_forward.1} parent=1 // pred_check_branch
      %583 = sbr.rel (0) target = $region197
    $region196: #{tdf_block_forward.1} parent=1 // pred_region
      _
    $region197: #{tdf_block_forward.1} parent=1 // pred_fallthru
      _
    // Predicated region
    $region198: #{tdf_block_forward.1} parent=1 // pred_check
      _
    $region199: #{tdf_block_forward.1} parent=1 // pred_check_branch
      %585 = sbr.rel (0) target = $region201
    $region200: #{tdf_block_forward.1} parent=1 // pred_region
      %587 = vsyncadd [#allocation52], 0
      %s589 = sshll.u32 %s99, 4
      %s590 = int_to_ptr.hbm [resolvable:$true] %s589
      %s591 = sshll.u32 [#allocation51], 4
      %s592 = int_to_ptr.vmem [resolvable:$true] %s591
      %594 = dma.hbm_to_vmem [thread:$0]  %s590, 16, %s592, [#allocation52]
    $region201: #{tdf_block_forward.1} parent=1 // pred_fallthru
      _
    // Predicated region
    $region202: #{tdf_block_forward.1} parent=1 // pred_check
      _
    $region203: #{tdf_block_forward.1} parent=1 // pred_check_branch
      %596 = sbr.rel (0) target = $region205
    $region204: #{tdf_block_forward.1} parent=1 // pred_region
      %598 = vsyncadd [#allocation52], 0
      %s600 = sshll.u32 %s101, 4
      %s601 = int_to_ptr.hbm [resolvable:$true] %s600
      %s602 = sshll.u32 [#allocation53], 4
      %s603 = int_to_ptr.vmem [resolvable:$true] %s602
      %605 = dma.hbm_to_vmem [thread:$0]  %s601, 16, %s603, [#allocation52]
    $region205: #{tdf_block_forward.1} parent=1 // pred_fallthru
      _
    // Predicated region
    $region206: #{tdf_block_forward.1} parent=1 // pred_check
      _
    $region207: #{tdf_block_forward.1} parent=1 // pred_check_branch
      %607 = sbr.rel (0) target = $region209
    $region208: #{tdf_block_forward.1} parent=1 // pred_region
      _
    $region209: #{tdf_block_forward.1} parent=1 // pred_fallthru
      _
    // Predicated region
    $region210: #{tdf_block_forward.1} parent=1 // pred_check
      _
    $region211: #{tdf_block_forward.1} parent=1 // pred_check_branch
      %609 = sbr.rel (0) target = $region213
    $region212: #{tdf_block_forward.1} parent=1 // pred_region
      %611 = vsyncadd [#allocation55], 0
      %s613 = sshll.u32 %s105, 4
      %s614 = int_to_ptr.hbm [resolvable:$true] %s613
      %s615 = sshll.u32 [#allocation54], 4
      %s616 = int_to_ptr.vmem [resolvable:$true] %s615
      %618 = dma.hbm_to_vmem [thread:$0]  %s614, 16, %s616, [#allocation55]
    $region213: #{tdf_block_forward.1} parent=1 // pred_fallthru
      _
    // Predicated region
    $region214: #{tdf_block_forward.1} parent=1 // pred_check
      _
    $region215: #{tdf_block_forward.1} parent=1 // pred_check_branch
      %620 = sbr.rel (0) target = $region217
    $region216: #{tdf_block_forward.1} parent=1 // pred_region
      %622 = vsyncadd [#allocation55], 0
      %s624 = sshll.u32 %s107, 4
      %s625 = int_to_ptr.hbm [resolvable:$true] %s624
      %s626 = sshll.u32 [#allocation56], 4
      %s627 = int_to_ptr.vmem [resolvable:$true] %s626
      %629 = dma.hbm_to_vmem [thread:$0]  %s625, 16, %s627, [#allocation55]
    $region217: #{tdf_block_forward.1} parent=1 // pred_fallthru
      _
    // Predicated region
    $region218: #{tdf_block_forward.1} parent=1 // pred_check
      _
    $region219: #{tdf_block_forward.1} parent=1 // pred_check_branch
      %631 = sbr.rel (0) target = $region221
    $region220: #{tdf_block_forward.1} parent=1 // pred_region
      _
    $region221: #{tdf_block_forward.1} parent=1 // pred_fallthru
      _
    // Predicated region
    $region222: #{tdf_block_forward.1} parent=1 // pred_check
      _
    $region223: #{tdf_block_forward.1} parent=1 // pred_check_branch
      %633 = sbr.rel (0) target = $region225
    $region224: #{tdf_block_forward.1} parent=1 // pred_region
      _
    $region225: #{tdf_block_forward.1} parent=1 // pred_fallthru
      _
    // Predicated region
    $region226: #{tdf_block_forward.1} parent=1 // pred_check
      _
    $region227: #{tdf_block_forward.1} parent=1 // pred_check_branch
      %635 = sbr.rel (0) target = $region229
    $region228: #{tdf_block_forward.1} parent=1 // pred_region
      %637 = vsyncadd [#allocation58], 0
      %s639 = sshll.u32 %s113, 4
      %s640 = int_to_ptr.hbm [resolvable:$true] %s639
      %s641 = sshll.u32 [#allocation57], 4
      %s642 = int_to_ptr.vmem [resolvable:$true] %s641
      %644 = dma.hbm_to_vmem [thread:$0]  %s640, 16, %s642, [#allocation58]
    $region229: #{tdf_block_forward.1} parent=1 // pred_fallthru
      _
    // Predicated region
    $region230: #{tdf_block_forward.1} parent=1 // pred_check
      _
    $region231: #{tdf_block_forward.1} parent=1 // pred_check_branch
      %646 = sbr.rel (0) target = $region233
    $region232: #{tdf_block_forward.1} parent=1 // pred_region
      %648 = vsyncadd [#allocation58], 0
      %s650 = sshll.u32 %s115, 4
      %s651 = int_to_ptr.hbm [resolvable:$true] %s650
      %s652 = sshll.u32 [#allocation59], 4
      %s653 = int_to_ptr.vmem [resolvable:$true] %s652
      %655 = dma.hbm_to_vmem [thread:$0]  %s651, 16, %s653, [#allocation58]
    $region233: #{tdf_block_forward.1} parent=1 // pred_fallthru
      _
    // Predicated region
    $region234: #{tdf_block_forward.1} parent=1 // pred_check
      _
    $region235: #{tdf_block_forward.1} parent=1 // pred_check_branch
      %657 = sbr.rel (0) target = $region237
    $region236: #{tdf_block_forward.1} parent=1 // pred_region
      _
    $region237: #{tdf_block_forward.1} parent=1 // pred_fallthru
      _
    // Predicated region
    $region238: #{tdf_block_forward.1} parent=1 // pred_check
      _
    $region239: #{tdf_block_forward.1} parent=1 // pred_check_branch
      %659 = sbr.rel (0) target = $region241
    $region240: #{tdf_block_forward.1} parent=1 // pred_region
      %661 = vsyncadd [#allocation61], 0
      %s663 = sshll.u32 %s119, 4
      %s664 = int_to_ptr.hbm [resolvable:$true] %s663
      %s665 = sshll.u32 [#allocation60], 4
      %s666 = int_to_ptr.vmem [resolvable:$true] %s665
      %668 = dma.hbm_to_vmem [thread:$0]  %s664, 16, %s666, [#allocation61]
    $region241: #{tdf_block_forward.1} parent=1 // pred_fallthru
      _
    // Predicated region
    $region242: #{tdf_block_forward.1} parent=1 // pred_check
      _
    $region243: #{tdf_block_forward.1} parent=1 // pred_check_branch
      %670 = sbr.rel (0) target = $region245
    $region244: #{tdf_block_forward.1} parent=1 // pred_region
      %672 = vsyncadd [#allocation61], 0
      %s674 = sshll.u32 %s121, 4
      %s675 = int_to_ptr.hbm [resolvable:$true] %s674
      %s676 = sshll.u32 [#allocation62], 4
      %s677 = int_to_ptr.vmem [resolvable:$true] %s676
      %679 = dma.hbm_to_vmem [thread:$0]  %s675, 16, %s677, [#allocation61]
    $region245: #{tdf_block_forward.1} parent=1 // pred_fallthru
      _
    // Predicated region
    $region246: #{tdf_block_forward.1} parent=1 // pred_check
      _
    $region247: #{tdf_block_forward.1} parent=1 // pred_check_branch
      %681 = sbr.rel (0) target = $region249
    $region248: #{tdf_block_forward.1} parent=1 // pred_region
      _
    $region249: #{tdf_block_forward.1} parent=1 // pred_fallthru
      _
    // Predicated region
    $region250: #{tdf_block_forward.1} parent=1 // pred_check
      _
    $region251: #{tdf_block_forward.1} parent=1 // pred_check_branch
      %683 = sbr.rel (0) target = $region253
    $region252: #{tdf_block_forward.1} parent=1 // pred_region
      %685 = vsyncadd [#allocation64], 0
      %s687 = sshll.u32 %s125, 4
      %s688 = int_to_ptr.hbm [resolvable:$true] %s687
      %s689 = sshll.u32 [#allocation63], 4
      %s690 = int_to_ptr.vmem [resolvable:$true] %s689
      %692 = dma.hbm_to_vmem [thread:$0]  %s688, 16, %s690, [#allocation64]
    $region253: #{tdf_block_forward.1} parent=1 // pred_fallthru
      _
    // Predicated region
    $region254: #{tdf_block_forward.1} parent=1 // pred_check
      _
    $region255: #{tdf_block_forward.1} parent=1 // pred_check_branch
      %694 = sbr.rel (0) target = $region257
    $region256: #{tdf_block_forward.1} parent=1 // pred_region
      %696 = vsyncadd [#allocation64], 0
      %s698 = sshll.u32 %s127, 4
      %s699 = int_to_ptr.hbm [resolvable:$true] %s698
      %s700 = sshll.u32 [#allocation65], 4
      %s701 = int_to_ptr.vmem [resolvable:$true] %s700
      %703 = dma.hbm_to_vmem [thread:$0]  %s699, 16, %s701, [#allocation64]
    $region257: #{tdf_block_forward.1} parent=1 // pred_fallthru
      _
    // Predicated region
    $region258: #{tdf_block_forward.1} parent=1 // pred_check
      _
    $region259: #{tdf_block_forward.1} parent=1 // pred_check_branch
      %705 = sbr.rel (0) target = $region261
    $region260: #{tdf_block_forward.1} parent=1 // pred_region
      _
    $region261: #{tdf_block_forward.1} parent=1 // pred_fallthru
      _
    // Predicated region
    $region262: #{tdf_block_forward.1} parent=1 // pred_check
      _
    $region263: #{tdf_block_forward.1} parent=1 // pred_check_branch
      %707 = sbr.rel (0) target = $region265
    $region264: #{tdf_block_forward.1} parent=1 // pred_region
      %709 = vsyncadd [#allocation67], 0
      %s711 = sshll.u32 %s131, 4
      %s712 = int_to_ptr.hbm [resolvable:$true] %s711
      %s713 = sshll.u32 [#allocation66], 4
      %s714 = int_to_ptr.vmem [resolvable:$true] %s713
      %716 = dma.hbm_to_vmem [thread:$0]  %s712, 16, %s714, [#allocation67]
    $region265: #{tdf_block_forward.1} parent=1 // pred_fallthru
      _
    // Predicated region
    $region266: #{tdf_block_forward.1} parent=1 // pred_check
      _
    $region267: #{tdf_block_forward.1} parent=1 // pred_check_branch
      %718 = sbr.rel (0) target = $region269
    $region268: #{tdf_block_forward.1} parent=1 // pred_region
      %720 = vsyncadd [#allocation67], 0
      %s722 = sshll.u32 %s133, 4
      %s723 = int_to_ptr.hbm [resolvable:$true] %s722
      %s724 = sshll.u32 [#allocation68], 4
      %s725 = int_to_ptr.vmem [resolvable:$true] %s724
      %727 = dma.hbm_to_vmem [thread:$0]  %s723, 16, %s725, [#allocation67]
    $region269: #{tdf_block_forward.1} parent=1 // pred_fallthru
      _
    // Predicated region
    $region270: #{tdf_block_forward.1} parent=1 // pred_check
      _
    $region271: #{tdf_block_forward.1} parent=1 // pred_check_branch
      %729 = sbr.rel (0) target = $region273
    $region272: #{tdf_block_forward.1} parent=1 // pred_region
      _
    $region273: #{tdf_block_forward.1} parent=1 // pred_fallthru
      _
    // Predicated region
    $region274: #{tdf_block_forward.1} parent=1 // pred_check
      _
    $region275: #{tdf_block_forward.1} parent=1 // pred_check_branch
      %731 = sbr.rel (0) target = $region277
    $region276: #{tdf_block_forward.1} parent=1 // pred_region
      %733 = vsyncadd [#allocation70], 0
      %s735 = sshll.u32 %s137, 4
      %s736 = int_to_ptr.hbm [resolvable:$true] %s735
      %s737 = sshll.u32 [#allocation69], 4
      %s738 = int_to_ptr.vmem [resolvable:$true] %s737
      %740 = dma.hbm_to_vmem [thread:$0]  %s736, 16, %s738, [#allocation70]
    $region277: #{tdf_block_forward.1} parent=1 // pred_fallthru
      _
    // Predicated region
    $region278: #{tdf_block_forward.1} parent=1 // pred_check
      _
    $region279: #{tdf_block_forward.1} parent=1 // pred_check_branch
      %742 = sbr.rel (0) target = $region281
    $region280: #{tdf_block_forward.1} parent=1 // pred_region
      %744 = vsyncadd [#allocation70], 0
      %s746 = sshll.u32 %s139, 4
      %s747 = int_to_ptr.hbm [resolvable:$true] %s746
      %s748 = sshll.u32 [#allocation71], 4
      %s749 = int_to_ptr.vmem [resolvable:$true] %s748
      %751 = dma.hbm_to_vmem [thread:$0]  %s747, 16, %s749, [#allocation70]
    $region281: #{tdf_block_forward.1} parent=1 // pred_fallthru
      _
    // Predicated region
    $region282: #{tdf_block_forward.1} parent=1 // pred_check
      _
    $region283: #{tdf_block_forward.1} parent=1 // pred_check_branch
      %753 = sbr.rel (0) target = $region285
    $region284: #{tdf_block_forward.1} parent=1 // pred_region
      _
    $region285: #{tdf_block_forward.1} parent=1 // pred_fallthru
      _
    // Predicated region
    $region286: #{tdf_block_forward.1} parent=1 // pred_check
      _
    $region287: #{tdf_block_forward.1} parent=1 // pred_check_branch
      %755 = sbr.rel (0) target = $region289
    $region288: #{tdf_block_forward.1} parent=1 // pred_region
      %757 = vsyncadd [#allocation73], 0
      %s759 = sshll.u32 %s143, 4
      %s760 = int_to_ptr.hbm [resolvable:$true] %s759
      %s761 = sshll.u32 [#allocation72], 4
      %s762 = int_to_ptr.vmem [resolvable:$true] %s761
      %764 = dma.hbm_to_vmem [thread:$0]  %s760, 16, %s762, [#allocation73]
    $region289: #{tdf_block_forward.1} parent=1 // pred_fallthru
      _
    // Predicated region
    $region290: #{tdf_block_forward.1} parent=1 // pred_check
      _
    $region291: #{tdf_block_forward.1} parent=1 // pred_check_branch
      %766 = sbr.rel (0) target = $region293
    $region292: #{tdf_block_forward.1} parent=1 // pred_region
      %768 = vsyncadd [#allocation73], 0
      %s770 = sshll.u32 %s145, 4
      %s771 = int_to_ptr.hbm [resolvable:$true] %s770
      %s772 = sshll.u32 [#allocation74], 4
      %s773 = int_to_ptr.vmem [resolvable:$true] %s772
      %775 = dma.hbm_to_vmem [thread:$0]  %s771, 16, %s773, [#allocation73]
    $region293: #{tdf_block_forward.1} parent=1 // pred_fallthru
      _
    // Predicated region
    $region294: #{tdf_block_forward.1} parent=1 // pred_check
      _
    $region295: #{tdf_block_forward.1} parent=1 // pred_check_branch
      %777 = sbr.rel (0) target = $region297
    $region296: #{tdf_block_forward.1} parent=1 // pred_region
      _
    $region297: #{tdf_block_forward.1} parent=1 // pred_fallthru
      _
    // Predicated region
    $region298: #{tdf_block_forward.1} parent=1 // pred_check
      _
    $region299: #{tdf_block_forward.1} parent=1 // pred_check_branch
      %779 = sbr.rel (0) target = $region301
    $region300: #{tdf_block_forward.1} parent=1 // pred_region
      _
    $region301: #{tdf_block_forward.1} parent=1 // pred_fallthru
      _
    // Predicated region
    $region302: #{tdf_block_forward.1} parent=1 // pred_check
      _
    $region303: #{tdf_block_forward.1} parent=1 // pred_check_branch
      %781 = sbr.rel (0) target = $region305
    $region304: #{tdf_block_forward.1} parent=1 // pred_region
      %783 = vsyncadd [#allocation76], 0
      %s785 = sshll.u32 %s151, 4
      %s786 = int_to_ptr.hbm [resolvable:$true] %s785
      %s787 = sshll.u32 [#allocation75], 4
      %s788 = int_to_ptr.vmem [resolvable:$true] %s787
      %790 = dma.hbm_to_vmem [thread:$0]  %s786, 16, %s788, [#allocation76]
    $region305: #{tdf_block_forward.1} parent=1 // pred_fallthru
      _
    // Predicated region
    $region306: #{tdf_block_forward.1} parent=1 // pred_check
      _
    $region307: #{tdf_block_forward.1} parent=1 // pred_check_branch
      %792 = sbr.rel (0) target = $region309
    $region308: #{tdf_block_forward.1} parent=1 // pred_region
      %794 = vsyncadd [#allocation76], 0
      %s796 = sshll.u32 %s153, 4
      %s797 = int_to_ptr.hbm [resolvable:$true] %s796
      %s798 = sshll.u32 [#allocation77], 4
      %s799 = int_to_ptr.vmem [resolvable:$true] %s798
      %801 = dma.hbm_to_vmem [thread:$0]  %s797, 16, %s799, [#allocation76]
    $region309: #{tdf_block_forward.1} parent=1 // pred_fallthru
      _
    // Predicated region
    $region310: #{tdf_block_forward.1} parent=1 // pred_check
      _
    $region311: #{tdf_block_forward.1} parent=1 // pred_check_branch
      %803 = sbr.rel (0) target = $region313
    $region312: #{tdf_block_forward.1} parent=1 // pred_region
      _
    $region313: #{tdf_block_forward.1} parent=1 // pred_fallthru
      _
    // Predicated region
    $region314: #{tdf_block_forward.1} parent=1 // pred_check
      _
    $region315: #{tdf_block_forward.1} parent=1 // pred_check_branch
      %805 = sbr.rel (0) target = $region317
    $region316: #{tdf_block_forward.1} parent=1 // pred_region
      %807 = vsyncadd [#allocation79], 0
      %s809 = sshll.u32 %s157, 4
      %s810 = int_to_ptr.hbm [resolvable:$true] %s809
      %s811 = sshll.u32 [#allocation78], 4
      %s812 = int_to_ptr.vmem [resolvable:$true] %s811
      %814 = dma.hbm_to_vmem [thread:$0]  %s810, 16, %s812, [#allocation79]
    $region317: #{tdf_block_forward.1} parent=1 // pred_fallthru
      _
    // Predicated region
    $region318: #{tdf_block_forward.1} parent=1 // pred_check
      _
    $region319: #{tdf_block_forward.1} parent=1 // pred_check_branch
      %816 = sbr.rel (0) target = $region321
    $region320: #{tdf_block_forward.1} parent=1 // pred_region
      %818 = vsyncadd [#allocation79], 0
      %s820 = sshll.u32 %s159, 4
      %s821 = int_to_ptr.hbm [resolvable:$true] %s820
      %s822 = sshll.u32 [#allocation80], 4
      %s823 = int_to_ptr.vmem [resolvable:$true] %s822
      %825 = dma.hbm_to_vmem [thread:$0]  %s821, 16, %s823, [#allocation79]
    $region321: #{tdf_block_forward.1} parent=1 // pred_fallthru
      _
    // Predicated region
    $region322: #{tdf_block_forward.1} parent=1 // pred_check
      _
    $region323: #{tdf_block_forward.1} parent=1 // pred_check_branch
      %827 = sbr.rel (0) target = $region325
    $region324: #{tdf_block_forward.1} parent=1 // pred_region
      _
    $region325: #{tdf_block_forward.1} parent=1 // pred_fallthru
      _
    // Predicated region
    $region326: #{tdf_block_forward.1} parent=1 // pred_check
      _
    $region327: #{tdf_block_forward.1} parent=1 // pred_check_branch
      %829 = sbr.rel (0) target = $region329
    $region328: #{tdf_block_forward.1} parent=1 // pred_region
      %831 = vsyncadd [#allocation82], 0
      %s833 = sshll.u32 %s163, 4
      %s834 = int_to_ptr.hbm [resolvable:$true] %s833
      %s835 = sshll.u32 [#allocation81], 4
      %s836 = int_to_ptr.vmem [resolvable:$true] %s835
      %838 = dma.hbm_to_vmem [thread:$0]  %s834, 16, %s836, [#allocation82]
    $region329: #{tdf_block_forward.1} parent=1 // pred_fallthru
      _
    // Predicated region
    $region330: #{tdf_block_forward.1} parent=1 // pred_check
      _
    $region331: #{tdf_block_forward.1} parent=1 // pred_check_branch
      %840 = sbr.rel (0) target = $region333
    $region332: #{tdf_block_forward.1} parent=1 // pred_region
      %842 = vsyncadd [#allocation82], 0
      %s844 = sshll.u32 %s165, 4
      %s845 = int_to_ptr.hbm [resolvable:$true] %s844
      %s846 = sshll.u32 [#allocation83], 4
      %s847 = int_to_ptr.vmem [resolvable:$true] %s846
      %849 = dma.hbm_to_vmem [thread:$0]  %s845, 16, %s847, [#allocation82]
    $region333: #{tdf_block_forward.1} parent=1 // pred_fallthru
      _
    // Predicated region
    $region334: #{tdf_block_forward.1} parent=1 // pred_check
      _
    $region335: #{tdf_block_forward.1} parent=1 // pred_check_branch
      %851 = sbr.rel (0) target = $region337
    $region336: #{tdf_block_forward.1} parent=1 // pred_region
      _
    $region337: #{tdf_block_forward.1} parent=1 // pred_fallthru
      _
    // Predicated region
    $region338: #{tdf_block_forward.1} parent=1 // pred_check
      _
    $region339: #{tdf_block_forward.1} parent=1 // pred_check_branch
      %853 = sbr.rel (0) target = $region341
    $region340: #{tdf_block_forward.1} parent=1 // pred_region
      _
    $region341: #{tdf_block_forward.1} parent=1 // pred_fallthru
      _
    // Predicated region
    $region342: #{tdf_block_forward.1} parent=1 // pred_check
      _
    $region343: #{tdf_block_forward.1} parent=1 // pred_check_branch
      %855 = sbr.rel (0) target = $region345
    $region344: #{tdf_block_forward.1} parent=1 // pred_region
      %857 = vsyncadd [#allocation85], 0
      %s859 = sshll.u32 %s171, 4
      %s860 = int_to_ptr.hbm [resolvable:$true] %s859
      %s861 = sshll.u32 [#allocation84], 4
      %s862 = int_to_ptr.vmem [resolvable:$true] %s861
      %864 = dma.hbm_to_vmem [thread:$0]  %s860, 16, %s862, [#allocation85]
    $region345: #{tdf_block_forward.1} parent=1 // pred_fallthru
      _
    // Predicated region
    $region346: #{tdf_block_forward.1} parent=1 // pred_check
      _
    $region347: #{tdf_block_forward.1} parent=1 // pred_check_branch
      %866 = sbr.rel (0) target = $region349
    $region348: #{tdf_block_forward.1} parent=1 // pred_region
      %868 = dma.done [#allocation4], 16
    $region349: #{tdf_block_forward.1} parent=1 // pred_fallthru
      _
    // Predicated region
    $region350: #{tdf_block_forward.1} parent=1 // pred_check
      _
    $region351: #{tdf_block_forward.1} parent=1 // pred_check_branch
      %870 = sbr.rel (0) target = $region353
    $region352: #{tdf_block_forward.1} parent=1 // pred_region
      %872 = dma.done [#allocation7], 16
    $region353: #{tdf_block_forward.1} parent=1 // pred_fallthru
      _
    // Predicated region
    $region354: #{tdf_block_forward.1} parent=1 // pred_check
      _
    $region355: #{tdf_block_forward.1} parent=1 // pred_check_branch
      %874 = sbr.rel (0) target = $region357
    $region356: #{tdf_block_forward.1} parent=1 // pred_region
      %876 = dma.done [#allocation7], 16
    $region357: #{tdf_block_forward.1} parent=1 // pred_fallthru
      _
    // Predicated region
    $region358: #{tdf_block_forward.1} parent=1 // pred_check
      _
    $region359: #{tdf_block_forward.1} parent=1 // pred_check_branch
      %878 = sbr.rel (0) target = $region361
    $region360: #{tdf_block_forward.1} parent=1 // pred_region
      %880 = dma.done [#allocation10], 16
    $region361: #{tdf_block_forward.1} parent=1 // pred_fallthru
      _
    // Predicated region
    $region362: #{tdf_block_forward.1} parent=1 // pred_check
      _
    $region363: #{tdf_block_forward.1} parent=1 // pred_check_branch
      %882 = sbr.rel (0) target = $region365
    $region364: #{tdf_block_forward.1} parent=1 // pred_region
      %884 = dma.done [#allocation10], 16
    $region365: #{tdf_block_forward.1} parent=1 // pred_fallthru
      _
    // Predicated region
    $region366: #{tdf_block_forward.1} parent=1 // pred_check
      _
    $region367: #{tdf_block_forward.1} parent=1 // pred_check_branch
      %886 = sbr.rel (0) target = $region369
    $region368: #{tdf_block_forward.1} parent=1 // pred_region
      %888 = dma.done [#allocation13], 16
    $region369: #{tdf_block_forward.1} parent=1 // pred_fallthru
      _
    // Predicated region
    $region370: #{tdf_block_forward.1} parent=1 // pred_check
      _
    $region371: #{tdf_block_forward.1} parent=1 // pred_check_branch
      %890 = sbr.rel (0) target = $region373
    $region372: #{tdf_block_forward.1} parent=1 // pred_region
      %892 = dma.done [#allocation13], 16
    $region373: #{tdf_block_forward.1} parent=1 // pred_fallthru
      _
    // Predicated region
    $region374: #{tdf_block_forward.1} parent=1 // pred_check
      _
    $region375: #{tdf_block_forward.1} parent=1 // pred_check_branch
      %894 = sbr.rel (0) target = $region377
    $region376: #{tdf_block_forward.1} parent=1 // pred_region
      %896 = dma.done [#allocation16], 16
    $region377: #{tdf_block_forward.1} parent=1 // pred_fallthru
      _
    // Predicated region
    $region378: #{tdf_block_forward.1} parent=1 // pred_check
      _
    $region379: #{tdf_block_forward.1} parent=1 // pred_check_branch
      %898 = sbr.rel (0) target = $region381
    $region380: #{tdf_block_forward.1} parent=1 // pred_region
      %900 = dma.done [#allocation16], 16
    $region381: #{tdf_block_forward.1} parent=1 // pred_fallthru
      _
    // Predicated region
    $region382: #{tdf_block_forward.1} parent=1 // pred_check
      _
    $region383: #{tdf_block_forward.1} parent=1 // pred_check_branch
      %902 = sbr.rel (0) target = $region385
    $region384: #{tdf_block_forward.1} parent=1 // pred_region
      %904 = dma.done [#allocation19], 16
    $region385: #{tdf_block_forward.1} parent=1 // pred_fallthru
      _
    // Predicated region
    $region386: #{tdf_block_forward.1} parent=1 // pred_check
      _
    $region387: #{tdf_block_forward.1} parent=1 // pred_check_branch
      %906 = sbr.rel (0) target = $region389
    $region388: #{tdf_block_forward.1} parent=1 // pred_region
      %908 = dma.done [#allocation19], 16
    $region389: #{tdf_block_forward.1} parent=1 // pred_fallthru
      _
    // Predicated region
    $region390: #{tdf_block_forward.1} parent=1 // pred_check
      _
    $region391: #{tdf_block_forward.1} parent=1 // pred_check_branch
      %910 = sbr.rel (0) target = $region393
    $region392: #{tdf_block_forward.1} parent=1 // pred_region
      %912 = dma.done [#allocation22], 16
    $region393: #{tdf_block_forward.1} parent=1 // pred_fallthru
      _
    // Predicated region
    $region394: #{tdf_block_forward.1} parent=1 // pred_check
      _
    $region395: #{tdf_block_forward.1} parent=1 // pred_check_branch
      %914 = sbr.rel (0) target = $region397
    $region396: #{tdf_block_forward.1} parent=1 // pred_region
      %916 = dma.done [#allocation22], 128
    $region397: #{tdf_block_forward.1} parent=1 // pred_fallthru
      _
    // Predicated region
    $region398: #{tdf_block_forward.1} parent=1 // pred_check
      _
    $region399: #{tdf_block_forward.1} parent=1 // pred_check_branch
      %918 = sbr.rel (0) target = $region401
    $region400: #{tdf_block_forward.1} parent=1 // pred_region
      %920 = dma.done [#allocation25], 128
    $region401: #{tdf_block_forward.1} parent=1 // pred_fallthru
      _
    // Predicated region
    $region402: #{tdf_block_forward.1} parent=1 // pred_check
      _
    $region403: #{tdf_block_forward.1} parent=1 // pred_check_branch
      %922 = sbr.rel (0) target = $region405
    $region404: #{tdf_block_forward.1} parent=1 // pred_region
      %924 = dma.done [#allocation25], 128
    $region405: #{tdf_block_forward.1} parent=1 // pred_fallthru
      _
    // Predicated region
    $region406: #{tdf_block_forward.1} parent=1 // pred_check
      _
    $region407: #{tdf_block_forward.1} parent=1 // pred_check_branch
      %926 = sbr.rel (0) target = $region409
    $region408: #{tdf_block_forward.1} parent=1 // pred_region
      %928 = dma.done [#allocation28], 16
    $region409: #{tdf_block_forward.1} parent=1 // pred_fallthru
      _
    // Predicated region
    $region410: #{tdf_block_forward.1} parent=1 // pred_check
      _
    $region411: #{tdf_block_forward.1} parent=1 // pred_check_branch
      %930 = sbr.rel (0) target = $region413
    $region412: #{tdf_block_forward.1} parent=1 // pred_region
      %932 = dma.done [#allocation28], 16
    $region413: #{tdf_block_forward.1} parent=1 // pred_fallthru
      _
    // Predicated region
    $region414: #{tdf_block_forward.1} parent=1 // pred_check
      _
    $region415: #{tdf_block_forward.1} parent=1 // pred_check_branch
      %934 = sbr.rel (0) target = $region417
    $region416: #{tdf_block_forward.1} parent=1 // pred_region
      %936 = dma.done [#allocation31], 16
    $region417: #{tdf_block_forward.1} parent=1 // pred_fallthru
      _
    // Predicated region
    $region418: #{tdf_block_forward.1} parent=1 // pred_check
      _
    $region419: #{tdf_block_forward.1} parent=1 // pred_check_branch
      %938 = sbr.rel (0) target = $region421
    $region420: #{tdf_block_forward.1} parent=1 // pred_region
      %940 = dma.done [#allocation31], 16
    $region421: #{tdf_block_forward.1} parent=1 // pred_fallthru
      _
    // Predicated region
    $region422: #{tdf_block_forward.1} parent=1 // pred_check
      _
    $region423: #{tdf_block_forward.1} parent=1 // pred_check_branch
      %942 = sbr.rel (0) target = $region425
    $region424: #{tdf_block_forward.1} parent=1 // pred_region
      %944 = dma.done [#allocation34], 16
    $region425: #{tdf_block_forward.1} parent=1 // pred_fallthru
      _
    // Predicated region
    $region426: #{tdf_block_forward.1} parent=1 // pred_check
      _
    $region427: #{tdf_block_forward.1} parent=1 // pred_check_branch
      %946 = sbr.rel (0) target = $region429
    $region428: #{tdf_block_forward.1} parent=1 // pred_region
      %948 = dma.done [#allocation34], 16
    $region429: #{tdf_block_forward.1} parent=1 // pred_fallthru
      _
    // Predicated region
    $region430: #{tdf_block_forward.1} parent=1 // pred_check
      _
    $region431: #{tdf_block_forward.1} parent=1 // pred_check_branch
      %950 = sbr.rel (0) target = $region433
    $region432: #{tdf_block_forward.1} parent=1 // pred_region
      %952 = dma.done [#allocation37], 16
    $region433: #{tdf_block_forward.1} parent=1 // pred_fallthru
      _
    // Predicated region
    $region434: #{tdf_block_forward.1} parent=1 // pred_check
      _
    $region435: #{tdf_block_forward.1} parent=1 // pred_check_branch
      %954 = sbr.rel (0) target = $region437
    $region436: #{tdf_block_forward.1} parent=1 // pred_region
      %956 = dma.done [#allocation37], 16
    $region437: #{tdf_block_forward.1} parent=1 // pred_fallthru
      _
    // Predicated region
    $region438: #{tdf_block_forward.1} parent=1 // pred_check
      _
    $region439: #{tdf_block_forward.1} parent=1 // pred_check_branch
      %958 = sbr.rel (0) target = $region441
    $region440: #{tdf_block_forward.1} parent=1 // pred_region
      %960 = dma.done [#allocation40], 16
    $region441: #{tdf_block_forward.1} parent=1 // pred_fallthru
      _
    // Predicated region
    $region442: #{tdf_block_forward.1} parent=1 // pred_check
      _
    $region443: #{tdf_block_forward.1} parent=1 // pred_check_branch
      %962 = sbr.rel (0) target = $region445
    $region444: #{tdf_block_forward.1} parent=1 // pred_region
      %964 = dma.done [#allocation40], 16
    $region445: #{tdf_block_forward.1} parent=1 // pred_fallthru
      _
    // Predicated region
    $region446: #{tdf_block_forward.1} parent=1 // pred_check
      _
    $region447: #{tdf_block_forward.1} parent=1 // pred_check_branch
      %966 = sbr.rel (0) target = $region449
    $region448: #{tdf_block_forward.1} parent=1 // pred_region
      %968 = dma.done [#allocation43], 16
    $region449: #{tdf_block_forward.1} parent=1 // pred_fallthru
      _
    // Predicated region
    $region450: #{tdf_block_forward.1} parent=1 // pred_check
      _
    $region451: #{tdf_block_forward.1} parent=1 // pred_check_branch
      %970 = sbr.rel (0) target = $region453
    $region452: #{tdf_block_forward.1} parent=1 // pred_region
      %972 = dma.done [#allocation43], 16
    $region453: #{tdf_block_forward.1} parent=1 // pred_fallthru
      _
    // Predicated region
    $region454: #{tdf_block_forward.1} parent=1 // pred_check
      _
    $region455: #{tdf_block_forward.1} parent=1 // pred_check_branch
      %974 = sbr.rel (0) target = $region457
    $region456: #{tdf_block_forward.1} parent=1 // pred_region
      %976 = dma.done [#allocation46], 16
    $region457: #{tdf_block_forward.1} parent=1 // pred_fallthru
      _
    // Predicated region
    $region458: #{tdf_block_forward.1} parent=1 // pred_check
      _
    $region459: #{tdf_block_forward.1} parent=1 // pred_check_branch
      %978 = sbr.rel (0) target = $region461
    $region460: #{tdf_block_forward.1} parent=1 // pred_region
      %980 = dma.done [#allocation46], 16
    $region461: #{tdf_block_forward.1} parent=1 // pred_fallthru
      _
    // Predicated region
    $region462: #{tdf_block_forward.1} parent=1 // pred_check
      _
    $region463: #{tdf_block_forward.1} parent=1 // pred_check_branch
      %982 = sbr.rel (0) target = $region465
    $region464: #{tdf_block_forward.1} parent=1 // pred_region
      %984 = dma.done [#allocation49], 16
    $region465: #{tdf_block_forward.1} parent=1 // pred_fallthru
      _
    // Predicated region
    $region466: #{tdf_block_forward.1} parent=1 // pred_check
      _
    $region467: #{tdf_block_forward.1} parent=1 // pred_check_branch
      %986 = sbr.rel (0) target = $region469
    $region468: #{tdf_block_forward.1} parent=1 // pred_region
      %988 = dma.done [#allocation49], 16
    $region469: #{tdf_block_forward.1} parent=1 // pred_fallthru
      _
    // Predicated region
    $region470: #{tdf_block_forward.1} parent=1 // pred_check
      _
    $region471: #{tdf_block_forward.1} parent=1 // pred_check_branch
      %990 = sbr.rel (0) target = $region473
    $region472: #{tdf_block_forward.1} parent=1 // pred_region
      %992 = dma.done [#allocation52], 16
    $region473: #{tdf_block_forward.1} parent=1 // pred_fallthru
      _
    // Predicated region
    $region474: #{tdf_block_forward.1} parent=1 // pred_check
      _
    $region475: #{tdf_block_forward.1} parent=1 // pred_check_branch
      %994 = sbr.rel (0) target = $region477
    $region476: #{tdf_block_forward.1} parent=1 // pred_region
      %996 = dma.done [#allocation52], 16
    $region477: #{tdf_block_forward.1} parent=1 // pred_fallthru
      _
    // Predicated region
    $region478: #{tdf_block_forward.1} parent=1 // pred_check
      _
    $region479: #{tdf_block_forward.1} parent=1 // pred_check_branch
      %998 = sbr.rel (0) target = $region481
    $region480: #{tdf_block_forward.1} parent=1 // pred_region
      %1000 = dma.done [#allocation55], 16
    $region481: #{tdf_block_forward.1} parent=1 // pred_fallthru
      _
    // Predicated region
    $region482: #{tdf_block_forward.1} parent=1 // pred_check
      _
    $region483: #{tdf_block_forward.1} parent=1 // pred_check_branch
      %1002 = sbr.rel (0) target = $region485
    $region484: #{tdf_block_forward.1} parent=1 // pred_region
      %1004 = dma.done [#allocation55], 16
    $region485: #{tdf_block_forward.1} parent=1 // pred_fallthru
      _
    // Predicated region
    $region486: #{tdf_block_forward.1} parent=1 // pred_check
      _
    $region487: #{tdf_block_forward.1} parent=1 // pred_check_branch
      %1006 = sbr.rel (0) target = $region489
    $region488: #{tdf_block_forward.1} parent=1 // pred_region
      %1008 = dma.done [#allocation58], 16
    $region489: #{tdf_block_forward.1} parent=1 // pred_fallthru
      _
    // Predicated region
    $region490: #{tdf_block_forward.1} parent=1 // pred_check
      _
    $region491: #{tdf_block_forward.1} parent=1 // pred_check_branch
      %1010 = sbr.rel (0) target = $region493
    $region492: #{tdf_block_forward.1} parent=1 // pred_region
      %1012 = dma.done [#allocation58], 16
    $region493: #{tdf_block_forward.1} parent=1 // pred_fallthru
      _
    // Predicated region
    $region494: #{tdf_block_forward.1} parent=1 // pred_check
      _
    $region495: #{tdf_block_forward.1} parent=1 // pred_check_branch
      %1014 = sbr.rel (0) target = $region497
    $region496: #{tdf_block_forward.1} parent=1 // pred_region
      %1016 = dma.done [#allocation61], 16
    $region497: #{tdf_block_forward.1} parent=1 // pred_fallthru
      _
    // Predicated region
    $region498: #{tdf_block_forward.1} parent=1 // pred_check
      _
    $region499: #{tdf_block_forward.1} parent=1 // pred_check_branch
      %1018 = sbr.rel (0) target = $region501
    $region500: #{tdf_block_forward.1} parent=1 // pred_region
      %1020 = dma.done [#allocation61], 16
    $region501: #{tdf_block_forward.1} parent=1 // pred_fallthru
      _
    // Predicated region
    $region502: #{tdf_block_forward.1} parent=1 // pred_check
      _
    $region503: #{tdf_block_forward.1} parent=1 // pred_check_branch
      %1022 = sbr.rel (0) target = $region505
    $region504: #{tdf_block_forward.1} parent=1 // pred_region
      %1024 = dma.done [#allocation64], 16
    $region505: #{tdf_block_forward.1} parent=1 // pred_fallthru
      _
    // Predicated region
    $region506: #{tdf_block_forward.1} parent=1 // pred_check
      _
    $region507: #{tdf_block_forward.1} parent=1 // pred_check_branch
      %1026 = sbr.rel (0) target = $region509
    $region508: #{tdf_block_forward.1} parent=1 // pred_region
      %1028 = dma.done [#allocation64], 16
    $region509: #{tdf_block_forward.1} parent=1 // pred_fallthru
      _
    // Predicated region
    $region510: #{tdf_block_forward.1} parent=1 // pred_check
      _
    $region511: #{tdf_block_forward.1} parent=1 // pred_check_branch
      %1030 = sbr.rel (0) target = $region513
    $region512: #{tdf_block_forward.1} parent=1 // pred_region
      %1032 = dma.done [#allocation67], 16
    $region513: #{tdf_block_forward.1} parent=1 // pred_fallthru
      _
    // Predicated region
    $region514: #{tdf_block_forward.1} parent=1 // pred_check
      _
    $region515: #{tdf_block_forward.1} parent=1 // pred_check_branch
      %1034 = sbr.rel (0) target = $region517
    $region516: #{tdf_block_forward.1} parent=1 // pred_region
      %1036 = dma.done [#allocation67], 16
    $region517: #{tdf_block_forward.1} parent=1 // pred_fallthru
      _
    // Predicated region
    $region518: #{tdf_block_forward.1} parent=1 // pred_check
      _
    $region519: #{tdf_block_forward.1} parent=1 // pred_check_branch
      %1038 = sbr.rel (0) target = $region521
    $region520: #{tdf_block_forward.1} parent=1 // pred_region
      %1040 = dma.done [#allocation70], 16
    $region521: #{tdf_block_forward.1} parent=1 // pred_fallthru
      _
    // Predicated region
    $region522: #{tdf_block_forward.1} parent=1 // pred_check
      _
    $region523: #{tdf_block_forward.1} parent=1 // pred_check_branch
      %1042 = sbr.rel (0) target = $region525
    $region524: #{tdf_block_forward.1} parent=1 // pred_region
      %1044 = dma.done [#allocation70], 16
    $region525: #{tdf_block_forward.1} parent=1 // pred_fallthru
      _
    // Predicated region
    $region526: #{tdf_block_forward.1} parent=1 // pred_check
      _
    $region527: #{tdf_block_forward.1} parent=1 // pred_check_branch
      %1046 = sbr.rel (0) target = $region529
    $region528: #{tdf_block_forward.1} parent=1 // pred_region
      %1048 = dma.done [#allocation73], 16
    $region529: #{tdf_block_forward.1} parent=1 // pred_fallthru
      _
    // Predicated region
    $region530: #{tdf_block_forward.1} parent=1 // pred_check
      _
    $region531: #{tdf_block_forward.1} parent=1 // pred_check_branch
      %1050 = sbr.rel (0) target = $region533
    $region532: #{tdf_block_forward.1} parent=1 // pred_region
      %1052 = dma.done [#allocation73], 16
    $region533: #{tdf_block_forward.1} parent=1 // pred_fallthru
      _
    // Predicated region
    $region534: #{tdf_block_forward.1} parent=1 // pred_check
      _
    $region535: #{tdf_block_forward.1} parent=1 // pred_check_branch
      %1054 = sbr.rel (0) target = $region537
    $region536: #{tdf_block_forward.1} parent=1 // pred_region
      %1056 = dma.done [#allocation76], 16
    $region537: #{tdf_block_forward.1} parent=1 // pred_fallthru
      _
    // Predicated region
    $region538: #{tdf_block_forward.1} parent=1 // pred_check
      _
    $region539: #{tdf_block_forward.1} parent=1 // pred_check_branch
      %1058 = sbr.rel (0) target = $region541
    $region540: #{tdf_block_forward.1} parent=1 // pred_region
      %1060 = dma.done [#allocation76], 16
    $region541: #{tdf_block_forward.1} parent=1 // pred_fallthru
      _
    // Predicated region
    $region542: #{tdf_block_forward.1} parent=1 // pred_check
      _
    $region543: #{tdf_block_forward.1} parent=1 // pred_check_branch
      %1062 = sbr.rel (0) target = $region545
    $region544: #{tdf_block_forward.1} parent=1 // pred_region
      %1064 = dma.done [#allocation79], 16
    $region545: #{tdf_block_forward.1} parent=1 // pred_fallthru
      _
    // Predicated region
    $region546: #{tdf_block_forward.1} parent=1 // pred_check
      _
    $region547: #{tdf_block_forward.1} parent=1 // pred_check_branch
      %1066 = sbr.rel (0) target = $region549
    $region548: #{tdf_block_forward.1} parent=1 // pred_region
      %1068 = dma.done [#allocation79], 16
    $region549: #{tdf_block_forward.1} parent=1 // pred_fallthru
      _
    // Predicated region
    $region550: #{tdf_block_forward.1} parent=1 // pred_check
      _
    $region551: #{tdf_block_forward.1} parent=1 // pred_check_branch
      %1070 = sbr.rel (0) target = $region553
    $region552: #{tdf_block_forward.1} parent=1 // pred_region
      %1072 = dma.done [#allocation82], 16
    $region553: #{tdf_block_forward.1} parent=1 // pred_fallthru
      _
    // Predicated region
    $region554: #{tdf_block_forward.1} parent=1 // pred_check
      _
    $region555: #{tdf_block_forward.1} parent=1 // pred_check_branch
      %1074 = sbr.rel (0) target = $region557
    $region556: #{tdf_block_forward.1} parent=1 // pred_region
      %1076 = dma.done [#allocation82], 16
    $region557: #{tdf_block_forward.1} parent=1 // pred_fallthru
      _
    // Predicated region
    $region558: #{tdf_block_forward.1} parent=1 // pred_check
      _
    $region559: #{tdf_block_forward.1} parent=1 // pred_check_branch
      %1078 = sbr.rel (0) target = $region561
    $region560: #{tdf_block_forward.1} parent=1 // pred_region
      %1080 = dma.done [#allocation85], 16
    $region561: #{tdf_block_forward.1} parent=1 // pred_fallthru
      _
    %vm1081 = vcmask 261120
    %1082 = vst.msk [vmem:[#allocation2] sm:$0xff] %vm1081, 0.0
    %1083 = vst.msk [vmem:[#allocation2 + $0x30] sm:$0xff] %vm1081, 0.0
    %v1084 = vld [vmem:[%s1] sm:$0xff]
    %v1085 = vld [vmem:[%s1 + $0x8] sm:$0xff]
    %v1086 = vld [vmem:[%s1 + $0x10] sm:$0xff]
    %v1087 = vld [vmem:[%s1 + $0x18] sm:$0xff]
    %v1088 = vld [vmem:[%s1 + $0x20] sm:$0xff]
    %v1089 = vld [vmem:[%s1 + $0x28] sm:$0xff]
    %v1090 = vld [vmem:[%s1 + $0x30] sm:$0xff]
    %v1091 = vld [vmem:[%s1 + $0x38] sm:$0xff]
    %v1092 = vld [vmem:[#allocation3] sm:$0x1]
    %v1093 = vld [vmem:[#allocation6] sm:$0x1]
    %v1094 = vld [vmem:[#allocation8] sm:$0x1]
    %1095 = vxpose.xlu0.b32.start [1/16] %v1084, 128
    %1096 = vxpose.xlu0.b32.cont [2/16] %v1085, 128
    %1097 = vxpose.xlu0.b32.cont [3/16] %v1086, 128
    %1098 = vxpose.xlu0.b32.cont [4/16] %v1087, 128
    %1099 = vxpose.xlu0.b32.cont [5/16] 0.0, 128
    %1100 = vxpose.xlu0.b32.cont [6/16] 0.0, 128
    %1101 = vxpose.xlu0.b32.cont [7/16] 0.0, 128
    %1102 = vxpose.xlu0.b32.cont [8/16] 0.0, 128
    %1103 = vxpose.xlu0.b32.cont [9/16] 0.0, 128
    %1104 = vxpose.xlu0.b32.cont [10/16] 0.0, 128
    %1105 = vxpose.xlu0.b32.cont [11/16] 0.0, 128
    %1106 = vxpose.xlu0.b32.cont [12/16] 0.0, 128
    %1107 = vxpose.xlu0.b32.cont [13/16] 0.0, 128
    %1108 = vxpose.xlu0.b32.cont [14/16] 0.0, 128
    %1109 = vxpose.xlu0.b32.cont [15/16] 0.0, 128
    %1110 = vxpose.xlu0.b32.end [16/16] 0.0, 128
    %v1111 = vpop.trf.xlu0
    %v1112 = vpop.trf.xlu0
    %v1113 = vpop.trf.xlu0
    %v1114 = vpop.trf.xlu0
    %v1115 = vpop.trf.xlu0
    %v1116 = vpop.trf.xlu0
    %v1117 = vpop.trf.xlu0
    %v1118 = vpop.trf.xlu0
    %v1119 = vpop.trf.xlu0
    %v1120 = vpop.trf.xlu0
    %v1121 = vpop.trf.xlu0
    %v1122 = vpop.trf.xlu0
    %v1123 = vpop.trf.xlu0
    %v1124 = vpop.trf.xlu0
    %v1125 = vpop.trf.xlu0
    %v1126 = vpop.trf.xlu0
    %1127 = vxpose.xlu0.b32.start [1/16] %v1088, 128
    %1128 = vxpose.xlu0.b32.cont [2/16] %v1089, 128
    %1129 = vxpose.xlu0.b32.cont [3/16] %v1090, 128
    %1130 = vxpose.xlu0.b32.cont [4/16] %v1091, 128
    %1131 = vxpose.xlu0.b32.cont [5/16] 0.0, 128
    %1132 = vxpose.xlu0.b32.cont [6/16] 0.0, 128
    %1133 = vxpose.xlu0.b32.cont [7/16] 0.0, 128
    %1134 = vxpose.xlu0.b32.cont [8/16] 0.0, 128
    %1135 = vxpose.xlu0.b32.cont [9/16] 0.0, 128
    %1136 = vxpose.xlu0.b32.cont [10/16] 0.0, 128
    %1137 = vxpose.xlu0.b32.cont [11/16] 0.0, 128
    %1138 = vxpose.xlu0.b32.cont [12/16] 0.0, 128
    %1139 = vxpose.xlu0.b32.cont [13/16] 0.0, 128
    %1140 = vxpose.xlu0.b32.cont [14/16] 0.0, 128
    %1141 = vxpose.xlu0.b32.cont [15/16] 0.0, 128
    %1142 = vxpose.xlu0.b32.end [16/16] 0.0, 128
    %v1143 = vpop.trf.xlu0
    %v1144 = vpop.trf.xlu0
    %v1145 = vpop.trf.xlu0
    %v1146 = vpop.trf.xlu0
    %v1147 = vpop.trf.xlu0
    %v1148 = vpop.trf.xlu0
    %v1149 = vpop.trf.xlu0
    %v1150 = vpop.trf.xlu0
    %v1151 = vpop.trf.xlu0
    %v1152 = vpop.trf.xlu0
    %v1153 = vpop.trf.xlu0
    %v1154 = vpop.trf.xlu0
    %v1155 = vpop.trf.xlu0
    %v1156 = vpop.trf.xlu0
    %v1157 = vpop.trf.xlu0
    %v1158 = vpop.trf.xlu0
    %v1160 = vperm.slane %v1092, 0
    %v1162 = vmul.f32 %v1111, %v1160
    %v1163 = vmul.f32 %v1112, %v1160
    %v1164 = vmul.f32 %v1113, %v1160
    %v1165 = vmul.f32 %v1114, %v1160
    %v1166 = vmul.f32 %v1143, %v1160
    %v1167 = vmul.f32 %v1144, %v1160
    %v1168 = vmul.f32 %v1145, %v1160
    %v1169 = vmul.f32 %v1146, %v1160
    %v1171 = vperm.slane %v1093, 0
    %v1173 = vadd.f32 %v1162, %v1171
    %v1174 = vadd.f32 %v1163, %v1171
    %v1175 = vadd.f32 %v1164, %v1171
    %v1176 = vadd.f32 %v1165, %v1171
    %v1177 = vadd.f32 %v1166, %v1171
    %v1178 = vadd.f32 %v1167, %v1171
    %v1179 = vadd.f32 %v1168, %v1171
    %v1180 = vadd.f32 %v1169, %v1171
    %vm1181 = vcmp.ge.f32.partialorder %v1173, 0.0
    %vm1182 = vcmp.ge.f32.partialorder %v1174, 0.0
    %vm1183 = vcmp.ge.f32.partialorder %v1175, 0.0
    %vm1184 = vcmp.ge.f32.partialorder %v1176, 0.0
    %vm1185 = vcmp.ge.f32.partialorder %v1177, 0.0
    %vm1186 = vcmp.ge.f32.partialorder %v1178, 0.0
    %vm1187 = vcmp.ge.f32.partialorder %v1179, 0.0
    %vm1188 = vcmp.ge.f32.partialorder %v1180, 0.0
    %v1190 = vperm.slane %v1094, 0
    %v1192 = vmul.f32 %v1190, %v1173
    %v1193 = vmul.f32 %v1190, %v1174
    %v1194 = vmul.f32 %v1190, %v1175
    %v1195 = vmul.f32 %v1190, %v1176
    %v1196 = vmul.f32 %v1190, %v1177
    %v1197 = vmul.f32 %v1190, %v1178
    %v1198 = vmul.f32 %v1190, %v1179
    %v1199 = vmul.f32 %v1190, %v1180
    %v1200 = vsel %vm1181, %v1173, %v1192
    %v1201 = vsel %vm1182, %v1174, %v1193
    %v1202 = vsel %vm1183, %v1175, %v1194
    %v1203 = vsel %vm1184, %v1176, %v1195
    %v1204 = vsel %vm1185, %v1177, %v1196
    %v1205 = vsel %vm1186, %v1178, %v1197
    %v1206 = vsel %vm1187, %v1179, %v1198
    %v1207 = vsel %vm1188, %v1180, %v1199
    %v1208 = vld [vmem:[%s9] sm:$0xff]
    %v1209 = vld [vmem:[%s9 + $0x8] sm:$0xff]
    %v1210 = vld [vmem:[%s9 + $0x10] sm:$0xff]
    %v1211 = vld [vmem:[%s9 + $0x18] sm:$0xff]
    %v1212 = vld [vmem:[#allocation9] sm:$0x1]
    %v1213 = vld [vmem:[%s13] sm:$0x1]
    %v1214 = vld [vmem:[#allocation11] sm:$0x1]
    %v1215 = vld [vmem:[#allocation12] sm:$0x1]
    %v1217 = vperm.slane %v1212, 0
    %v1220 = vsel %vm1081, %v1200, 0
    %v1223 = vsel %vm1081, %v1201, 0
    %v1226 = vsel %vm1081, %v1202, 0
    %v1229 = vsel %vm1081, %v1203, 0
    %v1232 = vsel %vm1081, %v1204, 0
    %v1235 = vsel %vm1081, %v1205, 0
    %v1238 = vsel %vm1081, %v1206, 0
    %v1241 = vsel %vm1081, %v1207, 0
    %1243 = vmatpush.msra.mxu0 0.0
    %1244 = vmatpush.msra.mxu0 0.0
    %1245 = vmatpush.msra.mxu0 0.0
    %1246 = vmatpush.msra.mxu0 0.0
    %1247 = vmatpush.msra.mxu0 0.0
    %1248 = vmatpush.msra.mxu0 0.0
    %1249 = vmatpush.msra.mxu0 0.0
    %1250 = vmatpush.msra.mxu0 0.0
    %1251 = vmatpush.msra.mxu0 0.0
    %1252 = vmatpush.msra.mxu0 0.0
    %1253 = vmatpush.msra.mxu0 0.0
    %1254 = vmatpush.msra.mxu0 0.0
    %1255 = vmatpush.msra.mxu0 %v1211
    %1256 = vmatpush.msra.mxu0 %v1210
    %1257 = vmatpush.msra.mxu0 %v1209
    %1258 = vmatpush.msra.mxu0 %v1208
    %1259 = vmatmul.f32.gmra.mxu0 %v1220
    %v1260 = vpop.f32.mrf.mxu0
    %v1261 = vadd.f32 %v1217, %v1260
    %1262 = vmatmul.f32.gmra.mxu0 %v1223
    %v1263 = vpop.f32.mrf.mxu0
    %v1264 = vadd.f32 %v1217, %v1263
    %1265 = vmatmul.f32.gmra.mxu0 %v1226
    %v1266 = vpop.f32.mrf.mxu0
    %v1267 = vadd.f32 %v1217, %v1266
    %1268 = vmatmul.f32.gmra.mxu0 %v1229
    %v1269 = vpop.f32.mrf.mxu0
    %v1270 = vadd.f32 %v1217, %v1269
    %1271 = vmatmul.f32.gmra.mxu0 %v1232
    %v1272 = vpop.f32.mrf.mxu0
    %v1273 = vadd.f32 %v1217, %v1272
    %1274 = vmatmul.f32.gmra.mxu0 %v1235
    %v1275 = vpop.f32.mrf.mxu0
    %v1276 = vadd.f32 %v1217, %v1275
    %1277 = vmatmul.f32.gmra.mxu0 %v1238
    %v1278 = vpop.f32.mrf.mxu0
    %v1279 = vadd.f32 %v1217, %v1278
    %1280 = vmatmul.f32.gmra.mxu0 %v1241
    %v1281 = vpop.f32.mrf.mxu0
    %v1282 = vadd.f32 %v1217, %v1281
    %1283 = vdwg.mxu0
    %v1284 = vsel %vm1081, %v1261, 0.0
    %1285 = vadd.xlane.f32.xlu0 %v1284
    %v1286 = vpop.xlane.xlu0 %1285
    %v1287 = vsel %vm1081, %v1264, 0.0
    %1288 = vadd.xlane.f32.xlu0 %v1287
    %v1289 = vpop.xlane.xlu0 %1288
    %v1290 = vsel %vm1081, %v1267, 0.0
    %1291 = vadd.xlane.f32.xlu0 %v1290
    %v1292 = vpop.xlane.xlu0 %1291
    %v1293 = vsel %vm1081, %v1270, 0.0
    %1294 = vadd.xlane.f32.xlu0 %v1293
    %v1295 = vpop.xlane.xlu0 %1294
    %v1296 = vsel %vm1081, %v1273, 0.0
    %1297 = vadd.xlane.f32.xlu0 %v1296
    %v1298 = vpop.xlane.xlu0 %1297
    %v1299 = vsel %vm1081, %v1276, 0.0
    %1300 = vadd.xlane.f32.xlu0 %v1299
    %v1301 = vpop.xlane.xlu0 %1300
    %v1302 = vsel %vm1081, %v1279, 0.0
    %1303 = vadd.xlane.f32.xlu0 %v1302
    %v1304 = vpop.xlane.xlu0 %1303
    %v1305 = vsel %vm1081, %v1282, 0.0
    %1306 = vadd.xlane.f32.xlu0 %v1305
    %v1307 = vpop.xlane.xlu0 %1306
    %v1308 = vadd.f32 %v1286, %v1289
    %v1309 = vadd.f32 %v1308, %v1292
    %v1310 = vadd.f32 %v1309, %v1295
    %v1311 = vrot.slane %v1310, 4
    %v1312 = vadd.f32 %v1310, %v1311
    %v1313 = vrot.slane %v1312, 2
    %v1314 = vadd.f32 %v1312, %v1313
    %v1315 = vrot.slane %v1314, 1
    %v1316 = vadd.f32 %v1314, %v1315
    %v1317 = vadd.f32 %v1298, %v1301
    %v1318 = vadd.f32 %v1317, %v1304
    %v1319 = vadd.f32 %v1318, %v1307
    %v1320 = vrot.slane %v1319, 4
    %v1321 = vadd.f32 %v1319, %v1320
    %v1322 = vrot.slane %v1321, 2
    %v1323 = vadd.f32 %v1321, %v1322
    %v1324 = vrot.slane %v1323, 1
    %v1325 = vadd.f32 %v1323, %v1324
    %v1326 = vrcp.pop 1024.0
    %v1327 = vmul.f32 1024.0, %v1326
    %v1328 = vsub.f32 1.0, %v1327
    %v1329 = vmul.f32 %v1326, %v1328
    %v1330 = vadd.f32 %v1326, %v1329
    %vm1331 = vweird.f32 %v1326
    %v1332 = vsel %vm1331, %v1326, %v1330
    %v1333 = vmul.f32 %v1316, %v1332
    %v1334 = vmul.f32 %v1325, %v1332
    %v1335 = vsub.f32 %v1261, %v1333
    %v1336 = vsub.f32 %v1264, %v1333
    %v1337 = vsub.f32 %v1267, %v1333
    %v1338 = vsub.f32 %v1270, %v1333
    %v1339 = vsub.f32 %v1273, %v1334
    %v1340 = vsub.f32 %v1276, %v1334
    %v1341 = vsub.f32 %v1279, %v1334
    %v1342 = vsub.f32 %v1282, %v1334
    %v1343 = vmul.f32 %v1335, %v1335
    %v1344 = vmul.f32 %v1336, %v1336
    %v1345 = vmul.f32 %v1337, %v1337
    %v1346 = vmul.f32 %v1338, %v1338
    %v1347 = vmul.f32 %v1339, %v1339
    %v1348 = vmul.f32 %v1340, %v1340
    %v1349 = vmul.f32 %v1341, %v1341
    %v1350 = vmul.f32 %v1342, %v1342
    %v1351 = vsel %vm1081, %v1343, 0.0
    %1352 = vadd.xlane.f32.xlu0 %v1351
    %v1353 = vpop.xlane.xlu0 %1352
    %v1354 = vsel %vm1081, %v1344, 0.0
    %1355 = vadd.xlane.f32.xlu0 %v1354
    %v1356 = vpop.xlane.xlu0 %1355
    %v1357 = vsel %vm1081, %v1345, 0.0
    %1358 = vadd.xlane.f32.xlu0 %v1357
    %v1359 = vpop.xlane.xlu0 %1358
    %v1360 = vsel %vm1081, %v1346, 0.0
    %1361 = vadd.xlane.f32.xlu0 %v1360
    %v1362 = vpop.xlane.xlu0 %1361
    %v1363 = vsel %vm1081, %v1347, 0.0
    %1364 = vadd.xlane.f32.xlu0 %v1363
    %v1365 = vpop.xlane.xlu0 %1364
    %v1366 = vsel %vm1081, %v1348, 0.0
    %1367 = vadd.xlane.f32.xlu0 %v1366
    %v1368 = vpop.xlane.xlu0 %1367
    %v1369 = vsel %vm1081, %v1349, 0.0
    %1370 = vadd.xlane.f32.xlu0 %v1369
    %v1371 = vpop.xlane.xlu0 %1370
    %v1372 = vsel %vm1081, %v1350, 0.0
    %1373 = vadd.xlane.f32.xlu0 %v1372
    %v1374 = vpop.xlane.xlu0 %1373
    %v1375 = vadd.f32 %v1353, %v1356
    %v1376 = vadd.f32 %v1375, %v1359
    %v1377 = vadd.f32 %v1376, %v1362
    %v1378 = vrot.slane %v1377, 4
    %v1379 = vadd.f32 %v1377, %v1378
    %v1380 = vrot.slane %v1379, 2
    %v1381 = vadd.f32 %v1379, %v1380
    %v1382 = vrot.slane %v1381, 1
    %v1383 = vadd.f32 %v1381, %v1382
    %v1384 = vadd.f32 %v1365, %v1368
    %v1385 = vadd.f32 %v1384, %v1371
    %v1386 = vadd.f32 %v1385, %v1374
    %v1387 = vrot.slane %v1386, 4
    %v1388 = vadd.f32 %v1386, %v1387
    %v1389 = vrot.slane %v1388, 2
    %v1390 = vadd.f32 %v1388, %v1389
    %v1391 = vrot.slane %v1390, 1
    %v1392 = vadd.f32 %v1390, %v1391
    %v1393 = vmul.f32 %v1383, %v1332
    %v1394 = vmul.f32 %v1392, %v1332
    %v1395 = vadd.f32 %v1393, 1e-08
    %v1396 = vadd.f32 %v1394, 1e-08
    %v1397 = vrsqrt.pop %v1395
    %v1398 = vmul.f32 %v1397, %v1395
    %v1399 = vmul.f32 %v1398, %v1397
    %v1400 = vmul.f32 0.5, %v1399
    %v1401 = vsub.f32 1.5, %v1400
    %v1402 = vmul.f32 %v1397, %v1401
    %vm1403 = vweird.f32 %v1395
    %vm1404 = vweird.f32 %v1397
    %vm1405 = vmor %vm1403, %vm1404
    %v1406 = vsel %vm1405, %v1397, %v1402
    %v1407 = vrsqrt.pop %v1396
    %v1408 = vmul.f32 %v1407, %v1396
    %v1409 = vmul.f32 %v1408, %v1407
    %v1410 = vmul.f32 0.5, %v1409
    %v1411 = vsub.f32 1.5, %v1410
    %v1412 = vmul.f32 %v1407, %v1411
    %vm1413 = vweird.f32 %v1396
    %vm1414 = vweird.f32 %v1407
    %vm1415 = vmor %vm1413, %vm1414
    %v1416 = vsel %vm1415, %v1407, %v1412
    %v1417 = vmul.f32 %v1335, %v1406
    %v1418 = vmul.f32 %v1336, %v1406
    %v1419 = vmul.f32 %v1337, %v1406
    %v1420 = vmul.f32 %v1338, %v1406
    %v1421 = vmul.f32 %v1339, %v1416
    %v1422 = vmul.f32 %v1340, %v1416
    %v1423 = vmul.f32 %v1341, %v1416
    %v1424 = vmul.f32 %v1342, %v1416
    %v1426 = vperm.slane %v1213, 0
    %v1428 = vmul.f32 %v1417, %v1426
    %v1429 = vmul.f32 %v1418, %v1426
    %v1430 = vmul.f32 %v1419, %v1426
    %v1431 = vmul.f32 %v1420, %v1426
    %v1432 = vmul.f32 %v1421, %v1426
    %v1433 = vmul.f32 %v1422, %v1426
    %v1434 = vmul.f32 %v1423, %v1426
    %v1435 = vmul.f32 %v1424, %v1426
    %v1437 = vperm.slane %v1214, 0
    %v1439 = vadd.f32 %v1428, %v1437
    %v1440 = vadd.f32 %v1429, %v1437
    %v1441 = vadd.f32 %v1430, %v1437
    %v1442 = vadd.f32 %v1431, %v1437
    %v1443 = vadd.f32 %v1432, %v1437
    %v1444 = vadd.f32 %v1433, %v1437
    %v1445 = vadd.f32 %v1434, %v1437
    %v1446 = vadd.f32 %v1435, %v1437
    %vm1447 = vcmp.ge.f32.partialorder %v1439, 0.0
    %vm1448 = vcmp.ge.f32.partialorder %v1440, 0.0
    %vm1449 = vcmp.ge.f32.partialorder %v1441, 0.0
    %vm1450 = vcmp.ge.f32.partialorder %v1442, 0.0
    %vm1451 = vcmp.ge.f32.partialorder %v1443, 0.0
    %vm1452 = vcmp.ge.f32.partialorder %v1444, 0.0
    %vm1453 = vcmp.ge.f32.partialorder %v1445, 0.0
    %vm1454 = vcmp.ge.f32.partialorder %v1446, 0.0
    %v1456 = vperm.slane %v1215, 0
    %v1458 = vmul.f32 %v1456, %v1439
    %v1459 = vmul.f32 %v1456, %v1440
    %v1460 = vmul.f32 %v1456, %v1441
    %v1461 = vmul.f32 %v1456, %v1442
    %v1462 = vmul.f32 %v1456, %v1443
    %v1463 = vmul.f32 %v1456, %v1444
    %v1464 = vmul.f32 %v1456, %v1445
    %v1465 = vmul.f32 %v1456, %v1446
    %v1466 = vsel %vm1447, %v1439, %v1458
    %v1467 = vsel %vm1448, %v1440, %v1459
    %v1468 = vsel %vm1449, %v1441, %v1460
    %v1469 = vsel %vm1450, %v1442, %v1461
    %v1470 = vsel %vm1451, %v1443, %v1462
    %v1471 = vsel %vm1452, %v1444, %v1463
    %v1472 = vsel %vm1453, %v1445, %v1464
    %v1473 = vsel %vm1454, %v1446, %v1465
    %v1474 = vld [vmem:[%s19] sm:$0x1]
    %v1475 = vld [vmem:[%s19 + $0x1] sm:$0x1]
    %v1476 = vld [vmem:[%s19 + $0x2] sm:$0x1]
    %v1477 = vld [vmem:[%s19 + $0x3] sm:$0x1]
    %v1478 = vld [vmem:[%s19 + $0x4] sm:$0x1]
    %v1479 = vld [vmem:[#allocation14] sm:$0x1]
    %v1480 = vld [vmem:[#allocation15] sm:$0x1]
    %v1481 = vld [vmem:[#allocation17] sm:$0x1]
    %v1482 = vld [vmem:[%s27] sm:$0xff]
    %v1483 = vld [vmem:[%s27 + $0x8] sm:$0xff]
    %1484 = vst.msk [vmem:[#allocation2 + $0x8] sm:$0xff] %vm1081, %v1466
    %1485 = vst.msk [vmem:[#allocation2 + $0x10] sm:$0xff] %vm1081, %v1467
    %1486 = vst.msk [vmem:[#allocation2 + $0x18] sm:$0xff] %vm1081, %v1468
    %1487 = vst.msk [vmem:[#allocation2 + $0x20] sm:$0xff] %vm1081, %v1469
    %1488 = vst.msk [vmem:[#allocation2 + $0x38] sm:$0xff] %vm1081, %v1470
    %1489 = vst.msk [vmem:[#allocation2 + $0x40] sm:$0xff] %vm1081, %v1471
    %1490 = vst.msk [vmem:[#allocation2 + $0x48] sm:$0xff] %vm1081, %v1472
    %1491 = vst.msk [vmem:[#allocation2 + $0x50] sm:$0xff] %vm1081, %v1473
    %1492 = vst.msk [vmem:[#allocation2 + $0x28] sm:$0xff] %vm1081, 0.0
    %1493 = vst.msk [vmem:[#allocation2 + $0x58] sm:$0xff] %vm1081, 0.0
    %v1494 = vld [vmem:[#allocation2 + $0x6] sm:$0xff]
    %v1495 = vld [vmem:[#allocation2 + $0xe] sm:$0xff]
    %v1496 = vld [vmem:[#allocation2 + $0x16] sm:$0xff]
    %v1497 = vld [vmem:[#allocation2 + $0x1e] sm:$0xff]
    %v1498 = vld [vmem:[#allocation2 + $0x36] sm:$0xff]
    %v1499 = vld [vmem:[#allocation2 + $0x3e] sm:$0xff]
    %v1500 = vld [vmem:[#allocation2 + $0x46] sm:$0xff]
    %v1501 = vld [vmem:[#allocation2 + $0x4e] sm:$0xff]
    %v1503 = vperm.slane %v1474, 0
    %v1505 = vmul.f32 %v1494, %v1503
    %v1506 = vmul.f32 %v1495, %v1503
    %v1507 = vmul.f32 %v1496, %v1503
    %v1508 = vmul.f32 %v1497, %v1503
    %v1509 = vmul.f32 %v1498, %v1503
    %v1510 = vmul.f32 %v1499, %v1503
    %v1511 = vmul.f32 %v1500, %v1503
    %v1512 = vmul.f32 %v1501, %v1503
    %v1513 = vld [vmem:[#allocation2 + $0x7] sm:$0xff]
    %v1514 = vld [vmem:[#allocation2 + $0xf] sm:$0xff]
    %v1515 = vld [vmem:[#allocation2 + $0x17] sm:$0xff]
    %v1516 = vld [vmem:[#allocation2 + $0x1f] sm:$0xff]
    %v1517 = vld [vmem:[#allocation2 + $0x37] sm:$0xff]
    %v1518 = vld [vmem:[#allocation2 + $0x3f] sm:$0xff]
    %v1519 = vld [vmem:[#allocation2 + $0x47] sm:$0xff]
    %v1520 = vld [vmem:[#allocation2 + $0x4f] sm:$0xff]
    %v1522 = vperm.slane %v1475, 0
    %v1524 = vmul.f32 %v1513, %v1522
    %v1525 = vmul.f32 %v1514, %v1522
    %v1526 = vmul.f32 %v1515, %v1522
    %v1527 = vmul.f32 %v1516, %v1522
    %v1528 = vmul.f32 %v1517, %v1522
    %v1529 = vmul.f32 %v1518, %v1522
    %v1530 = vmul.f32 %v1519, %v1522
    %v1531 = vmul.f32 %v1520, %v1522
    %v1532 = vadd.f32 %v1505, %v1524
    %v1533 = vadd.f32 %v1506, %v1525
    %v1534 = vadd.f32 %v1507, %v1526
    %v1535 = vadd.f32 %v1508, %v1527
    %v1536 = vadd.f32 %v1509, %v1528
    %v1537 = vadd.f32 %v1510, %v1529
    %v1538 = vadd.f32 %v1511, %v1530
    %v1539 = vadd.f32 %v1512, %v1531
    %v1540 = vld [vmem:[#allocation2 + $0x8] sm:$0xff]
    %v1541 = vld [vmem:[#allocation2 + $0x10] sm:$0xff]
    %v1542 = vld [vmem:[#allocation2 + $0x18] sm:$0xff]
    %v1543 = vld [vmem:[#allocation2 + $0x20] sm:$0xff]
    %v1544 = vld [vmem:[#allocation2 + $0x38] sm:$0xff]
    %v1545 = vld [vmem:[#allocation2 + $0x40] sm:$0xff]
    %v1546 = vld [vmem:[#allocation2 + $0x48] sm:$0xff]
    %v1547 = vld [vmem:[#allocation2 + $0x50] sm:$0xff]
    %v1549 = vperm.slane %v1476, 0
    %v1551 = vmul.f32 %v1540, %v1549
    %v1552 = vmul.f32 %v1541, %v1549
    %v1553 = vmul.f32 %v1542, %v1549
    %v1554 = vmul.f32 %v1543, %v1549
    %v1555 = vmul.f32 %v1544, %v1549
    %v1556 = vmul.f32 %v1545, %v1549
    %v1557 = vmul.f32 %v1546, %v1549
    %v1558 = vmul.f32 %v1547, %v1549
    %v1559 = vadd.f32 %v1532, %v1551
    %v1560 = vadd.f32 %v1533, %v1552
    %v1561 = vadd.f32 %v1534, %v1553
    %v1562 = vadd.f32 %v1535, %v1554
    %v1563 = vadd.f32 %v1536, %v1555
    %v1564 = vadd.f32 %v1537, %v1556
    %v1565 = vadd.f32 %v1538, %v1557
    %v1566 = vadd.f32 %v1539, %v1558
    %v1567 = vld [vmem:[#allocation2 + $0x9] sm:$0xff]
    %v1568 = vld [vmem:[#allocation2 + $0x11] sm:$0xff]
    %v1569 = vld [vmem:[#allocation2 + $0x19] sm:$0xff]
    %v1570 = vld [vmem:[#allocation2 + $0x21] sm:$0xff]
    %v1571 = vld [vmem:[#allocation2 + $0x39] sm:$0xff]
    %v1572 = vld [vmem:[#allocation2 + $0x41] sm:$0xff]
    %v1573 = vld [vmem:[#allocation2 + $0x49] sm:$0xff]
    %v1574 = vld [vmem:[#allocation2 + $0x51] sm:$0xff]
    %v1576 = vperm.slane %v1477, 0
    %v1578 = vmul.f32 %v1567, %v1576
    %v1579 = vmul.f32 %v1568, %v1576
    %v1580 = vmul.f32 %v1569, %v1576
    %v1581 = vmul.f32 %v1570, %v1576
    %v1582 = vmul.f32 %v1571, %v1576
    %v1583 = vmul.f32 %v1572, %v1576
    %v1584 = vmul.f32 %v1573, %v1576
    %v1585 = vmul.f32 %v1574, %v1576
    %v1586 = vadd.f32 %v1559, %v1578
    %v1587 = vadd.f32 %v1560, %v1579
    %v1588 = vadd.f32 %v1561, %v1580
    %v1589 = vadd.f32 %v1562, %v1581
    %v1590 = vadd.f32 %v1563, %v1582
    %v1591 = vadd.f32 %v1564, %v1583
    %v1592 = vadd.f32 %v1565, %v1584
    %v1593 = vadd.f32 %v1566, %v1585
    %v1594 = vld [vmem:[#allocation2 + $0xa] sm:$0xff]
    %v1595 = vld [vmem:[#allocation2 + $0x12] sm:$0xff]
    %v1596 = vld [vmem:[#allocation2 + $0x1a] sm:$0xff]
    %v1597 = vld [vmem:[#allocation2 + $0x22] sm:$0xff]
    %v1598 = vld [vmem:[#allocation2 + $0x3a] sm:$0xff]
    %v1599 = vld [vmem:[#allocation2 + $0x42] sm:$0xff]
    %v1600 = vld [vmem:[#allocation2 + $0x4a] sm:$0xff]
    %v1601 = vld [vmem:[#allocation2 + $0x52] sm:$0xff]
    %v1603 = vperm.slane %v1478, 0
    %v1605 = vmul.f32 %v1594, %v1603
    %v1606 = vmul.f32 %v1595, %v1603
    %v1607 = vmul.f32 %v1596, %v1603
    %v1608 = vmul.f32 %v1597, %v1603
    %v1609 = vmul.f32 %v1598, %v1603
    %v1610 = vmul.f32 %v1599, %v1603
    %v1611 = vmul.f32 %v1600, %v1603
    %v1612 = vmul.f32 %v1601, %v1603
    %v1613 = vadd.f32 %v1586, %v1605
    %v1614 = vadd.f32 %v1587, %v1606
    %v1615 = vadd.f32 %v1588, %v1607
    %v1616 = vadd.f32 %v1589, %v1608
    %v1617 = vadd.f32 %v1590, %v1609
    %v1618 = vadd.f32 %v1591, %v1610
    %v1619 = vadd.f32 %v1592, %v1611
    %v1620 = vadd.f32 %v1593, %v1612
    %v1622 = vperm.slane %v1479, 0
    %v1624 = vadd.f32 %v1613, %v1622
    %v1625 = vadd.f32 %v1614, %v1622
    %v1626 = vadd.f32 %v1615, %v1622
    %v1627 = vadd.f32 %v1616, %v1622
    %v1628 = vadd.f32 %v1617, %v1622
    %v1629 = vadd.f32 %v1618, %v1622
    %v1630 = vadd.f32 %v1619, %v1622
    %v1631 = vadd.f32 %v1620, %v1622
    %v1633 = vsel %vm1081, %v1482, 0
    %v1636 = vsel %vm1081, %v1483, 0
    %1638 = vmatpush.msra.mxu0 0.0
    %1639 = vmatpush.msra.mxu0 0.0
    %1640 = vmatpush.msra.mxu0 0.0
    %1641 = vmatpush.msra.mxu0 0.0
    %1642 = vmatpush.msra.mxu0 0.0
    %1643 = vmatpush.msra.mxu0 0.0
    %1644 = vmatpush.msra.mxu0 0.0
    %1645 = vmatpush.msra.mxu0 0.0
    %1646 = vmatpush.msra.mxu0 0.0
    %1647 = vmatpush.msra.mxu0 0.0
    %1648 = vmatpush.msra.mxu0 0.0
    %1649 = vmatpush.msra.mxu0 0.0
    %1650 = vmatpush.msra.mxu0 %v1627
    %1651 = vmatpush.msra.mxu0 %v1626
    %1652 = vmatpush.msra.mxu0 %v1625
    %1653 = vmatpush.msra.mxu0 %v1624
    %1654 = vmatmul.f32.gmra.mxu0 %v1633
    %v1655 = vpop.f32.mrf.mxu0
    %v1656 = vadd.f32 0.0, %v1655
    %1657 = vmatmul.f32.gmra.mxu0 %v1636
    %v1658 = vpop.f32.mrf.mxu0
    %v1659 = vadd.f32 0.0, %v1658
    %1660 = vdwg.mxu0
    %1661 = vmatpush.msra.mxu0 0.0
    %1662 = vmatpush.msra.mxu0 0.0
    %1663 = vmatpush.msra.mxu0 0.0
    %1664 = vmatpush.msra.mxu0 0.0
    %1665 = vmatpush.msra.mxu0 0.0
    %1666 = vmatpush.msra.mxu0 0.0
    %1667 = vmatpush.msra.mxu0 0.0
    %1668 = vmatpush.msra.mxu0 0.0
    %1669 = vmatpush.msra.mxu0 0.0
    %1670 = vmatpush.msra.mxu0 0.0
    %1671 = vmatpush.msra.mxu0 0.0
    %1672 = vmatpush.msra.mxu0 0.0
    %1673 = vmatpush.msra.mxu0 %v1631
    %1674 = vmatpush.msra.mxu0 %v1630
    %1675 = vmatpush.msra.mxu0 %v1629
    %1676 = vmatpush.msra.mxu0 %v1628
    %1677 = vmatmul.f32.gmra.mxu0 %v1633
    %v1678 = vpop.f32.mrf.mxu0
    %v1679 = vadd.f32 0.0, %v1678
    %1680 = vmatmul.f32.gmra.mxu0 %v1636
    %v1681 = vpop.f32.mrf.mxu0
    %v1682 = vadd.f32 0.0, %v1681
    %1683 = vdwg.mxu0
    %v1684 = vsel %vm1081, %v1656, 0.0
    %1685 = vadd.xlane.f32.xlu0 %v1684
    %v1686 = vpop.xlane.xlu0 %1685
    %v1687 = vsel %vm1081, %v1659, 0.0
    %1688 = vadd.xlane.f32.xlu0 %v1687
    %v1689 = vpop.xlane.xlu0 %1688
    %v1690 = vsel %vm1081, %v1679, 0.0
    %1691 = vadd.xlane.f32.xlu0 %v1690
    %v1692 = vpop.xlane.xlu0 %1691
    %v1693 = vsel %vm1081, %v1682, 0.0
    %1694 = vadd.xlane.f32.xlu0 %v1693
    %v1695 = vpop.xlane.xlu0 %1694
    %v1696 = vadd.f32 %v1686, %v1689
    %v1697 = vrot.slane %v1696, 4
    %v1698 = vadd.f32 %v1696, %v1697
    %v1699 = vrot.slane %v1698, 2
    %v1700 = vadd.f32 %v1698, %v1699
    %v1701 = vrot.slane %v1700, 1
    %v1702 = vadd.f32 %v1700, %v1701
    %v1703 = vadd.f32 %v1692, %v1695
    %v1704 = vrot.slane %v1703, 4
    %v1705 = vadd.f32 %v1703, %v1704
    %v1706 = vrot.slane %v1705, 2
    %v1707 = vadd.f32 %v1705, %v1706
    %v1708 = vrot.slane %v1707, 1
    %v1709 = vadd.f32 %v1707, %v1708
    %v1710 = vrcp.pop 512.0
    %v1711 = vmul.f32 512.0, %v1710
    %v1712 = vsub.f32 1.0, %v1711
    %v1713 = vmul.f32 %v1710, %v1712
    %v1714 = vadd.f32 %v1710, %v1713
    %vm1715 = vweird.f32 %v1710
    %v1716 = vsel %vm1715, %v1710, %v1714
    %v1717 = vmul.f32 %v1702, %v1716
    %v1718 = vmul.f32 %v1709, %v1716
    %v1719 = vsub.f32 %v1656, %v1717
    %v1720 = vsub.f32 %v1659, %v1717
    %v1721 = vsub.f32 %v1679, %v1718
    %v1722 = vsub.f32 %v1682, %v1718
    %v1723 = vmul.f32 %v1719, %v1719
    %v1724 = vmul.f32 %v1720, %v1720
    %v1725 = vmul.f32 %v1721, %v1721
    %v1726 = vmul.f32 %v1722, %v1722
    %v1727 = vsel %vm1081, %v1723, 0.0
    %1728 = vadd.xlane.f32.xlu0 %v1727
    %v1729 = vpop.xlane.xlu0 %1728
    %v1730 = vsel %vm1081, %v1724, 0.0
    %1731 = vadd.xlane.f32.xlu0 %v1730
    %v1732 = vpop.xlane.xlu0 %1731
    %v1733 = vsel %vm1081, %v1725, 0.0
    %1734 = vadd.xlane.f32.xlu0 %v1733
    %v1735 = vpop.xlane.xlu0 %1734
    %v1736 = vsel %vm1081, %v1726, 0.0
    %1737 = vadd.xlane.f32.xlu0 %v1736
    %v1738 = vpop.xlane.xlu0 %1737
    %v1739 = vadd.f32 %v1729, %v1732
    %v1740 = vrot.slane %v1739, 4
    %v1741 = vadd.f32 %v1739, %v1740
    %v1742 = vrot.slane %v1741, 2
    %v1743 = vadd.f32 %v1741, %v1742
    %v1744 = vrot.slane %v1743, 1
    %v1745 = vadd.f32 %v1743, %v1744
    %v1746 = vadd.f32 %v1735, %v1738
    %v1747 = vrot.slane %v1746, 4
    %v1748 = vadd.f32 %v1746, %v1747
    %v1749 = vrot.slane %v1748, 2
    %v1750 = vadd.f32 %v1748, %v1749
    %v1751 = vrot.slane %v1750, 1
    %v1752 = vadd.f32 %v1750, %v1751
    %v1753 = vmul.f32 %v1745, %v1716
    %v1754 = vmul.f32 %v1752, %v1716
    %v1755 = vadd.f32 %v1753, 1e-08
    %v1756 = vadd.f32 %v1754, 1e-08
    %v1757 = vrsqrt.pop %v1755
    %v1758 = vmul.f32 %v1757, %v1755
    %v1759 = vmul.f32 %v1758, %v1757
    %v1760 = vmul.f32 0.5, %v1759
    %v1761 = vsub.f32 1.5, %v1760
    %v1762 = vmul.f32 %v1757, %v1761
    %vm1763 = vweird.f32 %v1755
    %vm1764 = vweird.f32 %v1757
    %vm1765 = vmor %vm1763, %vm1764
    %v1766 = vsel %vm1765, %v1757, %v1762
    %v1767 = vrsqrt.pop %v1756
    %v1768 = vmul.f32 %v1767, %v1756
    %v1769 = vmul.f32 %v1768, %v1767
    %v1770 = vmul.f32 0.5, %v1769
    %v1771 = vsub.f32 1.5, %v1770
    %v1772 = vmul.f32 %v1767, %v1771
    %vm1773 = vweird.f32 %v1756
    %vm1774 = vweird.f32 %v1767
    %vm1775 = vmor %vm1773, %vm1774
    %v1776 = vsel %vm1775, %v1767, %v1772
    %v1777 = vmul.f32 %v1719, %v1766
    %v1778 = vmul.f32 %v1720, %v1766
    %v1779 = vmul.f32 %v1721, %v1776
    %v1780 = vmul.f32 %v1722, %v1776
    %v1782 = vperm.slane %v1480, 0
    %v1784 = vmul.f32 %v1777, %v1782
    %v1785 = vmul.f32 %v1778, %v1782
    %v1786 = vmul.f32 %v1779, %v1782
    %v1787 = vmul.f32 %v1780, %v1782
    %v1789 = vperm.slane %v1481, 0
    %v1791 = vadd.f32 %v1784, %v1789
    %v1792 = vadd.f32 %v1785, %v1789
    %v1793 = vadd.f32 %v1786, %v1789
    %v1794 = vadd.f32 %v1787, %v1789
    %v1795 = vld [vmem:[%s29] sm:$0x1]
    %v1796 = vld [vmem:[%s29 + $0x1] sm:$0x1]
    %v1797 = vld [vmem:[%s29 + $0x2] sm:$0x1]
    %v1798 = vld [vmem:[%s29 + $0x3] sm:$0x1]
    %v1799 = vld [vmem:[%s29 + $0x4] sm:$0x1]
    %v1800 = vld [vmem:[#allocation18] sm:$0x1]
    %v1801 = vld [vmem:[#allocation20] sm:$0x1]
    %v1802 = vld [vmem:[#allocation21] sm:$0x1]
    %v1803 = vld [vmem:[#allocation23] sm:$0xff]
    %1804 = vst.msk [vmem:[#allocation2 + $0x8] sm:$0xff] %vm1081, %v1791
    %1805 = vst.msk [vmem:[#allocation2 + $0x10] sm:$0xff] %vm1081, %v1792
    %1806 = vst.msk [vmem:[#allocation2 + $0x38] sm:$0xff] %vm1081, %v1793
    %1807 = vst.msk [vmem:[#allocation2 + $0x40] sm:$0xff] %vm1081, %v1794
    %1808 = vst.msk [vmem:[#allocation2 + $0x18] sm:$0xff] %vm1081, 0.0
    %1809 = vst.msk [vmem:[#allocation2 + $0x48] sm:$0xff] %vm1081, 0.0
    %v1810 = vld [vmem:[#allocation2 + $0x6] sm:$0xff]
    %v1811 = vld [vmem:[#allocation2 + $0xe] sm:$0xff]
    %v1812 = vld [vmem:[#allocation2 + $0x36] sm:$0xff]
    %v1813 = vld [vmem:[#allocation2 + $0x3e] sm:$0xff]
    %v1815 = vperm.slane %v1795, 0
    %v1817 = vmul.f32 %v1810, %v1815
    %v1818 = vmul.f32 %v1811, %v1815
    %v1819 = vmul.f32 %v1812, %v1815
    %v1820 = vmul.f32 %v1813, %v1815
    %v1821 = vld [vmem:[#allocation2 + $0x7] sm:$0xff]
    %v1822 = vld [vmem:[#allocation2 + $0xf] sm:$0xff]
    %v1823 = vld [vmem:[#allocation2 + $0x37] sm:$0xff]
    %v1824 = vld [vmem:[#allocation2 + $0x3f] sm:$0xff]
    %v1826 = vperm.slane %v1796, 0
    %v1828 = vmul.f32 %v1821, %v1826
    %v1829 = vmul.f32 %v1822, %v1826
    %v1830 = vmul.f32 %v1823, %v1826
    %v1831 = vmul.f32 %v1824, %v1826
    %v1832 = vadd.f32 %v1817, %v1828
    %v1833 = vadd.f32 %v1818, %v1829
    %v1834 = vadd.f32 %v1819, %v1830
    %v1835 = vadd.f32 %v1820, %v1831
    %v1836 = vld [vmem:[#allocation2 + $0x8] sm:$0xff]
    %v1837 = vld [vmem:[#allocation2 + $0x10] sm:$0xff]
    %v1838 = vld [vmem:[#allocation2 + $0x38] sm:$0xff]
    %v1839 = vld [vmem:[#allocation2 + $0x40] sm:$0xff]
    %v1841 = vperm.slane %v1797, 0
    %v1843 = vmul.f32 %v1836, %v1841
    %v1844 = vmul.f32 %v1837, %v1841
    %v1845 = vmul.f32 %v1838, %v1841
    %v1846 = vmul.f32 %v1839, %v1841
    %v1847 = vadd.f32 %v1832, %v1843
    %v1848 = vadd.f32 %v1833, %v1844
    %v1849 = vadd.f32 %v1834, %v1845
    %v1850 = vadd.f32 %v1835, %v1846
    %v1851 = vld [vmem:[#allocation2 + $0x9] sm:$0xff]
    %v1852 = vld [vmem:[#allocation2 + $0x11] sm:$0xff]
    %v1853 = vld [vmem:[#allocation2 + $0x39] sm:$0xff]
    %v1854 = vld [vmem:[#allocation2 + $0x41] sm:$0xff]
    %v1856 = vperm.slane %v1798, 0
    %v1858 = vmul.f32 %v1851, %v1856
    %v1859 = vmul.f32 %v1852, %v1856
    %v1860 = vmul.f32 %v1853, %v1856
    %v1861 = vmul.f32 %v1854, %v1856
    %v1862 = vadd.f32 %v1847, %v1858
    %v1863 = vadd.f32 %v1848, %v1859
    %v1864 = vadd.f32 %v1849, %v1860
    %v1865 = vadd.f32 %v1850, %v1861
    %v1866 = vld [vmem:[#allocation2 + $0xa] sm:$0xff]
    %v1867 = vld [vmem:[#allocation2 + $0x12] sm:$0xff]
    %v1868 = vld [vmem:[#allocation2 + $0x3a] sm:$0xff]
    %v1869 = vld [vmem:[#allocation2 + $0x42] sm:$0xff]
    %v1871 = vperm.slane %v1799, 0
    %v1873 = vmul.f32 %v1866, %v1871
    %v1874 = vmul.f32 %v1867, %v1871
    %v1875 = vmul.f32 %v1868, %v1871
    %v1876 = vmul.f32 %v1869, %v1871
    %v1877 = vadd.f32 %v1862, %v1873
    %v1878 = vadd.f32 %v1863, %v1874
    %v1879 = vadd.f32 %v1864, %v1875
    %v1880 = vadd.f32 %v1865, %v1876
    %v1882 = vperm.slane %v1800, 0
    %v1884 = vadd.f32 %v1877, %v1882
    %v1885 = vadd.f32 %v1878, %v1882
    %v1886 = vadd.f32 %v1879, %v1882
    %v1887 = vadd.f32 %v1880, %v1882
    %vm1888 = vcmask 130048
    %v1890 = vsel %vm1888, %v1803, 0
    %1892 = vmatpush.msra.mxu0 0.0
    %1893 = vmatpush.msra.mxu0 0.0
    %1894 = vmatpush.msra.mxu0 0.0
    %1895 = vmatpush.msra.mxu0 0.0
    %1896 = vmatpush.msra.mxu0 0.0
    %1897 = vmatpush.msra.mxu0 0.0
    %1898 = vmatpush.msra.mxu0 0.0
    %1899 = vmatpush.msra.mxu0 0.0
    %1900 = vmatpush.msra.mxu0 0.0
    %1901 = vmatpush.msra.mxu0 0.0
    %1902 = vmatpush.msra.mxu0 0.0
    %1903 = vmatpush.msra.mxu0 0.0
    %1904 = vmatpush.msra.mxu0 0.0
    %1905 = vmatpush.msra.mxu0 0.0
    %1906 = vmatpush.msra.mxu0 %v1885
    %1907 = vmatpush.msra.mxu0 %v1884
    %1908 = vmatmul.f32.gmra.mxu0 %v1890
    %v1909 = vpop.f32.mrf.mxu0
    %v1910 = vadd.f32 0.0, %v1909
    %1911 = vdwg.mxu0
    %1912 = vmatpush.msra.mxu0 0.0
    %1913 = vmatpush.msra.mxu0 0.0
    %1914 = vmatpush.msra.mxu0 0.0
    %1915 = vmatpush.msra.mxu0 0.0
    %1916 = vmatpush.msra.mxu0 0.0
    %1917 = vmatpush.msra.mxu0 0.0
    %1918 = vmatpush.msra.mxu0 0.0
    %1919 = vmatpush.msra.mxu0 0.0
    %1920 = vmatpush.msra.mxu0 0.0
    %1921 = vmatpush.msra.mxu0 0.0
    %1922 = vmatpush.msra.mxu0 0.0
    %1923 = vmatpush.msra.mxu0 0.0
    %1924 = vmatpush.msra.mxu0 0.0
    %1925 = vmatpush.msra.mxu0 0.0
    %1926 = vmatpush.msra.mxu0 %v1887
    %1927 = vmatpush.msra.mxu0 %v1886
    %1928 = vmatmul.f32.gmra.mxu0 %v1890
    %v1929 = vpop.f32.mrf.mxu0
    %v1930 = vadd.f32 0.0, %v1929
    %1931 = vdwg.mxu0
    %v1932 = vsel %vm1081, %v1910, 0.0
    %1933 = vadd.xlane.f32.xlu0 %v1932
    %v1934 = vpop.xlane.xlu0 %1933
    %v1935 = vsel %vm1081, %v1930, 0.0
    %1936 = vadd.xlane.f32.xlu0 %v1935
    %v1937 = vpop.xlane.xlu0 %1936
    %v1938 = vrot.slane %v1934, 4
    %v1939 = vadd.f32 %v1934, %v1938
    %v1940 = vrot.slane %v1939, 2
    %v1941 = vadd.f32 %v1939, %v1940
    %v1942 = vrot.slane %v1941, 1
    %v1943 = vadd.f32 %v1941, %v1942
    %v1944 = vrot.slane %v1937, 4
    %v1945 = vadd.f32 %v1937, %v1944
    %v1946 = vrot.slane %v1945, 2
    %v1947 = vadd.f32 %v1945, %v1946
    %v1948 = vrot.slane %v1947, 1
    %v1949 = vadd.f32 %v1947, %v1948
    %v1950 = vrcp.pop 256.0
    %v1951 = vmul.f32 256.0, %v1950
    %v1952 = vsub.f32 1.0, %v1951
    %v1953 = vmul.f32 %v1950, %v1952
    %v1954 = vadd.f32 %v1950, %v1953
    %vm1955 = vweird.f32 %v1950
    %v1956 = vsel %vm1955, %v1950, %v1954
    %v1957 = vmul.f32 %v1943, %v1956
    %v1958 = vmul.f32 %v1949, %v1956
    %v1959 = vsub.f32 %v1910, %v1957
    %v1960 = vsub.f32 %v1930, %v1958
    %v1961 = vmul.f32 %v1959, %v1959
    %v1962 = vmul.f32 %v1960, %v1960
    %v1963 = vsel %vm1081, %v1961, 0.0
    %1964 = vadd.xlane.f32.xlu0 %v1963
    %v1965 = vpop.xlane.xlu0 %1964
    %v1966 = vsel %vm1081, %v1962, 0.0
    %1967 = vadd.xlane.f32.xlu0 %v1966
    %v1968 = vpop.xlane.xlu0 %1967
    %v1969 = vrot.slane %v1965, 4
    %v1970 = vadd.f32 %v1965, %v1969
    %v1971 = vrot.slane %v1970, 2
    %v1972 = vadd.f32 %v1970, %v1971
    %v1973 = vrot.slane %v1972, 1
    %v1974 = vadd.f32 %v1972, %v1973
    %v1975 = vrot.slane %v1968, 4
    %v1976 = vadd.f32 %v1968, %v1975
    %v1977 = vrot.slane %v1976, 2
    %v1978 = vadd.f32 %v1976, %v1977
    %v1979 = vrot.slane %v1978, 1
    %v1980 = vadd.f32 %v1978, %v1979
    %v1981 = vmul.f32 %v1974, %v1956
    %v1982 = vmul.f32 %v1980, %v1956
    %v1983 = vadd.f32 %v1981, 1e-08
    %v1984 = vadd.f32 %v1982, 1e-08
    %v1985 = vrsqrt.pop %v1983
    %v1986 = vmul.f32 %v1985, %v1983
    %v1987 = vmul.f32 %v1986, %v1985
    %v1988 = vmul.f32 0.5, %v1987
    %v1989 = vsub.f32 1.5, %v1988
    %v1990 = vmul.f32 %v1985, %v1989
    %vm1991 = vweird.f32 %v1983
    %vm1992 = vweird.f32 %v1985
    %vm1993 = vmor %vm1991, %vm1992
    %v1994 = vsel %vm1993, %v1985, %v1990
    %v1995 = vrsqrt.pop %v1984
    %v1996 = vmul.f32 %v1995, %v1984
    %v1997 = vmul.f32 %v1996, %v1995
    %v1998 = vmul.f32 0.5, %v1997
    %v1999 = vsub.f32 1.5, %v1998
    %v2000 = vmul.f32 %v1995, %v1999
    %vm2001 = vweird.f32 %v1984
    %vm2002 = vweird.f32 %v1995
    %vm2003 = vmor %vm2001, %vm2002
    %v2004 = vsel %vm2003, %v1995, %v2000
    %v2005 = vmul.f32 %v1959, %v1994
    %v2006 = vmul.f32 %v1960, %v2004
    %v2008 = vperm.slane %v1801, 0
    %v2010 = vmul.f32 %v2005, %v2008
    %v2011 = vmul.f32 %v2006, %v2008
    %v2013 = vperm.slane %v1802, 0
    %v2015 = vadd.f32 %v2010, %v2013
    %v2016 = vadd.f32 %v2011, %v2013
    %v2017 = vld [vmem:[#allocation24] sm:$0xff]
    %v2019 = vsel %vm1081, %v2017, 0
    %2021 = vmatpush.msra.mxu0 0.0
    %2022 = vmatpush.msra.mxu0 0.0
    %2023 = vmatpush.msra.mxu0 0.0
    %2024 = vmatpush.msra.mxu0 0.0
    %2025 = vmatpush.msra.mxu0 0.0
    %2026 = vmatpush.msra.mxu0 0.0
    %2027 = vmatpush.msra.mxu0 0.0
    %2028 = vmatpush.msra.mxu0 0.0
    %2029 = vmatpush.msra.mxu0 0.0
    %2030 = vmatpush.msra.mxu0 0.0
    %2031 = vmatpush.msra.mxu0 0.0
    %2032 = vmatpush.msra.mxu0 0.0
    %2033 = vmatpush.msra.mxu0 %v1469
    %2034 = vmatpush.msra.mxu0 %v1468
    %2035 = vmatpush.msra.mxu0 %v1467
    %2036 = vmatpush.msra.mxu0 %v1466
    %2037 = vmatmul.f32.gmra.mxu0 %v2019
    %v2038 = vpop.f32.mrf.mxu0
    %v2039 = vadd.f32 0.0, %v2038
    %2040 = vdwg.mxu0
    %2041 = vmatpush.msra.mxu0 0.0
    %2042 = vmatpush.msra.mxu0 0.0
    %2043 = vmatpush.msra.mxu0 0.0
    %2044 = vmatpush.msra.mxu0 0.0
    %2045 = vmatpush.msra.mxu0 0.0
    %2046 = vmatpush.msra.mxu0 0.0
    %2047 = vmatpush.msra.mxu0 0.0
    %2048 = vmatpush.msra.mxu0 0.0
    %2049 = vmatpush.msra.mxu0 0.0
    %2050 = vmatpush.msra.mxu0 0.0
    %2051 = vmatpush.msra.mxu0 0.0
    %2052 = vmatpush.msra.mxu0 0.0
    %2053 = vmatpush.msra.mxu0 %v1473
    %2054 = vmatpush.msra.mxu0 %v1472
    %2055 = vmatpush.msra.mxu0 %v1471
    %2056 = vmatpush.msra.mxu0 %v1470
    %2057 = vmatmul.f32.gmra.mxu0 %v2019
    %v2058 = vpop.f32.mrf.mxu0
    %v2059 = vadd.f32 0.0, %v2058
    %2060 = vdwg.mxu0
    %v2061 = vadd.f32 %v2015, %v2039
    %v2062 = vadd.f32 %v2016, %v2059
    %v2063 = vld [vmem:[#allocation26] sm:$0xff]
    %v2065 = vsel %vm1888, %v2063, 0
    %2067 = vmatpush.msra.mxu0 0.0
    %2068 = vmatpush.msra.mxu0 0.0
    %2069 = vmatpush.msra.mxu0 0.0
    %2070 = vmatpush.msra.mxu0 0.0
    %2071 = vmatpush.msra.mxu0 0.0
    %2072 = vmatpush.msra.mxu0 0.0
    %2073 = vmatpush.msra.mxu0 0.0
    %2074 = vmatpush.msra.mxu0 0.0
    %2075 = vmatpush.msra.mxu0 0.0
    %2076 = vmatpush.msra.mxu0 0.0
    %2077 = vmatpush.msra.mxu0 0.0
    %2078 = vmatpush.msra.mxu0 0.0
    %2079 = vmatpush.msra.mxu0 0.0
    %2080 = vmatpush.msra.mxu0 0.0
    %2081 = vmatpush.msra.mxu0 %v1792
    %2082 = vmatpush.msra.mxu0 %v1791
    %2083 = vmatmul.f32.gmra.mxu0 %v2065
    %v2084 = vpop.f32.mrf.mxu0
    %v2085 = vadd.f32 0.0, %v2084
    %2086 = vdwg.mxu0
    %2087 = vmatpush.msra.mxu0 0.0
    %2088 = vmatpush.msra.mxu0 0.0
    %2089 = vmatpush.msra.mxu0 0.0
    %2090 = vmatpush.msra.mxu0 0.0
    %2091 = vmatpush.msra.mxu0 0.0
    %2092 = vmatpush.msra.mxu0 0.0
    %2093 = vmatpush.msra.mxu0 0.0
    %2094 = vmatpush.msra.mxu0 0.0
    %2095 = vmatpush.msra.mxu0 0.0
    %2096 = vmatpush.msra.mxu0 0.0
    %2097 = vmatpush.msra.mxu0 0.0
    %2098 = vmatpush.msra.mxu0 0.0
    %2099 = vmatpush.msra.mxu0 0.0
    %2100 = vmatpush.msra.mxu0 0.0
    %2101 = vmatpush.msra.mxu0 %v1794
    %2102 = vmatpush.msra.mxu0 %v1793
    %2103 = vmatmul.f32.gmra.mxu0 %v2065
    %v2104 = vpop.f32.mrf.mxu0
    %v2105 = vadd.f32 0.0, %v2104
    %2106 = vdwg.mxu0
    %v2107 = vadd.f32 %v2061, %v2085
    %v2108 = vadd.f32 %v2062, %v2105
    %v2109 = vld [vmem:[%s43] sm:$0x1]
    %v2110 = vld [vmem:[%s43 + $0x1] sm:$0x1]
    %v2111 = vld [vmem:[%s43 + $0x2] sm:$0x1]
    %v2112 = vld [vmem:[%s43 + $0x3] sm:$0x1]
    %v2113 = vld [vmem:[%s45] sm:$0xff]
    %v2114 = vld [vmem:[%s45 + $0x8] sm:$0xff]
    %v2115 = vld [vmem:[%s47] sm:$0xff]
    %v2116 = vld [vmem:[%s47 + $0x8] sm:$0xff]
    %v2117 = vld [vmem:[%s47 + $0x10] sm:$0xff]
    %v2118 = vld [vmem:[%s47 + $0x18] sm:$0xff]
    %v2119 = vld [vmem:[#allocation27] sm:$0x1]
    %v2120 = vld [vmem:[%s51] sm:$0xff]
    %v2121 = vld [vmem:[%s51 + $0x8] sm:$0xff]
    %v2122 = vld [vmem:[%s51 + $0x10] sm:$0xff]
    %v2123 = vld [vmem:[%s51 + $0x18] sm:$0xff]
    %v2124 = vld [vmem:[#allocation29] sm:$0x1]
    %v2125 = vld [vmem:[#allocation30] sm:$0x1]
    %v2126 = vld [vmem:[#allocation32] sm:$0x1]
    %v2127 = vld [vmem:[%s59] sm:$0xff]
    %v2128 = vld [vmem:[%s59 + $0x8] sm:$0xff]
    %v2129 = vld [vmem:[%s59 + $0x10] sm:$0xff]
    %v2130 = vld [vmem:[%s59 + $0x18] sm:$0xff]
    %v2131 = vld [vmem:[#allocation33] sm:$0x1]
    %v2132 = vld [vmem:[%s63] sm:$0xff]
    %v2133 = vld [vmem:[%s63 + $0x8] sm:$0xff]
    %v2134 = vld [vmem:[%s63 + $0x10] sm:$0xff]
    %v2135 = vld [vmem:[%s63 + $0x18] sm:$0xff]
    %v2136 = vld [vmem:[%s63 + $0x20] sm:$0xff]
    %v2137 = vld [vmem:[%s63 + $0x28] sm:$0xff]
    %v2138 = vld [vmem:[%s63 + $0x30] sm:$0xff]
    %v2139 = vld [vmem:[%s63 + $0x38] sm:$0xff]
    %v2140 = vld [vmem:[#allocation35] sm:$0x1]
    %v2141 = vld [vmem:[#allocation36] sm:$0x1]
    %v2142 = vld [vmem:[#allocation38] sm:$0x1]
    %v2144 = vperm.slane %v2119, 0
    %v2147 = vsel %vm1081, %v2107, 0
    %v2150 = vsel %vm1081, %v2108, 0
    %2152 = vmatpush.msra.mxu0 0.0
    %2153 = vmatpush.msra.mxu0 0.0
    %2154 = vmatpush.msra.mxu0 0.0
    %2155 = vmatpush.msra.mxu0 0.0
    %2156 = vmatpush.msra.mxu0 0.0
    %2157 = vmatpush.msra.mxu0 0.0
    %2158 = vmatpush.msra.mxu0 0.0
    %2159 = vmatpush.msra.mxu0 0.0
    %2160 = vmatpush.msra.mxu0 0.0
    %2161 = vmatpush.msra.mxu0 0.0
    %2162 = vmatpush.msra.mxu0 0.0
    %2163 = vmatpush.msra.mxu0 0.0
    %2164 = vmatpush.msra.mxu0 %v2118
    %2165 = vmatpush.msra.mxu0 %v2117
    %2166 = vmatpush.msra.mxu0 %v2116
    %2167 = vmatpush.msra.mxu0 %v2115
    %2168 = vmatmul.f32.gmra.mxu0 %v2147
    %v2169 = vpop.f32.mrf.mxu0
    %v2170 = vadd.f32 %v2144, %v2169
    %2171 = vmatmul.f32.gmra.mxu0 %v2150
    %v2172 = vpop.f32.mrf.mxu0
    %v2173 = vadd.f32 %v2144, %v2172
    %2174 = vdwg.mxu0
    %v2179 = vperm.slane %v2109, 0
    %v2180 = vperm.slane %v2110, 0
    %v2181 = vperm.slane %v2111, 0
    %v2182 = vperm.slane %v2112, 0
    %v2187 = vmul.f32 %v2170, %v2179
    %v2188 = vmul.f32 %v2173, %v2179
    %v2189 = vmul.f32 %v2170, %v2180
    %v2190 = vmul.f32 %v2173, %v2180
    %v2191 = vmul.f32 %v2170, %v2181
    %v2192 = vmul.f32 %v2173, %v2181
    %v2193 = vmul.f32 %v2170, %v2182
    %v2194 = vmul.f32 %v2173, %v2182
    %2195 = vrot.lane.b32.xlu0 %v2179, 32
    %v2196 = vpop.permute.xlu0 %2195
    %2197 = vrot.lane.b32.xlu0 %v2180, 32
    %v2198 = vpop.permute.xlu0 %2197
    %2199 = vrot.lane.b32.xlu0 %v2181, 32
    %v2200 = vpop.permute.xlu0 %2199
    %2201 = vrot.lane.b32.xlu0 %v2182, 32
    %v2202 = vpop.permute.xlu0 %2201
    %v2207 = vmul.f32 %v2170, %v2196
    %v2208 = vmul.f32 %v2173, %v2196
    %v2209 = vmul.f32 %v2170, %v2198
    %v2210 = vmul.f32 %v2173, %v2198
    %v2211 = vmul.f32 %v2170, %v2200
    %v2212 = vmul.f32 %v2173, %v2200
    %v2213 = vmul.f32 %v2170, %v2202
    %v2214 = vmul.f32 %v2173, %v2202
    %2215 = vrot.lane.b32.xlu0 %v2179, 64
    %v2216 = vpop.permute.xlu0 %2215
    %2217 = vrot.lane.b32.xlu0 %v2180, 64
    %v2218 = vpop.permute.xlu0 %2217
    %2219 = vrot.lane.b32.xlu0 %v2181, 64
    %v2220 = vpop.permute.xlu0 %2219
    %2221 = vrot.lane.b32.xlu0 %v2182, 64
    %v2222 = vpop.permute.xlu0 %2221
    %v2227 = vmul.f32 %v2170, %v2216
    %v2228 = vmul.f32 %v2173, %v2216
    %v2229 = vmul.f32 %v2170, %v2218
    %v2230 = vmul.f32 %v2173, %v2218
    %v2231 = vmul.f32 %v2170, %v2220
    %v2232 = vmul.f32 %v2173, %v2220
    %v2233 = vmul.f32 %v2170, %v2222
    %v2234 = vmul.f32 %v2173, %v2222
    %2237 = vrot.lane.b32.xlu0 %v2207, 96
    %v2238 = vpop.permute.xlu0 %2237
    %2239 = vrot.lane.b32.xlu0 %v2208, 96
    %v2240 = vpop.permute.xlu0 %2239
    %v2242 = vsel %vm1081, %v2187, 0
    %v2245 = vsel %vm1081, %v2188, 0
    %v2247 = vsel %vm1081, %v2238, 0
    %v2249 = vsel %vm1081, %v2240, 0
    %2251 = vmatpush.xpose.msra.mxu0 0.0
    %2252 = vmatpush.xpose.msra.mxu0 0.0
    %2253 = vmatpush.xpose.msra.mxu0 0.0
    %2254 = vmatpush.xpose.msra.mxu0 0.0
    %2255 = vmatpush.xpose.msra.mxu0 0.0
    %2256 = vmatpush.xpose.msra.mxu0 0.0
    %2257 = vmatpush.xpose.msra.mxu0 0.0
    %2258 = vmatpush.xpose.msra.mxu0 0.0
    %2259 = vmatpush.xpose.msra.mxu0 0.0
    %2260 = vmatpush.xpose.msra.mxu0 0.0
    %2261 = vmatpush.xpose.msra.mxu0 0.0
    %2262 = vmatpush.xpose.msra.mxu0 0.0
    %2263 = vmatpush.xpose.msra.mxu0 0.0
    %2264 = vmatpush.xpose.msra.mxu0 0.0
    %2265 = vmatpush.xpose.msra.mxu0 %v2249
    %2266 = vmatpush.xpose.msra.mxu0 %v2247
    %2267 = vmatmul.f32.gmra.mxu0 %v2242
    %v2268 = vpop.f32.mrf.mxu0
    %v2269 = vadd.f32 0.0, %v2268
    %2270 = vmatmul.f32.gmra.mxu0 %v2245
    %v2271 = vpop.f32.mrf.mxu0
    %v2272 = vadd.f32 0.0, %v2271
    %2273 = vdwg.mxu0
    %2276 = vrot.lane.b32.xlu0 %v2209, 96
    %v2277 = vpop.permute.xlu0 %2276
    %2278 = vrot.lane.b32.xlu0 %v2210, 96
    %v2279 = vpop.permute.xlu0 %2278
    %v2281 = vsel %vm1081, %v2189, 0
    %v2284 = vsel %vm1081, %v2190, 0
    %v2286 = vsel %vm1081, %v2277, 0
    %v2288 = vsel %vm1081, %v2279, 0
    %2290 = vmatpush.xpose.msra.mxu0 0.0
    %2291 = vmatpush.xpose.msra.mxu0 0.0
    %2292 = vmatpush.xpose.msra.mxu0 0.0
    %2293 = vmatpush.xpose.msra.mxu0 0.0
    %2294 = vmatpush.xpose.msra.mxu0 0.0
    %2295 = vmatpush.xpose.msra.mxu0 0.0
    %2296 = vmatpush.xpose.msra.mxu0 0.0
    %2297 = vmatpush.xpose.msra.mxu0 0.0
    %2298 = vmatpush.xpose.msra.mxu0 0.0
    %2299 = vmatpush.xpose.msra.mxu0 0.0
    %2300 = vmatpush.xpose.msra.mxu0 0.0
    %2301 = vmatpush.xpose.msra.mxu0 0.0
    %2302 = vmatpush.xpose.msra.mxu0 0.0
    %2303 = vmatpush.xpose.msra.mxu0 0.0
    %2304 = vmatpush.xpose.msra.mxu0 %v2288
    %2305 = vmatpush.xpose.msra.mxu0 %v2286
    %2306 = vmatmul.f32.gmra.mxu0 %v2281
    %v2307 = vpop.f32.mrf.mxu0
    %v2308 = vadd.f32 0.0, %v2307
    %2309 = vmatmul.f32.gmra.mxu0 %v2284
    %v2310 = vpop.f32.mrf.mxu0
    %v2311 = vadd.f32 0.0, %v2310
    %2312 = vdwg.mxu0
    %2315 = vrot.lane.b32.xlu0 %v2211, 96
    %v2316 = vpop.permute.xlu0 %2315
    %2317 = vrot.lane.b32.xlu0 %v2212, 96
    %v2318 = vpop.permute.xlu0 %2317
    %v2320 = vsel %vm1081, %v2191, 0
    %v2323 = vsel %vm1081, %v2192, 0
    %v2325 = vsel %vm1081, %v2316, 0
    %v2327 = vsel %vm1081, %v2318, 0
    %2329 = vmatpush.xpose.msra.mxu0 0.0
    %2330 = vmatpush.xpose.msra.mxu0 0.0
    %2331 = vmatpush.xpose.msra.mxu0 0.0
    %2332 = vmatpush.xpose.msra.mxu0 0.0
    %2333 = vmatpush.xpose.msra.mxu0 0.0
    %2334 = vmatpush.xpose.msra.mxu0 0.0
    %2335 = vmatpush.xpose.msra.mxu0 0.0
    %2336 = vmatpush.xpose.msra.mxu0 0.0
    %2337 = vmatpush.xpose.msra.mxu0 0.0
    %2338 = vmatpush.xpose.msra.mxu0 0.0
    %2339 = vmatpush.xpose.msra.mxu0 0.0
    %2340 = vmatpush.xpose.msra.mxu0 0.0
    %2341 = vmatpush.xpose.msra.mxu0 0.0
    %2342 = vmatpush.xpose.msra.mxu0 0.0
    %2343 = vmatpush.xpose.msra.mxu0 %v2327
    %2344 = vmatpush.xpose.msra.mxu0 %v2325
    %2345 = vmatmul.f32.gmra.mxu0 %v2320
    %v2346 = vpop.f32.mrf.mxu0
    %v2347 = vadd.f32 0.0, %v2346
    %2348 = vmatmul.f32.gmra.mxu0 %v2323
    %v2349 = vpop.f32.mrf.mxu0
    %v2350 = vadd.f32 0.0, %v2349
    %2351 = vdwg.mxu0
    %2354 = vrot.lane.b32.xlu0 %v2213, 96
    %v2355 = vpop.permute.xlu0 %2354
    %2356 = vrot.lane.b32.xlu0 %v2214, 96
    %v2357 = vpop.permute.xlu0 %2356
    %v2359 = vsel %vm1081, %v2193, 0
    %v2362 = vsel %vm1081, %v2194, 0
    %v2364 = vsel %vm1081, %v2355, 0
    %v2366 = vsel %vm1081, %v2357, 0
    %2368 = vmatpush.xpose.msra.mxu0 0.0
    %2369 = vmatpush.xpose.msra.mxu0 0.0
    %2370 = vmatpush.xpose.msra.mxu0 0.0
    %2371 = vmatpush.xpose.msra.mxu0 0.0
    %2372 = vmatpush.xpose.msra.mxu0 0.0
    %2373 = vmatpush.xpose.msra.mxu0 0.0
    %2374 = vmatpush.xpose.msra.mxu0 0.0
    %2375 = vmatpush.xpose.msra.mxu0 0.0
    %2376 = vmatpush.xpose.msra.mxu0 0.0
    %2377 = vmatpush.xpose.msra.mxu0 0.0
    %2378 = vmatpush.xpose.msra.mxu0 0.0
    %2379 = vmatpush.xpose.msra.mxu0 0.0
    %2380 = vmatpush.xpose.msra.mxu0 0.0
    %2381 = vmatpush.xpose.msra.mxu0 0.0
    %2382 = vmatpush.xpose.msra.mxu0 %v2366
    %2383 = vmatpush.xpose.msra.mxu0 %v2364
    %2384 = vmatmul.f32.gmra.mxu0 %v2359
    %v2385 = vpop.f32.mrf.mxu0
    %v2386 = vadd.f32 0.0, %v2385
    %2387 = vmatmul.f32.gmra.mxu0 %v2362
    %v2388 = vpop.f32.mrf.mxu0
    %v2389 = vadd.f32 0.0, %v2388
    %2390 = vdwg.mxu0
    %v2391 = vrcp.pop 2.828427
    %v2392 = vmul.f32 2.828427, %v2391
    %v2393 = vsub.f32 1.0, %v2392
    %v2394 = vmul.f32 %v2391, %v2393
    %v2395 = vadd.f32 %v2391, %v2394
    %vm2396 = vweird.f32 %v2391
    %v2397 = vsel %vm2396, %v2391, %v2395
    %v2398 = vmul.f32 %v2269, %v2397
    %v2399 = vmul.f32 %v2272, %v2397
    %v2400 = vmul.f32 %v2308, %v2397
    %v2401 = vmul.f32 %v2311, %v2397
    %v2402 = vmul.f32 %v2347, %v2397
    %v2403 = vmul.f32 %v2350, %v2397
    %v2404 = vmul.f32 %v2386, %v2397
    %v2405 = vmul.f32 %v2389, %v2397
    %v2406 = vadd.f32 %v2398, %v2113
    %v2407 = vadd.f32 %v2399, %v2114
    %v2408 = vadd.f32 %v2400, %v2113
    %v2409 = vadd.f32 %v2401, %v2114
    %v2410 = vadd.f32 %v2402, %v2113
    %v2411 = vadd.f32 %v2403, %v2114
    %v2412 = vadd.f32 %v2404, %v2113
    %v2413 = vadd.f32 %v2405, %v2114
    %v2414 = vsel %vm1888, %v2406, -inf
    %2415 = vmax.xlane.f32.xlu0 %v2414
    %v2416 = vpop.xlane.xlu0 %2415
    %v2417 = vsel %vm1888, %v2407, -inf
    %2418 = vmax.xlane.f32.xlu0 %v2417
    %v2419 = vpop.xlane.xlu0 %2418
    %v2420 = vsel %vm1888, %v2408, -inf
    %2421 = vmax.xlane.f32.xlu0 %v2420
    %v2422 = vpop.xlane.xlu0 %2421
    %v2423 = vsel %vm1888, %v2409, -inf
    %2424 = vmax.xlane.f32.xlu0 %v2423
    %v2425 = vpop.xlane.xlu0 %2424
    %v2426 = vsel %vm1888, %v2410, -inf
    %2427 = vmax.xlane.f32.xlu0 %v2426
    %v2428 = vpop.xlane.xlu0 %2427
    %v2429 = vsel %vm1888, %v2411, -inf
    %2430 = vmax.xlane.f32.xlu0 %v2429
    %v2431 = vpop.xlane.xlu0 %2430
    %v2432 = vsel %vm1888, %v2412, -inf
    %2433 = vmax.xlane.f32.xlu0 %v2432
    %v2434 = vpop.xlane.xlu0 %2433
    %v2435 = vsel %vm1888, %v2413, -inf
    %2436 = vmax.xlane.f32.xlu0 %v2435
    %v2437 = vpop.xlane.xlu0 %2436
    %v2438 = vsub.f32 %v2406, %v2416
    %v2439 = vsub.f32 %v2407, %v2419
    %v2440 = vsub.f32 %v2408, %v2422
    %v2441 = vsub.f32 %v2409, %v2425
    %v2442 = vsub.f32 %v2410, %v2428
    %v2443 = vsub.f32 %v2411, %v2431
    %v2444 = vsub.f32 %v2412, %v2434
    %v2445 = vsub.f32 %v2413, %v2437
    %v2446 = vmul.f32 %v2438, 1.442695
    %v2447 = vpow.pop %v2446
    %v2448 = vmul.f32 %v2439, 1.442695
    %v2449 = vpow.pop %v2448
    %v2450 = vmul.f32 %v2440, 1.442695
    %v2451 = vpow.pop %v2450
    %v2452 = vmul.f32 %v2441, 1.442695
    %v2453 = vpow.pop %v2452
    %v2454 = vmul.f32 %v2442, 1.442695
    %v2455 = vpow.pop %v2454
    %v2456 = vmul.f32 %v2443, 1.442695
    %v2457 = vpow.pop %v2456
    %v2458 = vmul.f32 %v2444, 1.442695
    %v2459 = vpow.pop %v2458
    %v2460 = vmul.f32 %v2445, 1.442695
    %v2461 = vpow.pop %v2460
    %v2462 = vsel %vm1888, %v2447, 0.0
    %2463 = vadd.xlane.f32.xlu0 %v2462
    %v2464 = vpop.xlane.xlu0 %2463
    %v2465 = vsel %vm1888, %v2449, 0.0
    %2466 = vadd.xlane.f32.xlu0 %v2465
    %v2467 = vpop.xlane.xlu0 %2466
    %v2468 = vsel %vm1888, %v2451, 0.0
    %2469 = vadd.xlane.f32.xlu0 %v2468
    %v2470 = vpop.xlane.xlu0 %2469
    %v2471 = vsel %vm1888, %v2453, 0.0
    %2472 = vadd.xlane.f32.xlu0 %v2471
    %v2473 = vpop.xlane.xlu0 %2472
    %v2474 = vsel %vm1888, %v2455, 0.0
    %2475 = vadd.xlane.f32.xlu0 %v2474
    %v2476 = vpop.xlane.xlu0 %2475
    %v2477 = vsel %vm1888, %v2457, 0.0
    %2478 = vadd.xlane.f32.xlu0 %v2477
    %v2479 = vpop.xlane.xlu0 %2478
    %v2480 = vsel %vm1888, %v2459, 0.0
    %2481 = vadd.xlane.f32.xlu0 %v2480
    %v2482 = vpop.xlane.xlu0 %2481
    %v2483 = vsel %vm1888, %v2461, 0.0
    %2484 = vadd.xlane.f32.xlu0 %v2483
    %v2485 = vpop.xlane.xlu0 %2484
    %v2486 = vrcp.pop %v2464
    %v2487 = vmul.f32 %v2464, %v2486
    %v2488 = vsub.f32 1.0, %v2487
    %v2489 = vmul.f32 %v2486, %v2488
    %v2490 = vadd.f32 %v2486, %v2489
    %vm2491 = vweird.f32 %v2464
    %vm2492 = vweird.f32 %v2486
    %vm2493 = vmor %vm2491, %vm2492
    %v2494 = vsel %vm2493, %v2486, %v2490
    %v2495 = vand.u32 2147483647, %v2464
    %vm2496 = vcmp.eq.f32.partialorder %v2495, 8.507059e+37
    %v2497 = vand.u32 %v2464, 2147483648
    %v2498 = vor.u32 1.1754944e-38, %v2497
    %v2499 = vsel %vm2496, %v2498, %v2494
    %v2500 = vmul.f32 %v2447, %v2499
    %v2501 = vrcp.pop %v2467
    %v2502 = vmul.f32 %v2467, %v2501
    %v2503 = vsub.f32 1.0, %v2502
    %v2504 = vmul.f32 %v2501, %v2503
    %v2505 = vadd.f32 %v2501, %v2504
    %vm2506 = vweird.f32 %v2467
    %vm2507 = vweird.f32 %v2501
    %vm2508 = vmor %vm2506, %vm2507
    %v2509 = vsel %vm2508, %v2501, %v2505
    %v2510 = vand.u32 2147483647, %v2467
    %vm2511 = vcmp.eq.f32.partialorder %v2510, 8.507059e+37
    %v2512 = vand.u32 %v2467, 2147483648
    %v2513 = vor.u32 1.1754944e-38, %v2512
    %v2514 = vsel %vm2511, %v2513, %v2509
    %v2515 = vmul.f32 %v2449, %v2514
    %v2516 = vrcp.pop %v2470
    %v2517 = vmul.f32 %v2470, %v2516
    %v2518 = vsub.f32 1.0, %v2517
    %v2519 = vmul.f32 %v2516, %v2518
    %v2520 = vadd.f32 %v2516, %v2519
    %vm2521 = vweird.f32 %v2470
    %vm2522 = vweird.f32 %v2516
    %vm2523 = vmor %vm2521, %vm2522
    %v2524 = vsel %vm2523, %v2516, %v2520
    %v2525 = vand.u32 2147483647, %v2470
    %vm2526 = vcmp.eq.f32.partialorder %v2525, 8.507059e+37
    %v2527 = vand.u32 %v2470, 2147483648
    %v2528 = vor.u32 1.1754944e-38, %v2527
    %v2529 = vsel %vm2526, %v2528, %v2524
    %v2530 = vmul.f32 %v2451, %v2529
    %v2531 = vrcp.pop %v2473
    %v2532 = vmul.f32 %v2473, %v2531
    %v2533 = vsub.f32 1.0, %v2532
    %v2534 = vmul.f32 %v2531, %v2533
    %v2535 = vadd.f32 %v2531, %v2534
    %vm2536 = vweird.f32 %v2473
    %vm2537 = vweird.f32 %v2531
    %vm2538 = vmor %vm2536, %vm2537
    %v2539 = vsel %vm2538, %v2531, %v2535
    %v2540 = vand.u32 2147483647, %v2473
    %vm2541 = vcmp.eq.f32.partialorder %v2540, 8.507059e+37
    %v2542 = vand.u32 %v2473, 2147483648
    %v2543 = vor.u32 1.1754944e-38, %v2542
    %v2544 = vsel %vm2541, %v2543, %v2539
    %v2545 = vmul.f32 %v2453, %v2544
    %v2546 = vrcp.pop %v2476
    %v2547 = vmul.f32 %v2476, %v2546
    %v2548 = vsub.f32 1.0, %v2547
    %v2549 = vmul.f32 %v2546, %v2548
    %v2550 = vadd.f32 %v2546, %v2549
    %vm2551 = vweird.f32 %v2476
    %vm2552 = vweird.f32 %v2546
    %vm2553 = vmor %vm2551, %vm2552
    %v2554 = vsel %vm2553, %v2546, %v2550
    %v2555 = vand.u32 2147483647, %v2476
    %vm2556 = vcmp.eq.f32.partialorder %v2555, 8.507059e+37
    %v2557 = vand.u32 %v2476, 2147483648
    %v2558 = vor.u32 1.1754944e-38, %v2557
    %v2559 = vsel %vm2556, %v2558, %v2554
    %v2560 = vmul.f32 %v2455, %v2559
    %v2561 = vrcp.pop %v2479
    %v2562 = vmul.f32 %v2479, %v2561
    %v2563 = vsub.f32 1.0, %v2562
    %v2564 = vmul.f32 %v2561, %v2563
    %v2565 = vadd.f32 %v2561, %v2564
    %vm2566 = vweird.f32 %v2479
    %vm2567 = vweird.f32 %v2561
    %vm2568 = vmor %vm2566, %vm2567
    %v2569 = vsel %vm2568, %v2561, %v2565
    %v2570 = vand.u32 2147483647, %v2479
    %vm2571 = vcmp.eq.f32.partialorder %v2570, 8.507059e+37
    %v2572 = vand.u32 %v2479, 2147483648
    %v2573 = vor.u32 1.1754944e-38, %v2572
    %v2574 = vsel %vm2571, %v2573, %v2569
    %v2575 = vmul.f32 %v2457, %v2574
    %v2576 = vrcp.pop %v2482
    %v2577 = vmul.f32 %v2482, %v2576
    %v2578 = vsub.f32 1.0, %v2577
    %v2579 = vmul.f32 %v2576, %v2578
    %v2580 = vadd.f32 %v2576, %v2579
    %vm2581 = vweird.f32 %v2482
    %vm2582 = vweird.f32 %v2576
    %vm2583 = vmor %vm2581, %vm2582
    %v2584 = vsel %vm2583, %v2576, %v2580
    %v2585 = vand.u32 2147483647, %v2482
    %vm2586 = vcmp.eq.f32.partialorder %v2585, 8.507059e+37
    %v2587 = vand.u32 %v2482, 2147483648
    %v2588 = vor.u32 1.1754944e-38, %v2587
    %v2589 = vsel %vm2586, %v2588, %v2584
    %v2590 = vmul.f32 %v2459, %v2589
    %v2591 = vrcp.pop %v2485
    %v2592 = vmul.f32 %v2485, %v2591
    %v2593 = vsub.f32 1.0, %v2592
    %v2594 = vmul.f32 %v2591, %v2593
    %v2595 = vadd.f32 %v2591, %v2594
    %vm2596 = vweird.f32 %v2485
    %vm2597 = vweird.f32 %v2591
    %vm2598 = vmor %vm2596, %vm2597
    %v2599 = vsel %vm2598, %v2591, %v2595
    %v2600 = vand.u32 2147483647, %v2485
    %vm2601 = vcmp.eq.f32.partialorder %v2600, 8.507059e+37
    %v2602 = vand.u32 %v2485, 2147483648
    %v2603 = vor.u32 1.1754944e-38, %v2602
    %v2604 = vsel %vm2601, %v2603, %v2599
    %v2605 = vmul.f32 %v2461, %v2604
    %2608 = vrot.lane.b32.xlu0 %v2227, 64
    %v2609 = vpop.permute.xlu0 %2608
    %2610 = vrot.lane.b32.xlu0 %v2228, 64
    %v2611 = vpop.permute.xlu0 %2610
    %v2615 = vsel %vm1888, %v2500, 0
    %v2618 = vsel %vm1888, %v2515, 0
    %2620 = vmatpush.msra.mxu0 0.0
    %2621 = vmatpush.msra.mxu0 0.0
    %2622 = vmatpush.msra.mxu0 0.0
    %2623 = vmatpush.msra.mxu0 0.0
    %2624 = vmatpush.msra.mxu0 0.0
    %2625 = vmatpush.msra.mxu0 0.0
    %2626 = vmatpush.msra.mxu0 0.0
    %2627 = vmatpush.msra.mxu0 0.0
    %2628 = vmatpush.msra.mxu0 0.0
    %2629 = vmatpush.msra.mxu0 0.0
    %2630 = vmatpush.msra.mxu0 0.0
    %2631 = vmatpush.msra.mxu0 0.0
    %2632 = vmatpush.msra.mxu0 0.0
    %2633 = vmatpush.msra.mxu0 0.0
    %2634 = vmatpush.msra.mxu0 %v2611
    %2635 = vmatpush.msra.mxu0 %v2609
    %2636 = vmatmul.f32.gmra.mxu0 %v2615
    %v2637 = vpop.f32.mrf.mxu0
    %v2638 = vadd.f32 0.0, %v2637
    %2639 = vmatmul.f32.gmra.mxu0 %v2618
    %v2640 = vpop.f32.mrf.mxu0
    %v2641 = vadd.f32 0.0, %v2640
    %2642 = vdwg.mxu0
    %2645 = vrot.lane.b32.xlu0 %v2229, 64
    %v2646 = vpop.permute.xlu0 %2645
    %2647 = vrot.lane.b32.xlu0 %v2230, 64
    %v2648 = vpop.permute.xlu0 %2647
    %v2652 = vsel %vm1888, %v2530, 0
    %v2655 = vsel %vm1888, %v2545, 0
    %2657 = vmatpush.msra.mxu0 0.0
    %2658 = vmatpush.msra.mxu0 0.0
    %2659 = vmatpush.msra.mxu0 0.0
    %2660 = vmatpush.msra.mxu0 0.0
    %2661 = vmatpush.msra.mxu0 0.0
    %2662 = vmatpush.msra.mxu0 0.0
    %2663 = vmatpush.msra.mxu0 0.0
    %2664 = vmatpush.msra.mxu0 0.0
    %2665 = vmatpush.msra.mxu0 0.0
    %2666 = vmatpush.msra.mxu0 0.0
    %2667 = vmatpush.msra.mxu0 0.0
    %2668 = vmatpush.msra.mxu0 0.0
    %2669 = vmatpush.msra.mxu0 0.0
    %2670 = vmatpush.msra.mxu0 0.0
    %2671 = vmatpush.msra.mxu0 %v2648
    %2672 = vmatpush.msra.mxu0 %v2646
    %2673 = vmatmul.f32.gmra.mxu0 %v2652
    %v2674 = vpop.f32.mrf.mxu0
    %v2675 = vadd.f32 0.0, %v2674
    %2676 = vmatmul.f32.gmra.mxu0 %v2655
    %v2677 = vpop.f32.mrf.mxu0
    %v2678 = vadd.f32 0.0, %v2677
    %2679 = vdwg.mxu0
    %2682 = vrot.lane.b32.xlu0 %v2231, 64
    %v2683 = vpop.permute.xlu0 %2682
    %2684 = vrot.lane.b32.xlu0 %v2232, 64
    %v2685 = vpop.permute.xlu0 %2684
    %v2689 = vsel %vm1888, %v2560, 0
    %v2692 = vsel %vm1888, %v2575, 0
    %2694 = vmatpush.msra.mxu0 0.0
    %2695 = vmatpush.msra.mxu0 0.0
    %2696 = vmatpush.msra.mxu0 0.0
    %2697 = vmatpush.msra.mxu0 0.0
    %2698 = vmatpush.msra.mxu0 0.0
    %2699 = vmatpush.msra.mxu0 0.0
    %2700 = vmatpush.msra.mxu0 0.0
    %2701 = vmatpush.msra.mxu0 0.0
    %2702 = vmatpush.msra.mxu0 0.0
    %2703 = vmatpush.msra.mxu0 0.0
    %2704 = vmatpush.msra.mxu0 0.0
    %2705 = vmatpush.msra.mxu0 0.0
    %2706 = vmatpush.msra.mxu0 0.0
    %2707 = vmatpush.msra.mxu0 0.0
    %2708 = vmatpush.msra.mxu0 %v2685
    %2709 = vmatpush.msra.mxu0 %v2683
    %2710 = vmatmul.f32.gmra.mxu0 %v2689
    %v2711 = vpop.f32.mrf.mxu0
    %v2712 = vadd.f32 0.0, %v2711
    %2713 = vmatmul.f32.gmra.mxu0 %v2692
    %v2714 = vpop.f32.mrf.mxu0
    %v2715 = vadd.f32 0.0, %v2714
    %2716 = vdwg.mxu0
    %2719 = vrot.lane.b32.xlu0 %v2233, 64
    %v2720 = vpop.permute.xlu0 %2719
    %2721 = vrot.lane.b32.xlu0 %v2234, 64
    %v2722 = vpop.permute.xlu0 %2721
    %v2726 = vsel %vm1888, %v2590, 0
    %v2729 = vsel %vm1888, %v2605, 0
    %2731 = vmatpush.msra.mxu0 0.0
    %2732 = vmatpush.msra.mxu0 0.0
    %2733 = vmatpush.msra.mxu0 0.0
    %2734 = vmatpush.msra.mxu0 0.0
    %2735 = vmatpush.msra.mxu0 0.0
    %2736 = vmatpush.msra.mxu0 0.0
    %2737 = vmatpush.msra.mxu0 0.0
    %2738 = vmatpush.msra.mxu0 0.0
    %2739 = vmatpush.msra.mxu0 0.0
    %2740 = vmatpush.msra.mxu0 0.0
    %2741 = vmatpush.msra.mxu0 0.0
    %2742 = vmatpush.msra.mxu0 0.0
    %2743 = vmatpush.msra.mxu0 0.0
    %2744 = vmatpush.msra.mxu0 0.0
    %2745 = vmatpush.msra.mxu0 %v2722
    %2746 = vmatpush.msra.mxu0 %v2720
    %2747 = vmatmul.f32.gmra.mxu0 %v2726
    %v2748 = vpop.f32.mrf.mxu0
    %v2749 = vadd.f32 0.0, %v2748
    %2750 = vmatmul.f32.gmra.mxu0 %v2729
    %v2751 = vpop.f32.mrf.mxu0
    %v2752 = vadd.f32 0.0, %v2751
    %2753 = vdwg.mxu0
    %v2754 = vsel %vm1081, %v2638, 0.0
    %v2755 = vsel %vm1081, %v2675, 0.0
    %v2756 = vadd.f32 %v2754, %v2755
    %v2757 = vsel %vm1081, %v2712, 0.0
    %v2758 = vadd.f32 %v2756, %v2757
    %v2759 = vsel %vm1081, %v2749, 0.0
    %v2760 = vadd.f32 %v2758, %v2759
    %v2761 = vsel %vm1081, %v2641, 0.0
    %v2762 = vsel %vm1081, %v2678, 0.0
    %v2763 = vadd.f32 %v2761, %v2762
    %v2764 = vsel %vm1081, %v2715, 0.0
    %v2765 = vadd.f32 %v2763, %v2764
    %v2766 = vsel %vm1081, %v2752, 0.0
    %v2767 = vadd.f32 %v2765, %v2766
    %v2769 = vperm.slane %v2124, 0
    %v2772 = vsel %vm1081, %v2760, 0
    %v2775 = vsel %vm1081, %v2767, 0
    %2777 = vmatpush.msra.mxu0 0.0
    %2778 = vmatpush.msra.mxu0 0.0
    %2779 = vmatpush.msra.mxu0 0.0
    %2780 = vmatpush.msra.mxu0 0.0
    %2781 = vmatpush.msra.mxu0 0.0
    %2782 = vmatpush.msra.mxu0 0.0
    %2783 = vmatpush.msra.mxu0 0.0
    %2784 = vmatpush.msra.mxu0 0.0
    %2785 = vmatpush.msra.mxu0 0.0
    %2786 = vmatpush.msra.mxu0 0.0
    %2787 = vmatpush.msra.mxu0 0.0
    %2788 = vmatpush.msra.mxu0 0.0
    %2789 = vmatpush.msra.mxu0 %v2123
    %2790 = vmatpush.msra.mxu0 %v2122
    %2791 = vmatpush.msra.mxu0 %v2121
    %2792 = vmatpush.msra.mxu0 %v2120
    %2793 = vmatmul.f32.gmra.mxu0 %v2772
    %v2794 = vpop.f32.mrf.mxu0
    %v2795 = vadd.f32 %v2769, %v2794
    %2796 = vmatmul.f32.gmra.mxu0 %v2775
    %v2797 = vpop.f32.mrf.mxu0
    %v2798 = vadd.f32 %v2769, %v2797
    %2799 = vdwg.mxu0
    %v2800 = vadd.f32 %v2107, %v2795
    %v2801 = vadd.f32 %v2108, %v2798
    %v2802 = vsel %vm1081, %v2800, 0.0
    %2803 = vadd.xlane.f32.xlu0 %v2802
    %v2804 = vpop.xlane.xlu0 %2803
    %v2805 = vsel %vm1081, %v2801, 0.0
    %2806 = vadd.xlane.f32.xlu0 %v2805
    %v2807 = vpop.xlane.xlu0 %2806
    %v2808 = vrcp.pop 32.0
    %v2809 = vmul.f32 32.0, %v2808
    %v2810 = vsub.f32 1.0, %v2809
    %v2811 = vmul.f32 %v2808, %v2810
    %v2812 = vadd.f32 %v2808, %v2811
    %vm2813 = vweird.f32 %v2808
    %v2814 = vsel %vm2813, %v2808, %v2812
    %v2815 = vmul.f32 %v2804, %v2814
    %v2816 = vmul.f32 %v2807, %v2814
    %v2817 = vsub.f32 %v2800, %v2815
    %v2818 = vsub.f32 %v2801, %v2816
    %v2819 = vmul.f32 %v2817, %v2817
    %v2820 = vmul.f32 %v2818, %v2818
    %v2821 = vsel %vm1081, %v2819, 0.0
    %2822 = vadd.xlane.f32.xlu0 %v2821
    %v2823 = vpop.xlane.xlu0 %2822
    %v2824 = vsel %vm1081, %v2820, 0.0
    %2825 = vadd.xlane.f32.xlu0 %v2824
    %v2826 = vpop.xlane.xlu0 %2825
    %v2827 = vmul.f32 %v2823, %v2814
    %v2828 = vmul.f32 %v2826, %v2814
    %v2829 = vadd.f32 %v2827, 1e-05
    %v2830 = vadd.f32 %v2828, 1e-05
    %v2831 = vrsqrt.pop %v2829
    %v2832 = vmul.f32 %v2831, %v2829
    %v2833 = vmul.f32 %v2832, %v2831
    %v2834 = vmul.f32 0.5, %v2833
    %v2835 = vsub.f32 1.5, %v2834
    %v2836 = vmul.f32 %v2831, %v2835
    %vm2837 = vweird.f32 %v2829
    %vm2838 = vweird.f32 %v2831
    %vm2839 = vmor %vm2837, %vm2838
    %v2840 = vsel %vm2839, %v2831, %v2836
    %v2841 = vrsqrt.pop %v2830
    %v2842 = vmul.f32 %v2841, %v2830
    %v2843 = vmul.f32 %v2842, %v2841
    %v2844 = vmul.f32 0.5, %v2843
    %v2845 = vsub.f32 1.5, %v2844
    %v2846 = vmul.f32 %v2841, %v2845
    %vm2847 = vweird.f32 %v2830
    %vm2848 = vweird.f32 %v2841
    %vm2849 = vmor %vm2847, %vm2848
    %v2850 = vsel %vm2849, %v2841, %v2846
    %v2851 = vmul.f32 %v2817, %v2840
    %v2852 = vmul.f32 %v2818, %v2850
    %v2854 = vperm.slane %v2125, 0
    %v2856 = vmul.f32 %v2851, %v2854
    %v2857 = vmul.f32 %v2852, %v2854
    %v2859 = vperm.slane %v2126, 0
    %v2861 = vadd.f32 %v2856, %v2859
    %v2862 = vadd.f32 %v2857, %v2859
    %v2864 = vperm.slane %v2131, 0
    %v2867 = vsel %vm1081, %v2861, 0
    %v2870 = vsel %vm1081, %v2862, 0
    %2872 = vmatpush.msra.mxu0 0.0
    %2873 = vmatpush.msra.mxu0 0.0
    %2874 = vmatpush.msra.mxu0 0.0
    %2875 = vmatpush.msra.mxu0 0.0
    %2876 = vmatpush.msra.mxu0 0.0
    %2877 = vmatpush.msra.mxu0 0.0
    %2878 = vmatpush.msra.mxu0 0.0
    %2879 = vmatpush.msra.mxu0 0.0
    %2880 = vmatpush.msra.mxu0 0.0
    %2881 = vmatpush.msra.mxu0 0.0
    %2882 = vmatpush.msra.mxu0 0.0
    %2883 = vmatpush.msra.mxu0 0.0
    %2884 = vmatpush.msra.mxu0 %v2130
    %2885 = vmatpush.msra.mxu0 %v2129
    %2886 = vmatpush.msra.mxu0 %v2128
    %2887 = vmatpush.msra.mxu0 %v2127
    %2888 = vmatmul.f32.gmra.mxu0 %v2867
    %v2889 = vpop.f32.mrf.mxu0
    %v2890 = vadd.f32 %v2864, %v2889
    %2891 = vmatmul.f32.gmra.mxu0 %v2870
    %v2892 = vpop.f32.mrf.mxu0
    %v2893 = vadd.f32 %v2864, %v2892
    %2894 = vdwg.mxu0
    %v2895 = vmax.f32 %v2890, 0.0
    %v2896 = vmax.f32 %v2893, 0.0
    %v2898 = vperm.slane %v2140, 0
    %vm2900 = vcmask 523264
    %v2902 = vsel %vm2900, %v2895, 0
    %v2905 = vsel %vm2900, %v2896, 0
    %2907 = vmatpush.msra.mxu0 0.0
    %2908 = vmatpush.msra.mxu0 0.0
    %2909 = vmatpush.msra.mxu0 0.0
    %2910 = vmatpush.msra.mxu0 0.0
    %2911 = vmatpush.msra.mxu0 0.0
    %2912 = vmatpush.msra.mxu0 0.0
    %2913 = vmatpush.msra.mxu0 0.0
    %2914 = vmatpush.msra.mxu0 0.0
    %2915 = vmatpush.msra.mxu0 %v2139
    %2916 = vmatpush.msra.mxu0 %v2138
    %2917 = vmatpush.msra.mxu0 %v2137
    %2918 = vmatpush.msra.mxu0 %v2136
    %2919 = vmatpush.msra.mxu0 %v2135
    %2920 = vmatpush.msra.mxu0 %v2134
    %2921 = vmatpush.msra.mxu0 %v2133
    %2922 = vmatpush.msra.mxu0 %v2132
    %2923 = vmatmul.f32.gmra.mxu0 %v2902
    %v2924 = vpop.f32.mrf.mxu0
    %v2925 = vadd.f32 %v2898, %v2924
    %2926 = vmatmul.f32.gmra.mxu0 %v2905
    %v2927 = vpop.f32.mrf.mxu0
    %v2928 = vadd.f32 %v2898, %v2927
    %2929 = vdwg.mxu0
    %v2930 = vadd.f32 %v2861, %v2925
    %v2931 = vadd.f32 %v2862, %v2928
    %v2932 = vsel %vm1081, %v2930, 0.0
    %2933 = vadd.xlane.f32.xlu0 %v2932
    %v2934 = vpop.xlane.xlu0 %2933
    %v2935 = vsel %vm1081, %v2931, 0.0
    %2936 = vadd.xlane.f32.xlu0 %v2935
    %v2937 = vpop.xlane.xlu0 %2936
    %v2938 = vmul.f32 %v2934, %v2814
    %v2939 = vmul.f32 %v2937, %v2814
    %v2940 = vsub.f32 %v2930, %v2938
    %v2941 = vsub.f32 %v2931, %v2939
    %v2942 = vmul.f32 %v2940, %v2940
    %v2943 = vmul.f32 %v2941, %v2941
    %v2944 = vsel %vm1081, %v2942, 0.0
    %2945 = vadd.xlane.f32.xlu0 %v2944
    %v2946 = vpop.xlane.xlu0 %2945
    %v2947 = vsel %vm1081, %v2943, 0.0
    %2948 = vadd.xlane.f32.xlu0 %v2947
    %v2949 = vpop.xlane.xlu0 %2948
    %v2950 = vmul.f32 %v2946, %v2814
    %v2951 = vmul.f32 %v2949, %v2814
    %v2952 = vadd.f32 %v2950, 1e-05
    %v2953 = vadd.f32 %v2951, 1e-05
    %v2954 = vrsqrt.pop %v2952
    %v2955 = vmul.f32 %v2954, %v2952
    %v2956 = vmul.f32 %v2955, %v2954
    %v2957 = vmul.f32 0.5, %v2956
    %v2958 = vsub.f32 1.5, %v2957
    %v2959 = vmul.f32 %v2954, %v2958
    %vm2960 = vweird.f32 %v2952
    %vm2961 = vweird.f32 %v2954
    %vm2962 = vmor %vm2960, %vm2961
    %v2963 = vsel %vm2962, %v2954, %v2959
    %v2964 = vrsqrt.pop %v2953
    %v2965 = vmul.f32 %v2964, %v2953
    %v2966 = vmul.f32 %v2965, %v2964
    %v2967 = vmul.f32 0.5, %v2966
    %v2968 = vsub.f32 1.5, %v2967
    %v2969 = vmul.f32 %v2964, %v2968
    %vm2970 = vweird.f32 %v2953
    %vm2971 = vweird.f32 %v2964
    %vm2972 = vmor %vm2970, %vm2971
    %v2973 = vsel %vm2972, %v2964, %v2969
    %v2974 = vmul.f32 %v2940, %v2963
    %v2975 = vmul.f32 %v2941, %v2973
    %v2977 = vperm.slane %v2141, 0
    %v2979 = vmul.f32 %v2974, %v2977
    %v2980 = vmul.f32 %v2975, %v2977
    %v2982 = vperm.slane %v2142, 0
    %v2984 = vadd.f32 %v2979, %v2982
    %v2985 = vadd.f32 %v2980, %v2982
    %v2986 = vld [vmem:[%s71] sm:$0x1]
    %v2987 = vld [vmem:[%s71 + $0x1] sm:$0x1]
    %v2988 = vld [vmem:[%s71 + $0x2] sm:$0x1]
    %v2989 = vld [vmem:[%s71 + $0x3] sm:$0x1]
    %v2990 = vld [vmem:[%s71 + $0x4] sm:$0x1]
    %v2991 = vld [vmem:[#allocation39] sm:$0x1]
    %v2992 = vld [vmem:[#allocation41] sm:$0x1]
    %v2993 = vld [vmem:[%s77] sm:$0x1]
    %v2994 = vld [vmem:[%s77 + $0x1] sm:$0x1]
    %v2995 = vld [vmem:[%s77 + $0x2] sm:$0x1]
    %v2996 = vld [vmem:[%s77 + $0x3] sm:$0x1]
    %v2997 = vld [vmem:[%s77 + $0x4] sm:$0x1]
    %v2998 = vld [vmem:[#allocation42] sm:$0x1]
    %v2999 = vld [vmem:[#allocation44] sm:$0x1]
    %v3000 = vld [vmem:[%s83] sm:$0x1]
    %v3001 = vld [vmem:[%s83 + $0x1] sm:$0x1]
    %v3002 = vld [vmem:[%s83 + $0x2] sm:$0x1]
    %v3003 = vld [vmem:[%s83 + $0x3] sm:$0x1]
    %v3004 = vld [vmem:[%s83 + $0x4] sm:$0x1]
    %v3005 = vld [vmem:[#allocation45] sm:$0x1]
    %v3006 = vld [vmem:[#allocation47] sm:$0x1]
    %v3007 = vld [vmem:[%s89] sm:$0xff]
    %v3008 = vld [vmem:[%s89 + $0x8] sm:$0xff]
    %v3009 = vld [vmem:[%s89 + $0x10] sm:$0xff]
    %v3010 = vld [vmem:[%s89 + $0x18] sm:$0xff]
    %3011 = vst.msk [vmem:[#allocation2 + $0x8] sm:$0xff] %vm1081, %v1466
    %3012 = vst.msk [vmem:[#allocation2 + $0x10] sm:$0xff] %vm1081, %v1467
    %3013 = vst.msk [vmem:[#allocation2 + $0x18] sm:$0xff] %vm1081, %v1468
    %3014 = vst.msk [vmem:[#allocation2 + $0x20] sm:$0xff] %vm1081, %v1469
    %3015 = vst.msk [vmem:[#allocation2 + $0x38] sm:$0xff] %vm1081, %v1470
    %3016 = vst.msk [vmem:[#allocation2 + $0x40] sm:$0xff] %vm1081, %v1471
    %3017 = vst.msk [vmem:[#allocation2 + $0x48] sm:$0xff] %vm1081, %v1472
    %3018 = vst.msk [vmem:[#allocation2 + $0x50] sm:$0xff] %vm1081, %v1473
    %3019 = vst.msk [vmem:[#allocation2 + $0x28] sm:$0xff] %vm1081, 0.0
    %3020 = vst.msk [vmem:[#allocation2 + $0x58] sm:$0xff] %vm1081, 0.0
    %v3021 = vld [vmem:[#allocation2 + $0x6] sm:$0xff]
    %v3022 = vld [vmem:[#allocation2 + $0xe] sm:$0xff]
    %v3023 = vld [vmem:[#allocation2 + $0x16] sm:$0xff]
    %v3024 = vld [vmem:[#allocation2 + $0x1e] sm:$0xff]
    %v3025 = vld [vmem:[#allocation2 + $0x36] sm:$0xff]
    %v3026 = vld [vmem:[#allocation2 + $0x3e] sm:$0xff]
    %v3027 = vld [vmem:[#allocation2 + $0x46] sm:$0xff]
    %v3028 = vld [vmem:[#allocation2 + $0x4e] sm:$0xff]
    %v3030 = vperm.slane %v2986, 0
    %v3032 = vmul.f32 %v3021, %v3030
    %v3033 = vmul.f32 %v3022, %v3030
    %v3034 = vmul.f32 %v3023, %v3030
    %v3035 = vmul.f32 %v3024, %v3030
    %v3036 = vmul.f32 %v3025, %v3030
    %v3037 = vmul.f32 %v3026, %v3030
    %v3038 = vmul.f32 %v3027, %v3030
    %v3039 = vmul.f32 %v3028, %v3030
    %v3040 = vld [vmem:[#allocation2 + $0x7] sm:$0xff]
    %v3041 = vld [vmem:[#allocation2 + $0xf] sm:$0xff]
    %v3042 = vld [vmem:[#allocation2 + $0x17] sm:$0xff]
    %v3043 = vld [vmem:[#allocation2 + $0x1f] sm:$0xff]
    %v3044 = vld [vmem:[#allocation2 + $0x37] sm:$0xff]
    %v3045 = vld [vmem:[#allocation2 + $0x3f] sm:$0xff]
    %v3046 = vld [vmem:[#allocation2 + $0x47] sm:$0xff]
    %v3047 = vld [vmem:[#allocation2 + $0x4f] sm:$0xff]
    %v3049 = vperm.slane %v2987, 0
    %v3051 = vmul.f32 %v3040, %v3049
    %v3052 = vmul.f32 %v3041, %v3049
    %v3053 = vmul.f32 %v3042, %v3049
    %v3054 = vmul.f32 %v3043, %v3049
    %v3055 = vmul.f32 %v3044, %v3049
    %v3056 = vmul.f32 %v3045, %v3049
    %v3057 = vmul.f32 %v3046, %v3049
    %v3058 = vmul.f32 %v3047, %v3049
    %v3059 = vadd.f32 %v3032, %v3051
    %v3060 = vadd.f32 %v3033, %v3052
    %v3061 = vadd.f32 %v3034, %v3053
    %v3062 = vadd.f32 %v3035, %v3054
    %v3063 = vadd.f32 %v3036, %v3055
    %v3064 = vadd.f32 %v3037, %v3056
    %v3065 = vadd.f32 %v3038, %v3057
    %v3066 = vadd.f32 %v3039, %v3058
    %v3067 = vld [vmem:[#allocation2 + $0x8] sm:$0xff]
    %v3068 = vld [vmem:[#allocation2 + $0x10] sm:$0xff]
    %v3069 = vld [vmem:[#allocation2 + $0x18] sm:$0xff]
    %v3070 = vld [vmem:[#allocation2 + $0x20] sm:$0xff]
    %v3071 = vld [vmem:[#allocation2 + $0x38] sm:$0xff]
    %v3072 = vld [vmem:[#allocation2 + $0x40] sm:$0xff]
    %v3073 = vld [vmem:[#allocation2 + $0x48] sm:$0xff]
    %v3074 = vld [vmem:[#allocation2 + $0x50] sm:$0xff]
    %v3076 = vperm.slane %v2988, 0
    %v3078 = vmul.f32 %v3067, %v3076
    %v3079 = vmul.f32 %v3068, %v3076
    %v3080 = vmul.f32 %v3069, %v3076
    %v3081 = vmul.f32 %v3070, %v3076
    %v3082 = vmul.f32 %v3071, %v3076
    %v3083 = vmul.f32 %v3072, %v3076
    %v3084 = vmul.f32 %v3073, %v3076
    %v3085 = vmul.f32 %v3074, %v3076
    %v3086 = vadd.f32 %v3059, %v3078
    %v3087 = vadd.f32 %v3060, %v3079
    %v3088 = vadd.f32 %v3061, %v3080
    %v3089 = vadd.f32 %v3062, %v3081
    %v3090 = vadd.f32 %v3063, %v3082
    %v3091 = vadd.f32 %v3064, %v3083
    %v3092 = vadd.f32 %v3065, %v3084
    %v3093 = vadd.f32 %v3066, %v3085
    %v3094 = vld [vmem:[#allocation2 + $0x9] sm:$0xff]
    %v3095 = vld [vmem:[#allocation2 + $0x11] sm:$0xff]
    %v3096 = vld [vmem:[#allocation2 + $0x19] sm:$0xff]
    %v3097 = vld [vmem:[#allocation2 + $0x21] sm:$0xff]
    %v3098 = vld [vmem:[#allocation2 + $0x39] sm:$0xff]
    %v3099 = vld [vmem:[#allocation2 + $0x41] sm:$0xff]
    %v3100 = vld [vmem:[#allocation2 + $0x49] sm:$0xff]
    %v3101 = vld [vmem:[#allocation2 + $0x51] sm:$0xff]
    %v3103 = vperm.slane %v2989, 0
    %v3105 = vmul.f32 %v3094, %v3103
    %v3106 = vmul.f32 %v3095, %v3103
    %v3107 = vmul.f32 %v3096, %v3103
    %v3108 = vmul.f32 %v3097, %v3103
    %v3109 = vmul.f32 %v3098, %v3103
    %v3110 = vmul.f32 %v3099, %v3103
    %v3111 = vmul.f32 %v3100, %v3103
    %v3112 = vmul.f32 %v3101, %v3103
    %v3113 = vadd.f32 %v3086, %v3105
    %v3114 = vadd.f32 %v3087, %v3106
    %v3115 = vadd.f32 %v3088, %v3107
    %v3116 = vadd.f32 %v3089, %v3108
    %v3117 = vadd.f32 %v3090, %v3109
    %v3118 = vadd.f32 %v3091, %v3110
    %v3119 = vadd.f32 %v3092, %v3111
    %v3120 = vadd.f32 %v3093, %v3112
    %v3121 = vld [vmem:[#allocation2 + $0xa] sm:$0xff]
    %v3122 = vld [vmem:[#allocation2 + $0x12] sm:$0xff]
    %v3123 = vld [vmem:[#allocation2 + $0x1a] sm:$0xff]
    %v3124 = vld [vmem:[#allocation2 + $0x22] sm:$0xff]
    %v3125 = vld [vmem:[#allocation2 + $0x3a] sm:$0xff]
    %v3126 = vld [vmem:[#allocation2 + $0x42] sm:$0xff]
    %v3127 = vld [vmem:[#allocation2 + $0x4a] sm:$0xff]
    %v3128 = vld [vmem:[#allocation2 + $0x52] sm:$0xff]
    %v3130 = vperm.slane %v2990, 0
    %v3132 = vmul.f32 %v3121, %v3130
    %v3133 = vmul.f32 %v3122, %v3130
    %v3134 = vmul.f32 %v3123, %v3130
    %v3135 = vmul.f32 %v3124, %v3130
    %v3136 = vmul.f32 %v3125, %v3130
    %v3137 = vmul.f32 %v3126, %v3130
    %v3138 = vmul.f32 %v3127, %v3130
    %v3139 = vmul.f32 %v3128, %v3130
    %v3140 = vadd.f32 %v3113, %v3132
    %v3141 = vadd.f32 %v3114, %v3133
    %v3142 = vadd.f32 %v3115, %v3134
    %v3143 = vadd.f32 %v3116, %v3135
    %v3144 = vadd.f32 %v3117, %v3136
    %v3145 = vadd.f32 %v3118, %v3137
    %v3146 = vadd.f32 %v3119, %v3138
    %v3147 = vadd.f32 %v3120, %v3139
    %v3148 = vsel %vm1081, %v3140, 0.0
    %3149 = vadd.xlane.f32.xlu0 %v3148
    %v3150 = vpop.xlane.xlu0 %3149
    %v3151 = vsel %vm1081, %v3141, 0.0
    %3152 = vadd.xlane.f32.xlu0 %v3151
    %v3153 = vpop.xlane.xlu0 %3152
    %v3154 = vsel %vm1081, %v3142, 0.0
    %3155 = vadd.xlane.f32.xlu0 %v3154
    %v3156 = vpop.xlane.xlu0 %3155
    %v3157 = vsel %vm1081, %v3143, 0.0
    %3158 = vadd.xlane.f32.xlu0 %v3157
    %v3159 = vpop.xlane.xlu0 %3158
    %v3160 = vsel %vm1081, %v3144, 0.0
    %3161 = vadd.xlane.f32.xlu0 %v3160
    %v3162 = vpop.xlane.xlu0 %3161
    %v3163 = vsel %vm1081, %v3145, 0.0
    %3164 = vadd.xlane.f32.xlu0 %v3163
    %v3165 = vpop.xlane.xlu0 %3164
    %v3166 = vsel %vm1081, %v3146, 0.0
    %3167 = vadd.xlane.f32.xlu0 %v3166
    %v3168 = vpop.xlane.xlu0 %3167
    %v3169 = vsel %vm1081, %v3147, 0.0
    %3170 = vadd.xlane.f32.xlu0 %v3169
    %v3171 = vpop.xlane.xlu0 %3170
    %v3172 = vadd.f32 %v3150, %v3153
    %v3173 = vadd.f32 %v3172, %v3156
    %v3174 = vadd.f32 %v3173, %v3159
    %v3175 = vrot.slane %v3174, 4
    %v3176 = vadd.f32 %v3174, %v3175
    %v3177 = vrot.slane %v3176, 2
    %v3178 = vadd.f32 %v3176, %v3177
    %v3179 = vrot.slane %v3178, 1
    %v3180 = vadd.f32 %v3178, %v3179
    %v3181 = vadd.f32 %v3162, %v3165
    %v3182 = vadd.f32 %v3181, %v3168
    %v3183 = vadd.f32 %v3182, %v3171
    %v3184 = vrot.slane %v3183, 4
    %v3185 = vadd.f32 %v3183, %v3184
    %v3186 = vrot.slane %v3185, 2
    %v3187 = vadd.f32 %v3185, %v3186
    %v3188 = vrot.slane %v3187, 1
    %v3189 = vadd.f32 %v3187, %v3188
    %v3190 = vmul.f32 %v3180, %v1332
    %v3191 = vmul.f32 %v3189, %v1332
    %v3192 = vsub.f32 %v3140, %v3190
    %v3193 = vsub.f32 %v3141, %v3190
    %v3194 = vsub.f32 %v3142, %v3190
    %v3195 = vsub.f32 %v3143, %v3190
    %v3196 = vsub.f32 %v3144, %v3191
    %v3197 = vsub.f32 %v3145, %v3191
    %v3198 = vsub.f32 %v3146, %v3191
    %v3199 = vsub.f32 %v3147, %v3191
    %v3200 = vmul.f32 %v3192, %v3192
    %v3201 = vmul.f32 %v3193, %v3193
    %v3202 = vmul.f32 %v3194, %v3194
    %v3203 = vmul.f32 %v3195, %v3195
    %v3204 = vmul.f32 %v3196, %v3196
    %v3205 = vmul.f32 %v3197, %v3197
    %v3206 = vmul.f32 %v3198, %v3198
    %v3207 = vmul.f32 %v3199, %v3199
    %v3208 = vsel %vm1081, %v3200, 0.0
    %3209 = vadd.xlane.f32.xlu0 %v3208
    %v3210 = vpop.xlane.xlu0 %3209
    %v3211 = vsel %vm1081, %v3201, 0.0
    %3212 = vadd.xlane.f32.xlu0 %v3211
    %v3213 = vpop.xlane.xlu0 %3212
    %v3214 = vsel %vm1081, %v3202, 0.0
    %3215 = vadd.xlane.f32.xlu0 %v3214
    %v3216 = vpop.xlane.xlu0 %3215
    %v3217 = vsel %vm1081, %v3203, 0.0
    %3218 = vadd.xlane.f32.xlu0 %v3217
    %v3219 = vpop.xlane.xlu0 %3218
    %v3220 = vsel %vm1081, %v3204, 0.0
    %3221 = vadd.xlane.f32.xlu0 %v3220
    %v3222 = vpop.xlane.xlu0 %3221
    %v3223 = vsel %vm1081, %v3205, 0.0
    %3224 = vadd.xlane.f32.xlu0 %v3223
    %v3225 = vpop.xlane.xlu0 %3224
    %v3226 = vsel %vm1081, %v3206, 0.0
    %3227 = vadd.xlane.f32.xlu0 %v3226
    %v3228 = vpop.xlane.xlu0 %3227
    %v3229 = vsel %vm1081, %v3207, 0.0
    %3230 = vadd.xlane.f32.xlu0 %v3229
    %v3231 = vpop.xlane.xlu0 %3230
    %v3232 = vadd.f32 %v3210, %v3213
    %v3233 = vadd.f32 %v3232, %v3216
    %v3234 = vadd.f32 %v3233, %v3219
    %v3235 = vrot.slane %v3234, 4
    %v3236 = vadd.f32 %v3234, %v3235
    %v3237 = vrot.slane %v3236, 2
    %v3238 = vadd.f32 %v3236, %v3237
    %v3239 = vrot.slane %v3238, 1
    %v3240 = vadd.f32 %v3238, %v3239
    %v3241 = vadd.f32 %v3222, %v3225
    %v3242 = vadd.f32 %v3241, %v3228
    %v3243 = vadd.f32 %v3242, %v3231
    %v3244 = vrot.slane %v3243, 4
    %v3245 = vadd.f32 %v3243, %v3244
    %v3246 = vrot.slane %v3245, 2
    %v3247 = vadd.f32 %v3245, %v3246
    %v3248 = vrot.slane %v3247, 1
    %v3249 = vadd.f32 %v3247, %v3248
    %v3250 = vmul.f32 %v3240, %v1332
    %v3251 = vmul.f32 %v3249, %v1332
    %v3252 = vadd.f32 %v3250, 1e-08
    %v3253 = vadd.f32 %v3251, 1e-08
    %v3254 = vrsqrt.pop %v3252
    %v3255 = vmul.f32 %v3254, %v3252
    %v3256 = vmul.f32 %v3255, %v3254
    %v3257 = vmul.f32 0.5, %v3256
    %v3258 = vsub.f32 1.5, %v3257
    %v3259 = vmul.f32 %v3254, %v3258
    %vm3260 = vweird.f32 %v3252
    %vm3261 = vweird.f32 %v3254
    %vm3262 = vmor %vm3260, %vm3261
    %v3263 = vsel %vm3262, %v3254, %v3259
    %v3264 = vrsqrt.pop %v3253
    %v3265 = vmul.f32 %v3264, %v3253
    %v3266 = vmul.f32 %v3265, %v3264
    %v3267 = vmul.f32 0.5, %v3266
    %v3268 = vsub.f32 1.5, %v3267
    %v3269 = vmul.f32 %v3264, %v3268
    %vm3270 = vweird.f32 %v3253
    %vm3271 = vweird.f32 %v3264
    %vm3272 = vmor %vm3270, %vm3271
    %v3273 = vsel %vm3272, %v3264, %v3269
    %v3274 = vmul.f32 %v3192, %v3263
    %v3275 = vmul.f32 %v3193, %v3263
    %v3276 = vmul.f32 %v3194, %v3263
    %v3277 = vmul.f32 %v3195, %v3263
    %v3278 = vmul.f32 %v3196, %v3273
    %v3279 = vmul.f32 %v3197, %v3273
    %v3280 = vmul.f32 %v3198, %v3273
    %v3281 = vmul.f32 %v3199, %v3273
    %v3283 = vperm.slane %v2991, 0
    %v3285 = vmul.f32 %v3274, %v3283
    %v3286 = vmul.f32 %v3275, %v3283
    %v3287 = vmul.f32 %v3276, %v3283
    %v3288 = vmul.f32 %v3277, %v3283
    %v3289 = vmul.f32 %v3278, %v3283
    %v3290 = vmul.f32 %v3279, %v3283
    %v3291 = vmul.f32 %v3280, %v3283
    %v3292 = vmul.f32 %v3281, %v3283
    %v3294 = vperm.slane %v2992, 0
    %v3296 = vadd.f32 %v3285, %v3294
    %v3297 = vadd.f32 %v3286, %v3294
    %v3298 = vadd.f32 %v3287, %v3294
    %v3299 = vadd.f32 %v3288, %v3294
    %v3300 = vadd.f32 %v3289, %v3294
    %v3301 = vadd.f32 %v3290, %v3294
    %v3302 = vadd.f32 %v3291, %v3294
    %v3303 = vadd.f32 %v3292, %v3294
    %3304 = vst.msk [vmem:[#allocation2 + $0x8] sm:$0xff] %vm1081, %v2984
    %3305 = vst.msk [vmem:[#allocation2 + $0x38] sm:$0xff] %vm1081, %v2985
    %3306 = vst.msk [vmem:[#allocation2 + $0x10] sm:$0xff] %vm1081, 0.0
    %3307 = vst.msk [vmem:[#allocation2 + $0x40] sm:$0xff] %vm1081, 0.0
    %v3308 = vld [vmem:[#allocation2 + $0x6] sm:$0xff]
    %v3309 = vld [vmem:[#allocation2 + $0x36] sm:$0xff]
    %v3311 = vperm.slane %v2993, 0
    %v3313 = vmul.f32 %v3308, %v3311
    %v3314 = vmul.f32 %v3309, %v3311
    %v3315 = vld [vmem:[#allocation2 + $0x7] sm:$0xff]
    %v3316 = vld [vmem:[#allocation2 + $0x37] sm:$0xff]
    %v3318 = vperm.slane %v2994, 0
    %v3320 = vmul.f32 %v3315, %v3318
    %v3321 = vmul.f32 %v3316, %v3318
    %v3322 = vadd.f32 %v3313, %v3320
    %v3323 = vadd.f32 %v3314, %v3321
    %v3324 = vld [vmem:[#allocation2 + $0x8] sm:$0xff]
    %v3325 = vld [vmem:[#allocation2 + $0x38] sm:$0xff]
    %v3327 = vperm.slane %v2995, 0
    %v3329 = vmul.f32 %v3324, %v3327
    %v3330 = vmul.f32 %v3325, %v3327
    %v3331 = vadd.f32 %v3322, %v3329
    %v3332 = vadd.f32 %v3323, %v3330
    %v3333 = vld [vmem:[#allocation2 + $0x9] sm:$0xff]
    %v3334 = vld [vmem:[#allocation2 + $0x39] sm:$0xff]
    %v3336 = vperm.slane %v2996, 0
    %v3338 = vmul.f32 %v3333, %v3336
    %v3339 = vmul.f32 %v3334, %v3336
    %v3340 = vadd.f32 %v3331, %v3338
    %v3341 = vadd.f32 %v3332, %v3339
    %v3342 = vld [vmem:[#allocation2 + $0xa] sm:$0xff]
    %v3343 = vld [vmem:[#allocation2 + $0x3a] sm:$0xff]
    %v3345 = vperm.slane %v2997, 0
    %v3347 = vmul.f32 %v3342, %v3345
    %v3348 = vmul.f32 %v3343, %v3345
    %v3349 = vadd.f32 %v3340, %v3347
    %v3350 = vadd.f32 %v3341, %v3348
    %v3351 = vsel %vm1081, %v3349, 0.0
    %3352 = vadd.xlane.f32.xlu0 %v3351
    %v3353 = vpop.xlane.xlu0 %3352
    %v3354 = vsel %vm1081, %v3350, 0.0
    %3355 = vadd.xlane.f32.xlu0 %v3354
    %v3356 = vpop.xlane.xlu0 %3355
    %v3357 = vrot.slane %v3353, 4
    %v3358 = vadd.f32 %v3353, %v3357
    %v3359 = vrot.slane %v3358, 2
    %v3360 = vadd.f32 %v3358, %v3359
    %v3361 = vrot.slane %v3360, 1
    %v3362 = vadd.f32 %v3360, %v3361
    %v3363 = vrot.slane %v3356, 4
    %v3364 = vadd.f32 %v3356, %v3363
    %v3365 = vrot.slane %v3364, 2
    %v3366 = vadd.f32 %v3364, %v3365
    %v3367 = vrot.slane %v3366, 1
    %v3368 = vadd.f32 %v3366, %v3367
    %v3369 = vmul.f32 %v3362, %v1956
    %v3370 = vmul.f32 %v3368, %v1956
    %v3371 = vsub.f32 %v3349, %v3369
    %v3372 = vsub.f32 %v3350, %v3370
    %v3373 = vmul.f32 %v3371, %v3371
    %v3374 = vmul.f32 %v3372, %v3372
    %v3375 = vsel %vm1081, %v3373, 0.0
    %3376 = vadd.xlane.f32.xlu0 %v3375
    %v3377 = vpop.xlane.xlu0 %3376
    %v3378 = vsel %vm1081, %v3374, 0.0
    %3379 = vadd.xlane.f32.xlu0 %v3378
    %v3380 = vpop.xlane.xlu0 %3379
    %v3381 = vrot.slane %v3377, 4
    %v3382 = vadd.f32 %v3377, %v3381
    %v3383 = vrot.slane %v3382, 2
    %v3384 = vadd.f32 %v3382, %v3383
    %v3385 = vrot.slane %v3384, 1
    %v3386 = vadd.f32 %v3384, %v3385
    %v3387 = vrot.slane %v3380, 4
    %v3388 = vadd.f32 %v3380, %v3387
    %v3389 = vrot.slane %v3388, 2
    %v3390 = vadd.f32 %v3388, %v3389
    %v3391 = vrot.slane %v3390, 1
    %v3392 = vadd.f32 %v3390, %v3391
    %v3393 = vmul.f32 %v3386, %v1956
    %v3394 = vmul.f32 %v3392, %v1956
    %v3395 = vadd.f32 %v3393, 1e-08
    %v3396 = vadd.f32 %v3394, 1e-08
    %v3397 = vrsqrt.pop %v3395
    %v3398 = vmul.f32 %v3397, %v3395
    %v3399 = vmul.f32 %v3398, %v3397
    %v3400 = vmul.f32 0.5, %v3399
    %v3401 = vsub.f32 1.5, %v3400
    %v3402 = vmul.f32 %v3397, %v3401
    %vm3403 = vweird.f32 %v3395
    %vm3404 = vweird.f32 %v3397
    %vm3405 = vmor %vm3403, %vm3404
    %v3406 = vsel %vm3405, %v3397, %v3402
    %v3407 = vrsqrt.pop %v3396
    %v3408 = vmul.f32 %v3407, %v3396
    %v3409 = vmul.f32 %v3408, %v3407
    %v3410 = vmul.f32 0.5, %v3409
    %v3411 = vsub.f32 1.5, %v3410
    %v3412 = vmul.f32 %v3407, %v3411
    %vm3413 = vweird.f32 %v3396
    %vm3414 = vweird.f32 %v3407
    %vm3415 = vmor %vm3413, %vm3414
    %v3416 = vsel %vm3415, %v3407, %v3412
    %v3417 = vmul.f32 %v3371, %v3406
    %v3418 = vmul.f32 %v3372, %v3416
    %v3420 = vperm.slane %v2998, 0
    %v3422 = vmul.f32 %v3417, %v3420
    %v3423 = vmul.f32 %v3418, %v3420
    %v3425 = vperm.slane %v2999, 0
    %v3427 = vadd.f32 %v3422, %v3425
    %v3428 = vadd.f32 %v3423, %v3425
    %v3429 = vxor.u32 %v3427, 2147483648
    %v3430 = vxor.u32 %v3428, 2147483648
    %v3431 = vmul.f32 %v3429, 1.442695
    %v3432 = vpow.pop %v3431
    %v3433 = vmul.f32 %v3430, 1.442695
    %v3434 = vpow.pop %v3433
    %v3435 = vadd.f32 %v3432, 1.0
    %v3436 = vadd.f32 %v3434, 1.0
    %v3437 = vrcp.pop %v3435
    %v3438 = vmul.f32 %v3435, %v3437
    %v3439 = vsub.f32 1.0, %v3438
    %v3440 = vmul.f32 %v3437, %v3439
    %v3441 = vadd.f32 %v3437, %v3440
    %vm3442 = vweird.f32 %v3435
    %vm3443 = vweird.f32 %v3437
    %vm3444 = vmor %vm3442, %vm3443
    %v3445 = vsel %vm3444, %v3437, %v3441
    %v3446 = vand.u32 2147483647, %v3435
    %vm3447 = vcmp.eq.f32.partialorder %v3446, 8.507059e+37
    %v3448 = vand.u32 %v3435, 2147483648
    %v3449 = vor.u32 1.1754944e-38, %v3448
    %v3450 = vsel %vm3447, %v3449, %v3445
    %v3451 = vmul.f32 1.0, %v3450
    %v3452 = vrcp.pop %v3436
    %v3453 = vmul.f32 %v3436, %v3452
    %v3454 = vsub.f32 1.0, %v3453
    %v3455 = vmul.f32 %v3452, %v3454
    %v3456 = vadd.f32 %v3452, %v3455
    %vm3457 = vweird.f32 %v3436
    %vm3458 = vweird.f32 %v3452
    %vm3459 = vmor %vm3457, %vm3458
    %v3460 = vsel %vm3459, %v3452, %v3456
    %v3461 = vand.u32 2147483647, %v3436
    %vm3462 = vcmp.eq.f32.partialorder %v3461, 8.507059e+37
    %v3463 = vand.u32 %v3436, 2147483648
    %v3464 = vor.u32 1.1754944e-38, %v3463
    %v3465 = vsel %vm3462, %v3464, %v3460
    %v3466 = vmul.f32 1.0, %v3465
    %v3468 = vperm.slane %v3000, 0
    %v3470 = vmul.f32 %v3308, %v3468
    %v3471 = vmul.f32 %v3309, %v3468
    %v3473 = vperm.slane %v3001, 0
    %v3475 = vmul.f32 %v3315, %v3473
    %v3476 = vmul.f32 %v3316, %v3473
    %v3477 = vadd.f32 %v3470, %v3475
    %v3478 = vadd.f32 %v3471, %v3476
    %v3480 = vperm.slane %v3002, 0
    %v3482 = vmul.f32 %v3324, %v3480
    %v3483 = vmul.f32 %v3325, %v3480
    %v3484 = vadd.f32 %v3477, %v3482
    %v3485 = vadd.f32 %v3478, %v3483
    %v3487 = vperm.slane %v3003, 0
    %v3489 = vmul.f32 %v3333, %v3487
    %v3490 = vmul.f32 %v3334, %v3487
    %v3491 = vadd.f32 %v3484, %v3489
    %v3492 = vadd.f32 %v3485, %v3490
    %v3494 = vperm.slane %v3004, 0
    %v3496 = vmul.f32 %v3342, %v3494
    %v3497 = vmul.f32 %v3343, %v3494
    %v3498 = vadd.f32 %v3491, %v3496
    %v3499 = vadd.f32 %v3492, %v3497
    %v3500 = vsel %vm1081, %v3498, 0.0
    %3501 = vadd.xlane.f32.xlu0 %v3500
    %v3502 = vpop.xlane.xlu0 %3501
    %v3503 = vsel %vm1081, %v3499, 0.0
    %3504 = vadd.xlane.f32.xlu0 %v3503
    %v3505 = vpop.xlane.xlu0 %3504
    %v3506 = vrot.slane %v3502, 4
    %v3507 = vadd.f32 %v3502, %v3506
    %v3508 = vrot.slane %v3507, 2
    %v3509 = vadd.f32 %v3507, %v3508
    %v3510 = vrot.slane %v3509, 1
    %v3511 = vadd.f32 %v3509, %v3510
    %v3512 = vrot.slane %v3505, 4
    %v3513 = vadd.f32 %v3505, %v3512
    %v3514 = vrot.slane %v3513, 2
    %v3515 = vadd.f32 %v3513, %v3514
    %v3516 = vrot.slane %v3515, 1
    %v3517 = vadd.f32 %v3515, %v3516
    %v3518 = vmul.f32 %v3511, %v1956
    %v3519 = vmul.f32 %v3517, %v1956
    %v3520 = vsub.f32 %v3498, %v3518
    %v3521 = vsub.f32 %v3499, %v3519
    %v3522 = vmul.f32 %v3520, %v3520
    %v3523 = vmul.f32 %v3521, %v3521
    %v3524 = vsel %vm1081, %v3522, 0.0
    %3525 = vadd.xlane.f32.xlu0 %v3524
    %v3526 = vpop.xlane.xlu0 %3525
    %v3527 = vsel %vm1081, %v3523, 0.0
    %3528 = vadd.xlane.f32.xlu0 %v3527
    %v3529 = vpop.xlane.xlu0 %3528
    %v3530 = vrot.slane %v3526, 4
    %v3531 = vadd.f32 %v3526, %v3530
    %v3532 = vrot.slane %v3531, 2
    %v3533 = vadd.f32 %v3531, %v3532
    %v3534 = vrot.slane %v3533, 1
    %v3535 = vadd.f32 %v3533, %v3534
    %v3536 = vrot.slane %v3529, 4
    %v3537 = vadd.f32 %v3529, %v3536
    %v3538 = vrot.slane %v3537, 2
    %v3539 = vadd.f32 %v3537, %v3538
    %v3540 = vrot.slane %v3539, 1
    %v3541 = vadd.f32 %v3539, %v3540
    %v3542 = vmul.f32 %v3535, %v1956
    %v3543 = vmul.f32 %v3541, %v1956
    %v3544 = vadd.f32 %v3542, 1e-08
    %v3545 = vadd.f32 %v3543, 1e-08
    %v3546 = vrsqrt.pop %v3544
    %v3547 = vmul.f32 %v3546, %v3544
    %v3548 = vmul.f32 %v3547, %v3546
    %v3549 = vmul.f32 0.5, %v3548
    %v3550 = vsub.f32 1.5, %v3549
    %v3551 = vmul.f32 %v3546, %v3550
    %vm3552 = vweird.f32 %v3544
    %vm3553 = vweird.f32 %v3546
    %vm3554 = vmor %vm3552, %vm3553
    %v3555 = vsel %vm3554, %v3546, %v3551
    %v3556 = vrsqrt.pop %v3545
    %v3557 = vmul.f32 %v3556, %v3545
    %v3558 = vmul.f32 %v3557, %v3556
    %v3559 = vmul.f32 0.5, %v3558
    %v3560 = vsub.f32 1.5, %v3559
    %v3561 = vmul.f32 %v3556, %v3560
    %vm3562 = vweird.f32 %v3545
    %vm3563 = vweird.f32 %v3556
    %vm3564 = vmor %vm3562, %vm3563
    %v3565 = vsel %vm3564, %v3556, %v3561
    %v3566 = vmul.f32 %v3520, %v3555
    %v3567 = vmul.f32 %v3521, %v3565
    %v3569 = vperm.slane %v3005, 0
    %v3571 = vmul.f32 %v3566, %v3569
    %v3572 = vmul.f32 %v3567, %v3569
    %v3574 = vperm.slane %v3006, 0
    %v3576 = vadd.f32 %v3571, %v3574
    %v3577 = vadd.f32 %v3572, %v3574
    %vm3578 = vcmask 64512
    %v3580 = vsel %vm3578, %v3007, 0
    %v3583 = vsel %vm3578, %v3008, 0
    %v3586 = vsel %vm3578, %v3009, 0
    %v3589 = vsel %vm3578, %v3010, 0
    %3591 = vmatpush.msra.mxu0 0.0
    %3592 = vmatpush.msra.mxu0 0.0
    %3593 = vmatpush.msra.mxu0 0.0
    %3594 = vmatpush.msra.mxu0 0.0
    %3595 = vmatpush.msra.mxu0 0.0
    %3596 = vmatpush.msra.mxu0 0.0
    %3597 = vmatpush.msra.mxu0 0.0
    %3598 = vmatpush.msra.mxu0 0.0
    %3599 = vmatpush.msra.mxu0 0.0
    %3600 = vmatpush.msra.mxu0 0.0
    %3601 = vmatpush.msra.mxu0 0.0
    %3602 = vmatpush.msra.mxu0 0.0
    %3603 = vmatpush.msra.mxu0 0.0
    %3604 = vmatpush.msra.mxu0 0.0
    %3605 = vmatpush.msra.mxu0 0.0
    %3606 = vmatpush.msra.mxu0 %v3451
    %3607 = vmatmul.f32.gmra.mxu0 %v3580
    %v3608 = vpop.f32.mrf.mxu0
    %v3609 = vadd.f32 0.0, %v3608
    %3610 = vmatmul.f32.gmra.mxu0 %v3583
    %v3611 = vpop.f32.mrf.mxu0
    %v3612 = vadd.f32 0.0, %v3611
    %3613 = vmatmul.f32.gmra.mxu0 %v3586
    %v3614 = vpop.f32.mrf.mxu0
    %v3615 = vadd.f32 0.0, %v3614
    %3616 = vmatmul.f32.gmra.mxu0 %v3589
    %v3617 = vpop.f32.mrf.mxu0
    %v3618 = vadd.f32 0.0, %v3617
    %3619 = vdwg.mxu0
    %3620 = vmatpush.msra.mxu0 0.0
    %3621 = vmatpush.msra.mxu0 0.0
    %3622 = vmatpush.msra.mxu0 0.0
    %3623 = vmatpush.msra.mxu0 0.0
    %3624 = vmatpush.msra.mxu0 0.0
    %3625 = vmatpush.msra.mxu0 0.0
    %3626 = vmatpush.msra.mxu0 0.0
    %3627 = vmatpush.msra.mxu0 0.0
    %3628 = vmatpush.msra.mxu0 0.0
    %3629 = vmatpush.msra.mxu0 0.0
    %3630 = vmatpush.msra.mxu0 0.0
    %3631 = vmatpush.msra.mxu0 0.0
    %3632 = vmatpush.msra.mxu0 0.0
    %3633 = vmatpush.msra.mxu0 0.0
    %3634 = vmatpush.msra.mxu0 0.0
    %3635 = vmatpush.msra.mxu0 %v3466
    %3636 = vmatmul.f32.gmra.mxu0 %v3580
    %v3637 = vpop.f32.mrf.mxu0
    %v3638 = vadd.f32 0.0, %v3637
    %3639 = vmatmul.f32.gmra.mxu0 %v3583
    %v3640 = vpop.f32.mrf.mxu0
    %v3641 = vadd.f32 0.0, %v3640
    %3642 = vmatmul.f32.gmra.mxu0 %v3586
    %v3643 = vpop.f32.mrf.mxu0
    %v3644 = vadd.f32 0.0, %v3643
    %3645 = vmatmul.f32.gmra.mxu0 %v3589
    %v3646 = vpop.f32.mrf.mxu0
    %v3647 = vadd.f32 0.0, %v3646
    %3648 = vdwg.mxu0
    %3649 = vmatpush.msra.mxu0 0.0
    %3650 = vmatpush.msra.mxu0 0.0
    %3651 = vmatpush.msra.mxu0 0.0
    %3652 = vmatpush.msra.mxu0 0.0
    %3653 = vmatpush.msra.mxu0 0.0
    %3654 = vmatpush.msra.mxu0 0.0
    %3655 = vmatpush.msra.mxu0 0.0
    %3656 = vmatpush.msra.mxu0 0.0
    %3657 = vmatpush.msra.mxu0 0.0
    %3658 = vmatpush.msra.mxu0 0.0
    %3659 = vmatpush.msra.mxu0 0.0
    %3660 = vmatpush.msra.mxu0 0.0
    %3661 = vmatpush.msra.mxu0 0.0
    %3662 = vmatpush.msra.mxu0 0.0
    %3663 = vmatpush.msra.mxu0 0.0
    %3664 = vmatpush.msra.mxu0 %v3576
    %3665 = vmatmul.f32.gmra.mxu0 %v3580
    %v3666 = vpop.f32.mrf.mxu0
    %v3667 = vadd.f32 0.0, %v3666
    %3668 = vmatmul.f32.gmra.mxu0 %v3583
    %v3669 = vpop.f32.mrf.mxu0
    %v3670 = vadd.f32 0.0, %v3669
    %3671 = vmatmul.f32.gmra.mxu0 %v3586
    %v3672 = vpop.f32.mrf.mxu0
    %v3673 = vadd.f32 0.0, %v3672
    %3674 = vmatmul.f32.gmra.mxu0 %v3589
    %v3675 = vpop.f32.mrf.mxu0
    %v3676 = vadd.f32 0.0, %v3675
    %3677 = vdwg.mxu0
    %3678 = vmatpush.msra.mxu0 0.0
    %3679 = vmatpush.msra.mxu0 0.0
    %3680 = vmatpush.msra.mxu0 0.0
    %3681 = vmatpush.msra.mxu0 0.0
    %3682 = vmatpush.msra.mxu0 0.0
    %3683 = vmatpush.msra.mxu0 0.0
    %3684 = vmatpush.msra.mxu0 0.0
    %3685 = vmatpush.msra.mxu0 0.0
    %3686 = vmatpush.msra.mxu0 0.0
    %3687 = vmatpush.msra.mxu0 0.0
    %3688 = vmatpush.msra.mxu0 0.0
    %3689 = vmatpush.msra.mxu0 0.0
    %3690 = vmatpush.msra.mxu0 0.0
    %3691 = vmatpush.msra.mxu0 0.0
    %3692 = vmatpush.msra.mxu0 0.0
    %3693 = vmatpush.msra.mxu0 %v3577
    %3694 = vmatmul.f32.gmra.mxu0 %v3580
    %v3695 = vpop.f32.mrf.mxu0
    %v3696 = vadd.f32 0.0, %v3695
    %3697 = vmatmul.f32.gmra.mxu0 %v3583
    %v3698 = vpop.f32.mrf.mxu0
    %v3699 = vadd.f32 0.0, %v3698
    %3700 = vmatmul.f32.gmra.mxu0 %v3586
    %v3701 = vpop.f32.mrf.mxu0
    %v3702 = vadd.f32 0.0, %v3701
    %3703 = vmatmul.f32.gmra.mxu0 %v3589
    %v3704 = vpop.f32.mrf.mxu0
    %v3705 = vadd.f32 0.0, %v3704
    %3706 = vdwg.mxu0
    %v3707 = vmul.f32 %v3296, %v3609
    %v3708 = vmul.f32 %v3297, %v3612
    %v3709 = vmul.f32 %v3298, %v3615
    %v3710 = vmul.f32 %v3299, %v3618
    %v3711 = vmul.f32 %v3300, %v3638
    %v3712 = vmul.f32 %v3301, %v3641
    %v3713 = vmul.f32 %v3302, %v3644
    %v3714 = vmul.f32 %v3303, %v3647
    %v3715 = vadd.f32 %v3707, %v3667
    %v3716 = vadd.f32 %v3708, %v3670
    %v3717 = vadd.f32 %v3709, %v3673
    %v3718 = vadd.f32 %v3710, %v3676
    %v3719 = vadd.f32 %v3711, %v3696
    %v3720 = vadd.f32 %v3712, %v3699
    %v3721 = vadd.f32 %v3713, %v3702
    %v3722 = vadd.f32 %v3714, %v3705
    %v3723 = vld [vmem:[%s91] sm:$0x1]
    %v3724 = vld [vmem:[%s91 + $0x1] sm:$0x1]
    %v3725 = vld [vmem:[%s91 + $0x2] sm:$0x1]
    %v3726 = vld [vmem:[%s91 + $0x3] sm:$0x1]
    %v3727 = vld [vmem:[%s91 + $0x4] sm:$0x1]
    %v3728 = vld [vmem:[#allocation48] sm:$0x1]
    %v3729 = vld [vmem:[#allocation50] sm:$0x1]
    %v3730 = vld [vmem:[%s97] sm:$0x1]
    %v3731 = vld [vmem:[%s97 + $0x1] sm:$0x1]
    %v3732 = vld [vmem:[%s97 + $0x2] sm:$0x1]
    %v3733 = vld [vmem:[%s97 + $0x3] sm:$0x1]
    %v3734 = vld [vmem:[%s97 + $0x4] sm:$0x1]
    %v3735 = vld [vmem:[#allocation51] sm:$0x1]
    %v3736 = vld [vmem:[#allocation53] sm:$0x1]
    %v3737 = vld [vmem:[%s103] sm:$0x1]
    %v3738 = vld [vmem:[%s103 + $0x1] sm:$0x1]
    %v3739 = vld [vmem:[%s103 + $0x2] sm:$0x1]
    %v3740 = vld [vmem:[%s103 + $0x3] sm:$0x1]
    %v3741 = vld [vmem:[%s103 + $0x4] sm:$0x1]
    %v3742 = vld [vmem:[#allocation54] sm:$0x1]
    %v3743 = vld [vmem:[#allocation56] sm:$0x1]
    %v3744 = vld [vmem:[%s109] sm:$0xff]
    %v3745 = vld [vmem:[%s109 + $0x8] sm:$0xff]
    %3746 = vst.msk [vmem:[#allocation2 + $0x8] sm:$0xff] %vm1081, %v1791
    %3747 = vst.msk [vmem:[#allocation2 + $0x10] sm:$0xff] %vm1081, %v1792
    %3748 = vst.msk [vmem:[#allocation2 + $0x38] sm:$0xff] %vm1081, %v1793
    %3749 = vst.msk [vmem:[#allocation2 + $0x40] sm:$0xff] %vm1081, %v1794
    %3750 = vst.msk [vmem:[#allocation2 + $0x18] sm:$0xff] %vm1081, 0.0
    %3751 = vst.msk [vmem:[#allocation2 + $0x48] sm:$0xff] %vm1081, 0.0
    %v3752 = vld [vmem:[#allocation2 + $0x6] sm:$0xff]
    %v3753 = vld [vmem:[#allocation2 + $0xe] sm:$0xff]
    %v3754 = vld [vmem:[#allocation2 + $0x36] sm:$0xff]
    %v3755 = vld [vmem:[#allocation2 + $0x3e] sm:$0xff]
    %v3757 = vperm.slane %v3723, 0
    %v3759 = vmul.f32 %v3752, %v3757
    %v3760 = vmul.f32 %v3753, %v3757
    %v3761 = vmul.f32 %v3754, %v3757
    %v3762 = vmul.f32 %v3755, %v3757
    %v3763 = vld [vmem:[#allocation2 + $0x7] sm:$0xff]
    %v3764 = vld [vmem:[#allocation2 + $0xf] sm:$0xff]
    %v3765 = vld [vmem:[#allocation2 + $0x37] sm:$0xff]
    %v3766 = vld [vmem:[#allocation2 + $0x3f] sm:$0xff]
    %v3768 = vperm.slane %v3724, 0
    %v3770 = vmul.f32 %v3763, %v3768
    %v3771 = vmul.f32 %v3764, %v3768
    %v3772 = vmul.f32 %v3765, %v3768
    %v3773 = vmul.f32 %v3766, %v3768
    %v3774 = vadd.f32 %v3759, %v3770
    %v3775 = vadd.f32 %v3760, %v3771
    %v3776 = vadd.f32 %v3761, %v3772
    %v3777 = vadd.f32 %v3762, %v3773
    %v3778 = vld [vmem:[#allocation2 + $0x8] sm:$0xff]
    %v3779 = vld [vmem:[#allocation2 + $0x10] sm:$0xff]
    %v3780 = vld [vmem:[#allocation2 + $0x38] sm:$0xff]
    %v3781 = vld [vmem:[#allocation2 + $0x40] sm:$0xff]
    %v3783 = vperm.slane %v3725, 0
    %v3785 = vmul.f32 %v3778, %v3783
    %v3786 = vmul.f32 %v3779, %v3783
    %v3787 = vmul.f32 %v3780, %v3783
    %v3788 = vmul.f32 %v3781, %v3783
    %v3789 = vadd.f32 %v3774, %v3785
    %v3790 = vadd.f32 %v3775, %v3786
    %v3791 = vadd.f32 %v3776, %v3787
    %v3792 = vadd.f32 %v3777, %v3788
    %v3793 = vld [vmem:[#allocation2 + $0x9] sm:$0xff]
    %v3794 = vld [vmem:[#allocation2 + $0x11] sm:$0xff]
    %v3795 = vld [vmem:[#allocation2 + $0x39] sm:$0xff]
    %v3796 = vld [vmem:[#allocation2 + $0x41] sm:$0xff]
    %v3798 = vperm.slane %v3726, 0
    %v3800 = vmul.f32 %v3793, %v3798
    %v3801 = vmul.f32 %v3794, %v3798
    %v3802 = vmul.f32 %v3795, %v3798
    %v3803 = vmul.f32 %v3796, %v3798
    %v3804 = vadd.f32 %v3789, %v3800
    %v3805 = vadd.f32 %v3790, %v3801
    %v3806 = vadd.f32 %v3791, %v3802
    %v3807 = vadd.f32 %v3792, %v3803
    %v3808 = vld [vmem:[#allocation2 + $0xa] sm:$0xff]
    %v3809 = vld [vmem:[#allocation2 + $0x12] sm:$0xff]
    %v3810 = vld [vmem:[#allocation2 + $0x3a] sm:$0xff]
    %v3811 = vld [vmem:[#allocation2 + $0x42] sm:$0xff]
    %v3813 = vperm.slane %v3727, 0
    %v3815 = vmul.f32 %v3808, %v3813
    %v3816 = vmul.f32 %v3809, %v3813
    %v3817 = vmul.f32 %v3810, %v3813
    %v3818 = vmul.f32 %v3811, %v3813
    %v3819 = vadd.f32 %v3804, %v3815
    %v3820 = vadd.f32 %v3805, %v3816
    %v3821 = vadd.f32 %v3806, %v3817
    %v3822 = vadd.f32 %v3807, %v3818
    %v3823 = vsel %vm1081, %v3819, 0.0
    %3824 = vadd.xlane.f32.xlu0 %v3823
    %v3825 = vpop.xlane.xlu0 %3824
    %v3826 = vsel %vm1081, %v3820, 0.0
    %3827 = vadd.xlane.f32.xlu0 %v3826
    %v3828 = vpop.xlane.xlu0 %3827
    %v3829 = vsel %vm1081, %v3821, 0.0
    %3830 = vadd.xlane.f32.xlu0 %v3829
    %v3831 = vpop.xlane.xlu0 %3830
    %v3832 = vsel %vm1081, %v3822, 0.0
    %3833 = vadd.xlane.f32.xlu0 %v3832
    %v3834 = vpop.xlane.xlu0 %3833
    %v3835 = vadd.f32 %v3825, %v3828
    %v3836 = vrot.slane %v3835, 4
    %v3837 = vadd.f32 %v3835, %v3836
    %v3838 = vrot.slane %v3837, 2
    %v3839 = vadd.f32 %v3837, %v3838
    %v3840 = vrot.slane %v3839, 1
    %v3841 = vadd.f32 %v3839, %v3840
    %v3842 = vadd.f32 %v3831, %v3834
    %v3843 = vrot.slane %v3842, 4
    %v3844 = vadd.f32 %v3842, %v3843
    %v3845 = vrot.slane %v3844, 2
    %v3846 = vadd.f32 %v3844, %v3845
    %v3847 = vrot.slane %v3846, 1
    %v3848 = vadd.f32 %v3846, %v3847
    %v3849 = vmul.f32 %v3841, %v1716
    %v3850 = vmul.f32 %v3848, %v1716
    %v3851 = vsub.f32 %v3819, %v3849
    %v3852 = vsub.f32 %v3820, %v3849
    %v3853 = vsub.f32 %v3821, %v3850
    %v3854 = vsub.f32 %v3822, %v3850
    %v3855 = vmul.f32 %v3851, %v3851
    %v3856 = vmul.f32 %v3852, %v3852
    %v3857 = vmul.f32 %v3853, %v3853
    %v3858 = vmul.f32 %v3854, %v3854
    %v3859 = vsel %vm1081, %v3855, 0.0
    %3860 = vadd.xlane.f32.xlu0 %v3859
    %v3861 = vpop.xlane.xlu0 %3860
    %v3862 = vsel %vm1081, %v3856, 0.0
    %3863 = vadd.xlane.f32.xlu0 %v3862
    %v3864 = vpop.xlane.xlu0 %3863
    %v3865 = vsel %vm1081, %v3857, 0.0
    %3866 = vadd.xlane.f32.xlu0 %v3865
    %v3867 = vpop.xlane.xlu0 %3866
    %v3868 = vsel %vm1081, %v3858, 0.0
    %3869 = vadd.xlane.f32.xlu0 %v3868
    %v3870 = vpop.xlane.xlu0 %3869
    %v3871 = vadd.f32 %v3861, %v3864
    %v3872 = vrot.slane %v3871, 4
    %v3873 = vadd.f32 %v3871, %v3872
    %v3874 = vrot.slane %v3873, 2
    %v3875 = vadd.f32 %v3873, %v3874
    %v3876 = vrot.slane %v3875, 1
    %v3877 = vadd.f32 %v3875, %v3876
    %v3878 = vadd.f32 %v3867, %v3870
    %v3879 = vrot.slane %v3878, 4
    %v3880 = vadd.f32 %v3878, %v3879
    %v3881 = vrot.slane %v3880, 2
    %v3882 = vadd.f32 %v3880, %v3881
    %v3883 = vrot.slane %v3882, 1
    %v3884 = vadd.f32 %v3882, %v3883
    %v3885 = vmul.f32 %v3877, %v1716
    %v3886 = vmul.f32 %v3884, %v1716
    %v3887 = vadd.f32 %v3885, 1e-08
    %v3888 = vadd.f32 %v3886, 1e-08
    %v3889 = vrsqrt.pop %v3887
    %v3890 = vmul.f32 %v3889, %v3887
    %v3891 = vmul.f32 %v3890, %v3889
    %v3892 = vmul.f32 0.5, %v3891
    %v3893 = vsub.f32 1.5, %v3892
    %v3894 = vmul.f32 %v3889, %v3893
    %vm3895 = vweird.f32 %v3887
    %vm3896 = vweird.f32 %v3889
    %vm3897 = vmor %vm3895, %vm3896
    %v3898 = vsel %vm3897, %v3889, %v3894
    %v3899 = vrsqrt.pop %v3888
    %v3900 = vmul.f32 %v3899, %v3888
    %v3901 = vmul.f32 %v3900, %v3899
    %v3902 = vmul.f32 0.5, %v3901
    %v3903 = vsub.f32 1.5, %v3902
    %v3904 = vmul.f32 %v3899, %v3903
    %vm3905 = vweird.f32 %v3888
    %vm3906 = vweird.f32 %v3899
    %vm3907 = vmor %vm3905, %vm3906
    %v3908 = vsel %vm3907, %v3899, %v3904
    %v3909 = vmul.f32 %v3851, %v3898
    %v3910 = vmul.f32 %v3852, %v3898
    %v3911 = vmul.f32 %v3853, %v3908
    %v3912 = vmul.f32 %v3854, %v3908
    %v3914 = vperm.slane %v3728, 0
    %v3916 = vmul.f32 %v3909, %v3914
    %v3917 = vmul.f32 %v3910, %v3914
    %v3918 = vmul.f32 %v3911, %v3914
    %v3919 = vmul.f32 %v3912, %v3914
    %v3921 = vperm.slane %v3729, 0
    %v3923 = vadd.f32 %v3916, %v3921
    %v3924 = vadd.f32 %v3917, %v3921
    %v3925 = vadd.f32 %v3918, %v3921
    %v3926 = vadd.f32 %v3919, %v3921
    %3927 = vst.msk [vmem:[#allocation2 + $0x8] sm:$0xff] %vm1081, %v2984
    %3928 = vst.msk [vmem:[#allocation2 + $0x38] sm:$0xff] %vm1081, %v2985
    %3929 = vst.msk [vmem:[#allocation2 + $0x10] sm:$0xff] %vm1081, 0.0
    %3930 = vst.msk [vmem:[#allocation2 + $0x40] sm:$0xff] %vm1081, 0.0
    %v3931 = vld [vmem:[#allocation2 + $0x6] sm:$0xff]
    %v3932 = vld [vmem:[#allocation2 + $0x36] sm:$0xff]
    %v3934 = vperm.slane %v3730, 0
    %v3936 = vmul.f32 %v3931, %v3934
    %v3937 = vmul.f32 %v3932, %v3934
    %v3938 = vld [vmem:[#allocation2 + $0x7] sm:$0xff]
    %v3939 = vld [vmem:[#allocation2 + $0x37] sm:$0xff]
    %v3941 = vperm.slane %v3731, 0
    %v3943 = vmul.f32 %v3938, %v3941
    %v3944 = vmul.f32 %v3939, %v3941
    %v3945 = vadd.f32 %v3936, %v3943
    %v3946 = vadd.f32 %v3937, %v3944
    %v3947 = vld [vmem:[#allocation2 + $0x8] sm:$0xff]
    %v3948 = vld [vmem:[#allocation2 + $0x38] sm:$0xff]
    %v3950 = vperm.slane %v3732, 0
    %v3952 = vmul.f32 %v3947, %v3950
    %v3953 = vmul.f32 %v3948, %v3950
    %v3954 = vadd.f32 %v3945, %v3952
    %v3955 = vadd.f32 %v3946, %v3953
    %v3956 = vld [vmem:[#allocation2 + $0x9] sm:$0xff]
    %v3957 = vld [vmem:[#allocation2 + $0x39] sm:$0xff]
    %v3959 = vperm.slane %v3733, 0
    %v3961 = vmul.f32 %v3956, %v3959
    %v3962 = vmul.f32 %v3957, %v3959
    %v3963 = vadd.f32 %v3954, %v3961
    %v3964 = vadd.f32 %v3955, %v3962
    %v3965 = vld [vmem:[#allocation2 + $0xa] sm:$0xff]
    %v3966 = vld [vmem:[#allocation2 + $0x3a] sm:$0xff]
    %v3968 = vperm.slane %v3734, 0
    %v3970 = vmul.f32 %v3965, %v3968
    %v3971 = vmul.f32 %v3966, %v3968
    %v3972 = vadd.f32 %v3963, %v3970
    %v3973 = vadd.f32 %v3964, %v3971
    %v3974 = vsel %vm1081, %v3972, 0.0
    %3975 = vadd.xlane.f32.xlu0 %v3974
    %v3976 = vpop.xlane.xlu0 %3975
    %v3977 = vsel %vm1081, %v3973, 0.0
    %3978 = vadd.xlane.f32.xlu0 %v3977
    %v3979 = vpop.xlane.xlu0 %3978
    %v3980 = vrot.slane %v3976, 4
    %v3981 = vadd.f32 %v3976, %v3980
    %v3982 = vrot.slane %v3981, 2
    %v3983 = vadd.f32 %v3981, %v3982
    %v3984 = vrot.slane %v3983, 1
    %v3985 = vadd.f32 %v3983, %v3984
    %v3986 = vrot.slane %v3979, 4
    %v3987 = vadd.f32 %v3979, %v3986
    %v3988 = vrot.slane %v3987, 2
    %v3989 = vadd.f32 %v3987, %v3988
    %v3990 = vrot.slane %v3989, 1
    %v3991 = vadd.f32 %v3989, %v3990
    %v3992 = vmul.f32 %v3985, %v1956
    %v3993 = vmul.f32 %v3991, %v1956
    %v3994 = vsub.f32 %v3972, %v3992
    %v3995 = vsub.f32 %v3973, %v3993
    %v3996 = vmul.f32 %v3994, %v3994
    %v3997 = vmul.f32 %v3995, %v3995
    %v3998 = vsel %vm1081, %v3996, 0.0
    %3999 = vadd.xlane.f32.xlu0 %v3998
    %v4000 = vpop.xlane.xlu0 %3999
    %v4001 = vsel %vm1081, %v3997, 0.0
    %4002 = vadd.xlane.f32.xlu0 %v4001
    %v4003 = vpop.xlane.xlu0 %4002
    %v4004 = vrot.slane %v4000, 4
    %v4005 = vadd.f32 %v4000, %v4004
    %v4006 = vrot.slane %v4005, 2
    %v4007 = vadd.f32 %v4005, %v4006
    %v4008 = vrot.slane %v4007, 1
    %v4009 = vadd.f32 %v4007, %v4008
    %v4010 = vrot.slane %v4003, 4
    %v4011 = vadd.f32 %v4003, %v4010
    %v4012 = vrot.slane %v4011, 2
    %v4013 = vadd.f32 %v4011, %v4012
    %v4014 = vrot.slane %v4013, 1
    %v4015 = vadd.f32 %v4013, %v4014
    %v4016 = vmul.f32 %v4009, %v1956
    %v4017 = vmul.f32 %v4015, %v1956
    %v4018 = vadd.f32 %v4016, 1e-08
    %v4019 = vadd.f32 %v4017, 1e-08
    %v4020 = vrsqrt.pop %v4018
    %v4021 = vmul.f32 %v4020, %v4018
    %v4022 = vmul.f32 %v4021, %v4020
    %v4023 = vmul.f32 0.5, %v4022
    %v4024 = vsub.f32 1.5, %v4023
    %v4025 = vmul.f32 %v4020, %v4024
    %vm4026 = vweird.f32 %v4018
    %vm4027 = vweird.f32 %v4020
    %vm4028 = vmor %vm4026, %vm4027
    %v4029 = vsel %vm4028, %v4020, %v4025
    %v4030 = vrsqrt.pop %v4019
    %v4031 = vmul.f32 %v4030, %v4019
    %v4032 = vmul.f32 %v4031, %v4030
    %v4033 = vmul.f32 0.5, %v4032
    %v4034 = vsub.f32 1.5, %v4033
    %v4035 = vmul.f32 %v4030, %v4034
    %vm4036 = vweird.f32 %v4019
    %vm4037 = vweird.f32 %v4030
    %vm4038 = vmor %vm4036, %vm4037
    %v4039 = vsel %vm4038, %v4030, %v4035
    %v4040 = vmul.f32 %v3994, %v4029
    %v4041 = vmul.f32 %v3995, %v4039
    %v4043 = vperm.slane %v3735, 0
    %v4045 = vmul.f32 %v4040, %v4043
    %v4046 = vmul.f32 %v4041, %v4043
    %v4048 = vperm.slane %v3736, 0
    %v4050 = vadd.f32 %v4045, %v4048
    %v4051 = vadd.f32 %v4046, %v4048
    %v4052 = vxor.u32 %v4050, 2147483648
    %v4053 = vxor.u32 %v4051, 2147483648
    %v4054 = vmul.f32 %v4052, 1.442695
    %v4055 = vpow.pop %v4054
    %v4056 = vmul.f32 %v4053, 1.442695
    %v4057 = vpow.pop %v4056
    %v4058 = vadd.f32 %v4055, 1.0
    %v4059 = vadd.f32 %v4057, 1.0
    %v4060 = vrcp.pop %v4058
    %v4061 = vmul.f32 %v4058, %v4060
    %v4062 = vsub.f32 1.0, %v4061
    %v4063 = vmul.f32 %v4060, %v4062
    %v4064 = vadd.f32 %v4060, %v4063
    %vm4065 = vweird.f32 %v4058
    %vm4066 = vweird.f32 %v4060
    %vm4067 = vmor %vm4065, %vm4066
    %v4068 = vsel %vm4067, %v4060, %v4064
    %v4069 = vand.u32 2147483647, %v4058
    %vm4070 = vcmp.eq.f32.partialorder %v4069, 8.507059e+37
    %v4071 = vand.u32 %v4058, 2147483648
    %v4072 = vor.u32 1.1754944e-38, %v4071
    %v4073 = vsel %vm4070, %v4072, %v4068
    %v4074 = vmul.f32 1.0, %v4073
    %v4075 = vrcp.pop %v4059
    %v4076 = vmul.f32 %v4059, %v4075
    %v4077 = vsub.f32 1.0, %v4076
    %v4078 = vmul.f32 %v4075, %v4077
    %v4079 = vadd.f32 %v4075, %v4078
    %vm4080 = vweird.f32 %v4059
    %vm4081 = vweird.f32 %v4075
    %vm4082 = vmor %vm4080, %vm4081
    %v4083 = vsel %vm4082, %v4075, %v4079
    %v4084 = vand.u32 2147483647, %v4059
    %vm4085 = vcmp.eq.f32.partialorder %v4084, 8.507059e+37
    %v4086 = vand.u32 %v4059, 2147483648
    %v4087 = vor.u32 1.1754944e-38, %v4086
    %v4088 = vsel %vm4085, %v4087, %v4083
    %v4089 = vmul.f32 1.0, %v4088
    %v4091 = vperm.slane %v3737, 0
    %v4093 = vmul.f32 %v3931, %v4091
    %v4094 = vmul.f32 %v3932, %v4091
    %v4096 = vperm.slane %v3738, 0
    %v4098 = vmul.f32 %v3938, %v4096
    %v4099 = vmul.f32 %v3939, %v4096
    %v4100 = vadd.f32 %v4093, %v4098
    %v4101 = vadd.f32 %v4094, %v4099
    %v4103 = vperm.slane %v3739, 0
    %v4105 = vmul.f32 %v3947, %v4103
    %v4106 = vmul.f32 %v3948, %v4103
    %v4107 = vadd.f32 %v4100, %v4105
    %v4108 = vadd.f32 %v4101, %v4106
    %v4110 = vperm.slane %v3740, 0
    %v4112 = vmul.f32 %v3956, %v4110
    %v4113 = vmul.f32 %v3957, %v4110
    %v4114 = vadd.f32 %v4107, %v4112
    %v4115 = vadd.f32 %v4108, %v4113
    %v4117 = vperm.slane %v3741, 0
    %v4119 = vmul.f32 %v3965, %v4117
    %v4120 = vmul.f32 %v3966, %v4117
    %v4121 = vadd.f32 %v4114, %v4119
    %v4122 = vadd.f32 %v4115, %v4120
    %v4123 = vsel %vm1081, %v4121, 0.0
    %4124 = vadd.xlane.f32.xlu0 %v4123
    %v4125 = vpop.xlane.xlu0 %4124
    %v4126 = vsel %vm1081, %v4122, 0.0
    %4127 = vadd.xlane.f32.xlu0 %v4126
    %v4128 = vpop.xlane.xlu0 %4127
    %v4129 = vrot.slane %v4125, 4
    %v4130 = vadd.f32 %v4125, %v4129
    %v4131 = vrot.slane %v4130, 2
    %v4132 = vadd.f32 %v4130, %v4131
    %v4133 = vrot.slane %v4132, 1
    %v4134 = vadd.f32 %v4132, %v4133
    %v4135 = vrot.slane %v4128, 4
    %v4136 = vadd.f32 %v4128, %v4135
    %v4137 = vrot.slane %v4136, 2
    %v4138 = vadd.f32 %v4136, %v4137
    %v4139 = vrot.slane %v4138, 1
    %v4140 = vadd.f32 %v4138, %v4139
    %v4141 = vmul.f32 %v4134, %v1956
    %v4142 = vmul.f32 %v4140, %v1956
    %v4143 = vsub.f32 %v4121, %v4141
    %v4144 = vsub.f32 %v4122, %v4142
    %v4145 = vmul.f32 %v4143, %v4143
    %v4146 = vmul.f32 %v4144, %v4144
    %v4147 = vsel %vm1081, %v4145, 0.0
    %4148 = vadd.xlane.f32.xlu0 %v4147
    %v4149 = vpop.xlane.xlu0 %4148
    %v4150 = vsel %vm1081, %v4146, 0.0
    %4151 = vadd.xlane.f32.xlu0 %v4150
    %v4152 = vpop.xlane.xlu0 %4151
    %v4153 = vrot.slane %v4149, 4
    %v4154 = vadd.f32 %v4149, %v4153
    %v4155 = vrot.slane %v4154, 2
    %v4156 = vadd.f32 %v4154, %v4155
    %v4157 = vrot.slane %v4156, 1
    %v4158 = vadd.f32 %v4156, %v4157
    %v4159 = vrot.slane %v4152, 4
    %v4160 = vadd.f32 %v4152, %v4159
    %v4161 = vrot.slane %v4160, 2
    %v4162 = vadd.f32 %v4160, %v4161
    %v4163 = vrot.slane %v4162, 1
    %v4164 = vadd.f32 %v4162, %v4163
    %v4165 = vmul.f32 %v4158, %v1956
    %v4166 = vmul.f32 %v4164, %v1956
    %v4167 = vadd.f32 %v4165, 1e-08
    %v4168 = vadd.f32 %v4166, 1e-08
    %v4169 = vrsqrt.pop %v4167
    %v4170 = vmul.f32 %v4169, %v4167
    %v4171 = vmul.f32 %v4170, %v4169
    %v4172 = vmul.f32 0.5, %v4171
    %v4173 = vsub.f32 1.5, %v4172
    %v4174 = vmul.f32 %v4169, %v4173
    %vm4175 = vweird.f32 %v4167
    %vm4176 = vweird.f32 %v4169
    %vm4177 = vmor %vm4175, %vm4176
    %v4178 = vsel %vm4177, %v4169, %v4174
    %v4179 = vrsqrt.pop %v4168
    %v4180 = vmul.f32 %v4179, %v4168
    %v4181 = vmul.f32 %v4180, %v4179
    %v4182 = vmul.f32 0.5, %v4181
    %v4183 = vsub.f32 1.5, %v4182
    %v4184 = vmul.f32 %v4179, %v4183
    %vm4185 = vweird.f32 %v4168
    %vm4186 = vweird.f32 %v4179
    %vm4187 = vmor %vm4185, %vm4186
    %v4188 = vsel %vm4187, %v4179, %v4184
    %v4189 = vmul.f32 %v4143, %v4178
    %v4190 = vmul.f32 %v4144, %v4188
    %v4192 = vperm.slane %v3742, 0
    %v4194 = vmul.f32 %v4189, %v4192
    %v4195 = vmul.f32 %v4190, %v4192
    %v4197 = vperm.slane %v3743, 0
    %v4199 = vadd.f32 %v4194, %v4197
    %v4200 = vadd.f32 %v4195, %v4197
    %v4202 = vsel %vm3578, %v3744, 0
    %v4205 = vsel %vm3578, %v3745, 0
    %4207 = vmatpush.msra.mxu0 0.0
    %4208 = vmatpush.msra.mxu0 0.0
    %4209 = vmatpush.msra.mxu0 0.0
    %4210 = vmatpush.msra.mxu0 0.0
    %4211 = vmatpush.msra.mxu0 0.0
    %4212 = vmatpush.msra.mxu0 0.0
    %4213 = vmatpush.msra.mxu0 0.0
    %4214 = vmatpush.msra.mxu0 0.0
    %4215 = vmatpush.msra.mxu0 0.0
    %4216 = vmatpush.msra.mxu0 0.0
    %4217 = vmatpush.msra.mxu0 0.0
    %4218 = vmatpush.msra.mxu0 0.0
    %4219 = vmatpush.msra.mxu0 0.0
    %4220 = vmatpush.msra.mxu0 0.0
    %4221 = vmatpush.msra.mxu0 0.0
    %4222 = vmatpush.msra.mxu0 %v4074
    %4223 = vmatmul.f32.gmra.mxu0 %v4202
    %v4224 = vpop.f32.mrf.mxu0
    %v4225 = vadd.f32 0.0, %v4224
    %4226 = vmatmul.f32.gmra.mxu0 %v4205
    %v4227 = vpop.f32.mrf.mxu0
    %v4228 = vadd.f32 0.0, %v4227
    %4229 = vdwg.mxu0
    %4230 = vmatpush.msra.mxu0 0.0
    %4231 = vmatpush.msra.mxu0 0.0
    %4232 = vmatpush.msra.mxu0 0.0
    %4233 = vmatpush.msra.mxu0 0.0
    %4234 = vmatpush.msra.mxu0 0.0
    %4235 = vmatpush.msra.mxu0 0.0
    %4236 = vmatpush.msra.mxu0 0.0
    %4237 = vmatpush.msra.mxu0 0.0
    %4238 = vmatpush.msra.mxu0 0.0
    %4239 = vmatpush.msra.mxu0 0.0
    %4240 = vmatpush.msra.mxu0 0.0
    %4241 = vmatpush.msra.mxu0 0.0
    %4242 = vmatpush.msra.mxu0 0.0
    %4243 = vmatpush.msra.mxu0 0.0
    %4244 = vmatpush.msra.mxu0 0.0
    %4245 = vmatpush.msra.mxu0 %v4089
    %4246 = vmatmul.f32.gmra.mxu0 %v4202
    %v4247 = vpop.f32.mrf.mxu0
    %v4248 = vadd.f32 0.0, %v4247
    %4249 = vmatmul.f32.gmra.mxu0 %v4205
    %v4250 = vpop.f32.mrf.mxu0
    %v4251 = vadd.f32 0.0, %v4250
    %4252 = vdwg.mxu0
    %4253 = vmatpush.msra.mxu0 0.0
    %4254 = vmatpush.msra.mxu0 0.0
    %4255 = vmatpush.msra.mxu0 0.0
    %4256 = vmatpush.msra.mxu0 0.0
    %4257 = vmatpush.msra.mxu0 0.0
    %4258 = vmatpush.msra.mxu0 0.0
    %4259 = vmatpush.msra.mxu0 0.0
    %4260 = vmatpush.msra.mxu0 0.0
    %4261 = vmatpush.msra.mxu0 0.0
    %4262 = vmatpush.msra.mxu0 0.0
    %4263 = vmatpush.msra.mxu0 0.0
    %4264 = vmatpush.msra.mxu0 0.0
    %4265 = vmatpush.msra.mxu0 0.0
    %4266 = vmatpush.msra.mxu0 0.0
    %4267 = vmatpush.msra.mxu0 0.0
    %4268 = vmatpush.msra.mxu0 %v4199
    %4269 = vmatmul.f32.gmra.mxu0 %v4202
    %v4270 = vpop.f32.mrf.mxu0
    %v4271 = vadd.f32 0.0, %v4270
    %4272 = vmatmul.f32.gmra.mxu0 %v4205
    %v4273 = vpop.f32.mrf.mxu0
    %v4274 = vadd.f32 0.0, %v4273
    %4275 = vdwg.mxu0
    %4276 = vmatpush.msra.mxu0 0.0
    %4277 = vmatpush.msra.mxu0 0.0
    %4278 = vmatpush.msra.mxu0 0.0
    %4279 = vmatpush.msra.mxu0 0.0
    %4280 = vmatpush.msra.mxu0 0.0
    %4281 = vmatpush.msra.mxu0 0.0
    %4282 = vmatpush.msra.mxu0 0.0
    %4283 = vmatpush.msra.mxu0 0.0
    %4284 = vmatpush.msra.mxu0 0.0
    %4285 = vmatpush.msra.mxu0 0.0
    %4286 = vmatpush.msra.mxu0 0.0
    %4287 = vmatpush.msra.mxu0 0.0
    %4288 = vmatpush.msra.mxu0 0.0
    %4289 = vmatpush.msra.mxu0 0.0
    %4290 = vmatpush.msra.mxu0 0.0
    %4291 = vmatpush.msra.mxu0 %v4200
    %4292 = vmatmul.f32.gmra.mxu0 %v4202
    %v4293 = vpop.f32.mrf.mxu0
    %v4294 = vadd.f32 0.0, %v4293
    %4295 = vmatmul.f32.gmra.mxu0 %v4205
    %v4296 = vpop.f32.mrf.mxu0
    %v4297 = vadd.f32 0.0, %v4296
    %4298 = vdwg.mxu0
    %v4299 = vmul.f32 %v3923, %v4225
    %v4300 = vmul.f32 %v3924, %v4228
    %v4301 = vmul.f32 %v3925, %v4248
    %v4302 = vmul.f32 %v3926, %v4251
    %v4303 = vadd.f32 %v4299, %v4271
    %v4304 = vadd.f32 %v4300, %v4274
    %v4305 = vadd.f32 %v4301, %v4294
    %v4306 = vadd.f32 %v4302, %v4297
    %v4307 = vld [vmem:[%s111] sm:$0x1]
    %v4308 = vld [vmem:[%s111 + $0x1] sm:$0x1]
    %v4309 = vld [vmem:[%s111 + $0x2] sm:$0x1]
    %v4310 = vld [vmem:[%s111 + $0x3] sm:$0x1]
    %v4311 = vld [vmem:[%s111 + $0x4] sm:$0x1]
    %v4312 = vld [vmem:[#allocation57] sm:$0x1]
    %v4313 = vld [vmem:[#allocation59] sm:$0x1]
    %v4314 = vld [vmem:[%s117] sm:$0x1]
    %v4315 = vld [vmem:[%s117 + $0x1] sm:$0x1]
    %v4316 = vld [vmem:[%s117 + $0x2] sm:$0x1]
    %v4317 = vld [vmem:[%s117 + $0x3] sm:$0x1]
    %v4318 = vld [vmem:[%s117 + $0x4] sm:$0x1]
    %v4319 = vld [vmem:[#allocation60] sm:$0x1]
    %v4320 = vld [vmem:[#allocation62] sm:$0x1]
    %v4321 = vld [vmem:[%s123] sm:$0x1]
    %v4322 = vld [vmem:[%s123 + $0x1] sm:$0x1]
    %v4323 = vld [vmem:[%s123 + $0x2] sm:$0x1]
    %v4324 = vld [vmem:[%s123 + $0x3] sm:$0x1]
    %v4325 = vld [vmem:[%s123 + $0x4] sm:$0x1]
    %v4326 = vld [vmem:[#allocation63] sm:$0x1]
    %v4327 = vld [vmem:[#allocation65] sm:$0x1]
    %4328 = vst.msk [vmem:[#allocation2 + $0x8] sm:$0xff] %vm1081, %v2015
    %4329 = vst.msk [vmem:[#allocation2 + $0x38] sm:$0xff] %vm1081, %v2016
    %4330 = vst.msk [vmem:[#allocation2 + $0x10] sm:$0xff] %vm1081, 0.0
    %4331 = vst.msk [vmem:[#allocation2 + $0x40] sm:$0xff] %vm1081, 0.0
    %v4332 = vld [vmem:[#allocation2 + $0x6] sm:$0xff]
    %v4333 = vld [vmem:[#allocation2 + $0x36] sm:$0xff]
    %v4335 = vperm.slane %v4307, 0
    %v4337 = vmul.f32 %v4332, %v4335
    %v4338 = vmul.f32 %v4333, %v4335
    %v4339 = vld [vmem:[#allocation2 + $0x7] sm:$0xff]
    %v4340 = vld [vmem:[#allocation2 + $0x37] sm:$0xff]
    %v4342 = vperm.slane %v4308, 0
    %v4344 = vmul.f32 %v4339, %v4342
    %v4345 = vmul.f32 %v4340, %v4342
    %v4346 = vadd.f32 %v4337, %v4344
    %v4347 = vadd.f32 %v4338, %v4345
    %v4348 = vld [vmem:[#allocation2 + $0x8] sm:$0xff]
    %v4349 = vld [vmem:[#allocation2 + $0x38] sm:$0xff]
    %v4351 = vperm.slane %v4309, 0
    %v4353 = vmul.f32 %v4348, %v4351
    %v4354 = vmul.f32 %v4349, %v4351
    %v4355 = vadd.f32 %v4346, %v4353
    %v4356 = vadd.f32 %v4347, %v4354
    %v4357 = vld [vmem:[#allocation2 + $0x9] sm:$0xff]
    %v4358 = vld [vmem:[#allocation2 + $0x39] sm:$0xff]
    %v4360 = vperm.slane %v4310, 0
    %v4362 = vmul.f32 %v4357, %v4360
    %v4363 = vmul.f32 %v4358, %v4360
    %v4364 = vadd.f32 %v4355, %v4362
    %v4365 = vadd.f32 %v4356, %v4363
    %v4366 = vld [vmem:[#allocation2 + $0xa] sm:$0xff]
    %v4367 = vld [vmem:[#allocation2 + $0x3a] sm:$0xff]
    %v4369 = vperm.slane %v4311, 0
    %v4371 = vmul.f32 %v4366, %v4369
    %v4372 = vmul.f32 %v4367, %v4369
    %v4373 = vadd.f32 %v4364, %v4371
    %v4374 = vadd.f32 %v4365, %v4372
    %v4375 = vsel %vm1081, %v4373, 0.0
    %4376 = vadd.xlane.f32.xlu0 %v4375
    %v4377 = vpop.xlane.xlu0 %4376
    %v4378 = vsel %vm1081, %v4374, 0.0
    %4379 = vadd.xlane.f32.xlu0 %v4378
    %v4380 = vpop.xlane.xlu0 %4379
    %v4381 = vrot.slane %v4377, 4
    %v4382 = vadd.f32 %v4377, %v4381
    %v4383 = vrot.slane %v4382, 2
    %v4384 = vadd.f32 %v4382, %v4383
    %v4385 = vrot.slane %v4384, 1
    %v4386 = vadd.f32 %v4384, %v4385
    %v4387 = vrot.slane %v4380, 4
    %v4388 = vadd.f32 %v4380, %v4387
    %v4389 = vrot.slane %v4388, 2
    %v4390 = vadd.f32 %v4388, %v4389
    %v4391 = vrot.slane %v4390, 1
    %v4392 = vadd.f32 %v4390, %v4391
    %v4393 = vmul.f32 %v4386, %v1956
    %v4394 = vmul.f32 %v4392, %v1956
    %v4395 = vsub.f32 %v4373, %v4393
    %v4396 = vsub.f32 %v4374, %v4394
    %v4397 = vmul.f32 %v4395, %v4395
    %v4398 = vmul.f32 %v4396, %v4396
    %v4399 = vsel %vm1081, %v4397, 0.0
    %4400 = vadd.xlane.f32.xlu0 %v4399
    %v4401 = vpop.xlane.xlu0 %4400
    %v4402 = vsel %vm1081, %v4398, 0.0
    %4403 = vadd.xlane.f32.xlu0 %v4402
    %v4404 = vpop.xlane.xlu0 %4403
    %v4405 = vrot.slane %v4401, 4
    %v4406 = vadd.f32 %v4401, %v4405
    %v4407 = vrot.slane %v4406, 2
    %v4408 = vadd.f32 %v4406, %v4407
    %v4409 = vrot.slane %v4408, 1
    %v4410 = vadd.f32 %v4408, %v4409
    %v4411 = vrot.slane %v4404, 4
    %v4412 = vadd.f32 %v4404, %v4411
    %v4413 = vrot.slane %v4412, 2
    %v4414 = vadd.f32 %v4412, %v4413
    %v4415 = vrot.slane %v4414, 1
    %v4416 = vadd.f32 %v4414, %v4415
    %v4417 = vmul.f32 %v4410, %v1956
    %v4418 = vmul.f32 %v4416, %v1956
    %v4419 = vadd.f32 %v4417, 1e-08
    %v4420 = vadd.f32 %v4418, 1e-08
    %v4421 = vrsqrt.pop %v4419
    %v4422 = vmul.f32 %v4421, %v4419
    %v4423 = vmul.f32 %v4422, %v4421
    %v4424 = vmul.f32 0.5, %v4423
    %v4425 = vsub.f32 1.5, %v4424
    %v4426 = vmul.f32 %v4421, %v4425
    %vm4427 = vweird.f32 %v4419
    %vm4428 = vweird.f32 %v4421
    %vm4429 = vmor %vm4427, %vm4428
    %v4430 = vsel %vm4429, %v4421, %v4426
    %v4431 = vrsqrt.pop %v4420
    %v4432 = vmul.f32 %v4431, %v4420
    %v4433 = vmul.f32 %v4432, %v4431
    %v4434 = vmul.f32 0.5, %v4433
    %v4435 = vsub.f32 1.5, %v4434
    %v4436 = vmul.f32 %v4431, %v4435
    %vm4437 = vweird.f32 %v4420
    %vm4438 = vweird.f32 %v4431
    %vm4439 = vmor %vm4437, %vm4438
    %v4440 = vsel %vm4439, %v4431, %v4436
    %v4441 = vmul.f32 %v4395, %v4430
    %v4442 = vmul.f32 %v4396, %v4440
    %v4444 = vperm.slane %v4312, 0
    %v4446 = vmul.f32 %v4441, %v4444
    %v4447 = vmul.f32 %v4442, %v4444
    %v4449 = vperm.slane %v4313, 0
    %v4451 = vadd.f32 %v4446, %v4449
    %v4452 = vadd.f32 %v4447, %v4449
    %4453 = vst.msk [vmem:[#allocation2 + $0x8] sm:$0xff] %vm1081, %v2984
    %4454 = vst.msk [vmem:[#allocation2 + $0x38] sm:$0xff] %vm1081, %v2985
    %4455 = vst.msk [vmem:[#allocation2 + $0x10] sm:$0xff] %vm1081, 0.0
    %4456 = vst.msk [vmem:[#allocation2 + $0x40] sm:$0xff] %vm1081, 0.0
    %v4457 = vld [vmem:[#allocation2 + $0x6] sm:$0xff]
    %v4458 = vld [vmem:[#allocation2 + $0x36] sm:$0xff]
    %v4460 = vperm.slane %v4314, 0
    %v4462 = vmul.f32 %v4457, %v4460
    %v4463 = vmul.f32 %v4458, %v4460
    %v4464 = vld [vmem:[#allocation2 + $0x7] sm:$0xff]
    %v4465 = vld [vmem:[#allocation2 + $0x37] sm:$0xff]
    %v4467 = vperm.slane %v4315, 0
    %v4469 = vmul.f32 %v4464, %v4467
    %v4470 = vmul.f32 %v4465, %v4467
    %v4471 = vadd.f32 %v4462, %v4469
    %v4472 = vadd.f32 %v4463, %v4470
    %v4473 = vld [vmem:[#allocation2 + $0x8] sm:$0xff]
    %v4474 = vld [vmem:[#allocation2 + $0x38] sm:$0xff]
    %v4476 = vperm.slane %v4316, 0
    %v4478 = vmul.f32 %v4473, %v4476
    %v4479 = vmul.f32 %v4474, %v4476
    %v4480 = vadd.f32 %v4471, %v4478
    %v4481 = vadd.f32 %v4472, %v4479
    %v4482 = vld [vmem:[#allocation2 + $0x9] sm:$0xff]
    %v4483 = vld [vmem:[#allocation2 + $0x39] sm:$0xff]
    %v4485 = vperm.slane %v4317, 0
    %v4487 = vmul.f32 %v4482, %v4485
    %v4488 = vmul.f32 %v4483, %v4485
    %v4489 = vadd.f32 %v4480, %v4487
    %v4490 = vadd.f32 %v4481, %v4488
    %v4491 = vld [vmem:[#allocation2 + $0xa] sm:$0xff]
    %v4492 = vld [vmem:[#allocation2 + $0x3a] sm:$0xff]
    %v4494 = vperm.slane %v4318, 0
    %v4496 = vmul.f32 %v4491, %v4494
    %v4497 = vmul.f32 %v4492, %v4494
    %v4498 = vadd.f32 %v4489, %v4496
    %v4499 = vadd.f32 %v4490, %v4497
    %v4500 = vsel %vm1081, %v4498, 0.0
    %4501 = vadd.xlane.f32.xlu0 %v4500
    %v4502 = vpop.xlane.xlu0 %4501
    %v4503 = vsel %vm1081, %v4499, 0.0
    %4504 = vadd.xlane.f32.xlu0 %v4503
    %v4505 = vpop.xlane.xlu0 %4504
    %v4506 = vrot.slane %v4502, 4
    %v4507 = vadd.f32 %v4502, %v4506
    %v4508 = vrot.slane %v4507, 2
    %v4509 = vadd.f32 %v4507, %v4508
    %v4510 = vrot.slane %v4509, 1
    %v4511 = vadd.f32 %v4509, %v4510
    %v4512 = vrot.slane %v4505, 4
    %v4513 = vadd.f32 %v4505, %v4512
    %v4514 = vrot.slane %v4513, 2
    %v4515 = vadd.f32 %v4513, %v4514
    %v4516 = vrot.slane %v4515, 1
    %v4517 = vadd.f32 %v4515, %v4516
    %v4518 = vmul.f32 %v4511, %v1956
    %v4519 = vmul.f32 %v4517, %v1956
    %v4520 = vsub.f32 %v4498, %v4518
    %v4521 = vsub.f32 %v4499, %v4519
    %v4522 = vmul.f32 %v4520, %v4520
    %v4523 = vmul.f32 %v4521, %v4521
    %v4524 = vsel %vm1081, %v4522, 0.0
    %4525 = vadd.xlane.f32.xlu0 %v4524
    %v4526 = vpop.xlane.xlu0 %4525
    %v4527 = vsel %vm1081, %v4523, 0.0
    %4528 = vadd.xlane.f32.xlu0 %v4527
    %v4529 = vpop.xlane.xlu0 %4528
    %v4530 = vrot.slane %v4526, 4
    %v4531 = vadd.f32 %v4526, %v4530
    %v4532 = vrot.slane %v4531, 2
    %v4533 = vadd.f32 %v4531, %v4532
    %v4534 = vrot.slane %v4533, 1
    %v4535 = vadd.f32 %v4533, %v4534
    %v4536 = vrot.slane %v4529, 4
    %v4537 = vadd.f32 %v4529, %v4536
    %v4538 = vrot.slane %v4537, 2
    %v4539 = vadd.f32 %v4537, %v4538
    %v4540 = vrot.slane %v4539, 1
    %v4541 = vadd.f32 %v4539, %v4540
    %v4542 = vmul.f32 %v4535, %v1956
    %v4543 = vmul.f32 %v4541, %v1956
    %v4544 = vadd.f32 %v4542, 1e-08
    %v4545 = vadd.f32 %v4543, 1e-08
    %v4546 = vrsqrt.pop %v4544
    %v4547 = vmul.f32 %v4546, %v4544
    %v4548 = vmul.f32 %v4547, %v4546
    %v4549 = vmul.f32 0.5, %v4548
    %v4550 = vsub.f32 1.5, %v4549
    %v4551 = vmul.f32 %v4546, %v4550
    %vm4552 = vweird.f32 %v4544
    %vm4553 = vweird.f32 %v4546
    %vm4554 = vmor %vm4552, %vm4553
    %v4555 = vsel %vm4554, %v4546, %v4551
    %v4556 = vrsqrt.pop %v4545
    %v4557 = vmul.f32 %v4556, %v4545
    %v4558 = vmul.f32 %v4557, %v4556
    %v4559 = vmul.f32 0.5, %v4558
    %v4560 = vsub.f32 1.5, %v4559
    %v4561 = vmul.f32 %v4556, %v4560
    %vm4562 = vweird.f32 %v4545
    %vm4563 = vweird.f32 %v4556
    %vm4564 = vmor %vm4562, %vm4563
    %v4565 = vsel %vm4564, %v4556, %v4561
    %v4566 = vmul.f32 %v4520, %v4555
    %v4567 = vmul.f32 %v4521, %v4565
    %v4569 = vperm.slane %v4319, 0
    %v4571 = vmul.f32 %v4566, %v4569
    %v4572 = vmul.f32 %v4567, %v4569
    %v4574 = vperm.slane %v4320, 0
    %v4576 = vadd.f32 %v4571, %v4574
    %v4577 = vadd.f32 %v4572, %v4574
    %v4578 = vxor.u32 %v4576, 2147483648
    %v4579 = vxor.u32 %v4577, 2147483648
    %v4580 = vmul.f32 %v4578, 1.442695
    %v4581 = vpow.pop %v4580
    %v4582 = vmul.f32 %v4579, 1.442695
    %v4583 = vpow.pop %v4582
    %v4584 = vadd.f32 %v4581, 1.0
    %v4585 = vadd.f32 %v4583, 1.0
    %v4586 = vrcp.pop %v4584
    %v4587 = vmul.f32 %v4584, %v4586
    %v4588 = vsub.f32 1.0, %v4587
    %v4589 = vmul.f32 %v4586, %v4588
    %v4590 = vadd.f32 %v4586, %v4589
    %vm4591 = vweird.f32 %v4584
    %vm4592 = vweird.f32 %v4586
    %vm4593 = vmor %vm4591, %vm4592
    %v4594 = vsel %vm4593, %v4586, %v4590
    %v4595 = vand.u32 2147483647, %v4584
    %vm4596 = vcmp.eq.f32.partialorder %v4595, 8.507059e+37
    %v4597 = vand.u32 %v4584, 2147483648
    %v4598 = vor.u32 1.1754944e-38, %v4597
    %v4599 = vsel %vm4596, %v4598, %v4594
    %v4600 = vmul.f32 1.0, %v4599
    %v4601 = vrcp.pop %v4585
    %v4602 = vmul.f32 %v4585, %v4601
    %v4603 = vsub.f32 1.0, %v4602
    %v4604 = vmul.f32 %v4601, %v4603
    %v4605 = vadd.f32 %v4601, %v4604
    %vm4606 = vweird.f32 %v4585
    %vm4607 = vweird.f32 %v4601
    %vm4608 = vmor %vm4606, %vm4607
    %v4609 = vsel %vm4608, %v4601, %v4605
    %v4610 = vand.u32 2147483647, %v4585
    %vm4611 = vcmp.eq.f32.partialorder %v4610, 8.507059e+37
    %v4612 = vand.u32 %v4585, 2147483648
    %v4613 = vor.u32 1.1754944e-38, %v4612
    %v4614 = vsel %vm4611, %v4613, %v4609
    %v4615 = vmul.f32 1.0, %v4614
    %v4617 = vperm.slane %v4321, 0
    %v4619 = vmul.f32 %v4457, %v4617
    %v4620 = vmul.f32 %v4458, %v4617
    %v4622 = vperm.slane %v4322, 0
    %v4624 = vmul.f32 %v4464, %v4622
    %v4625 = vmul.f32 %v4465, %v4622
    %v4626 = vadd.f32 %v4619, %v4624
    %v4627 = vadd.f32 %v4620, %v4625
    %v4629 = vperm.slane %v4323, 0
    %v4631 = vmul.f32 %v4473, %v4629
    %v4632 = vmul.f32 %v4474, %v4629
    %v4633 = vadd.f32 %v4626, %v4631
    %v4634 = vadd.f32 %v4627, %v4632
    %v4636 = vperm.slane %v4324, 0
    %v4638 = vmul.f32 %v4482, %v4636
    %v4639 = vmul.f32 %v4483, %v4636
    %v4640 = vadd.f32 %v4633, %v4638
    %v4641 = vadd.f32 %v4634, %v4639
    %v4643 = vperm.slane %v4325, 0
    %v4645 = vmul.f32 %v4491, %v4643
    %v4646 = vmul.f32 %v4492, %v4643
    %v4647 = vadd.f32 %v4640, %v4645
    %v4648 = vadd.f32 %v4641, %v4646
    %v4649 = vsel %vm1081, %v4647, 0.0
    %4650 = vadd.xlane.f32.xlu0 %v4649
    %v4651 = vpop.xlane.xlu0 %4650
    %v4652 = vsel %vm1081, %v4648, 0.0
    %4653 = vadd.xlane.f32.xlu0 %v4652
    %v4654 = vpop.xlane.xlu0 %4653
    %v4655 = vrot.slane %v4651, 4
    %v4656 = vadd.f32 %v4651, %v4655
    %v4657 = vrot.slane %v4656, 2
    %v4658 = vadd.f32 %v4656, %v4657
    %v4659 = vrot.slane %v4658, 1
    %v4660 = vadd.f32 %v4658, %v4659
    %v4661 = vrot.slane %v4654, 4
    %v4662 = vadd.f32 %v4654, %v4661
    %v4663 = vrot.slane %v4662, 2
    %v4664 = vadd.f32 %v4662, %v4663
    %v4665 = vrot.slane %v4664, 1
    %v4666 = vadd.f32 %v4664, %v4665
    %v4667 = vmul.f32 %v4660, %v1956
    %v4668 = vmul.f32 %v4666, %v1956
    %v4669 = vsub.f32 %v4647, %v4667
    %v4670 = vsub.f32 %v4648, %v4668
    %v4671 = vmul.f32 %v4669, %v4669
    %v4672 = vmul.f32 %v4670, %v4670
    %v4673 = vsel %vm1081, %v4671, 0.0
    %4674 = vadd.xlane.f32.xlu0 %v4673
    %v4675 = vpop.xlane.xlu0 %4674
    %v4676 = vsel %vm1081, %v4672, 0.0
    %4677 = vadd.xlane.f32.xlu0 %v4676
    %v4678 = vpop.xlane.xlu0 %4677
    %v4679 = vrot.slane %v4675, 4
    %v4680 = vadd.f32 %v4675, %v4679
    %v4681 = vrot.slane %v4680, 2
    %v4682 = vadd.f32 %v4680, %v4681
    %v4683 = vrot.slane %v4682, 1
    %v4684 = vadd.f32 %v4682, %v4683
    %v4685 = vrot.slane %v4678, 4
    %v4686 = vadd.f32 %v4678, %v4685
    %v4687 = vrot.slane %v4686, 2
    %v4688 = vadd.f32 %v4686, %v4687
    %v4689 = vrot.slane %v4688, 1
    %v4690 = vadd.f32 %v4688, %v4689
    %v4691 = vmul.f32 %v4684, %v1956
    %v4692 = vmul.f32 %v4690, %v1956
    %v4693 = vadd.f32 %v4691, 1e-08
    %v4694 = vadd.f32 %v4692, 1e-08
    %v4695 = vrsqrt.pop %v4693
    %v4696 = vmul.f32 %v4695, %v4693
    %v4697 = vmul.f32 %v4696, %v4695
    %v4698 = vmul.f32 0.5, %v4697
    %v4699 = vsub.f32 1.5, %v4698
    %v4700 = vmul.f32 %v4695, %v4699
    %vm4701 = vweird.f32 %v4693
    %vm4702 = vweird.f32 %v4695
    %vm4703 = vmor %vm4701, %vm4702
    %v4704 = vsel %vm4703, %v4695, %v4700
    %v4705 = vrsqrt.pop %v4694
    %v4706 = vmul.f32 %v4705, %v4694
    %v4707 = vmul.f32 %v4706, %v4705
    %v4708 = vmul.f32 0.5, %v4707
    %v4709 = vsub.f32 1.5, %v4708
    %v4710 = vmul.f32 %v4705, %v4709
    %vm4711 = vweird.f32 %v4694
    %vm4712 = vweird.f32 %v4705
    %vm4713 = vmor %vm4711, %vm4712
    %v4714 = vsel %vm4713, %v4705, %v4710
    %v4715 = vmul.f32 %v4669, %v4704
    %v4716 = vmul.f32 %v4670, %v4714
    %v4718 = vperm.slane %v4326, 0
    %v4720 = vmul.f32 %v4715, %v4718
    %v4721 = vmul.f32 %v4716, %v4718
    %v4723 = vperm.slane %v4327, 0
    %v4725 = vadd.f32 %v4720, %v4723
    %v4726 = vadd.f32 %v4721, %v4723
    %v4727 = vmul.f32 %v4451, %v4600
    %v4728 = vmul.f32 %v4452, %v4615
    %v4729 = vadd.f32 %v4727, %v4725
    %v4730 = vadd.f32 %v4728, %v4726
    %v4731 = vld [vmem:[%s129] sm:$0x1]
    %v4732 = vld [vmem:[%s129 + $0x1] sm:$0x1]
    %v4733 = vld [vmem:[%s129 + $0x2] sm:$0x1]
    %v4734 = vld [vmem:[%s129 + $0x3] sm:$0x1]
    %v4735 = vld [vmem:[%s129 + $0x4] sm:$0x1]
    %v4736 = vld [vmem:[#allocation66] sm:$0x1]
    %v4737 = vld [vmem:[#allocation68] sm:$0x1]
    %v4738 = vld [vmem:[%s135] sm:$0x1]
    %v4739 = vld [vmem:[%s135 + $0x1] sm:$0x1]
    %v4740 = vld [vmem:[%s135 + $0x2] sm:$0x1]
    %v4741 = vld [vmem:[%s135 + $0x3] sm:$0x1]
    %v4742 = vld [vmem:[%s135 + $0x4] sm:$0x1]
    %v4743 = vld [vmem:[#allocation69] sm:$0x1]
    %v4744 = vld [vmem:[#allocation71] sm:$0x1]
    %v4745 = vld [vmem:[%s141] sm:$0x1]
    %v4746 = vld [vmem:[%s141 + $0x1] sm:$0x1]
    %v4747 = vld [vmem:[%s141 + $0x2] sm:$0x1]
    %v4748 = vld [vmem:[%s141 + $0x3] sm:$0x1]
    %v4749 = vld [vmem:[%s141 + $0x4] sm:$0x1]
    %v4750 = vld [vmem:[#allocation72] sm:$0x1]
    %v4751 = vld [vmem:[#allocation74] sm:$0x1]
    %v4752 = vld [vmem:[%s147] sm:$0xff]
    %v4753 = vld [vmem:[%s147 + $0x8] sm:$0xff]
    %4754 = vst.msk [vmem:[#allocation2 + $0x8] sm:$0xff] %vm1081, %v4303
    %4755 = vst.msk [vmem:[#allocation2 + $0x10] sm:$0xff] %vm1081, %v4304
    %4756 = vst.msk [vmem:[#allocation2 + $0x38] sm:$0xff] %vm1081, %v4305
    %4757 = vst.msk [vmem:[#allocation2 + $0x40] sm:$0xff] %vm1081, %v4306
    %4758 = vst.msk [vmem:[#allocation2 + $0x18] sm:$0xff] %vm1081, 0.0
    %4759 = vst.msk [vmem:[#allocation2 + $0x48] sm:$0xff] %vm1081, 0.0
    %v4760 = vld [vmem:[#allocation2 + $0x6] sm:$0xff]
    %v4761 = vld [vmem:[#allocation2 + $0xe] sm:$0xff]
    %v4762 = vld [vmem:[#allocation2 + $0x36] sm:$0xff]
    %v4763 = vld [vmem:[#allocation2 + $0x3e] sm:$0xff]
    %v4765 = vperm.slane %v4731, 0
    %v4767 = vmul.f32 %v4760, %v4765
    %v4768 = vmul.f32 %v4761, %v4765
    %v4769 = vmul.f32 %v4762, %v4765
    %v4770 = vmul.f32 %v4763, %v4765
    %v4771 = vld [vmem:[#allocation2 + $0x7] sm:$0xff]
    %v4772 = vld [vmem:[#allocation2 + $0xf] sm:$0xff]
    %v4773 = vld [vmem:[#allocation2 + $0x37] sm:$0xff]
    %v4774 = vld [vmem:[#allocation2 + $0x3f] sm:$0xff]
    %v4776 = vperm.slane %v4732, 0
    %v4778 = vmul.f32 %v4771, %v4776
    %v4779 = vmul.f32 %v4772, %v4776
    %v4780 = vmul.f32 %v4773, %v4776
    %v4781 = vmul.f32 %v4774, %v4776
    %v4782 = vadd.f32 %v4767, %v4778
    %v4783 = vadd.f32 %v4768, %v4779
    %v4784 = vadd.f32 %v4769, %v4780
    %v4785 = vadd.f32 %v4770, %v4781
    %v4786 = vld [vmem:[#allocation2 + $0x8] sm:$0xff]
    %v4787 = vld [vmem:[#allocation2 + $0x10] sm:$0xff]
    %v4788 = vld [vmem:[#allocation2 + $0x38] sm:$0xff]
    %v4789 = vld [vmem:[#allocation2 + $0x40] sm:$0xff]
    %v4791 = vperm.slane %v4733, 0
    %v4793 = vmul.f32 %v4786, %v4791
    %v4794 = vmul.f32 %v4787, %v4791
    %v4795 = vmul.f32 %v4788, %v4791
    %v4796 = vmul.f32 %v4789, %v4791
    %v4797 = vadd.f32 %v4782, %v4793
    %v4798 = vadd.f32 %v4783, %v4794
    %v4799 = vadd.f32 %v4784, %v4795
    %v4800 = vadd.f32 %v4785, %v4796
    %v4801 = vld [vmem:[#allocation2 + $0x9] sm:$0xff]
    %v4802 = vld [vmem:[#allocation2 + $0x11] sm:$0xff]
    %v4803 = vld [vmem:[#allocation2 + $0x39] sm:$0xff]
    %v4804 = vld [vmem:[#allocation2 + $0x41] sm:$0xff]
    %v4806 = vperm.slane %v4734, 0
    %v4808 = vmul.f32 %v4801, %v4806
    %v4809 = vmul.f32 %v4802, %v4806
    %v4810 = vmul.f32 %v4803, %v4806
    %v4811 = vmul.f32 %v4804, %v4806
    %v4812 = vadd.f32 %v4797, %v4808
    %v4813 = vadd.f32 %v4798, %v4809
    %v4814 = vadd.f32 %v4799, %v4810
    %v4815 = vadd.f32 %v4800, %v4811
    %v4816 = vld [vmem:[#allocation2 + $0xa] sm:$0xff]
    %v4817 = vld [vmem:[#allocation2 + $0x12] sm:$0xff]
    %v4818 = vld [vmem:[#allocation2 + $0x3a] sm:$0xff]
    %v4819 = vld [vmem:[#allocation2 + $0x42] sm:$0xff]
    %v4821 = vperm.slane %v4735, 0
    %v4823 = vmul.f32 %v4816, %v4821
    %v4824 = vmul.f32 %v4817, %v4821
    %v4825 = vmul.f32 %v4818, %v4821
    %v4826 = vmul.f32 %v4819, %v4821
    %v4827 = vadd.f32 %v4812, %v4823
    %v4828 = vadd.f32 %v4813, %v4824
    %v4829 = vadd.f32 %v4814, %v4825
    %v4830 = vadd.f32 %v4815, %v4826
    %v4831 = vsel %vm1081, %v4827, 0.0
    %4832 = vadd.xlane.f32.xlu0 %v4831
    %v4833 = vpop.xlane.xlu0 %4832
    %v4834 = vsel %vm1081, %v4828, 0.0
    %4835 = vadd.xlane.f32.xlu0 %v4834
    %v4836 = vpop.xlane.xlu0 %4835
    %v4837 = vsel %vm1081, %v4829, 0.0
    %4838 = vadd.xlane.f32.xlu0 %v4837
    %v4839 = vpop.xlane.xlu0 %4838
    %v4840 = vsel %vm1081, %v4830, 0.0
    %4841 = vadd.xlane.f32.xlu0 %v4840
    %v4842 = vpop.xlane.xlu0 %4841
    %v4843 = vadd.f32 %v4833, %v4836
    %v4844 = vrot.slane %v4843, 4
    %v4845 = vadd.f32 %v4843, %v4844
    %v4846 = vrot.slane %v4845, 2
    %v4847 = vadd.f32 %v4845, %v4846
    %v4848 = vrot.slane %v4847, 1
    %v4849 = vadd.f32 %v4847, %v4848
    %v4850 = vadd.f32 %v4839, %v4842
    %v4851 = vrot.slane %v4850, 4
    %v4852 = vadd.f32 %v4850, %v4851
    %v4853 = vrot.slane %v4852, 2
    %v4854 = vadd.f32 %v4852, %v4853
    %v4855 = vrot.slane %v4854, 1
    %v4856 = vadd.f32 %v4854, %v4855
    %v4857 = vmul.f32 %v4849, %v1716
    %v4858 = vmul.f32 %v4856, %v1716
    %v4859 = vsub.f32 %v4827, %v4857
    %v4860 = vsub.f32 %v4828, %v4857
    %v4861 = vsub.f32 %v4829, %v4858
    %v4862 = vsub.f32 %v4830, %v4858
    %v4863 = vmul.f32 %v4859, %v4859
    %v4864 = vmul.f32 %v4860, %v4860
    %v4865 = vmul.f32 %v4861, %v4861
    %v4866 = vmul.f32 %v4862, %v4862
    %v4867 = vsel %vm1081, %v4863, 0.0
    %4868 = vadd.xlane.f32.xlu0 %v4867
    %v4869 = vpop.xlane.xlu0 %4868
    %v4870 = vsel %vm1081, %v4864, 0.0
    %4871 = vadd.xlane.f32.xlu0 %v4870
    %v4872 = vpop.xlane.xlu0 %4871
    %v4873 = vsel %vm1081, %v4865, 0.0
    %4874 = vadd.xlane.f32.xlu0 %v4873
    %v4875 = vpop.xlane.xlu0 %4874
    %v4876 = vsel %vm1081, %v4866, 0.0
    %4877 = vadd.xlane.f32.xlu0 %v4876
    %v4878 = vpop.xlane.xlu0 %4877
    %v4879 = vadd.f32 %v4869, %v4872
    %v4880 = vrot.slane %v4879, 4
    %v4881 = vadd.f32 %v4879, %v4880
    %v4882 = vrot.slane %v4881, 2
    %v4883 = vadd.f32 %v4881, %v4882
    %v4884 = vrot.slane %v4883, 1
    %v4885 = vadd.f32 %v4883, %v4884
    %v4886 = vadd.f32 %v4875, %v4878
    %v4887 = vrot.slane %v4886, 4
    %v4888 = vadd.f32 %v4886, %v4887
    %v4889 = vrot.slane %v4888, 2
    %v4890 = vadd.f32 %v4888, %v4889
    %v4891 = vrot.slane %v4890, 1
    %v4892 = vadd.f32 %v4890, %v4891
    %v4893 = vmul.f32 %v4885, %v1716
    %v4894 = vmul.f32 %v4892, %v1716
    %v4895 = vadd.f32 %v4893, 1e-08
    %v4896 = vadd.f32 %v4894, 1e-08
    %v4897 = vrsqrt.pop %v4895
    %v4898 = vmul.f32 %v4897, %v4895
    %v4899 = vmul.f32 %v4898, %v4897
    %v4900 = vmul.f32 0.5, %v4899
    %v4901 = vsub.f32 1.5, %v4900
    %v4902 = vmul.f32 %v4897, %v4901
    %vm4903 = vweird.f32 %v4895
    %vm4904 = vweird.f32 %v4897
    %vm4905 = vmor %vm4903, %vm4904
    %v4906 = vsel %vm4905, %v4897, %v4902
    %v4907 = vrsqrt.pop %v4896
    %v4908 = vmul.f32 %v4907, %v4896
    %v4909 = vmul.f32 %v4908, %v4907
    %v4910 = vmul.f32 0.5, %v4909
    %v4911 = vsub.f32 1.5, %v4910
    %v4912 = vmul.f32 %v4907, %v4911
    %vm4913 = vweird.f32 %v4896
    %vm4914 = vweird.f32 %v4907
    %vm4915 = vmor %vm4913, %vm4914
    %v4916 = vsel %vm4915, %v4907, %v4912
    %v4917 = vmul.f32 %v4859, %v4906
    %v4918 = vmul.f32 %v4860, %v4906
    %v4919 = vmul.f32 %v4861, %v4916
    %v4920 = vmul.f32 %v4862, %v4916
    %v4922 = vperm.slane %v4736, 0
    %v4924 = vmul.f32 %v4917, %v4922
    %v4925 = vmul.f32 %v4918, %v4922
    %v4926 = vmul.f32 %v4919, %v4922
    %v4927 = vmul.f32 %v4920, %v4922
    %v4929 = vperm.slane %v4737, 0
    %v4931 = vadd.f32 %v4924, %v4929
    %v4932 = vadd.f32 %v4925, %v4929
    %v4933 = vadd.f32 %v4926, %v4929
    %v4934 = vadd.f32 %v4927, %v4929
    %4935 = vst.msk [vmem:[#allocation2 + $0x8] sm:$0xff] %vm1081, %v4729
    %4936 = vst.msk [vmem:[#allocation2 + $0x38] sm:$0xff] %vm1081, %v4730
    %4937 = vst.msk [vmem:[#allocation2 + $0x10] sm:$0xff] %vm1081, 0.0
    %4938 = vst.msk [vmem:[#allocation2 + $0x40] sm:$0xff] %vm1081, 0.0
    %v4939 = vld [vmem:[#allocation2 + $0x6] sm:$0xff]
    %v4940 = vld [vmem:[#allocation2 + $0x36] sm:$0xff]
    %v4942 = vperm.slane %v4738, 0
    %v4944 = vmul.f32 %v4939, %v4942
    %v4945 = vmul.f32 %v4940, %v4942
    %v4946 = vld [vmem:[#allocation2 + $0x7] sm:$0xff]
    %v4947 = vld [vmem:[#allocation2 + $0x37] sm:$0xff]
    %v4949 = vperm.slane %v4739, 0
    %v4951 = vmul.f32 %v4946, %v4949
    %v4952 = vmul.f32 %v4947, %v4949
    %v4953 = vadd.f32 %v4944, %v4951
    %v4954 = vadd.f32 %v4945, %v4952
    %v4955 = vld [vmem:[#allocation2 + $0x8] sm:$0xff]
    %v4956 = vld [vmem:[#allocation2 + $0x38] sm:$0xff]
    %v4958 = vperm.slane %v4740, 0
    %v4960 = vmul.f32 %v4955, %v4958
    %v4961 = vmul.f32 %v4956, %v4958
    %v4962 = vadd.f32 %v4953, %v4960
    %v4963 = vadd.f32 %v4954, %v4961
    %v4964 = vld [vmem:[#allocation2 + $0x9] sm:$0xff]
    %v4965 = vld [vmem:[#allocation2 + $0x39] sm:$0xff]
    %v4967 = vperm.slane %v4741, 0
    %v4969 = vmul.f32 %v4964, %v4967
    %v4970 = vmul.f32 %v4965, %v4967
    %v4971 = vadd.f32 %v4962, %v4969
    %v4972 = vadd.f32 %v4963, %v4970
    %v4973 = vld [vmem:[#allocation2 + $0xa] sm:$0xff]
    %v4974 = vld [vmem:[#allocation2 + $0x3a] sm:$0xff]
    %v4976 = vperm.slane %v4742, 0
    %v4978 = vmul.f32 %v4973, %v4976
    %v4979 = vmul.f32 %v4974, %v4976
    %v4980 = vadd.f32 %v4971, %v4978
    %v4981 = vadd.f32 %v4972, %v4979
    %v4982 = vsel %vm1081, %v4980, 0.0
    %4983 = vadd.xlane.f32.xlu0 %v4982
    %v4984 = vpop.xlane.xlu0 %4983
    %v4985 = vsel %vm1081, %v4981, 0.0
    %4986 = vadd.xlane.f32.xlu0 %v4985
    %v4987 = vpop.xlane.xlu0 %4986
    %v4988 = vrot.slane %v4984, 4
    %v4989 = vadd.f32 %v4984, %v4988
    %v4990 = vrot.slane %v4989, 2
    %v4991 = vadd.f32 %v4989, %v4990
    %v4992 = vrot.slane %v4991, 1
    %v4993 = vadd.f32 %v4991, %v4992
    %v4994 = vrot.slane %v4987, 4
    %v4995 = vadd.f32 %v4987, %v4994
    %v4996 = vrot.slane %v4995, 2
    %v4997 = vadd.f32 %v4995, %v4996
    %v4998 = vrot.slane %v4997, 1
    %v4999 = vadd.f32 %v4997, %v4998
    %v5000 = vmul.f32 %v4993, %v1956
    %v5001 = vmul.f32 %v4999, %v1956
    %v5002 = vsub.f32 %v4980, %v5000
    %v5003 = vsub.f32 %v4981, %v5001
    %v5004 = vmul.f32 %v5002, %v5002
    %v5005 = vmul.f32 %v5003, %v5003
    %v5006 = vsel %vm1081, %v5004, 0.0
    %5007 = vadd.xlane.f32.xlu0 %v5006
    %v5008 = vpop.xlane.xlu0 %5007
    %v5009 = vsel %vm1081, %v5005, 0.0
    %5010 = vadd.xlane.f32.xlu0 %v5009
    %v5011 = vpop.xlane.xlu0 %5010
    %v5012 = vrot.slane %v5008, 4
    %v5013 = vadd.f32 %v5008, %v5012
    %v5014 = vrot.slane %v5013, 2
    %v5015 = vadd.f32 %v5013, %v5014
    %v5016 = vrot.slane %v5015, 1
    %v5017 = vadd.f32 %v5015, %v5016
    %v5018 = vrot.slane %v5011, 4
    %v5019 = vadd.f32 %v5011, %v5018
    %v5020 = vrot.slane %v5019, 2
    %v5021 = vadd.f32 %v5019, %v5020
    %v5022 = vrot.slane %v5021, 1
    %v5023 = vadd.f32 %v5021, %v5022
    %v5024 = vmul.f32 %v5017, %v1956
    %v5025 = vmul.f32 %v5023, %v1956
    %v5026 = vadd.f32 %v5024, 1e-08
    %v5027 = vadd.f32 %v5025, 1e-08
    %v5028 = vrsqrt.pop %v5026
    %v5029 = vmul.f32 %v5028, %v5026
    %v5030 = vmul.f32 %v5029, %v5028
    %v5031 = vmul.f32 0.5, %v5030
    %v5032 = vsub.f32 1.5, %v5031
    %v5033 = vmul.f32 %v5028, %v5032
    %vm5034 = vweird.f32 %v5026
    %vm5035 = vweird.f32 %v5028
    %vm5036 = vmor %vm5034, %vm5035
    %v5037 = vsel %vm5036, %v5028, %v5033
    %v5038 = vrsqrt.pop %v5027
    %v5039 = vmul.f32 %v5038, %v5027
    %v5040 = vmul.f32 %v5039, %v5038
    %v5041 = vmul.f32 0.5, %v5040
    %v5042 = vsub.f32 1.5, %v5041
    %v5043 = vmul.f32 %v5038, %v5042
    %vm5044 = vweird.f32 %v5027
    %vm5045 = vweird.f32 %v5038
    %vm5046 = vmor %vm5044, %vm5045
    %v5047 = vsel %vm5046, %v5038, %v5043
    %v5048 = vmul.f32 %v5002, %v5037
    %v5049 = vmul.f32 %v5003, %v5047
    %v5051 = vperm.slane %v4743, 0
    %v5053 = vmul.f32 %v5048, %v5051
    %v5054 = vmul.f32 %v5049, %v5051
    %v5056 = vperm.slane %v4744, 0
    %v5058 = vadd.f32 %v5053, %v5056
    %v5059 = vadd.f32 %v5054, %v5056
    %v5060 = vxor.u32 %v5058, 2147483648
    %v5061 = vxor.u32 %v5059, 2147483648
    %v5062 = vmul.f32 %v5060, 1.442695
    %v5063 = vpow.pop %v5062
    %v5064 = vmul.f32 %v5061, 1.442695
    %v5065 = vpow.pop %v5064
    %v5066 = vadd.f32 %v5063, 1.0
    %v5067 = vadd.f32 %v5065, 1.0
    %v5068 = vrcp.pop %v5066
    %v5069 = vmul.f32 %v5066, %v5068
    %v5070 = vsub.f32 1.0, %v5069
    %v5071 = vmul.f32 %v5068, %v5070
    %v5072 = vadd.f32 %v5068, %v5071
    %vm5073 = vweird.f32 %v5066
    %vm5074 = vweird.f32 %v5068
    %vm5075 = vmor %vm5073, %vm5074
    %v5076 = vsel %vm5075, %v5068, %v5072
    %v5077 = vand.u32 2147483647, %v5066
    %vm5078 = vcmp.eq.f32.partialorder %v5077, 8.507059e+37
    %v5079 = vand.u32 %v5066, 2147483648
    %v5080 = vor.u32 1.1754944e-38, %v5079
    %v5081 = vsel %vm5078, %v5080, %v5076
    %v5082 = vmul.f32 1.0, %v5081
    %v5083 = vrcp.pop %v5067
    %v5084 = vmul.f32 %v5067, %v5083
    %v5085 = vsub.f32 1.0, %v5084
    %v5086 = vmul.f32 %v5083, %v5085
    %v5087 = vadd.f32 %v5083, %v5086
    %vm5088 = vweird.f32 %v5067
    %vm5089 = vweird.f32 %v5083
    %vm5090 = vmor %vm5088, %vm5089
    %v5091 = vsel %vm5090, %v5083, %v5087
    %v5092 = vand.u32 2147483647, %v5067
    %vm5093 = vcmp.eq.f32.partialorder %v5092, 8.507059e+37
    %v5094 = vand.u32 %v5067, 2147483648
    %v5095 = vor.u32 1.1754944e-38, %v5094
    %v5096 = vsel %vm5093, %v5095, %v5091
    %v5097 = vmul.f32 1.0, %v5096
    %v5099 = vperm.slane %v4745, 0
    %v5101 = vmul.f32 %v4939, %v5099
    %v5102 = vmul.f32 %v4940, %v5099
    %v5104 = vperm.slane %v4746, 0
    %v5106 = vmul.f32 %v4946, %v5104
    %v5107 = vmul.f32 %v4947, %v5104
    %v5108 = vadd.f32 %v5101, %v5106
    %v5109 = vadd.f32 %v5102, %v5107
    %v5111 = vperm.slane %v4747, 0
    %v5113 = vmul.f32 %v4955, %v5111
    %v5114 = vmul.f32 %v4956, %v5111
    %v5115 = vadd.f32 %v5108, %v5113
    %v5116 = vadd.f32 %v5109, %v5114
    %v5118 = vperm.slane %v4748, 0
    %v5120 = vmul.f32 %v4964, %v5118
    %v5121 = vmul.f32 %v4965, %v5118
    %v5122 = vadd.f32 %v5115, %v5120
    %v5123 = vadd.f32 %v5116, %v5121
    %v5125 = vperm.slane %v4749, 0
    %v5127 = vmul.f32 %v4973, %v5125
    %v5128 = vmul.f32 %v4974, %v5125
    %v5129 = vadd.f32 %v5122, %v5127
    %v5130 = vadd.f32 %v5123, %v5128
    %v5131 = vsel %vm1081, %v5129, 0.0
    %5132 = vadd.xlane.f32.xlu0 %v5131
    %v5133 = vpop.xlane.xlu0 %5132
    %v5134 = vsel %vm1081, %v5130, 0.0
    %5135 = vadd.xlane.f32.xlu0 %v5134
    %v5136 = vpop.xlane.xlu0 %5135
    %v5137 = vrot.slane %v5133, 4
    %v5138 = vadd.f32 %v5133, %v5137
    %v5139 = vrot.slane %v5138, 2
    %v5140 = vadd.f32 %v5138, %v5139
    %v5141 = vrot.slane %v5140, 1
    %v5142 = vadd.f32 %v5140, %v5141
    %v5143 = vrot.slane %v5136, 4
    %v5144 = vadd.f32 %v5136, %v5143
    %v5145 = vrot.slane %v5144, 2
    %v5146 = vadd.f32 %v5144, %v5145
    %v5147 = vrot.slane %v5146, 1
    %v5148 = vadd.f32 %v5146, %v5147
    %v5149 = vmul.f32 %v5142, %v1956
    %v5150 = vmul.f32 %v5148, %v1956
    %v5151 = vsub.f32 %v5129, %v5149
    %v5152 = vsub.f32 %v5130, %v5150
    %v5153 = vmul.f32 %v5151, %v5151
    %v5154 = vmul.f32 %v5152, %v5152
    %v5155 = vsel %vm1081, %v5153, 0.0
    %5156 = vadd.xlane.f32.xlu0 %v5155
    %v5157 = vpop.xlane.xlu0 %5156
    %v5158 = vsel %vm1081, %v5154, 0.0
    %5159 = vadd.xlane.f32.xlu0 %v5158
    %v5160 = vpop.xlane.xlu0 %5159
    %v5161 = vrot.slane %v5157, 4
    %v5162 = vadd.f32 %v5157, %v5161
    %v5163 = vrot.slane %v5162, 2
    %v5164 = vadd.f32 %v5162, %v5163
    %v5165 = vrot.slane %v5164, 1
    %v5166 = vadd.f32 %v5164, %v5165
    %v5167 = vrot.slane %v5160, 4
    %v5168 = vadd.f32 %v5160, %v5167
    %v5169 = vrot.slane %v5168, 2
    %v5170 = vadd.f32 %v5168, %v5169
    %v5171 = vrot.slane %v5170, 1
    %v5172 = vadd.f32 %v5170, %v5171
    %v5173 = vmul.f32 %v5166, %v1956
    %v5174 = vmul.f32 %v5172, %v1956
    %v5175 = vadd.f32 %v5173, 1e-08
    %v5176 = vadd.f32 %v5174, 1e-08
    %v5177 = vrsqrt.pop %v5175
    %v5178 = vmul.f32 %v5177, %v5175
    %v5179 = vmul.f32 %v5178, %v5177
    %v5180 = vmul.f32 0.5, %v5179
    %v5181 = vsub.f32 1.5, %v5180
    %v5182 = vmul.f32 %v5177, %v5181
    %vm5183 = vweird.f32 %v5175
    %vm5184 = vweird.f32 %v5177
    %vm5185 = vmor %vm5183, %vm5184
    %v5186 = vsel %vm5185, %v5177, %v5182
    %v5187 = vrsqrt.pop %v5176
    %v5188 = vmul.f32 %v5187, %v5176
    %v5189 = vmul.f32 %v5188, %v5187
    %v5190 = vmul.f32 0.5, %v5189
    %v5191 = vsub.f32 1.5, %v5190
    %v5192 = vmul.f32 %v5187, %v5191
    %vm5193 = vweird.f32 %v5176
    %vm5194 = vweird.f32 %v5187
    %vm5195 = vmor %vm5193, %vm5194
    %v5196 = vsel %vm5195, %v5187, %v5192
    %v5197 = vmul.f32 %v5151, %v5186
    %v5198 = vmul.f32 %v5152, %v5196
    %v5200 = vperm.slane %v4750, 0
    %v5202 = vmul.f32 %v5197, %v5200
    %v5203 = vmul.f32 %v5198, %v5200
    %v5205 = vperm.slane %v4751, 0
    %v5207 = vadd.f32 %v5202, %v5205
    %v5208 = vadd.f32 %v5203, %v5205
    %v5210 = vsel %vm3578, %v4752, 0
    %v5213 = vsel %vm3578, %v4753, 0
    %5215 = vmatpush.msra.mxu0 0.0
    %5216 = vmatpush.msra.mxu0 0.0
    %5217 = vmatpush.msra.mxu0 0.0
    %5218 = vmatpush.msra.mxu0 0.0
    %5219 = vmatpush.msra.mxu0 0.0
    %5220 = vmatpush.msra.mxu0 0.0
    %5221 = vmatpush.msra.mxu0 0.0
    %5222 = vmatpush.msra.mxu0 0.0
    %5223 = vmatpush.msra.mxu0 0.0
    %5224 = vmatpush.msra.mxu0 0.0
    %5225 = vmatpush.msra.mxu0 0.0
    %5226 = vmatpush.msra.mxu0 0.0
    %5227 = vmatpush.msra.mxu0 0.0
    %5228 = vmatpush.msra.mxu0 0.0
    %5229 = vmatpush.msra.mxu0 0.0
    %5230 = vmatpush.msra.mxu0 %v5082
    %5231 = vmatmul.f32.gmra.mxu0 %v5210
    %v5232 = vpop.f32.mrf.mxu0
    %v5233 = vadd.f32 0.0, %v5232
    %5234 = vmatmul.f32.gmra.mxu0 %v5213
    %v5235 = vpop.f32.mrf.mxu0
    %v5236 = vadd.f32 0.0, %v5235
    %5237 = vdwg.mxu0
    %5238 = vmatpush.msra.mxu0 0.0
    %5239 = vmatpush.msra.mxu0 0.0
    %5240 = vmatpush.msra.mxu0 0.0
    %5241 = vmatpush.msra.mxu0 0.0
    %5242 = vmatpush.msra.mxu0 0.0
    %5243 = vmatpush.msra.mxu0 0.0
    %5244 = vmatpush.msra.mxu0 0.0
    %5245 = vmatpush.msra.mxu0 0.0
    %5246 = vmatpush.msra.mxu0 0.0
    %5247 = vmatpush.msra.mxu0 0.0
    %5248 = vmatpush.msra.mxu0 0.0
    %5249 = vmatpush.msra.mxu0 0.0
    %5250 = vmatpush.msra.mxu0 0.0
    %5251 = vmatpush.msra.mxu0 0.0
    %5252 = vmatpush.msra.mxu0 0.0
    %5253 = vmatpush.msra.mxu0 %v5097
    %5254 = vmatmul.f32.gmra.mxu0 %v5210
    %v5255 = vpop.f32.mrf.mxu0
    %v5256 = vadd.f32 0.0, %v5255
    %5257 = vmatmul.f32.gmra.mxu0 %v5213
    %v5258 = vpop.f32.mrf.mxu0
    %v5259 = vadd.f32 0.0, %v5258
    %5260 = vdwg.mxu0
    %5261 = vmatpush.msra.mxu0 0.0
    %5262 = vmatpush.msra.mxu0 0.0
    %5263 = vmatpush.msra.mxu0 0.0
    %5264 = vmatpush.msra.mxu0 0.0
    %5265 = vmatpush.msra.mxu0 0.0
    %5266 = vmatpush.msra.mxu0 0.0
    %5267 = vmatpush.msra.mxu0 0.0
    %5268 = vmatpush.msra.mxu0 0.0
    %5269 = vmatpush.msra.mxu0 0.0
    %5270 = vmatpush.msra.mxu0 0.0
    %5271 = vmatpush.msra.mxu0 0.0
    %5272 = vmatpush.msra.mxu0 0.0
    %5273 = vmatpush.msra.mxu0 0.0
    %5274 = vmatpush.msra.mxu0 0.0
    %5275 = vmatpush.msra.mxu0 0.0
    %5276 = vmatpush.msra.mxu0 %v5207
    %5277 = vmatmul.f32.gmra.mxu0 %v5210
    %v5278 = vpop.f32.mrf.mxu0
    %v5279 = vadd.f32 0.0, %v5278
    %5280 = vmatmul.f32.gmra.mxu0 %v5213
    %v5281 = vpop.f32.mrf.mxu0
    %v5282 = vadd.f32 0.0, %v5281
    %5283 = vdwg.mxu0
    %5284 = vmatpush.msra.mxu0 0.0
    %5285 = vmatpush.msra.mxu0 0.0
    %5286 = vmatpush.msra.mxu0 0.0
    %5287 = vmatpush.msra.mxu0 0.0
    %5288 = vmatpush.msra.mxu0 0.0
    %5289 = vmatpush.msra.mxu0 0.0
    %5290 = vmatpush.msra.mxu0 0.0
    %5291 = vmatpush.msra.mxu0 0.0
    %5292 = vmatpush.msra.mxu0 0.0
    %5293 = vmatpush.msra.mxu0 0.0
    %5294 = vmatpush.msra.mxu0 0.0
    %5295 = vmatpush.msra.mxu0 0.0
    %5296 = vmatpush.msra.mxu0 0.0
    %5297 = vmatpush.msra.mxu0 0.0
    %5298 = vmatpush.msra.mxu0 0.0
    %5299 = vmatpush.msra.mxu0 %v5208
    %5300 = vmatmul.f32.gmra.mxu0 %v5210
    %v5301 = vpop.f32.mrf.mxu0
    %v5302 = vadd.f32 0.0, %v5301
    %5303 = vmatmul.f32.gmra.mxu0 %v5213
    %v5304 = vpop.f32.mrf.mxu0
    %v5305 = vadd.f32 0.0, %v5304
    %5306 = vdwg.mxu0
    %v5307 = vmul.f32 %v4931, %v5233
    %v5308 = vmul.f32 %v4932, %v5236
    %v5309 = vmul.f32 %v4933, %v5256
    %v5310 = vmul.f32 %v4934, %v5259
    %v5311 = vadd.f32 %v5307, %v5279
    %v5312 = vadd.f32 %v5308, %v5282
    %v5313 = vadd.f32 %v5309, %v5302
    %v5314 = vadd.f32 %v5310, %v5305
    %v5315 = vadd.f32 %v5311, %v4303
    %v5316 = vadd.f32 %v5312, %v4304
    %v5317 = vadd.f32 %v5313, %v4305
    %v5318 = vadd.f32 %v5314, %v4306
    %v5319 = vld [vmem:[%s149] sm:$0x1]
    %v5320 = vld [vmem:[%s149 + $0x1] sm:$0x1]
    %v5321 = vld [vmem:[%s149 + $0x2] sm:$0x1]
    %v5322 = vld [vmem:[%s149 + $0x3] sm:$0x1]
    %v5323 = vld [vmem:[%s149 + $0x4] sm:$0x1]
    %v5324 = vld [vmem:[#allocation75] sm:$0x1]
    %v5325 = vld [vmem:[#allocation77] sm:$0x1]
    %v5326 = vld [vmem:[%s155] sm:$0x1]
    %v5327 = vld [vmem:[%s155 + $0x1] sm:$0x1]
    %v5328 = vld [vmem:[%s155 + $0x2] sm:$0x1]
    %v5329 = vld [vmem:[%s155 + $0x3] sm:$0x1]
    %v5330 = vld [vmem:[%s155 + $0x4] sm:$0x1]
    %v5331 = vld [vmem:[#allocation78] sm:$0x1]
    %v5332 = vld [vmem:[#allocation80] sm:$0x1]
    %v5333 = vld [vmem:[%s161] sm:$0x1]
    %v5334 = vld [vmem:[%s161 + $0x1] sm:$0x1]
    %v5335 = vld [vmem:[%s161 + $0x2] sm:$0x1]
    %v5336 = vld [vmem:[%s161 + $0x3] sm:$0x1]
    %v5337 = vld [vmem:[%s161 + $0x4] sm:$0x1]
    %v5338 = vld [vmem:[#allocation81] sm:$0x1]
    %v5339 = vld [vmem:[#allocation83] sm:$0x1]
    %v5340 = vld [vmem:[%s167] sm:$0xff]
    %v5341 = vld [vmem:[%s167 + $0x8] sm:$0xff]
    %v5342 = vld [vmem:[%s167 + $0x10] sm:$0xff]
    %v5343 = vld [vmem:[%s167 + $0x18] sm:$0xff]
    %5344 = vst.msk [vmem:[#allocation2 + $0x8] sm:$0xff] %vm1081, %v3715
    %5345 = vst.msk [vmem:[#allocation2 + $0x10] sm:$0xff] %vm1081, %v3716
    %5346 = vst.msk [vmem:[#allocation2 + $0x18] sm:$0xff] %vm1081, %v3717
    %5347 = vst.msk [vmem:[#allocation2 + $0x20] sm:$0xff] %vm1081, %v3718
    %5348 = vst.msk [vmem:[#allocation2 + $0x38] sm:$0xff] %vm1081, %v3719
    %5349 = vst.msk [vmem:[#allocation2 + $0x40] sm:$0xff] %vm1081, %v3720
    %5350 = vst.msk [vmem:[#allocation2 + $0x48] sm:$0xff] %vm1081, %v3721
    %5351 = vst.msk [vmem:[#allocation2 + $0x50] sm:$0xff] %vm1081, %v3722
    %5352 = vst.msk [vmem:[#allocation2 + $0x28] sm:$0xff] %vm1081, 0.0
    %5353 = vst.msk [vmem:[#allocation2 + $0x58] sm:$0xff] %vm1081, 0.0
    %v5354 = vld [vmem:[#allocation2 + $0x6] sm:$0xff]
    %v5355 = vld [vmem:[#allocation2 + $0xe] sm:$0xff]
    %v5356 = vld [vmem:[#allocation2 + $0x16] sm:$0xff]
    %v5357 = vld [vmem:[#allocation2 + $0x1e] sm:$0xff]
    %v5358 = vld [vmem:[#allocation2 + $0x36] sm:$0xff]
    %v5359 = vld [vmem:[#allocation2 + $0x3e] sm:$0xff]
    %v5360 = vld [vmem:[#allocation2 + $0x46] sm:$0xff]
    %v5361 = vld [vmem:[#allocation2 + $0x4e] sm:$0xff]
    %v5363 = vperm.slane %v5319, 0
    %v5365 = vmul.f32 %v5354, %v5363
    %v5366 = vmul.f32 %v5355, %v5363
    %v5367 = vmul.f32 %v5356, %v5363
    %v5368 = vmul.f32 %v5357, %v5363
    %v5369 = vmul.f32 %v5358, %v5363
    %v5370 = vmul.f32 %v5359, %v5363
    %v5371 = vmul.f32 %v5360, %v5363
    %v5372 = vmul.f32 %v5361, %v5363
    %v5373 = vld [vmem:[#allocation2 + $0x7] sm:$0xff]
    %v5374 = vld [vmem:[#allocation2 + $0xf] sm:$0xff]
    %v5375 = vld [vmem:[#allocation2 + $0x17] sm:$0xff]
    %v5376 = vld [vmem:[#allocation2 + $0x1f] sm:$0xff]
    %v5377 = vld [vmem:[#allocation2 + $0x37] sm:$0xff]
    %v5378 = vld [vmem:[#allocation2 + $0x3f] sm:$0xff]
    %v5379 = vld [vmem:[#allocation2 + $0x47] sm:$0xff]
    %v5380 = vld [vmem:[#allocation2 + $0x4f] sm:$0xff]
    %v5382 = vperm.slane %v5320, 0
    %v5384 = vmul.f32 %v5373, %v5382
    %v5385 = vmul.f32 %v5374, %v5382
    %v5386 = vmul.f32 %v5375, %v5382
    %v5387 = vmul.f32 %v5376, %v5382
    %v5388 = vmul.f32 %v5377, %v5382
    %v5389 = vmul.f32 %v5378, %v5382
    %v5390 = vmul.f32 %v5379, %v5382
    %v5391 = vmul.f32 %v5380, %v5382
    %v5392 = vadd.f32 %v5365, %v5384
    %v5393 = vadd.f32 %v5366, %v5385
    %v5394 = vadd.f32 %v5367, %v5386
    %v5395 = vadd.f32 %v5368, %v5387
    %v5396 = vadd.f32 %v5369, %v5388
    %v5397 = vadd.f32 %v5370, %v5389
    %v5398 = vadd.f32 %v5371, %v5390
    %v5399 = vadd.f32 %v5372, %v5391
    %v5400 = vld [vmem:[#allocation2 + $0x8] sm:$0xff]
    %v5401 = vld [vmem:[#allocation2 + $0x10] sm:$0xff]
    %v5402 = vld [vmem:[#allocation2 + $0x18] sm:$0xff]
    %v5403 = vld [vmem:[#allocation2 + $0x20] sm:$0xff]
    %v5404 = vld [vmem:[#allocation2 + $0x38] sm:$0xff]
    %v5405 = vld [vmem:[#allocation2 + $0x40] sm:$0xff]
    %v5406 = vld [vmem:[#allocation2 + $0x48] sm:$0xff]
    %v5407 = vld [vmem:[#allocation2 + $0x50] sm:$0xff]
    %v5409 = vperm.slane %v5321, 0
    %v5411 = vmul.f32 %v5400, %v5409
    %v5412 = vmul.f32 %v5401, %v5409
    %v5413 = vmul.f32 %v5402, %v5409
    %v5414 = vmul.f32 %v5403, %v5409
    %v5415 = vmul.f32 %v5404, %v5409
    %v5416 = vmul.f32 %v5405, %v5409
    %v5417 = vmul.f32 %v5406, %v5409
    %v5418 = vmul.f32 %v5407, %v5409
    %v5419 = vadd.f32 %v5392, %v5411
    %v5420 = vadd.f32 %v5393, %v5412
    %v5421 = vadd.f32 %v5394, %v5413
    %v5422 = vadd.f32 %v5395, %v5414
    %v5423 = vadd.f32 %v5396, %v5415
    %v5424 = vadd.f32 %v5397, %v5416
    %v5425 = vadd.f32 %v5398, %v5417
    %v5426 = vadd.f32 %v5399, %v5418
    %v5427 = vld [vmem:[#allocation2 + $0x9] sm:$0xff]
    %v5428 = vld [vmem:[#allocation2 + $0x11] sm:$0xff]
    %v5429 = vld [vmem:[#allocation2 + $0x19] sm:$0xff]
    %v5430 = vld [vmem:[#allocation2 + $0x21] sm:$0xff]
    %v5431 = vld [vmem:[#allocation2 + $0x39] sm:$0xff]
    %v5432 = vld [vmem:[#allocation2 + $0x41] sm:$0xff]
    %v5433 = vld [vmem:[#allocation2 + $0x49] sm:$0xff]
    %v5434 = vld [vmem:[#allocation2 + $0x51] sm:$0xff]
    %v5436 = vperm.slane %v5322, 0
    %v5438 = vmul.f32 %v5427, %v5436
    %v5439 = vmul.f32 %v5428, %v5436
    %v5440 = vmul.f32 %v5429, %v5436
    %v5441 = vmul.f32 %v5430, %v5436
    %v5442 = vmul.f32 %v5431, %v5436
    %v5443 = vmul.f32 %v5432, %v5436
    %v5444 = vmul.f32 %v5433, %v5436
    %v5445 = vmul.f32 %v5434, %v5436
    %v5446 = vadd.f32 %v5419, %v5438
    %v5447 = vadd.f32 %v5420, %v5439
    %v5448 = vadd.f32 %v5421, %v5440
    %v5449 = vadd.f32 %v5422, %v5441
    %v5450 = vadd.f32 %v5423, %v5442
    %v5451 = vadd.f32 %v5424, %v5443
    %v5452 = vadd.f32 %v5425, %v5444
    %v5453 = vadd.f32 %v5426, %v5445
    %v5454 = vld [vmem:[#allocation2 + $0xa] sm:$0xff]
    %v5455 = vld [vmem:[#allocation2 + $0x12] sm:$0xff]
    %v5456 = vld [vmem:[#allocation2 + $0x1a] sm:$0xff]
    %v5457 = vld [vmem:[#allocation2 + $0x22] sm:$0xff]
    %v5458 = vld [vmem:[#allocation2 + $0x3a] sm:$0xff]
    %v5459 = vld [vmem:[#allocation2 + $0x42] sm:$0xff]
    %v5460 = vld [vmem:[#allocation2 + $0x4a] sm:$0xff]
    %v5461 = vld [vmem:[#allocation2 + $0x52] sm:$0xff]
    %v5463 = vperm.slane %v5323, 0
    %v5465 = vmul.f32 %v5454, %v5463
    %v5466 = vmul.f32 %v5455, %v5463
    %v5467 = vmul.f32 %v5456, %v5463
    %v5468 = vmul.f32 %v5457, %v5463
    %v5469 = vmul.f32 %v5458, %v5463
    %v5470 = vmul.f32 %v5459, %v5463
    %v5471 = vmul.f32 %v5460, %v5463
    %v5472 = vmul.f32 %v5461, %v5463
    %v5473 = vadd.f32 %v5446, %v5465
    %v5474 = vadd.f32 %v5447, %v5466
    %v5475 = vadd.f32 %v5448, %v5467
    %v5476 = vadd.f32 %v5449, %v5468
    %v5477 = vadd.f32 %v5450, %v5469
    %v5478 = vadd.f32 %v5451, %v5470
    %v5479 = vadd.f32 %v5452, %v5471
    %v5480 = vadd.f32 %v5453, %v5472
    %v5481 = vsel %vm1081, %v5473, 0.0
    %5482 = vadd.xlane.f32.xlu0 %v5481
    %v5483 = vpop.xlane.xlu0 %5482
    %v5484 = vsel %vm1081, %v5474, 0.0
    %5485 = vadd.xlane.f32.xlu0 %v5484
    %v5486 = vpop.xlane.xlu0 %5485
    %v5487 = vsel %vm1081, %v5475, 0.0
    %5488 = vadd.xlane.f32.xlu0 %v5487
    %v5489 = vpop.xlane.xlu0 %5488
    %v5490 = vsel %vm1081, %v5476, 0.0
    %5491 = vadd.xlane.f32.xlu0 %v5490
    %v5492 = vpop.xlane.xlu0 %5491
    %v5493 = vsel %vm1081, %v5477, 0.0
    %5494 = vadd.xlane.f32.xlu0 %v5493
    %v5495 = vpop.xlane.xlu0 %5494
    %v5496 = vsel %vm1081, %v5478, 0.0
    %5497 = vadd.xlane.f32.xlu0 %v5496
    %v5498 = vpop.xlane.xlu0 %5497
    %v5499 = vsel %vm1081, %v5479, 0.0
    %5500 = vadd.xlane.f32.xlu0 %v5499
    %v5501 = vpop.xlane.xlu0 %5500
    %v5502 = vsel %vm1081, %v5480, 0.0
    %5503 = vadd.xlane.f32.xlu0 %v5502
    %v5504 = vpop.xlane.xlu0 %5503
    %v5505 = vadd.f32 %v5483, %v5486
    %v5506 = vadd.f32 %v5505, %v5489
    %v5507 = vadd.f32 %v5506, %v5492
    %v5508 = vrot.slane %v5507, 4
    %v5509 = vadd.f32 %v5507, %v5508
    %v5510 = vrot.slane %v5509, 2
    %v5511 = vadd.f32 %v5509, %v5510
    %v5512 = vrot.slane %v5511, 1
    %v5513 = vadd.f32 %v5511, %v5512
    %v5514 = vadd.f32 %v5495, %v5498
    %v5515 = vadd.f32 %v5514, %v5501
    %v5516 = vadd.f32 %v5515, %v5504
    %v5517 = vrot.slane %v5516, 4
    %v5518 = vadd.f32 %v5516, %v5517
    %v5519 = vrot.slane %v5518, 2
    %v5520 = vadd.f32 %v5518, %v5519
    %v5521 = vrot.slane %v5520, 1
    %v5522 = vadd.f32 %v5520, %v5521
    %v5523 = vmul.f32 %v5513, %v1332
    %v5524 = vmul.f32 %v5522, %v1332
    %v5525 = vsub.f32 %v5473, %v5523
    %v5526 = vsub.f32 %v5474, %v5523
    %v5527 = vsub.f32 %v5475, %v5523
    %v5528 = vsub.f32 %v5476, %v5523
    %v5529 = vsub.f32 %v5477, %v5524
    %v5530 = vsub.f32 %v5478, %v5524
    %v5531 = vsub.f32 %v5479, %v5524
    %v5532 = vsub.f32 %v5480, %v5524
    %v5533 = vmul.f32 %v5525, %v5525
    %v5534 = vmul.f32 %v5526, %v5526
    %v5535 = vmul.f32 %v5527, %v5527
    %v5536 = vmul.f32 %v5528, %v5528
    %v5537 = vmul.f32 %v5529, %v5529
    %v5538 = vmul.f32 %v5530, %v5530
    %v5539 = vmul.f32 %v5531, %v5531
    %v5540 = vmul.f32 %v5532, %v5532
    %v5541 = vsel %vm1081, %v5533, 0.0
    %5542 = vadd.xlane.f32.xlu0 %v5541
    %v5543 = vpop.xlane.xlu0 %5542
    %v5544 = vsel %vm1081, %v5534, 0.0
    %5545 = vadd.xlane.f32.xlu0 %v5544
    %v5546 = vpop.xlane.xlu0 %5545
    %v5547 = vsel %vm1081, %v5535, 0.0
    %5548 = vadd.xlane.f32.xlu0 %v5547
    %v5549 = vpop.xlane.xlu0 %5548
    %v5550 = vsel %vm1081, %v5536, 0.0
    %5551 = vadd.xlane.f32.xlu0 %v5550
    %v5552 = vpop.xlane.xlu0 %5551
    %v5553 = vsel %vm1081, %v5537, 0.0
    %5554 = vadd.xlane.f32.xlu0 %v5553
    %v5555 = vpop.xlane.xlu0 %5554
    %v5556 = vsel %vm1081, %v5538, 0.0
    %5557 = vadd.xlane.f32.xlu0 %v5556
    %v5558 = vpop.xlane.xlu0 %5557
    %v5559 = vsel %vm1081, %v5539, 0.0
    %5560 = vadd.xlane.f32.xlu0 %v5559
    %v5561 = vpop.xlane.xlu0 %5560
    %v5562 = vsel %vm1081, %v5540, 0.0
    %5563 = vadd.xlane.f32.xlu0 %v5562
    %v5564 = vpop.xlane.xlu0 %5563
    %v5565 = vadd.f32 %v5543, %v5546
    %v5566 = vadd.f32 %v5565, %v5549
    %v5567 = vadd.f32 %v5566, %v5552
    %v5568 = vrot.slane %v5567, 4
    %v5569 = vadd.f32 %v5567, %v5568
    %v5570 = vrot.slane %v5569, 2
    %v5571 = vadd.f32 %v5569, %v5570
    %v5572 = vrot.slane %v5571, 1
    %v5573 = vadd.f32 %v5571, %v5572
    %v5574 = vadd.f32 %v5555, %v5558
    %v5575 = vadd.f32 %v5574, %v5561
    %v5576 = vadd.f32 %v5575, %v5564
    %v5577 = vrot.slane %v5576, 4
    %v5578 = vadd.f32 %v5576, %v5577
    %v5579 = vrot.slane %v5578, 2
    %v5580 = vadd.f32 %v5578, %v5579
    %v5581 = vrot.slane %v5580, 1
    %v5582 = vadd.f32 %v5580, %v5581
    %v5583 = vmul.f32 %v5573, %v1332
    %v5584 = vmul.f32 %v5582, %v1332
    %v5585 = vadd.f32 %v5583, 1e-08
    %v5586 = vadd.f32 %v5584, 1e-08
    %v5587 = vrsqrt.pop %v5585
    %v5588 = vmul.f32 %v5587, %v5585
    %v5589 = vmul.f32 %v5588, %v5587
    %v5590 = vmul.f32 0.5, %v5589
    %v5591 = vsub.f32 1.5, %v5590
    %v5592 = vmul.f32 %v5587, %v5591
    %vm5593 = vweird.f32 %v5585
    %vm5594 = vweird.f32 %v5587
    %vm5595 = vmor %vm5593, %vm5594
    %v5596 = vsel %vm5595, %v5587, %v5592
    %v5597 = vrsqrt.pop %v5586
    %v5598 = vmul.f32 %v5597, %v5586
    %v5599 = vmul.f32 %v5598, %v5597
    %v5600 = vmul.f32 0.5, %v5599
    %v5601 = vsub.f32 1.5, %v5600
    %v5602 = vmul.f32 %v5597, %v5601
    %vm5603 = vweird.f32 %v5586
    %vm5604 = vweird.f32 %v5597
    %vm5605 = vmor %vm5603, %vm5604
    %v5606 = vsel %vm5605, %v5597, %v5602
    %v5607 = vmul.f32 %v5525, %v5596
    %v5608 = vmul.f32 %v5526, %v5596
    %v5609 = vmul.f32 %v5527, %v5596
    %v5610 = vmul.f32 %v5528, %v5596
    %v5611 = vmul.f32 %v5529, %v5606
    %v5612 = vmul.f32 %v5530, %v5606
    %v5613 = vmul.f32 %v5531, %v5606
    %v5614 = vmul.f32 %v5532, %v5606
    %v5616 = vperm.slane %v5324, 0
    %v5618 = vmul.f32 %v5607, %v5616
    %v5619 = vmul.f32 %v5608, %v5616
    %v5620 = vmul.f32 %v5609, %v5616
    %v5621 = vmul.f32 %v5610, %v5616
    %v5622 = vmul.f32 %v5611, %v5616
    %v5623 = vmul.f32 %v5612, %v5616
    %v5624 = vmul.f32 %v5613, %v5616
    %v5625 = vmul.f32 %v5614, %v5616
    %v5627 = vperm.slane %v5325, 0
    %v5629 = vadd.f32 %v5618, %v5627
    %v5630 = vadd.f32 %v5619, %v5627
    %v5631 = vadd.f32 %v5620, %v5627
    %v5632 = vadd.f32 %v5621, %v5627
    %v5633 = vadd.f32 %v5622, %v5627
    %v5634 = vadd.f32 %v5623, %v5627
    %v5635 = vadd.f32 %v5624, %v5627
    %v5636 = vadd.f32 %v5625, %v5627
    %5637 = vst.msk [vmem:[#allocation2 + $0x8] sm:$0xff] %vm1081, %v5315
    %5638 = vst.msk [vmem:[#allocation2 + $0x10] sm:$0xff] %vm1081, %v5316
    %5639 = vst.msk [vmem:[#allocation2 + $0x38] sm:$0xff] %vm1081, %v5317
    %5640 = vst.msk [vmem:[#allocation2 + $0x40] sm:$0xff] %vm1081, %v5318
    %5641 = vst.msk [vmem:[#allocation2 + $0x18] sm:$0xff] %vm1081, 0.0
    %5642 = vst.msk [vmem:[#allocation2 + $0x48] sm:$0xff] %vm1081, 0.0
    %v5643 = vld [vmem:[#allocation2 + $0x6] sm:$0xff]
    %v5644 = vld [vmem:[#allocation2 + $0xe] sm:$0xff]
    %v5645 = vld [vmem:[#allocation2 + $0x36] sm:$0xff]
    %v5646 = vld [vmem:[#allocation2 + $0x3e] sm:$0xff]
    %v5648 = vperm.slane %v5326, 0
    %v5650 = vmul.f32 %v5643, %v5648
    %v5651 = vmul.f32 %v5644, %v5648
    %v5652 = vmul.f32 %v5645, %v5648
    %v5653 = vmul.f32 %v5646, %v5648
    %v5654 = vld [vmem:[#allocation2 + $0x7] sm:$0xff]
    %v5655 = vld [vmem:[#allocation2 + $0xf] sm:$0xff]
    %v5656 = vld [vmem:[#allocation2 + $0x37] sm:$0xff]
    %v5657 = vld [vmem:[#allocation2 + $0x3f] sm:$0xff]
    %v5659 = vperm.slane %v5327, 0
    %v5661 = vmul.f32 %v5654, %v5659
    %v5662 = vmul.f32 %v5655, %v5659
    %v5663 = vmul.f32 %v5656, %v5659
    %v5664 = vmul.f32 %v5657, %v5659
    %v5665 = vadd.f32 %v5650, %v5661
    %v5666 = vadd.f32 %v5651, %v5662
    %v5667 = vadd.f32 %v5652, %v5663
    %v5668 = vadd.f32 %v5653, %v5664
    %v5669 = vld [vmem:[#allocation2 + $0x8] sm:$0xff]
    %v5670 = vld [vmem:[#allocation2 + $0x10] sm:$0xff]
    %v5671 = vld [vmem:[#allocation2 + $0x38] sm:$0xff]
    %v5672 = vld [vmem:[#allocation2 + $0x40] sm:$0xff]
    %v5674 = vperm.slane %v5328, 0
    %v5676 = vmul.f32 %v5669, %v5674
    %v5677 = vmul.f32 %v5670, %v5674
    %v5678 = vmul.f32 %v5671, %v5674
    %v5679 = vmul.f32 %v5672, %v5674
    %v5680 = vadd.f32 %v5665, %v5676
    %v5681 = vadd.f32 %v5666, %v5677
    %v5682 = vadd.f32 %v5667, %v5678
    %v5683 = vadd.f32 %v5668, %v5679
    %v5684 = vld [vmem:[#allocation2 + $0x9] sm:$0xff]
    %v5685 = vld [vmem:[#allocation2 + $0x11] sm:$0xff]
    %v5686 = vld [vmem:[#allocation2 + $0x39] sm:$0xff]
    %v5687 = vld [vmem:[#allocation2 + $0x41] sm:$0xff]
    %v5689 = vperm.slane %v5329, 0
    %v5691 = vmul.f32 %v5684, %v5689
    %v5692 = vmul.f32 %v5685, %v5689
    %v5693 = vmul.f32 %v5686, %v5689
    %v5694 = vmul.f32 %v5687, %v5689
    %v5695 = vadd.f32 %v5680, %v5691
    %v5696 = vadd.f32 %v5681, %v5692
    %v5697 = vadd.f32 %v5682, %v5693
    %v5698 = vadd.f32 %v5683, %v5694
    %v5699 = vld [vmem:[#allocation2 + $0xa] sm:$0xff]
    %v5700 = vld [vmem:[#allocation2 + $0x12] sm:$0xff]
    %v5701 = vld [vmem:[#allocation2 + $0x3a] sm:$0xff]
    %v5702 = vld [vmem:[#allocation2 + $0x42] sm:$0xff]
    %v5704 = vperm.slane %v5330, 0
    %v5706 = vmul.f32 %v5699, %v5704
    %v5707 = vmul.f32 %v5700, %v5704
    %v5708 = vmul.f32 %v5701, %v5704
    %v5709 = vmul.f32 %v5702, %v5704
    %v5710 = vadd.f32 %v5695, %v5706
    %v5711 = vadd.f32 %v5696, %v5707
    %v5712 = vadd.f32 %v5697, %v5708
    %v5713 = vadd.f32 %v5698, %v5709
    %v5714 = vsel %vm1081, %v5710, 0.0
    %5715 = vadd.xlane.f32.xlu0 %v5714
    %v5716 = vpop.xlane.xlu0 %5715
    %v5717 = vsel %vm1081, %v5711, 0.0
    %5718 = vadd.xlane.f32.xlu0 %v5717
    %v5719 = vpop.xlane.xlu0 %5718
    %v5720 = vsel %vm1081, %v5712, 0.0
    %5721 = vadd.xlane.f32.xlu0 %v5720
    %v5722 = vpop.xlane.xlu0 %5721
    %v5723 = vsel %vm1081, %v5713, 0.0
    %5724 = vadd.xlane.f32.xlu0 %v5723
    %v5725 = vpop.xlane.xlu0 %5724
    %v5726 = vadd.f32 %v5716, %v5719
    %v5727 = vrot.slane %v5726, 4
    %v5728 = vadd.f32 %v5726, %v5727
    %v5729 = vrot.slane %v5728, 2
    %v5730 = vadd.f32 %v5728, %v5729
    %v5731 = vrot.slane %v5730, 1
    %v5732 = vadd.f32 %v5730, %v5731
    %v5733 = vadd.f32 %v5722, %v5725
    %v5734 = vrot.slane %v5733, 4
    %v5735 = vadd.f32 %v5733, %v5734
    %v5736 = vrot.slane %v5735, 2
    %v5737 = vadd.f32 %v5735, %v5736
    %v5738 = vrot.slane %v5737, 1
    %v5739 = vadd.f32 %v5737, %v5738
    %v5740 = vmul.f32 %v5732, %v1716
    %v5741 = vmul.f32 %v5739, %v1716
    %v5742 = vsub.f32 %v5710, %v5740
    %v5743 = vsub.f32 %v5711, %v5740
    %v5744 = vsub.f32 %v5712, %v5741
    %v5745 = vsub.f32 %v5713, %v5741
    %v5746 = vmul.f32 %v5742, %v5742
    %v5747 = vmul.f32 %v5743, %v5743
    %v5748 = vmul.f32 %v5744, %v5744
    %v5749 = vmul.f32 %v5745, %v5745
    %v5750 = vsel %vm1081, %v5746, 0.0
    %5751 = vadd.xlane.f32.xlu0 %v5750
    %v5752 = vpop.xlane.xlu0 %5751
    %v5753 = vsel %vm1081, %v5747, 0.0
    %5754 = vadd.xlane.f32.xlu0 %v5753
    %v5755 = vpop.xlane.xlu0 %5754
    %v5756 = vsel %vm1081, %v5748, 0.0
    %5757 = vadd.xlane.f32.xlu0 %v5756
    %v5758 = vpop.xlane.xlu0 %5757
    %v5759 = vsel %vm1081, %v5749, 0.0
    %5760 = vadd.xlane.f32.xlu0 %v5759
    %v5761 = vpop.xlane.xlu0 %5760
    %v5762 = vadd.f32 %v5752, %v5755
    %v5763 = vrot.slane %v5762, 4
    %v5764 = vadd.f32 %v5762, %v5763
    %v5765 = vrot.slane %v5764, 2
    %v5766 = vadd.f32 %v5764, %v5765
    %v5767 = vrot.slane %v5766, 1
    %v5768 = vadd.f32 %v5766, %v5767
    %v5769 = vadd.f32 %v5758, %v5761
    %v5770 = vrot.slane %v5769, 4
    %v5771 = vadd.f32 %v5769, %v5770
    %v5772 = vrot.slane %v5771, 2
    %v5773 = vadd.f32 %v5771, %v5772
    %v5774 = vrot.slane %v5773, 1
    %v5775 = vadd.f32 %v5773, %v5774
    %v5776 = vmul.f32 %v5768, %v1716
    %v5777 = vmul.f32 %v5775, %v1716
    %v5778 = vadd.f32 %v5776, 1e-08
    %v5779 = vadd.f32 %v5777, 1e-08
    %v5780 = vrsqrt.pop %v5778
    %v5781 = vmul.f32 %v5780, %v5778
    %v5782 = vmul.f32 %v5781, %v5780
    %v5783 = vmul.f32 0.5, %v5782
    %v5784 = vsub.f32 1.5, %v5783
    %v5785 = vmul.f32 %v5780, %v5784
    %vm5786 = vweird.f32 %v5778
    %vm5787 = vweird.f32 %v5780
    %vm5788 = vmor %vm5786, %vm5787
    %v5789 = vsel %vm5788, %v5780, %v5785
    %v5790 = vrsqrt.pop %v5779
    %v5791 = vmul.f32 %v5790, %v5779
    %v5792 = vmul.f32 %v5791, %v5790
    %v5793 = vmul.f32 0.5, %v5792
    %v5794 = vsub.f32 1.5, %v5793
    %v5795 = vmul.f32 %v5790, %v5794
    %vm5796 = vweird.f32 %v5779
    %vm5797 = vweird.f32 %v5790
    %vm5798 = vmor %vm5796, %vm5797
    %v5799 = vsel %vm5798, %v5790, %v5795
    %v5800 = vmul.f32 %v5742, %v5789
    %v5801 = vmul.f32 %v5743, %v5789
    %v5802 = vmul.f32 %v5744, %v5799
    %v5803 = vmul.f32 %v5745, %v5799
    %v5805 = vperm.slane %v5331, 0
    %v5807 = vmul.f32 %v5800, %v5805
    %v5808 = vmul.f32 %v5801, %v5805
    %v5809 = vmul.f32 %v5802, %v5805
    %v5810 = vmul.f32 %v5803, %v5805
    %v5812 = vperm.slane %v5332, 0
    %v5814 = vadd.f32 %v5807, %v5812
    %v5815 = vadd.f32 %v5808, %v5812
    %v5816 = vadd.f32 %v5809, %v5812
    %v5817 = vadd.f32 %v5810, %v5812
    %v5818 = vxor.u32 %v5814, 2147483648
    %v5819 = vxor.u32 %v5815, 2147483648
    %v5820 = vxor.u32 %v5816, 2147483648
    %v5821 = vxor.u32 %v5817, 2147483648
    %v5822 = vmul.f32 %v5818, 1.442695
    %v5823 = vpow.pop %v5822
    %v5824 = vmul.f32 %v5819, 1.442695
    %v5825 = vpow.pop %v5824
    %v5826 = vmul.f32 %v5820, 1.442695
    %v5827 = vpow.pop %v5826
    %v5828 = vmul.f32 %v5821, 1.442695
    %v5829 = vpow.pop %v5828
    %v5830 = vadd.f32 %v5823, 1.0
    %v5831 = vadd.f32 %v5825, 1.0
    %v5832 = vadd.f32 %v5827, 1.0
    %v5833 = vadd.f32 %v5829, 1.0
    %v5834 = vrcp.pop %v5830
    %v5835 = vmul.f32 %v5830, %v5834
    %v5836 = vsub.f32 1.0, %v5835
    %v5837 = vmul.f32 %v5834, %v5836
    %v5838 = vadd.f32 %v5834, %v5837
    %vm5839 = vweird.f32 %v5830
    %vm5840 = vweird.f32 %v5834
    %vm5841 = vmor %vm5839, %vm5840
    %v5842 = vsel %vm5841, %v5834, %v5838
    %v5843 = vand.u32 2147483647, %v5830
    %vm5844 = vcmp.eq.f32.partialorder %v5843, 8.507059e+37
    %v5845 = vand.u32 %v5830, 2147483648
    %v5846 = vor.u32 1.1754944e-38, %v5845
    %v5847 = vsel %vm5844, %v5846, %v5842
    %v5848 = vmul.f32 1.0, %v5847
    %v5849 = vrcp.pop %v5831
    %v5850 = vmul.f32 %v5831, %v5849
    %v5851 = vsub.f32 1.0, %v5850
    %v5852 = vmul.f32 %v5849, %v5851
    %v5853 = vadd.f32 %v5849, %v5852
    %vm5854 = vweird.f32 %v5831
    %vm5855 = vweird.f32 %v5849
    %vm5856 = vmor %vm5854, %vm5855
    %v5857 = vsel %vm5856, %v5849, %v5853
    %v5858 = vand.u32 2147483647, %v5831
    %vm5859 = vcmp.eq.f32.partialorder %v5858, 8.507059e+37
    %v5860 = vand.u32 %v5831, 2147483648
    %v5861 = vor.u32 1.1754944e-38, %v5860
    %v5862 = vsel %vm5859, %v5861, %v5857
    %v5863 = vmul.f32 1.0, %v5862
    %v5864 = vrcp.pop %v5832
    %v5865 = vmul.f32 %v5832, %v5864
    %v5866 = vsub.f32 1.0, %v5865
    %v5867 = vmul.f32 %v5864, %v5866
    %v5868 = vadd.f32 %v5864, %v5867
    %vm5869 = vweird.f32 %v5832
    %vm5870 = vweird.f32 %v5864
    %vm5871 = vmor %vm5869, %vm5870
    %v5872 = vsel %vm5871, %v5864, %v5868
    %v5873 = vand.u32 2147483647, %v5832
    %vm5874 = vcmp.eq.f32.partialorder %v5873, 8.507059e+37
    %v5875 = vand.u32 %v5832, 2147483648
    %v5876 = vor.u32 1.1754944e-38, %v5875
    %v5877 = vsel %vm5874, %v5876, %v5872
    %v5878 = vmul.f32 1.0, %v5877
    %v5879 = vrcp.pop %v5833
    %v5880 = vmul.f32 %v5833, %v5879
    %v5881 = vsub.f32 1.0, %v5880
    %v5882 = vmul.f32 %v5879, %v5881
    %v5883 = vadd.f32 %v5879, %v5882
    %vm5884 = vweird.f32 %v5833
    %vm5885 = vweird.f32 %v5879
    %vm5886 = vmor %vm5884, %vm5885
    %v5887 = vsel %vm5886, %v5879, %v5883
    %v5888 = vand.u32 2147483647, %v5833
    %vm5889 = vcmp.eq.f32.partialorder %v5888, 8.507059e+37
    %v5890 = vand.u32 %v5833, 2147483648
    %v5891 = vor.u32 1.1754944e-38, %v5890
    %v5892 = vsel %vm5889, %v5891, %v5887
    %v5893 = vmul.f32 1.0, %v5892
    %v5895 = vperm.slane %v5333, 0
    %v5897 = vmul.f32 %v5643, %v5895
    %v5898 = vmul.f32 %v5644, %v5895
    %v5899 = vmul.f32 %v5645, %v5895
    %v5900 = vmul.f32 %v5646, %v5895
    %v5902 = vperm.slane %v5334, 0
    %v5904 = vmul.f32 %v5654, %v5902
    %v5905 = vmul.f32 %v5655, %v5902
    %v5906 = vmul.f32 %v5656, %v5902
    %v5907 = vmul.f32 %v5657, %v5902
    %v5908 = vadd.f32 %v5897, %v5904
    %v5909 = vadd.f32 %v5898, %v5905
    %v5910 = vadd.f32 %v5899, %v5906
    %v5911 = vadd.f32 %v5900, %v5907
    %v5913 = vperm.slane %v5335, 0
    %v5915 = vmul.f32 %v5669, %v5913
    %v5916 = vmul.f32 %v5670, %v5913
    %v5917 = vmul.f32 %v5671, %v5913
    %v5918 = vmul.f32 %v5672, %v5913
    %v5919 = vadd.f32 %v5908, %v5915
    %v5920 = vadd.f32 %v5909, %v5916
    %v5921 = vadd.f32 %v5910, %v5917
    %v5922 = vadd.f32 %v5911, %v5918
    %v5924 = vperm.slane %v5336, 0
    %v5926 = vmul.f32 %v5684, %v5924
    %v5927 = vmul.f32 %v5685, %v5924
    %v5928 = vmul.f32 %v5686, %v5924
    %v5929 = vmul.f32 %v5687, %v5924
    %v5930 = vadd.f32 %v5919, %v5926
    %v5931 = vadd.f32 %v5920, %v5927
    %v5932 = vadd.f32 %v5921, %v5928
    %v5933 = vadd.f32 %v5922, %v5929
    %v5935 = vperm.slane %v5337, 0
    %v5937 = vmul.f32 %v5699, %v5935
    %v5938 = vmul.f32 %v5700, %v5935
    %v5939 = vmul.f32 %v5701, %v5935
    %v5940 = vmul.f32 %v5702, %v5935
    %v5941 = vadd.f32 %v5930, %v5937
    %v5942 = vadd.f32 %v5931, %v5938
    %v5943 = vadd.f32 %v5932, %v5939
    %v5944 = vadd.f32 %v5933, %v5940
    %v5945 = vsel %vm1081, %v5941, 0.0
    %5946 = vadd.xlane.f32.xlu0 %v5945
    %v5947 = vpop.xlane.xlu0 %5946
    %v5948 = vsel %vm1081, %v5942, 0.0
    %5949 = vadd.xlane.f32.xlu0 %v5948
    %v5950 = vpop.xlane.xlu0 %5949
    %v5951 = vsel %vm1081, %v5943, 0.0
    %5952 = vadd.xlane.f32.xlu0 %v5951
    %v5953 = vpop.xlane.xlu0 %5952
    %v5954 = vsel %vm1081, %v5944, 0.0
    %5955 = vadd.xlane.f32.xlu0 %v5954
    %v5956 = vpop.xlane.xlu0 %5955
    %v5957 = vadd.f32 %v5947, %v5950
    %v5958 = vrot.slane %v5957, 4
    %v5959 = vadd.f32 %v5957, %v5958
    %v5960 = vrot.slane %v5959, 2
    %v5961 = vadd.f32 %v5959, %v5960
    %v5962 = vrot.slane %v5961, 1
    %v5963 = vadd.f32 %v5961, %v5962
    %v5964 = vadd.f32 %v5953, %v5956
    %v5965 = vrot.slane %v5964, 4
    %v5966 = vadd.f32 %v5964, %v5965
    %v5967 = vrot.slane %v5966, 2
    %v5968 = vadd.f32 %v5966, %v5967
    %v5969 = vrot.slane %v5968, 1
    %v5970 = vadd.f32 %v5968, %v5969
    %v5971 = vmul.f32 %v5963, %v1716
    %v5972 = vmul.f32 %v5970, %v1716
    %v5973 = vsub.f32 %v5941, %v5971
    %v5974 = vsub.f32 %v5942, %v5971
    %v5975 = vsub.f32 %v5943, %v5972
    %v5976 = vsub.f32 %v5944, %v5972
    %v5977 = vmul.f32 %v5973, %v5973
    %v5978 = vmul.f32 %v5974, %v5974
    %v5979 = vmul.f32 %v5975, %v5975
    %v5980 = vmul.f32 %v5976, %v5976
    %v5981 = vsel %vm1081, %v5977, 0.0
    %5982 = vadd.xlane.f32.xlu0 %v5981
    %v5983 = vpop.xlane.xlu0 %5982
    %v5984 = vsel %vm1081, %v5978, 0.0
    %5985 = vadd.xlane.f32.xlu0 %v5984
    %v5986 = vpop.xlane.xlu0 %5985
    %v5987 = vsel %vm1081, %v5979, 0.0
    %5988 = vadd.xlane.f32.xlu0 %v5987
    %v5989 = vpop.xlane.xlu0 %5988
    %v5990 = vsel %vm1081, %v5980, 0.0
    %5991 = vadd.xlane.f32.xlu0 %v5990
    %v5992 = vpop.xlane.xlu0 %5991
    %v5993 = vadd.f32 %v5983, %v5986
    %v5994 = vrot.slane %v5993, 4
    %v5995 = vadd.f32 %v5993, %v5994
    %v5996 = vrot.slane %v5995, 2
    %v5997 = vadd.f32 %v5995, %v5996
    %v5998 = vrot.slane %v5997, 1
    %v5999 = vadd.f32 %v5997, %v5998
    %v6000 = vadd.f32 %v5989, %v5992
    %v6001 = vrot.slane %v6000, 4
    %v6002 = vadd.f32 %v6000, %v6001
    %v6003 = vrot.slane %v6002, 2
    %v6004 = vadd.f32 %v6002, %v6003
    %v6005 = vrot.slane %v6004, 1
    %v6006 = vadd.f32 %v6004, %v6005
    %v6007 = vmul.f32 %v5999, %v1716
    %v6008 = vmul.f32 %v6006, %v1716
    %v6009 = vadd.f32 %v6007, 1e-08
    %v6010 = vadd.f32 %v6008, 1e-08
    %v6011 = vrsqrt.pop %v6009
    %v6012 = vmul.f32 %v6011, %v6009
    %v6013 = vmul.f32 %v6012, %v6011
    %v6014 = vmul.f32 0.5, %v6013
    %v6015 = vsub.f32 1.5, %v6014
    %v6016 = vmul.f32 %v6011, %v6015
    %vm6017 = vweird.f32 %v6009
    %vm6018 = vweird.f32 %v6011
    %vm6019 = vmor %vm6017, %vm6018
    %v6020 = vsel %vm6019, %v6011, %v6016
    %v6021 = vrsqrt.pop %v6010
    %v6022 = vmul.f32 %v6021, %v6010
    %v6023 = vmul.f32 %v6022, %v6021
    %v6024 = vmul.f32 0.5, %v6023
    %v6025 = vsub.f32 1.5, %v6024
    %v6026 = vmul.f32 %v6021, %v6025
    %vm6027 = vweird.f32 %v6010
    %vm6028 = vweird.f32 %v6021
    %vm6029 = vmor %vm6027, %vm6028
    %v6030 = vsel %vm6029, %v6021, %v6026
    %v6031 = vmul.f32 %v5973, %v6020
    %v6032 = vmul.f32 %v5974, %v6020
    %v6033 = vmul.f32 %v5975, %v6030
    %v6034 = vmul.f32 %v5976, %v6030
    %v6036 = vperm.slane %v5338, 0
    %v6038 = vmul.f32 %v6031, %v6036
    %v6039 = vmul.f32 %v6032, %v6036
    %v6040 = vmul.f32 %v6033, %v6036
    %v6041 = vmul.f32 %v6034, %v6036
    %v6043 = vperm.slane %v5339, 0
    %v6045 = vadd.f32 %v6038, %v6043
    %v6046 = vadd.f32 %v6039, %v6043
    %v6047 = vadd.f32 %v6040, %v6043
    %v6048 = vadd.f32 %v6041, %v6043
    %v6050 = vsel %vm1888, %v5340, 0
    %v6053 = vsel %vm1888, %v5341, 0
    %v6056 = vsel %vm1888, %v5342, 0
    %v6059 = vsel %vm1888, %v5343, 0
    %6061 = vmatpush.msra.mxu0 0.0
    %6062 = vmatpush.msra.mxu0 0.0
    %6063 = vmatpush.msra.mxu0 0.0
    %6064 = vmatpush.msra.mxu0 0.0
    %6065 = vmatpush.msra.mxu0 0.0
    %6066 = vmatpush.msra.mxu0 0.0
    %6067 = vmatpush.msra.mxu0 0.0
    %6068 = vmatpush.msra.mxu0 0.0
    %6069 = vmatpush.msra.mxu0 0.0
    %6070 = vmatpush.msra.mxu0 0.0
    %6071 = vmatpush.msra.mxu0 0.0
    %6072 = vmatpush.msra.mxu0 0.0
    %6073 = vmatpush.msra.mxu0 0.0
    %6074 = vmatpush.msra.mxu0 0.0
    %6075 = vmatpush.msra.mxu0 %v5863
    %6076 = vmatpush.msra.mxu0 %v5848
    %6077 = vmatmul.f32.gmra.mxu0 %v6050
    %v6078 = vpop.f32.mrf.mxu0
    %v6079 = vadd.f32 0.0, %v6078
    %6080 = vmatmul.f32.gmra.mxu0 %v6053
    %v6081 = vpop.f32.mrf.mxu0
    %v6082 = vadd.f32 0.0, %v6081
    %6083 = vmatmul.f32.gmra.mxu0 %v6056
    %v6084 = vpop.f32.mrf.mxu0
    %v6085 = vadd.f32 0.0, %v6084
    %6086 = vmatmul.f32.gmra.mxu0 %v6059
    %v6087 = vpop.f32.mrf.mxu0
    %v6088 = vadd.f32 0.0, %v6087
    %6089 = vdwg.mxu0
    %6090 = vmatpush.msra.mxu0 0.0
    %6091 = vmatpush.msra.mxu0 0.0
    %6092 = vmatpush.msra.mxu0 0.0
    %6093 = vmatpush.msra.mxu0 0.0
    %6094 = vmatpush.msra.mxu0 0.0
    %6095 = vmatpush.msra.mxu0 0.0
    %6096 = vmatpush.msra.mxu0 0.0
    %6097 = vmatpush.msra.mxu0 0.0
    %6098 = vmatpush.msra.mxu0 0.0
    %6099 = vmatpush.msra.mxu0 0.0
    %6100 = vmatpush.msra.mxu0 0.0
    %6101 = vmatpush.msra.mxu0 0.0
    %6102 = vmatpush.msra.mxu0 0.0
    %6103 = vmatpush.msra.mxu0 0.0
    %6104 = vmatpush.msra.mxu0 %v5893
    %6105 = vmatpush.msra.mxu0 %v5878
    %6106 = vmatmul.f32.gmra.mxu0 %v6050
    %v6107 = vpop.f32.mrf.mxu0
    %v6108 = vadd.f32 0.0, %v6107
    %6109 = vmatmul.f32.gmra.mxu0 %v6053
    %v6110 = vpop.f32.mrf.mxu0
    %v6111 = vadd.f32 0.0, %v6110
    %6112 = vmatmul.f32.gmra.mxu0 %v6056
    %v6113 = vpop.f32.mrf.mxu0
    %v6114 = vadd.f32 0.0, %v6113
    %6115 = vmatmul.f32.gmra.mxu0 %v6059
    %v6116 = vpop.f32.mrf.mxu0
    %v6117 = vadd.f32 0.0, %v6116
    %6118 = vdwg.mxu0
    %6119 = vmatpush.msra.mxu0 0.0
    %6120 = vmatpush.msra.mxu0 0.0
    %6121 = vmatpush.msra.mxu0 0.0
    %6122 = vmatpush.msra.mxu0 0.0
    %6123 = vmatpush.msra.mxu0 0.0
    %6124 = vmatpush.msra.mxu0 0.0
    %6125 = vmatpush.msra.mxu0 0.0
    %6126 = vmatpush.msra.mxu0 0.0
    %6127 = vmatpush.msra.mxu0 0.0
    %6128 = vmatpush.msra.mxu0 0.0
    %6129 = vmatpush.msra.mxu0 0.0
    %6130 = vmatpush.msra.mxu0 0.0
    %6131 = vmatpush.msra.mxu0 0.0
    %6132 = vmatpush.msra.mxu0 0.0
    %6133 = vmatpush.msra.mxu0 %v6046
    %6134 = vmatpush.msra.mxu0 %v6045
    %6135 = vmatmul.f32.gmra.mxu0 %v6050
    %v6136 = vpop.f32.mrf.mxu0
    %v6137 = vadd.f32 0.0, %v6136
    %6138 = vmatmul.f32.gmra.mxu0 %v6053
    %v6139 = vpop.f32.mrf.mxu0
    %v6140 = vadd.f32 0.0, %v6139
    %6141 = vmatmul.f32.gmra.mxu0 %v6056
    %v6142 = vpop.f32.mrf.mxu0
    %v6143 = vadd.f32 0.0, %v6142
    %6144 = vmatmul.f32.gmra.mxu0 %v6059
    %v6145 = vpop.f32.mrf.mxu0
    %v6146 = vadd.f32 0.0, %v6145
    %6147 = vdwg.mxu0
    %6148 = vmatpush.msra.mxu0 0.0
    %6149 = vmatpush.msra.mxu0 0.0
    %6150 = vmatpush.msra.mxu0 0.0
    %6151 = vmatpush.msra.mxu0 0.0
    %6152 = vmatpush.msra.mxu0 0.0
    %6153 = vmatpush.msra.mxu0 0.0
    %6154 = vmatpush.msra.mxu0 0.0
    %6155 = vmatpush.msra.mxu0 0.0
    %6156 = vmatpush.msra.mxu0 0.0
    %6157 = vmatpush.msra.mxu0 0.0
    %6158 = vmatpush.msra.mxu0 0.0
    %6159 = vmatpush.msra.mxu0 0.0
    %6160 = vmatpush.msra.mxu0 0.0
    %6161 = vmatpush.msra.mxu0 0.0
    %6162 = vmatpush.msra.mxu0 %v6048
    %6163 = vmatpush.msra.mxu0 %v6047
    %6164 = vmatmul.f32.gmra.mxu0 %v6050
    %v6165 = vpop.f32.mrf.mxu0
    %v6166 = vadd.f32 0.0, %v6165
    %6167 = vmatmul.f32.gmra.mxu0 %v6053
    %v6168 = vpop.f32.mrf.mxu0
    %v6169 = vadd.f32 0.0, %v6168
    %6170 = vmatmul.f32.gmra.mxu0 %v6056
    %v6171 = vpop.f32.mrf.mxu0
    %v6172 = vadd.f32 0.0, %v6171
    %6173 = vmatmul.f32.gmra.mxu0 %v6059
    %v6174 = vpop.f32.mrf.mxu0
    %v6175 = vadd.f32 0.0, %v6174
    %6176 = vdwg.mxu0
    %v6177 = vmul.f32 %v5629, %v6079
    %v6178 = vmul.f32 %v5630, %v6082
    %v6179 = vmul.f32 %v5631, %v6085
    %v6180 = vmul.f32 %v5632, %v6088
    %v6181 = vmul.f32 %v5633, %v6108
    %v6182 = vmul.f32 %v5634, %v6111
    %v6183 = vmul.f32 %v5635, %v6114
    %v6184 = vmul.f32 %v5636, %v6117
    %v6185 = vadd.f32 %v6177, %v6137
    %v6186 = vadd.f32 %v6178, %v6140
    %v6187 = vadd.f32 %v6179, %v6143
    %v6188 = vadd.f32 %v6180, %v6146
    %v6189 = vadd.f32 %v6181, %v6166
    %v6190 = vadd.f32 %v6182, %v6169
    %v6191 = vadd.f32 %v6183, %v6172
    %v6192 = vadd.f32 %v6184, %v6175
    %v6193 = vadd.f32 %v6185, %v3715
    %v6194 = vadd.f32 %v6186, %v3716
    %v6195 = vadd.f32 %v6187, %v3717
    %v6196 = vadd.f32 %v6188, %v3718
    %v6197 = vadd.f32 %v6189, %v3719
    %v6198 = vadd.f32 %v6190, %v3720
    %v6199 = vadd.f32 %v6191, %v3721
    %v6200 = vadd.f32 %v6192, %v3722
    %v6201 = vld [vmem:[%s169] sm:$0xff]
    %v6202 = vld [vmem:[%s169 + $0x8] sm:$0xff]
    %v6203 = vld [vmem:[%s169 + $0x10] sm:$0xff]
    %v6204 = vld [vmem:[%s169 + $0x18] sm:$0xff]
    %v6205 = vld [vmem:[#allocation84] sm:$0x1]
    %v6207 = vperm.slane %v6205, 0
    %v6210 = vsel %vm1081, %v6193, 0
    %v6213 = vsel %vm1081, %v6194, 0
    %v6216 = vsel %vm1081, %v6195, 0
    %v6219 = vsel %vm1081, %v6196, 0
    %v6222 = vsel %vm1081, %v6197, 0
    %v6225 = vsel %vm1081, %v6198, 0
    %v6228 = vsel %vm1081, %v6199, 0
    %v6231 = vsel %vm1081, %v6200, 0
    %6233 = vmatpush.msra.mxu0 0.0
    %6234 = vmatpush.msra.mxu0 0.0
    %6235 = vmatpush.msra.mxu0 0.0
    %6236 = vmatpush.msra.mxu0 0.0
    %6237 = vmatpush.msra.mxu0 0.0
    %6238 = vmatpush.msra.mxu0 0.0
    %6239 = vmatpush.msra.mxu0 0.0
    %6240 = vmatpush.msra.mxu0 0.0
    %6241 = vmatpush.msra.mxu0 0.0
    %6242 = vmatpush.msra.mxu0 0.0
    %6243 = vmatpush.msra.mxu0 0.0
    %6244 = vmatpush.msra.mxu0 0.0
    %6245 = vmatpush.msra.mxu0 %v6204
    %6246 = vmatpush.msra.mxu0 %v6203
    %6247 = vmatpush.msra.mxu0 %v6202
    %6248 = vmatpush.msra.mxu0 %v6201
    %6249 = vmatmul.f32.gmra.mxu0 %v6210
    %v6250 = vpop.f32.mrf.mxu0
    %v6251 = vadd.f32 %v6207, %v6250
    %6252 = vmatmul.f32.gmra.mxu0 %v6213
    %v6253 = vpop.f32.mrf.mxu0
    %v6254 = vadd.f32 %v6207, %v6253
    %6255 = vmatmul.f32.gmra.mxu0 %v6216
    %v6256 = vpop.f32.mrf.mxu0
    %v6257 = vadd.f32 %v6207, %v6256
    %6258 = vmatmul.f32.gmra.mxu0 %v6219
    %v6259 = vpop.f32.mrf.mxu0
    %v6260 = vadd.f32 %v6207, %v6259
    %6261 = vmatmul.f32.gmra.mxu0 %v6222
    %v6262 = vpop.f32.mrf.mxu0
    %v6263 = vadd.f32 %v6207, %v6262
    %6264 = vmatmul.f32.gmra.mxu0 %v6225
    %v6265 = vpop.f32.mrf.mxu0
    %v6266 = vadd.f32 %v6207, %v6265
    %6267 = vmatmul.f32.gmra.mxu0 %v6228
    %v6268 = vpop.f32.mrf.mxu0
    %v6269 = vadd.f32 %v6207, %v6268
    %6270 = vmatmul.f32.gmra.mxu0 %v6231
    %v6271 = vpop.f32.mrf.mxu0
    %v6272 = vadd.f32 %v6207, %v6271
    %6273 = vdwg.mxu0
    %v6274 = vadd.f32 %v6251, %v1200
    %v6275 = vadd.f32 %v6254, %v1201
    %v6276 = vadd.f32 %v6257, %v1202
    %v6277 = vadd.f32 %v6260, %v1203
    %v6278 = vadd.f32 %v6263, %v1204
    %v6279 = vadd.f32 %v6266, %v1205
    %v6280 = vadd.f32 %v6269, %v1206
    %v6281 = vadd.f32 %v6272, %v1207
    %6282 = vxpose.xlu0.b32.start [1/16] %v6274, 128
    %6283 = vxpose.xlu0.b32.cont [2/16] %v6275, 128
    %6284 = vxpose.xlu0.b32.cont [3/16] %v6276, 128
    %6285 = vxpose.xlu0.b32.cont [4/16] %v6277, 128
    %6286 = vxpose.xlu0.b32.cont [5/16] 0.0, 128
    %6287 = vxpose.xlu0.b32.cont [6/16] 0.0, 128
    %6288 = vxpose.xlu0.b32.cont [7/16] 0.0, 128
    %6289 = vxpose.xlu0.b32.cont [8/16] 0.0, 128
    %6290 = vxpose.xlu0.b32.cont [9/16] 0.0, 128
    %6291 = vxpose.xlu0.b32.cont [10/16] 0.0, 128
    %6292 = vxpose.xlu0.b32.cont [11/16] 0.0, 128
    %6293 = vxpose.xlu0.b32.cont [12/16] 0.0, 128
    %6294 = vxpose.xlu0.b32.cont [13/16] 0.0, 128
    %6295 = vxpose.xlu0.b32.cont [14/16] 0.0, 128
    %6296 = vxpose.xlu0.b32.cont [15/16] 0.0, 128
    %6297 = vxpose.xlu0.b32.end [16/16] 0.0, 128
    %v6298 = vpop.trf.xlu0
    %v6299 = vpop.trf.xlu0
    %v6300 = vpop.trf.xlu0
    %v6301 = vpop.trf.xlu0
    %v6302 = vpop.trf.xlu0
    %v6303 = vpop.trf.xlu0
    %v6304 = vpop.trf.xlu0
    %v6305 = vpop.trf.xlu0
    %v6306 = vpop.trf.xlu0
    %v6307 = vpop.trf.xlu0
    %v6308 = vpop.trf.xlu0
    %v6309 = vpop.trf.xlu0
    %v6310 = vpop.trf.xlu0
    %v6311 = vpop.trf.xlu0
    %v6312 = vpop.trf.xlu0
    %v6313 = vpop.trf.xlu0
    %6314 = vxpose.xlu0.b32.start [1/16] %v6278, 128
    %6315 = vxpose.xlu0.b32.cont [2/16] %v6279, 128
    %6316 = vxpose.xlu0.b32.cont [3/16] %v6280, 128
    %6317 = vxpose.xlu0.b32.cont [4/16] %v6281, 128
    %6318 = vxpose.xlu0.b32.cont [5/16] 0.0, 128
    %6319 = vxpose.xlu0.b32.cont [6/16] 0.0, 128
    %6320 = vxpose.xlu0.b32.cont [7/16] 0.0, 128
    %6321 = vxpose.xlu0.b32.cont [8/16] 0.0, 128
    %6322 = vxpose.xlu0.b32.cont [9/16] 0.0, 128
    %6323 = vxpose.xlu0.b32.cont [10/16] 0.0, 128
    %6324 = vxpose.xlu0.b32.cont [11/16] 0.0, 128
    %6325 = vxpose.xlu0.b32.cont [12/16] 0.0, 128
    %6326 = vxpose.xlu0.b32.cont [13/16] 0.0, 128
    %6327 = vxpose.xlu0.b32.cont [14/16] 0.0, 128
    %6328 = vxpose.xlu0.b32.cont [15/16] 0.0, 128
    %6329 = vxpose.xlu0.b32.end [16/16] 0.0, 128
    %v6330 = vpop.trf.xlu0
    %v6331 = vpop.trf.xlu0
    %v6332 = vpop.trf.xlu0
    %v6333 = vpop.trf.xlu0
    %v6334 = vpop.trf.xlu0
    %v6335 = vpop.trf.xlu0
    %v6336 = vpop.trf.xlu0
    %v6337 = vpop.trf.xlu0
    %v6338 = vpop.trf.xlu0
    %v6339 = vpop.trf.xlu0
    %v6340 = vpop.trf.xlu0
    %v6341 = vpop.trf.xlu0
    %v6342 = vpop.trf.xlu0
    %v6343 = vpop.trf.xlu0
    %v6344 = vpop.trf.xlu0
    %v6345 = vpop.trf.xlu0
    %6346 = vst.msk [vmem:[#allocation86] sm:$0xff] %vm1081, %v6298
    %6347 = vst.msk [vmem:[#allocation86 + $0x8] sm:$0xff] %vm1081, %v6299
    %6348 = vst.msk [vmem:[#allocation86 + $0x10] sm:$0xff] %vm1081, %v6300
    %6349 = vst.msk [vmem:[#allocation86 + $0x18] sm:$0xff] %vm1081, %v6301
    %6350 = vst.msk [vmem:[#allocation86 + $0x20] sm:$0xff] %vm1081, %v6330
    %6351 = vst.msk [vmem:[#allocation86 + $0x28] sm:$0xff] %vm1081, %v6331
    %6352 = vst.msk [vmem:[#allocation86 + $0x30] sm:$0xff] %vm1081, %v6332
    %6353 = vst.msk [vmem:[#allocation86 + $0x38] sm:$0xff] %vm1081, %v6333
    // Predicated region
    $region562: #{tdf_block_forward.1} parent=1 // pred_check
      _
    $region563: #{tdf_block_forward.1} parent=1 // pred_check_branch
      %6355 = sbr.rel (0) target = $region565
    $region564: #{tdf_block_forward.1} parent=1 // pred_region
      %6357 = vsyncadd [#allocation5], 0
      %s6358 = sshll.u32 [#allocation86], 4
      %s6359 = int_to_ptr.vmem [resolvable:$true] %s6358
      %s6360 = sshll.u32 %s173, 4
      %s6361 = int_to_ptr.hbm [resolvable:$true] %s6360
      %6366 = dma.vmem_to_hbm [thread:$0]  %s6359, 1024, %s6361, [#allocation5], 128, 128, 8
    $region565: #{tdf_block_forward.1} parent=1 // pred_fallthru
      _
    // Predicated region
    $region566: #{tdf_block_forward.1} parent=1 // pred_check
      _
    $region567: #{tdf_block_forward.1} parent=1 // pred_check_branch
      %6368 = sbr.rel (0) target = $region569
    $region568: #{tdf_block_forward.1} parent=1 // pred_region
      %6370 = dma.done [#allocation5], 1024
    $region569: #{tdf_block_forward.1} parent=1 // pred_fallthru
      _
    %6371 = vsyncpa [#allocation4], 1
    %6372 = vsyncpa [#allocation7], 1
    %6373 = vsyncpa [#allocation10], 1
    %6374 = vsyncpa [#allocation13], 1
    %6375 = vsyncpa [#allocation16], 1
    %6376 = vsyncpa [#allocation19], 1
    %6377 = vsyncpa [#allocation22], 1
    %6378 = vsyncpa [#allocation25], 1
    %6379 = vsyncpa [#allocation28], 1
    %6380 = vsyncpa [#allocation31], 1
    %6381 = vsyncpa [#allocation34], 1
    %6382 = vsyncpa [#allocation37], 1
    %6383 = vsyncpa [#allocation40], 1
    %6384 = vsyncpa [#allocation43], 1
    %6385 = vsyncpa [#allocation46], 1
    %6386 = vsyncpa [#allocation49], 1
    %6387 = vsyncpa [#allocation52], 1
    %6388 = vsyncpa [#allocation55], 1
    %6389 = vsyncpa [#allocation58], 1
    %6390 = vsyncpa [#allocation61], 1
    %6391 = vsyncpa [#allocation64], 1
    %6392 = vsyncpa [#allocation67], 1
    %6393 = vsyncpa [#allocation70], 1
    %6394 = vsyncpa [#allocation73], 1
    %6395 = vsyncpa [#allocation76], 1
    %6396 = vsyncpa [#allocation79], 1
    %6397 = vsyncpa [#allocation82], 1
    %6398 = vsyncpa [#allocation85], 1
    %6399 = vsyncpa [#allocation5], 1

</llo_original>
